<compile_context>
chip_gen: v5e
topology: v5e:2x2
jax: 0.10.0
libtpu: 0.0.40
codegen_flags: <defaults>
</compile_context>

<pallas_src>
import functools
import math

import jax
import jax.numpy as jnp
from jax import lax
from jax.experimental import pallas as pl
from jax.experimental.pallas import tpu as pltpu


# ----------------------------------------------------------------------------
# Single fused kernel
# ----------------------------------------------------------------------------
def _fused_kernel(*refs, L, T, B, Tq, H1, H2, nh):
    o_ref = refs[-1]        # output: [B, out]
    ins = refs[:-1]

    idx = 0

    def take(n):
        nonlocal idx
        out = ins[idx:idx + n]
        idx += n
        return out

    (x_ref,) = take(1)                       # [T*B,  Din]  time-major rows
    (xq_ref,) = take(1)                      # [Tq*B, 4]
    gru1_layers = [take(6) for _ in range(L)]
    gru2_layers = [take(6) for _ in range(L)]
    w1_ref, b1_ref = take(2)                 # [4,16], [1,16]
    wq_ref, wk_ref, wv_ref, bq_ref, bk_ref, bv_ref, wo_ref, bo_ref = take(8)
    fcw1_ref, fcw2_ref, fcb_ref = take(3)

    def gru_stack(seq2d, n_steps, layers, H):
        # seq2d: [n_steps*B, Din] value, rows in time-major order (t major, b minor).
        # Returns the list of per-step hidden states [B, H] of the last layer.
        outs = []
        for li, (wih_ref, whhr_ref, whhz_ref, whhn_ref, bgi_ref, bhn_ref) in enumerate(layers):
            # weights / biases loaded once per layer (hoisted out of the time loop)
            whh_r = whhr_ref[...]
            whh_z = whhz_ref[...]
            whh_n = whhn_ref[...]
            bhn = bhn_ref[...]
            # Hoisted input projection: ONE matmul for all timesteps.
            # (b_hh of the r/z gates is already folded into bgi by the wrapper.)
            gi = jnp.dot(seq2d, wih_ref[...],
                         preferred_element_type=jnp.float32) + bgi_ref[...]
            gi = gi.reshape(n_steps, B, 3 * H)
            gi_r = gi[:, :, 0:H]          # gate split done once per layer
            gi_z = gi[:, :, H:2 * H]
            gi_n = gi[:, :, 2 * H:3 * H]

            outs = []
            h = None
            for t in range(n_steps):      # fully unrolled (n_steps static & small)
                if t == 0:
                    # h0 == 0  ->  h @ W_hh == 0, skip the three matmuls
                    r = jax.nn.sigmoid(gi_r[0])
                    z = jax.nn.sigmoid(gi_z[0])
                    n = jnp.tanh(gi_n[0] + r * bhn)
                    h = (1.0 - z) * n
                else:
                    gh_r = jnp.dot(h, whh_r, preferred_element_type=jnp.float32)
                    gh_z = jnp.dot(h, whh_z, preferred_element_type=jnp.float32)
                    gh_n = jnp.dot(h, whh_n, preferred_element_type=jnp.float32)
                    r = jax.nn.sigmoid(gi_r[t] + gh_r)
                    z = jax.nn.sigmoid(gi_z[t] + gh_z)
                    n = jnp.tanh(gi_n[t] + r * (gh_n + bhn))
                    h = (1.0 - z) * n + z * h
                outs.append(h)
            if li + 1 < len(layers):
                seq2d = jnp.concatenate(outs, axis=0)   # [n_steps*B, H], time-major
        return outs

    # ---- branch 1: gru1 over x; only the last hidden state is needed ----
    outs1 = gru_stack(x_ref[...], T, gru1_layers, H1)
    out1_last = outs1[-1]                                              # [B, H1]

    # ---- branch 2: linear1 + exact GELU (erf form), then gru2 ----
    y = jnp.dot(xq_ref[...], w1_ref[...],
                preferred_element_type=jnp.float32) + b1_ref[...]      # [Tq*B, 16]
    y = 0.5 * y * (1.0 + lax.erf(y * 0.7071067811865476))

    outs2 = gru_stack(y, Tq, gru2_layers, H2)
    E = H2
    hd = E // nh
    scale = 1.0 / math.sqrt(hd)

    # gru2 output sequence kept in registers (batch-major for the attention)
    seq_bt = jnp.stack(outs2, axis=1)                                  # [B, Tq, E]
    seq2d = seq_bt.reshape(B * Tq, E)

    # ---- MHA: query = last gru2 step, keys/values = whole sequence ----
    q = (jnp.dot(outs2[-1], wq_ref[...],
                 preferred_element_type=jnp.float32) + bq_ref[...]) * scale   # [B, E]
    k = (jnp.dot(seq2d, wk_ref[...],
                 preferred_element_type=jnp.float32) + bk_ref[...]).reshape(B, Tq, E)
    v = (jnp.dot(seq2d, wv_ref[...],
                 preferred_element_type=jnp.float32) + bv_ref[...]).reshape(B, Tq, E)

    wo = wo_ref[...]                                                   # [E, E]
    attn_acc = None
    for hi in range(nh):                       # small static head loop; batched dots inside
        lo = hi * hd
        qh = q[:, lo:lo + hd].reshape(B, 1, hd)                        # [B, 1, hd]
        kh = k[:, :, lo:lo + hd]                                       # [B, Tq, hd]
        vh = v[:, :, lo:lo + hd]
        s = jnp.einsum('bqd,bkd->bqk', qh, kh,
                       preferred_element_type=jnp.float32)             # [B, 1, Tq]
        a = jax.nn.softmax(s, axis=-1)
        c = jnp.einsum('bqk,bkd->bqd', a, vh,
                       preferred_element_type=jnp.float32).reshape(B, hd)
        # output projection folded per head (sublane-aligned W_o row slice),
        # avoiding the lane-wise concat of 8-wide head contexts
        part = jnp.dot(c, wo[lo:lo + hd, :], preferred_element_type=jnp.float32)
        attn_acc = part if attn_acc is None else attn_acc + part
    attn_out = attn_acc + bo_ref[...]                                  # [B, E]

    # ---- final fc: concat([out1_last, attn_out]) folded into split weights ----
    o_ref[...] = (jnp.dot(out1_last, fcw1_ref[...], preferred_element_type=jnp.float32)
                  + jnp.dot(attn_out, fcw2_ref[...], preferred_element_type=jnp.float32)
                  + fcb_ref[...])


# ----------------------------------------------------------------------------
# Wrapper: weight layout prep (host-side) + single pallas_call
# ----------------------------------------------------------------------------
def _gru_layer_inputs(wih, whh, bih, bhh):
    # PyTorch GRU stacked weights: rows [0:H)=reset, [H:2H)=update, [2H:3H)=new.
    H = whh.shape[1]
    wih_t = jnp.transpose(wih)                       # [Din, 3H]
    whh_t = jnp.transpose(whh)                       # [H, 3H]
    # fold b_hh of the r/z gates into the hoisted input-projection bias
    bgi = bih + jnp.concatenate([bhh[:2 * H], jnp.zeros((H,), bih.dtype)])
    return [wih_t,
            whh_t[:, 0:H], whh_t[:, H:2 * H], whh_t[:, 2 * H:3 * H],
            bgi.reshape(1, 3 * H),
            bhh[2 * H:].reshape(1, H)]


def gru_model_with_attention(params, x, x_q, num_heads):
    # x:   [B, T, input_size]   (batch_first, like PyTorch); x_q: [B, Tq, 4]
    B, T, _ = x.shape
    Tq = x_q.shape[1]
    H1 = params["gru1"][0][1].shape[1]
    H2 = params["gru2"][0][1].shape[1]
    L = len(params["gru1"])
    E = H2
    out_dim = params["fc_w"].shape[0]

    # time-major, flattened to [T*B, F] rows (free host-side layout prep)
    x2d = jnp.transpose(x, (1, 0, 2)).reshape(T * B, x.shape[-1])
    xq2d = jnp.transpose(x_q, (1, 0, 2)).reshape(Tq * B, x_q.shape[-1])

    inputs = [x2d, xq2d]
    for lp in params["gru1"]:
        inputs += _gru_layer_inputs(*lp)
    for lp in params["gru2"]:
        inputs += _gru_layer_inputs(*lp)
    inputs += [params["linear1_w"].T, params["linear1_b"].reshape(1, -1)]
    in_w, in_b = params["mha_in_w"], params["mha_in_b"]
    inputs += [in_w[0:E].T, in_w[E:2 * E].T, in_w[2 * E:3 * E].T,
               in_b[0:E].reshape(1, E), in_b[E:2 * E].reshape(1, E),
               in_b[2 * E:3 * E].reshape(1, E),
               params["mha_out_w"].T, params["mha_out_b"].reshape(1, -1)]
    fc_w = params["fc_w"]
    inputs += [fc_w[:, :H1].T, fc_w[:, H1:].T, params["fc_b"].reshape(1, -1)]

    kernel = functools.partial(_fused_kernel, L=L, T=T, B=B, Tq=Tq,
                               H1=H1, H2=H2, nh=num_heads)
    return pl.pallas_call(
        kernel,
        out_shape=jax.ShapeDtypeStruct((B, out_dim), jnp.float32),
        in_specs=[pl.BlockSpec(memory_space=pltpu.MemorySpace.VMEM)] * len(inputs),
        out_specs=pl.BlockSpec(memory_space=pltpu.MemorySpace.VMEM),
    )(*inputs)


# ----------------------------------------------------------------------------
# Deterministic parameter init (shapes as in the PyTorch module __init__).
# ----------------------------------------------------------------------------
def init_params(key, input_size, hidden_size, hidden_size2, output_size,
                num_gru_layers, num_heads):
    keys = iter(jax.random.split(key, 64))

    def u(shape, scale):
        return jax.random.uniform(next(keys), shape, jnp.float32, -scale, scale)

    def gru_params(in_size, hid, n_layers):
        ps = []
        k = 1.0 / math.sqrt(hid)
        for layer in range(n_layers):
            d = in_size if layer == 0 else hid
            ps.append((u((3 * hid, d), k), u((3 * hid, hid), k),
                       u((3 * hid,), k), u((3 * hid,), k)))
        return ps

    kf = 1.0 / math.sqrt(hidden_size + hidden_size2)
    return {
        "gru1": gru_params(input_size, hidden_size, num_gru_layers),
        "linear1_w": u((16, 4), 0.5),
        "linear1_b": u((16,), 0.5),
        "gru2": gru_params(16, hidden_size2, num_gru_layers),
        "mha_in_w": u((3 * hidden_size2, hidden_size2), 1.0 / math.sqrt(hidden_size2)),
        "mha_in_b": u((3 * hidden_size2,), 1.0 / math.sqrt(hidden_size2)),
        "mha_out_w": u((hidden_size2, hidden_size2), 1.0 / math.sqrt(hidden_size2)),
        "mha_out_b": u((hidden_size2,), 1.0 / math.sqrt(hidden_size2)),
        "fc_w": u((output_size, hidden_size + hidden_size2), kf),
        "fc_b": u((output_size,), kf),
    }


# ----------------------------------------------------------------------------
# Pure-JAX reference (mirrors the PyTorch forward) for a correctness check.
# ----------------------------------------------------------------------------
def _ref_gru(x, layers):  # x [B, T, D]
    h_seq = x
    for (wih, whh, bih, bhh) in layers:
        B, T, _ = h_seq.shape
        H = whh.shape[1]
        h = jnp.zeros((B, H), jnp.float32)
        outs = []
        for t in range(T):
            gi = h_seq[:, t, :] @ wih.T + bih
            gh = h @ whh.T + bhh
            r = jax.nn.sigmoid(gi[:, :H] + gh[:, :H])
            z = jax.nn.sigmoid(gi[:, H:2 * H] + gh[:, H:2 * H])
            n = jnp.tanh(gi[:, 2 * H:] + r * gh[:, 2 * H:])
            h = (1.0 - z) * n + z * h
            outs.append(h)
        h_seq = jnp.stack(outs, axis=1)
    return h_seq


def _ref_mha(seq, in_w, in_b, out_w, out_b, num_heads):  # seq [B, T, E]
    B, T, E = seq.shape
    hd = E // num_heads
    wq, wk, wv = in_w[:E], in_w[E:2 * E], in_w[2 * E:]
    bq, bk, bv = in_b[:E], in_b[E:2 * E], in_b[2 * E:]
    q = seq[:, -1, :] @ wq.T + bq
    k = seq @ wk.T + bk
    v = seq @ wv.T + bv
    qh = q.reshape(B, num_heads, hd)
    kh = k.reshape(B, T, num_heads, hd)
    vh = v.reshape(B, T, num_heads, hd)
    scores = jnp.einsum("bhd,bthd->bht", qh, kh) / math.sqrt(hd)
    attn = jax.nn.softmax(scores, axis=-1)
    ctx = jnp.einsum("bht,bthd->bhd", attn, vh).reshape(B, E)
    return ctx @ out_w.T + out_b


def _ref_forward(params, x, x_q, num_heads):
    out1 = _ref_gru(x, params["gru1"])
    y = jax.nn.gelu(x_q @ params["linear1_w"].T + params["linear1_b"], approximate=False)
    out2 = _ref_gru(y, params["gru2"])
    ctx = _ref_mha(out2, params["mha_in_w"], params["mha_in_b"],
                   params["mha_out_w"], params["mha_out_b"], num_heads)
    cat = jnp.concatenate([out1[:, -1, :], ctx], axis=1)
    return cat @ params["fc_w"].T + params["fc_b"]


if __name__ == "__main__":
    # Small, module-consistent shapes.
    B, T, Tq = 2, 8, 8
    input_size = 4            # gru1 input features
    hidden_size = 32
    hidden_size2 = 32
    output_size = 4
    num_gru_layers = 2
    num_heads = 4

    key = jax.random.PRNGKey(0)
    kp, kx, kq = jax.random.split(key, 3)
    params = init_params(kp, input_size, hidden_size, hidden_size2,
                         output_size, num_gru_layers, num_heads)
    x = jax.random.normal(kx, (B, T, input_size), jnp.float32)
    x_q = jax.random.normal(kq, (B, Tq, 4), jnp.float32)

    fwd = jax.jit(gru_model_with_attention, static_argnames=("num_heads",))
    out = jax.block_until_ready(fwd(params, x, x_q, num_heads=num_heads))

    ref = jax.block_until_ready(_ref_forward(params, x, x_q, num_heads))
    assert out.shape == (B, output_size)
    assert jnp.allclose(out, ref, atol=5e-4, rtol=5e-4), (out, ref)

    print("KERNEL_OK")
</pallas_src>

<mosaic_0001>
module attributes {stable_mosaic.version = 11 : i64} {
  func.func @_fused_kernel(%arg0: memref<16x4xf32, #tpu.memory_space<vmem>>, %arg1: memref<16x4xf32, #tpu.memory_space<vmem>>, %arg2: memref<4x96xf32, #tpu.memory_space<vmem>>, %arg3: memref<32x32xf32, #tpu.memory_space<vmem>>, %arg4: memref<32x32xf32, #tpu.memory_space<vmem>>, %arg5: memref<32x32xf32, #tpu.memory_space<vmem>>, %arg6: memref<1x96xf32, #tpu.memory_space<vmem>>, %arg7: memref<1x32xf32, #tpu.memory_space<vmem>>, %arg8: memref<32x96xf32, #tpu.memory_space<vmem>>, %arg9: memref<32x32xf32, #tpu.memory_space<vmem>>, %arg10: memref<32x32xf32, #tpu.memory_space<vmem>>, %arg11: memref<32x32xf32, #tpu.memory_space<vmem>>, %arg12: memref<1x96xf32, #tpu.memory_space<vmem>>, %arg13: memref<1x32xf32, #tpu.memory_space<vmem>>, %arg14: memref<16x96xf32, #tpu.memory_space<vmem>>, %arg15: memref<32x32xf32, #tpu.memory_space<vmem>>, %arg16: memref<32x32xf32, #tpu.memory_space<vmem>>, %arg17: memref<32x32xf32, #tpu.memory_space<vmem>>, %arg18: memref<1x96xf32, #tpu.memory_space<vmem>>, %arg19: memref<1x32xf32, #tpu.memory_space<vmem>>, %arg20: memref<32x96xf32, #tpu.memory_space<vmem>>, %arg21: memref<32x32xf32, #tpu.memory_space<vmem>>, %arg22: memref<32x32xf32, #tpu.memory_space<vmem>>, %arg23: memref<32x32xf32, #tpu.memory_space<vmem>>, %arg24: memref<1x96xf32, #tpu.memory_space<vmem>>, %arg25: memref<1x32xf32, #tpu.memory_space<vmem>>, %arg26: memref<4x16xf32, #tpu.memory_space<vmem>>, %arg27: memref<1x16xf32, #tpu.memory_space<vmem>>, %arg28: memref<32x32xf32, #tpu.memory_space<vmem>>, %arg29: memref<32x32xf32, #tpu.memory_space<vmem>>, %arg30: memref<32x32xf32, #tpu.memory_space<vmem>>, %arg31: memref<1x32xf32, #tpu.memory_space<vmem>>, %arg32: memref<1x32xf32, #tpu.memory_space<vmem>>, %arg33: memref<1x32xf32, #tpu.memory_space<vmem>>, %arg34: memref<32x32xf32, #tpu.memory_space<vmem>>, %arg35: memref<1x32xf32, #tpu.memory_space<vmem>>, %arg36: memref<32x4xf32, #tpu.memory_space<vmem>>, %arg37: memref<32x4xf32, #tpu.memory_space<vmem>>, %arg38: memref<1x4xf32, #tpu.memory_space<vmem>>, %arg39: memref<2x4xf32, #tpu.memory_space<vmem>>) attributes {dimension_semantics = [], scalar_prefetch = 0 : i64, scratch_operands = 0 : i64, tpu.core_type = #tpu.core_type<tc>} {
    %c0 = arith.constant 0 : index
    %c0_0 = arith.constant 0 : index
    %0 = vector.load %arg0[%c0, %c0_0] : memref<16x4xf32, #tpu.memory_space<vmem>>, vector<16x4xf32>
    %c0_1 = arith.constant 0 : index
    %c0_2 = arith.constant 0 : index
    %1 = vector.load %arg3[%c0_1, %c0_2] : memref<32x32xf32, #tpu.memory_space<vmem>>, vector<32x32xf32>
    %c0_3 = arith.constant 0 : index
    %c0_4 = arith.constant 0 : index
    %2 = vector.load %arg4[%c0_3, %c0_4] : memref<32x32xf32, #tpu.memory_space<vmem>>, vector<32x32xf32>
    %c0_5 = arith.constant 0 : index
    %c0_6 = arith.constant 0 : index
    %3 = vector.load %arg5[%c0_5, %c0_6] : memref<32x32xf32, #tpu.memory_space<vmem>>, vector<32x32xf32>
    %c0_7 = arith.constant 0 : index
    %c0_8 = arith.constant 0 : index
    %4 = vector.load %arg7[%c0_7, %c0_8] : memref<1x32xf32, #tpu.memory_space<vmem>>, vector<1x32xf32>
    %c0_9 = arith.constant 0 : index
    %c0_10 = arith.constant 0 : index
    %5 = vector.load %arg2[%c0_9, %c0_10] : memref<4x96xf32, #tpu.memory_space<vmem>>, vector<4x96xf32>
    %cst = arith.constant dense<0.000000e+00> : vector<16x96xf32>
    %6 = tpu.matmul %0, %5, %cst {dimension_numbers = #tpu.dot_dimension_numbers<[1], [0], [0], [1], [0, 0, 1, 1], [], []>} : vector<16x4xf32>, vector<4x96xf32>, vector<16x96xf32> -> vector<16x96xf32>
    %c0_11 = arith.constant 0 : index
    %c0_12 = arith.constant 0 : index
    %7 = vector.load %arg6[%c0_11, %c0_12] : memref<1x96xf32, #tpu.memory_space<vmem>>, vector<1x96xf32>
    %8 = vector.broadcast %7 : vector<1x96xf32> to vector<16x96xf32>
    %9 = arith.addf %6, %8 : vector<16x96xf32>
    %10 = vector.shape_cast %9 : vector<16x96xf32> to vector<8x2x96xf32>
    %11 = vector.extract_strided_slice %10 {offsets = [0, 0, 0], sizes = [8, 2, 32], strides = [1, 1, 1]} : vector<8x2x96xf32> to vector<8x2x32xf32>
    %12 = vector.extract_strided_slice %10 {offsets = [0, 0, 32], sizes = [8, 2, 32], strides = [1, 1, 1]} : vector<8x2x96xf32> to vector<8x2x32xf32>
    %13 = vector.extract_strided_slice %10 {offsets = [0, 0, 64], sizes = [8, 2, 32], strides = [1, 1, 1]} : vector<8x2x96xf32> to vector<8x2x32xf32>
    %14 = vector.extract_strided_slice %11 {offsets = [0, 0, 0], sizes = [1, 2, 32], strides = [1, 1, 1]} : vector<8x2x32xf32> to vector<1x2x32xf32>
    %15 = vector.shape_cast %14 : vector<1x2x32xf32> to vector<2x32xf32>
    %16 = arith.negf %15 : vector<2x32xf32>
    %17 = math.exp %16 : vector<2x32xf32>
    %cst_13 = arith.constant 1.000000e+00 : f32
    %18 = vector.broadcast %cst_13 : f32 to vector<2x32xf32>
    %19 = arith.addf %18, %17 : vector<2x32xf32>
    %20 = arith.divf %18, %19 : vector<2x32xf32>
    %21 = vector.extract_strided_slice %12 {offsets = [0, 0, 0], sizes = [1, 2, 32], strides = [1, 1, 1]} : vector<8x2x32xf32> to vector<1x2x32xf32>
    %22 = vector.shape_cast %21 : vector<1x2x32xf32> to vector<2x32xf32>
    %23 = arith.negf %22 : vector<2x32xf32>
    %24 = math.exp %23 : vector<2x32xf32>
    %cst_14 = arith.constant 1.000000e+00 : f32
    %25 = vector.broadcast %cst_14 : f32 to vector<2x32xf32>
    %26 = arith.addf %25, %24 : vector<2x32xf32>
    %27 = arith.divf %25, %26 : vector<2x32xf32>
    %28 = vector.extract_strided_slice %13 {offsets = [0, 0, 0], sizes = [1, 2, 32], strides = [1, 1, 1]} : vector<8x2x32xf32> to vector<1x2x32xf32>
    %29 = vector.shape_cast %28 : vector<1x2x32xf32> to vector<2x32xf32>
    %30 = vector.broadcast %4 : vector<1x32xf32> to vector<2x32xf32>
    %31 = arith.mulf %20, %30 : vector<2x32xf32>
    %32 = arith.addf %29, %31 : vector<2x32xf32>
    %33 = math.tanh %32 : vector<2x32xf32>
    %cst_15 = arith.constant 1.000000e+00 : f32
    %34 = vector.broadcast %cst_15 : f32 to vector<2x32xf32>
    %35 = arith.subf %34, %27 : vector<2x32xf32>
    %36 = arith.mulf %35, %33 : vector<2x32xf32>
    %cst_16 = arith.constant dense<0.000000e+00> : vector<2x32xf32>
    %37 = tpu.matmul %36, %1, %cst_16 {dimension_numbers = #tpu.dot_dimension_numbers<[1], [0], [0], [1], [0, 0, 1, 1], [], []>} : vector<2x32xf32>, vector<32x32xf32>, vector<2x32xf32> -> vector<2x32xf32>
    %cst_17 = arith.constant dense<0.000000e+00> : vector<2x32xf32>
    %38 = tpu.matmul %36, %2, %cst_17 {dimension_numbers = #tpu.dot_dimension_numbers<[1], [0], [0], [1], [0, 0, 1, 1], [], []>} : vector<2x32xf32>, vector<32x32xf32>, vector<2x32xf32> -> vector<2x32xf32>
    %cst_18 = arith.constant dense<0.000000e+00> : vector<2x32xf32>
    %39 = tpu.matmul %36, %3, %cst_18 {dimension_numbers = #tpu.dot_dimension_numbers<[1], [0], [0], [1], [0, 0, 1, 1], [], []>} : vector<2x32xf32>, vector<32x32xf32>, vector<2x32xf32> -> vector<2x32xf32>
    %40 = vector.extract_strided_slice %11 {offsets = [1, 0, 0], sizes = [1, 2, 32], strides = [1, 1, 1]} : vector<8x2x32xf32> to vector<1x2x32xf32>
    %41 = vector.shape_cast %40 : vector<1x2x32xf32> to vector<2x32xf32>
    %42 = arith.addf %41, %37 : vector<2x32xf32>
    %43 = arith.negf %42 : vector<2x32xf32>
    %44 = math.exp %43 : vector<2x32xf32>
    %cst_19 = arith.constant 1.000000e+00 : f32
    %45 = vector.broadcast %cst_19 : f32 to vector<2x32xf32>
    %46 = arith.addf %45, %44 : vector<2x32xf32>
    %47 = arith.divf %45, %46 : vector<2x32xf32>
    %48 = vector.extract_strided_slice %12 {offsets = [1, 0, 0], sizes = [1, 2, 32], strides = [1, 1, 1]} : vector<8x2x32xf32> to vector<1x2x32xf32>
    %49 = vector.shape_cast %48 : vector<1x2x32xf32> to vector<2x32xf32>
    %50 = arith.addf %49, %38 : vector<2x32xf32>
    %51 = arith.negf %50 : vector<2x32xf32>
    %52 = math.exp %51 : vector<2x32xf32>
    %cst_20 = arith.constant 1.000000e+00 : f32
    %53 = vector.broadcast %cst_20 : f32 to vector<2x32xf32>
    %54 = arith.addf %53, %52 : vector<2x32xf32>
    %55 = arith.divf %53, %54 : vector<2x32xf32>
    %56 = vector.extract_strided_slice %13 {offsets = [1, 0, 0], sizes = [1, 2, 32], strides = [1, 1, 1]} : vector<8x2x32xf32> to vector<1x2x32xf32>
    %57 = vector.shape_cast %56 : vector<1x2x32xf32> to vector<2x32xf32>
    %58 = vector.broadcast %4 : vector<1x32xf32> to vector<2x32xf32>
    %59 = arith.addf %39, %58 : vector<2x32xf32>
    %60 = arith.mulf %47, %59 : vector<2x32xf32>
    %61 = arith.addf %57, %60 : vector<2x32xf32>
    %62 = math.tanh %61 : vector<2x32xf32>
    %cst_21 = arith.constant 1.000000e+00 : f32
    %63 = vector.broadcast %cst_21 : f32 to vector<2x32xf32>
    %64 = arith.subf %63, %55 : vector<2x32xf32>
    %65 = arith.mulf %64, %62 : vector<2x32xf32>
    %66 = arith.mulf %55, %36 : vector<2x32xf32>
    %67 = arith.addf %65, %66 : vector<2x32xf32>
    %cst_22 = arith.constant dense<0.000000e+00> : vector<2x32xf32>
    %68 = tpu.matmul %67, %1, %cst_22 {dimension_numbers = #tpu.dot_dimension_numbers<[1], [0], [0], [1], [0, 0, 1, 1], [], []>} : vector<2x32xf32>, vector<32x32xf32>, vector<2x32xf32> -> vector<2x32xf32>
    %cst_23 = arith.constant dense<0.000000e+00> : vector<2x32xf32>
    %69 = tpu.matmul %67, %2, %cst_23 {dimension_numbers = #tpu.dot_dimension_numbers<[1], [0], [0], [1], [0, 0, 1, 1], [], []>} : vector<2x32xf32>, vector<32x32xf32>, vector<2x32xf32> -> vector<2x32xf32>
    %cst_24 = arith.constant dense<0.000000e+00> : vector<2x32xf32>
    %70 = tpu.matmul %67, %3, %cst_24 {dimension_numbers = #tpu.dot_dimension_numbers<[1], [0], [0], [1], [0, 0, 1, 1], [], []>} : vector<2x32xf32>, vector<32x32xf32>, vector<2x32xf32> -> vector<2x32xf32>
    %71 = vector.extract_strided_slice %11 {offsets = [2, 0, 0], sizes = [1, 2, 32], strides = [1, 1, 1]} : vector<8x2x32xf32> to vector<1x2x32xf32>
    %72 = vector.shape_cast %71 : vector<1x2x32xf32> to vector<2x32xf32>
    %73 = arith.addf %72, %68 : vector<2x32xf32>
    %74 = arith.negf %73 : vector<2x32xf32>
    %75 = math.exp %74 : vector<2x32xf32>
    %cst_25 = arith.constant 1.000000e+00 : f32
    %76 = vector.broadcast %cst_25 : f32 to vector<2x32xf32>
    %77 = arith.addf %76, %75 : vector<2x32xf32>
    %78 = arith.divf %76, %77 : vector<2x32xf32>
    %79 = vector.extract_strided_slice %12 {offsets = [2, 0, 0], sizes = [1, 2, 32], strides = [1, 1, 1]} : vector<8x2x32xf32> to vector<1x2x32xf32>
    %80 = vector.shape_cast %79 : vector<1x2x32xf32> to vector<2x32xf32>
    %81 = arith.addf %80, %69 : vector<2x32xf32>
    %82 = arith.negf %81 : vector<2x32xf32>
    %83 = math.exp %82 : vector<2x32xf32>
    %cst_26 = arith.constant 1.000000e+00 : f32
    %84 = vector.broadcast %cst_26 : f32 to vector<2x32xf32>
    %85 = arith.addf %84, %83 : vector<2x32xf32>
    %86 = arith.divf %84, %85 : vector<2x32xf32>
    %87 = vector.extract_strided_slice %13 {offsets = [2, 0, 0], sizes = [1, 2, 32], strides = [1, 1, 1]} : vector<8x2x32xf32> to vector<1x2x32xf32>
    %88 = vector.shape_cast %87 : vector<1x2x32xf32> to vector<2x32xf32>
    %89 = vector.broadcast %4 : vector<1x32xf32> to vector<2x32xf32>
    %90 = arith.addf %70, %89 : vector<2x32xf32>
    %91 = arith.mulf %78, %90 : vector<2x32xf32>
    %92 = arith.addf %88, %91 : vector<2x32xf32>
    %93 = math.tanh %92 : vector<2x32xf32>
    %cst_27 = arith.constant 1.000000e+00 : f32
    %94 = vector.broadcast %cst_27 : f32 to vector<2x32xf32>
    %95 = arith.subf %94, %86 : vector<2x32xf32>
    %96 = arith.mulf %95, %93 : vector<2x32xf32>
    %97 = arith.mulf %86, %67 : vector<2x32xf32>
    %98 = arith.addf %96, %97 : vector<2x32xf32>
    %cst_28 = arith.constant dense<0.000000e+00> : vector<2x32xf32>
    %99 = tpu.matmul %98, %1, %cst_28 {dimension_numbers = #tpu.dot_dimension_numbers<[1], [0], [0], [1], [0, 0, 1, 1], [], []>} : vector<2x32xf32>, vector<32x32xf32>, vector<2x32xf32> -> vector<2x32xf32>
    %cst_29 = arith.constant dense<0.000000e+00> : vector<2x32xf32>
    %100 = tpu.matmul %98, %2, %cst_29 {dimension_numbers = #tpu.dot_dimension_numbers<[1], [0], [0], [1], [0, 0, 1, 1], [], []>} : vector<2x32xf32>, vector<32x32xf32>, vector<2x32xf32> -> vector<2x32xf32>
    %cst_30 = arith.constant dense<0.000000e+00> : vector<2x32xf32>
    %101 = tpu.matmul %98, %3, %cst_30 {dimension_numbers = #tpu.dot_dimension_numbers<[1], [0], [0], [1], [0, 0, 1, 1], [], []>} : vector<2x32xf32>, vector<32x32xf32>, vector<2x32xf32> -> vector<2x32xf32>
    %102 = vector.extract_strided_slice %11 {offsets = [3, 0, 0], sizes = [1, 2, 32], strides = [1, 1, 1]} : vector<8x2x32xf32> to vector<1x2x32xf32>
    %103 = vector.shape_cast %102 : vector<1x2x32xf32> to vector<2x32xf32>
    %104 = arith.addf %103, %99 : vector<2x32xf32>
    %105 = arith.negf %104 : vector<2x32xf32>
    %106 = math.exp %105 : vector<2x32xf32>
    %cst_31 = arith.constant 1.000000e+00 : f32
    %107 = vector.broadcast %cst_31 : f32 to vector<2x32xf32>
    %108 = arith.addf %107, %106 : vector<2x32xf32>
    %109 = arith.divf %107, %108 : vector<2x32xf32>
    %110 = vector.extract_strided_slice %12 {offsets = [3, 0, 0], sizes = [1, 2, 32], strides = [1, 1, 1]} : vector<8x2x32xf32> to vector<1x2x32xf32>
    %111 = vector.shape_cast %110 : vector<1x2x32xf32> to vector<2x32xf32>
    %112 = arith.addf %111, %100 : vector<2x32xf32>
    %113 = arith.negf %112 : vector<2x32xf32>
    %114 = math.exp %113 : vector<2x32xf32>
    %cst_32 = arith.constant 1.000000e+00 : f32
    %115 = vector.broadcast %cst_32 : f32 to vector<2x32xf32>
    %116 = arith.addf %115, %114 : vector<2x32xf32>
    %117 = arith.divf %115, %116 : vector<2x32xf32>
    %118 = vector.extract_strided_slice %13 {offsets = [3, 0, 0], sizes = [1, 2, 32], strides = [1, 1, 1]} : vector<8x2x32xf32> to vector<1x2x32xf32>
    %119 = vector.shape_cast %118 : vector<1x2x32xf32> to vector<2x32xf32>
    %120 = vector.broadcast %4 : vector<1x32xf32> to vector<2x32xf32>
    %121 = arith.addf %101, %120 : vector<2x32xf32>
    %122 = arith.mulf %109, %121 : vector<2x32xf32>
    %123 = arith.addf %119, %122 : vector<2x32xf32>
    %124 = math.tanh %123 : vector<2x32xf32>
    %cst_33 = arith.constant 1.000000e+00 : f32
    %125 = vector.broadcast %cst_33 : f32 to vector<2x32xf32>
    %126 = arith.subf %125, %117 : vector<2x32xf32>
    %127 = arith.mulf %126, %124 : vector<2x32xf32>
    %128 = arith.mulf %117, %98 : vector<2x32xf32>
    %129 = arith.addf %127, %128 : vector<2x32xf32>
    %cst_34 = arith.constant dense<0.000000e+00> : vector<2x32xf32>
    %130 = tpu.matmul %129, %1, %cst_34 {dimension_numbers = #tpu.dot_dimension_numbers<[1], [0], [0], [1], [0, 0, 1, 1], [], []>} : vector<2x32xf32>, vector<32x32xf32>, vector<2x32xf32> -> vector<2x32xf32>
    %cst_35 = arith.constant dense<0.000000e+00> : vector<2x32xf32>
    %131 = tpu.matmul %129, %2, %cst_35 {dimension_numbers = #tpu.dot_dimension_numbers<[1], [0], [0], [1], [0, 0, 1, 1], [], []>} : vector<2x32xf32>, vector<32x32xf32>, vector<2x32xf32> -> vector<2x32xf32>
    %cst_36 = arith.constant dense<0.000000e+00> : vector<2x32xf32>
    %132 = tpu.matmul %129, %3, %cst_36 {dimension_numbers = #tpu.dot_dimension_numbers<[1], [0], [0], [1], [0, 0, 1, 1], [], []>} : vector<2x32xf32>, vector<32x32xf32>, vector<2x32xf32> -> vector<2x32xf32>
    %133 = vector.extract_strided_slice %11 {offsets = [4, 0, 0], sizes = [1, 2, 32], strides = [1, 1, 1]} : vector<8x2x32xf32> to vector<1x2x32xf32>
    %134 = vector.shape_cast %133 : vector<1x2x32xf32> to vector<2x32xf32>
    %135 = arith.addf %134, %130 : vector<2x32xf32>
    %136 = arith.negf %135 : vector<2x32xf32>
    %137 = math.exp %136 : vector<2x32xf32>
    %cst_37 = arith.constant 1.000000e+00 : f32
    %138 = vector.broadcast %cst_37 : f32 to vector<2x32xf32>
    %139 = arith.addf %138, %137 : vector<2x32xf32>
    %140 = arith.divf %138, %139 : vector<2x32xf32>
    %141 = vector.extract_strided_slice %12 {offsets = [4, 0, 0], sizes = [1, 2, 32], strides = [1, 1, 1]} : vector<8x2x32xf32> to vector<1x2x32xf32>
    %142 = vector.shape_cast %141 : vector<1x2x32xf32> to vector<2x32xf32>
    %143 = arith.addf %142, %131 : vector<2x32xf32>
    %144 = arith.negf %143 : vector<2x32xf32>
    %145 = math.exp %144 : vector<2x32xf32>
    %cst_38 = arith.constant 1.000000e+00 : f32
    %146 = vector.broadcast %cst_38 : f32 to vector<2x32xf32>
    %147 = arith.addf %146, %145 : vector<2x32xf32>
    %148 = arith.divf %146, %147 : vector<2x32xf32>
    %149 = vector.extract_strided_slice %13 {offsets = [4, 0, 0], sizes = [1, 2, 32], strides = [1, 1, 1]} : vector<8x2x32xf32> to vector<1x2x32xf32>
    %150 = vector.shape_cast %149 : vector<1x2x32xf32> to vector<2x32xf32>
    %151 = vector.broadcast %4 : vector<1x32xf32> to vector<2x32xf32>
    %152 = arith.addf %132, %151 : vector<2x32xf32>
    %153 = arith.mulf %140, %152 : vector<2x32xf32>
    %154 = arith.addf %150, %153 : vector<2x32xf32>
    %155 = math.tanh %154 : vector<2x32xf32>
    %cst_39 = arith.constant 1.000000e+00 : f32
    %156 = vector.broadcast %cst_39 : f32 to vector<2x32xf32>
    %157 = arith.subf %156, %148 : vector<2x32xf32>
    %158 = arith.mulf %157, %155 : vector<2x32xf32>
    %159 = arith.mulf %148, %129 : vector<2x32xf32>
    %160 = arith.addf %158, %159 : vector<2x32xf32>
    %cst_40 = arith.constant dense<0.000000e+00> : vector<2x32xf32>
    %161 = tpu.matmul %160, %1, %cst_40 {dimension_numbers = #tpu.dot_dimension_numbers<[1], [0], [0], [1], [0, 0, 1, 1], [], []>} : vector<2x32xf32>, vector<32x32xf32>, vector<2x32xf32> -> vector<2x32xf32>
    %cst_41 = arith.constant dense<0.000000e+00> : vector<2x32xf32>
    %162 = tpu.matmul %160, %2, %cst_41 {dimension_numbers = #tpu.dot_dimension_numbers<[1], [0], [0], [1], [0, 0, 1, 1], [], []>} : vector<2x32xf32>, vector<32x32xf32>, vector<2x32xf32> -> vector<2x32xf32>
    %cst_42 = arith.constant dense<0.000000e+00> : vector<2x32xf32>
    %163 = tpu.matmul %160, %3, %cst_42 {dimension_numbers = #tpu.dot_dimension_numbers<[1], [0], [0], [1], [0, 0, 1, 1], [], []>} : vector<2x32xf32>, vector<32x32xf32>, vector<2x32xf32> -> vector<2x32xf32>
    %164 = vector.extract_strided_slice %11 {offsets = [5, 0, 0], sizes = [1, 2, 32], strides = [1, 1, 1]} : vector<8x2x32xf32> to vector<1x2x32xf32>
    %165 = vector.shape_cast %164 : vector<1x2x32xf32> to vector<2x32xf32>
    %166 = arith.addf %165, %161 : vector<2x32xf32>
    %167 = arith.negf %166 : vector<2x32xf32>
    %168 = math.exp %167 : vector<2x32xf32>
    %cst_43 = arith.constant 1.000000e+00 : f32
    %169 = vector.broadcast %cst_43 : f32 to vector<2x32xf32>
    %170 = arith.addf %169, %168 : vector<2x32xf32>
    %171 = arith.divf %169, %170 : vector<2x32xf32>
    %172 = vector.extract_strided_slice %12 {offsets = [5, 0, 0], sizes = [1, 2, 32], strides = [1, 1, 1]} : vector<8x2x32xf32> to vector<1x2x32xf32>
    %173 = vector.shape_cast %172 : vector<1x2x32xf32> to vector<2x32xf32>
    %174 = arith.addf %173, %162 : vector<2x32xf32>
    %175 = arith.negf %174 : vector<2x32xf32>
    %176 = math.exp %175 : vector<2x32xf32>
    %cst_44 = arith.constant 1.000000e+00 : f32
    %177 = vector.broadcast %cst_44 : f32 to vector<2x32xf32>
    %178 = arith.addf %177, %176 : vector<2x32xf32>
    %179 = arith.divf %177, %178 : vector<2x32xf32>
    %180 = vector.extract_strided_slice %13 {offsets = [5, 0, 0], sizes = [1, 2, 32], strides = [1, 1, 1]} : vector<8x2x32xf32> to vector<1x2x32xf32>
    %181 = vector.shape_cast %180 : vector<1x2x32xf32> to vector<2x32xf32>
    %182 = vector.broadcast %4 : vector<1x32xf32> to vector<2x32xf32>
    %183 = arith.addf %163, %182 : vector<2x32xf32>
    %184 = arith.mulf %171, %183 : vector<2x32xf32>
    %185 = arith.addf %181, %184 : vector<2x32xf32>
    %186 = math.tanh %185 : vector<2x32xf32>
    %cst_45 = arith.constant 1.000000e+00 : f32
    %187 = vector.broadcast %cst_45 : f32 to vector<2x32xf32>
    %188 = arith.subf %187, %179 : vector<2x32xf32>
    %189 = arith.mulf %188, %186 : vector<2x32xf32>
    %190 = arith.mulf %179, %160 : vector<2x32xf32>
    %191 = arith.addf %189, %190 : vector<2x32xf32>
    %cst_46 = arith.constant dense<0.000000e+00> : vector<2x32xf32>
    %192 = tpu.matmul %191, %1, %cst_46 {dimension_numbers = #tpu.dot_dimension_numbers<[1], [0], [0], [1], [0, 0, 1, 1], [], []>} : vector<2x32xf32>, vector<32x32xf32>, vector<2x32xf32> -> vector<2x32xf32>
    %cst_47 = arith.constant dense<0.000000e+00> : vector<2x32xf32>
    %193 = tpu.matmul %191, %2, %cst_47 {dimension_numbers = #tpu.dot_dimension_numbers<[1], [0], [0], [1], [0, 0, 1, 1], [], []>} : vector<2x32xf32>, vector<32x32xf32>, vector<2x32xf32> -> vector<2x32xf32>
    %cst_48 = arith.constant dense<0.000000e+00> : vector<2x32xf32>
    %194 = tpu.matmul %191, %3, %cst_48 {dimension_numbers = #tpu.dot_dimension_numbers<[1], [0], [0], [1], [0, 0, 1, 1], [], []>} : vector<2x32xf32>, vector<32x32xf32>, vector<2x32xf32> -> vector<2x32xf32>
    %195 = vector.extract_strided_slice %11 {offsets = [6, 0, 0], sizes = [1, 2, 32], strides = [1, 1, 1]} : vector<8x2x32xf32> to vector<1x2x32xf32>
    %196 = vector.shape_cast %195 : vector<1x2x32xf32> to vector<2x32xf32>
    %197 = arith.addf %196, %192 : vector<2x32xf32>
    %198 = arith.negf %197 : vector<2x32xf32>
    %199 = math.exp %198 : vector<2x32xf32>
    %cst_49 = arith.constant 1.000000e+00 : f32
    %200 = vector.broadcast %cst_49 : f32 to vector<2x32xf32>
    %201 = arith.addf %200, %199 : vector<2x32xf32>
    %202 = arith.divf %200, %201 : vector<2x32xf32>
    %203 = vector.extract_strided_slice %12 {offsets = [6, 0, 0], sizes = [1, 2, 32], strides = [1, 1, 1]} : vector<8x2x32xf32> to vector<1x2x32xf32>
    %204 = vector.shape_cast %203 : vector<1x2x32xf32> to vector<2x32xf32>
    %205 = arith.addf %204, %193 : vector<2x32xf32>
    %206 = arith.negf %205 : vector<2x32xf32>
    %207 = math.exp %206 : vector<2x32xf32>
    %cst_50 = arith.constant 1.000000e+00 : f32
    %208 = vector.broadcast %cst_50 : f32 to vector<2x32xf32>
    %209 = arith.addf %208, %207 : vector<2x32xf32>
    %210 = arith.divf %208, %209 : vector<2x32xf32>
    %211 = vector.extract_strided_slice %13 {offsets = [6, 0, 0], sizes = [1, 2, 32], strides = [1, 1, 1]} : vector<8x2x32xf32> to vector<1x2x32xf32>
    %212 = vector.shape_cast %211 : vector<1x2x32xf32> to vector<2x32xf32>
    %213 = vector.broadcast %4 : vector<1x32xf32> to vector<2x32xf32>
    %214 = arith.addf %194, %213 : vector<2x32xf32>
    %215 = arith.mulf %202, %214 : vector<2x32xf32>
    %216 = arith.addf %212, %215 : vector<2x32xf32>
    %217 = math.tanh %216 : vector<2x32xf32>
    %cst_51 = arith.constant 1.000000e+00 : f32
    %218 = vector.broadcast %cst_51 : f32 to vector<2x32xf32>
    %219 = arith.subf %218, %210 : vector<2x32xf32>
    %220 = arith.mulf %219, %217 : vector<2x32xf32>
    %221 = arith.mulf %210, %191 : vector<2x32xf32>
    %222 = arith.addf %220, %221 : vector<2x32xf32>
    %cst_52 = arith.constant dense<0.000000e+00> : vector<2x32xf32>
    %223 = tpu.matmul %222, %1, %cst_52 {dimension_numbers = #tpu.dot_dimension_numbers<[1], [0], [0], [1], [0, 0, 1, 1], [], []>} : vector<2x32xf32>, vector<32x32xf32>, vector<2x32xf32> -> vector<2x32xf32>
    %cst_53 = arith.constant dense<0.000000e+00> : vector<2x32xf32>
    %224 = tpu.matmul %222, %2, %cst_53 {dimension_numbers = #tpu.dot_dimension_numbers<[1], [0], [0], [1], [0, 0, 1, 1], [], []>} : vector<2x32xf32>, vector<32x32xf32>, vector<2x32xf32> -> vector<2x32xf32>
    %cst_54 = arith.constant dense<0.000000e+00> : vector<2x32xf32>
    %225 = tpu.matmul %222, %3, %cst_54 {dimension_numbers = #tpu.dot_dimension_numbers<[1], [0], [0], [1], [0, 0, 1, 1], [], []>} : vector<2x32xf32>, vector<32x32xf32>, vector<2x32xf32> -> vector<2x32xf32>
    %226 = vector.extract_strided_slice %11 {offsets = [7, 0, 0], sizes = [1, 2, 32], strides = [1, 1, 1]} : vector<8x2x32xf32> to vector<1x2x32xf32>
    %227 = vector.shape_cast %226 : vector<1x2x32xf32> to vector<2x32xf32>
    %228 = arith.addf %227, %223 : vector<2x32xf32>
    %229 = arith.negf %228 : vector<2x32xf32>
    %230 = math.exp %229 : vector<2x32xf32>
    %cst_55 = arith.constant 1.000000e+00 : f32
    %231 = vector.broadcast %cst_55 : f32 to vector<2x32xf32>
    %232 = arith.addf %231, %230 : vector<2x32xf32>
    %233 = arith.divf %231, %232 : vector<2x32xf32>
    %234 = vector.extract_strided_slice %12 {offsets = [7, 0, 0], sizes = [1, 2, 32], strides = [1, 1, 1]} : vector<8x2x32xf32> to vector<1x2x32xf32>
    %235 = vector.shape_cast %234 : vector<1x2x32xf32> to vector<2x32xf32>
    %236 = arith.addf %235, %224 : vector<2x32xf32>
    %237 = arith.negf %236 : vector<2x32xf32>
    %238 = math.exp %237 : vector<2x32xf32>
    %cst_56 = arith.constant 1.000000e+00 : f32
    %239 = vector.broadcast %cst_56 : f32 to vector<2x32xf32>
    %240 = arith.addf %239, %238 : vector<2x32xf32>
    %241 = arith.divf %239, %240 : vector<2x32xf32>
    %242 = vector.extract_strided_slice %13 {offsets = [7, 0, 0], sizes = [1, 2, 32], strides = [1, 1, 1]} : vector<8x2x32xf32> to vector<1x2x32xf32>
    %243 = vector.shape_cast %242 : vector<1x2x32xf32> to vector<2x32xf32>
    %244 = vector.broadcast %4 : vector<1x32xf32> to vector<2x32xf32>
    %245 = arith.addf %225, %244 : vector<2x32xf32>
    %246 = arith.mulf %233, %245 : vector<2x32xf32>
    %247 = arith.addf %243, %246 : vector<2x32xf32>
    %248 = math.tanh %247 : vector<2x32xf32>
    %cst_57 = arith.constant 1.000000e+00 : f32
    %249 = vector.broadcast %cst_57 : f32 to vector<2x32xf32>
    %250 = arith.subf %249, %241 : vector<2x32xf32>
    %251 = arith.mulf %250, %248 : vector<2x32xf32>
    %252 = arith.mulf %241, %222 : vector<2x32xf32>
    %253 = arith.addf %251, %252 : vector<2x32xf32>
    %254 = tpu.concatenate %36, %67, %98, %129, %160, %191, %222, %253 in 0 : vector<2x32xf32>, vector<2x32xf32>, vector<2x32xf32>, vector<2x32xf32>, vector<2x32xf32>, vector<2x32xf32>, vector<2x32xf32>, vector<2x32xf32> -> vector<16x32xf32>
    %c0_58 = arith.constant 0 : index
    %c0_59 = arith.constant 0 : index
    %255 = vector.load %arg9[%c0_58, %c0_59] : memref<32x32xf32, #tpu.memory_space<vmem>>, vector<32x32xf32>
    %c0_60 = arith.constant 0 : index
    %c0_61 = arith.constant 0 : index
    %256 = vector.load %arg10[%c0_60, %c0_61] : memref<32x32xf32, #tpu.memory_space<vmem>>, vector<32x32xf32>
    %c0_62 = arith.constant 0 : index
    %c0_63 = arith.constant 0 : index
    %257 = vector.load %arg11[%c0_62, %c0_63] : memref<32x32xf32, #tpu.memory_space<vmem>>, vector<32x32xf32>
    %c0_64 = arith.constant 0 : index
    %c0_65 = arith.constant 0 : index
    %258 = vector.load %arg13[%c0_64, %c0_65] : memref<1x32xf32, #tpu.memory_space<vmem>>, vector<1x32xf32>
    %c0_66 = arith.constant 0 : index
    %c0_67 = arith.constant 0 : index
    %259 = vector.load %arg8[%c0_66, %c0_67] : memref<32x96xf32, #tpu.memory_space<vmem>>, vector<32x96xf32>
    %cst_68 = arith.constant dense<0.000000e+00> : vector<16x96xf32>
    %260 = tpu.matmul %254, %259, %cst_68 {dimension_numbers = #tpu.dot_dimension_numbers<[1], [0], [0], [1], [0, 0, 1, 1], [], []>} : vector<16x32xf32>, vector<32x96xf32>, vector<16x96xf32> -> vector<16x96xf32>
    %c0_69 = arith.constant 0 : index
    %c0_70 = arith.constant 0 : index
    %261 = vector.load %arg12[%c0_69, %c0_70] : memref<1x96xf32, #tpu.memory_space<vmem>>, vector<1x96xf32>
    %262 = vector.broadcast %261 : vector<1x96xf32> to vector<16x96xf32>
    %263 = arith.addf %260, %262 : vector<16x96xf32>
    %264 = vector.shape_cast %263 : vector<16x96xf32> to vector<8x2x96xf32>
    %265 = vector.extract_strided_slice %264 {offsets = [0, 0, 0], sizes = [8, 2, 32], strides = [1, 1, 1]} : vector<8x2x96xf32> to vector<8x2x32xf32>
    %266 = vector.extract_strided_slice %264 {offsets = [0, 0, 32], sizes = [8, 2, 32], strides = [1, 1, 1]} : vector<8x2x96xf32> to vector<8x2x32xf32>
    %267 = vector.extract_strided_slice %264 {offsets = [0, 0, 64], sizes = [8, 2, 32], strides = [1, 1, 1]} : vector<8x2x96xf32> to vector<8x2x32xf32>
    %268 = vector.extract_strided_slice %265 {offsets = [0, 0, 0], sizes = [1, 2, 32], strides = [1, 1, 1]} : vector<8x2x32xf32> to vector<1x2x32xf32>
    %269 = vector.shape_cast %268 : vector<1x2x32xf32> to vector<2x32xf32>
    %270 = arith.negf %269 : vector<2x32xf32>
    %271 = math.exp %270 : vector<2x32xf32>
    %cst_71 = arith.constant 1.000000e+00 : f32
    %272 = vector.broadcast %cst_71 : f32 to vector<2x32xf32>
    %273 = arith.addf %272, %271 : vector<2x32xf32>
    %274 = arith.divf %272, %273 : vector<2x32xf32>
    %275 = vector.extract_strided_slice %266 {offsets = [0, 0, 0], sizes = [1, 2, 32], strides = [1, 1, 1]} : vector<8x2x32xf32> to vector<1x2x32xf32>
    %276 = vector.shape_cast %275 : vector<1x2x32xf32> to vector<2x32xf32>
    %277 = arith.negf %276 : vector<2x32xf32>
    %278 = math.exp %277 : vector<2x32xf32>
    %cst_72 = arith.constant 1.000000e+00 : f32
    %279 = vector.broadcast %cst_72 : f32 to vector<2x32xf32>
    %280 = arith.addf %279, %278 : vector<2x32xf32>
    %281 = arith.divf %279, %280 : vector<2x32xf32>
    %282 = vector.extract_strided_slice %267 {offsets = [0, 0, 0], sizes = [1, 2, 32], strides = [1, 1, 1]} : vector<8x2x32xf32> to vector<1x2x32xf32>
    %283 = vector.shape_cast %282 : vector<1x2x32xf32> to vector<2x32xf32>
    %284 = vector.broadcast %258 : vector<1x32xf32> to vector<2x32xf32>
    %285 = arith.mulf %274, %284 : vector<2x32xf32>
    %286 = arith.addf %283, %285 : vector<2x32xf32>
    %287 = math.tanh %286 : vector<2x32xf32>
    %cst_73 = arith.constant 1.000000e+00 : f32
    %288 = vector.broadcast %cst_73 : f32 to vector<2x32xf32>
    %289 = arith.subf %288, %281 : vector<2x32xf32>
    %290 = arith.mulf %289, %287 : vector<2x32xf32>
    %cst_74 = arith.constant dense<0.000000e+00> : vector<2x32xf32>
    %291 = tpu.matmul %290, %255, %cst_74 {dimension_numbers = #tpu.dot_dimension_numbers<[1], [0], [0], [1], [0, 0, 1, 1], [], []>} : vector<2x32xf32>, vector<32x32xf32>, vector<2x32xf32> -> vector<2x32xf32>
    %cst_75 = arith.constant dense<0.000000e+00> : vector<2x32xf32>
    %292 = tpu.matmul %290, %256, %cst_75 {dimension_numbers = #tpu.dot_dimension_numbers<[1], [0], [0], [1], [0, 0, 1, 1], [], []>} : vector<2x32xf32>, vector<32x32xf32>, vector<2x32xf32> -> vector<2x32xf32>
    %cst_76 = arith.constant dense<0.000000e+00> : vector<2x32xf32>
    %293 = tpu.matmul %290, %257, %cst_76 {dimension_numbers = #tpu.dot_dimension_numbers<[1], [0], [0], [1], [0, 0, 1, 1], [], []>} : vector<2x32xf32>, vector<32x32xf32>, vector<2x32xf32> -> vector<2x32xf32>
    %294 = vector.extract_strided_slice %265 {offsets = [1, 0, 0], sizes = [1, 2, 32], strides = [1, 1, 1]} : vector<8x2x32xf32> to vector<1x2x32xf32>
    %295 = vector.shape_cast %294 : vector<1x2x32xf32> to vector<2x32xf32>
    %296 = arith.addf %295, %291 : vector<2x32xf32>
    %297 = arith.negf %296 : vector<2x32xf32>
    %298 = math.exp %297 : vector<2x32xf32>
    %cst_77 = arith.constant 1.000000e+00 : f32
    %299 = vector.broadcast %cst_77 : f32 to vector<2x32xf32>
    %300 = arith.addf %299, %298 : vector<2x32xf32>
    %301 = arith.divf %299, %300 : vector<2x32xf32>
    %302 = vector.extract_strided_slice %266 {offsets = [1, 0, 0], sizes = [1, 2, 32], strides = [1, 1, 1]} : vector<8x2x32xf32> to vector<1x2x32xf32>
    %303 = vector.shape_cast %302 : vector<1x2x32xf32> to vector<2x32xf32>
    %304 = arith.addf %303, %292 : vector<2x32xf32>
    %305 = arith.negf %304 : vector<2x32xf32>
    %306 = math.exp %305 : vector<2x32xf32>
    %cst_78 = arith.constant 1.000000e+00 : f32
    %307 = vector.broadcast %cst_78 : f32 to vector<2x32xf32>
    %308 = arith.addf %307, %306 : vector<2x32xf32>
    %309 = arith.divf %307, %308 : vector<2x32xf32>
    %310 = vector.extract_strided_slice %267 {offsets = [1, 0, 0], sizes = [1, 2, 32], strides = [1, 1, 1]} : vector<8x2x32xf32> to vector<1x2x32xf32>
    %311 = vector.shape_cast %310 : vector<1x2x32xf32> to vector<2x32xf32>
    %312 = vector.broadcast %258 : vector<1x32xf32> to vector<2x32xf32>
    %313 = arith.addf %293, %312 : vector<2x32xf32>
    %314 = arith.mulf %301, %313 : vector<2x32xf32>
    %315 = arith.addf %311, %314 : vector<2x32xf32>
    %316 = math.tanh %315 : vector<2x32xf32>
    %cst_79 = arith.constant 1.000000e+00 : f32
    %317 = vector.broadcast %cst_79 : f32 to vector<2x32xf32>
    %318 = arith.subf %317, %309 : vector<2x32xf32>
    %319 = arith.mulf %318, %316 : vector<2x32xf32>
    %320 = arith.mulf %309, %290 : vector<2x32xf32>
    %321 = arith.addf %319, %320 : vector<2x32xf32>
    %cst_80 = arith.constant dense<0.000000e+00> : vector<2x32xf32>
    %322 = tpu.matmul %321, %255, %cst_80 {dimension_numbers = #tpu.dot_dimension_numbers<[1], [0], [0], [1], [0, 0, 1, 1], [], []>} : vector<2x32xf32>, vector<32x32xf32>, vector<2x32xf32> -> vector<2x32xf32>
    %cst_81 = arith.constant dense<0.000000e+00> : vector<2x32xf32>
    %323 = tpu.matmul %321, %256, %cst_81 {dimension_numbers = #tpu.dot_dimension_numbers<[1], [0], [0], [1], [0, 0, 1, 1], [], []>} : vector<2x32xf32>, vector<32x32xf32>, vector<2x32xf32> -> vector<2x32xf32>
    %cst_82 = arith.constant dense<0.000000e+00> : vector<2x32xf32>
    %324 = tpu.matmul %321, %257, %cst_82 {dimension_numbers = #tpu.dot_dimension_numbers<[1], [0], [0], [1], [0, 0, 1, 1], [], []>} : vector<2x32xf32>, vector<32x32xf32>, vector<2x32xf32> -> vector<2x32xf32>
    %325 = vector.extract_strided_slice %265 {offsets = [2, 0, 0], sizes = [1, 2, 32], strides = [1, 1, 1]} : vector<8x2x32xf32> to vector<1x2x32xf32>
    %326 = vector.shape_cast %325 : vector<1x2x32xf32> to vector<2x32xf32>
    %327 = arith.addf %326, %322 : vector<2x32xf32>
    %328 = arith.negf %327 : vector<2x32xf32>
    %329 = math.exp %328 : vector<2x32xf32>
    %cst_83 = arith.constant 1.000000e+00 : f32
    %330 = vector.broadcast %cst_83 : f32 to vector<2x32xf32>
    %331 = arith.addf %330, %329 : vector<2x32xf32>
    %332 = arith.divf %330, %331 : vector<2x32xf32>
    %333 = vector.extract_strided_slice %266 {offsets = [2, 0, 0], sizes = [1, 2, 32], strides = [1, 1, 1]} : vector<8x2x32xf32> to vector<1x2x32xf32>
    %334 = vector.shape_cast %333 : vector<1x2x32xf32> to vector<2x32xf32>
    %335 = arith.addf %334, %323 : vector<2x32xf32>
    %336 = arith.negf %335 : vector<2x32xf32>
    %337 = math.exp %336 : vector<2x32xf32>
    %cst_84 = arith.constant 1.000000e+00 : f32
    %338 = vector.broadcast %cst_84 : f32 to vector<2x32xf32>
    %339 = arith.addf %338, %337 : vector<2x32xf32>
    %340 = arith.divf %338, %339 : vector<2x32xf32>
    %341 = vector.extract_strided_slice %267 {offsets = [2, 0, 0], sizes = [1, 2, 32], strides = [1, 1, 1]} : vector<8x2x32xf32> to vector<1x2x32xf32>
    %342 = vector.shape_cast %341 : vector<1x2x32xf32> to vector<2x32xf32>
    %343 = vector.broadcast %258 : vector<1x32xf32> to vector<2x32xf32>
    %344 = arith.addf %324, %343 : vector<2x32xf32>
    %345 = arith.mulf %332, %344 : vector<2x32xf32>
    %346 = arith.addf %342, %345 : vector<2x32xf32>
    %347 = math.tanh %346 : vector<2x32xf32>
    %cst_85 = arith.constant 1.000000e+00 : f32
    %348 = vector.broadcast %cst_85 : f32 to vector<2x32xf32>
    %349 = arith.subf %348, %340 : vector<2x32xf32>
    %350 = arith.mulf %349, %347 : vector<2x32xf32>
    %351 = arith.mulf %340, %321 : vector<2x32xf32>
    %352 = arith.addf %350, %351 : vector<2x32xf32>
    %cst_86 = arith.constant dense<0.000000e+00> : vector<2x32xf32>
    %353 = tpu.matmul %352, %255, %cst_86 {dimension_numbers = #tpu.dot_dimension_numbers<[1], [0], [0], [1], [0, 0, 1, 1], [], []>} : vector<2x32xf32>, vector<32x32xf32>, vector<2x32xf32> -> vector<2x32xf32>
    %cst_87 = arith.constant dense<0.000000e+00> : vector<2x32xf32>
    %354 = tpu.matmul %352, %256, %cst_87 {dimension_numbers = #tpu.dot_dimension_numbers<[1], [0], [0], [1], [0, 0, 1, 1], [], []>} : vector<2x32xf32>, vector<32x32xf32>, vector<2x32xf32> -> vector<2x32xf32>
    %cst_88 = arith.constant dense<0.000000e+00> : vector<2x32xf32>
    %355 = tpu.matmul %352, %257, %cst_88 {dimension_numbers = #tpu.dot_dimension_numbers<[1], [0], [0], [1], [0, 0, 1, 1], [], []>} : vector<2x32xf32>, vector<32x32xf32>, vector<2x32xf32> -> vector<2x32xf32>
    %356 = vector.extract_strided_slice %265 {offsets = [3, 0, 0], sizes = [1, 2, 32], strides = [1, 1, 1]} : vector<8x2x32xf32> to vector<1x2x32xf32>
    %357 = vector.shape_cast %356 : vector<1x2x32xf32> to vector<2x32xf32>
    %358 = arith.addf %357, %353 : vector<2x32xf32>
    %359 = arith.negf %358 : vector<2x32xf32>
    %360 = math.exp %359 : vector<2x32xf32>
    %cst_89 = arith.constant 1.000000e+00 : f32
    %361 = vector.broadcast %cst_89 : f32 to vector<2x32xf32>
    %362 = arith.addf %361, %360 : vector<2x32xf32>
    %363 = arith.divf %361, %362 : vector<2x32xf32>
    %364 = vector.extract_strided_slice %266 {offsets = [3, 0, 0], sizes = [1, 2, 32], strides = [1, 1, 1]} : vector<8x2x32xf32> to vector<1x2x32xf32>
    %365 = vector.shape_cast %364 : vector<1x2x32xf32> to vector<2x32xf32>
    %366 = arith.addf %365, %354 : vector<2x32xf32>
    %367 = arith.negf %366 : vector<2x32xf32>
    %368 = math.exp %367 : vector<2x32xf32>
    %cst_90 = arith.constant 1.000000e+00 : f32
    %369 = vector.broadcast %cst_90 : f32 to vector<2x32xf32>
    %370 = arith.addf %369, %368 : vector<2x32xf32>
    %371 = arith.divf %369, %370 : vector<2x32xf32>
    %372 = vector.extract_strided_slice %267 {offsets = [3, 0, 0], sizes = [1, 2, 32], strides = [1, 1, 1]} : vector<8x2x32xf32> to vector<1x2x32xf32>
    %373 = vector.shape_cast %372 : vector<1x2x32xf32> to vector<2x32xf32>
    %374 = vector.broadcast %258 : vector<1x32xf32> to vector<2x32xf32>
    %375 = arith.addf %355, %374 : vector<2x32xf32>
    %376 = arith.mulf %363, %375 : vector<2x32xf32>
    %377 = arith.addf %373, %376 : vector<2x32xf32>
    %378 = math.tanh %377 : vector<2x32xf32>
    %cst_91 = arith.constant 1.000000e+00 : f32
    %379 = vector.broadcast %cst_91 : f32 to vector<2x32xf32>
    %380 = arith.subf %379, %371 : vector<2x32xf32>
    %381 = arith.mulf %380, %378 : vector<2x32xf32>
    %382 = arith.mulf %371, %352 : vector<2x32xf32>
    %383 = arith.addf %381, %382 : vector<2x32xf32>
    %cst_92 = arith.constant dense<0.000000e+00> : vector<2x32xf32>
    %384 = tpu.matmul %383, %255, %cst_92 {dimension_numbers = #tpu.dot_dimension_numbers<[1], [0], [0], [1], [0, 0, 1, 1], [], []>} : vector<2x32xf32>, vector<32x32xf32>, vector<2x32xf32> -> vector<2x32xf32>
    %cst_93 = arith.constant dense<0.000000e+00> : vector<2x32xf32>
    %385 = tpu.matmul %383, %256, %cst_93 {dimension_numbers = #tpu.dot_dimension_numbers<[1], [0], [0], [1], [0, 0, 1, 1], [], []>} : vector<2x32xf32>, vector<32x32xf32>, vector<2x32xf32> -> vector<2x32xf32>
    %cst_94 = arith.constant dense<0.000000e+00> : vector<2x32xf32>
    %386 = tpu.matmul %383, %257, %cst_94 {dimension_numbers = #tpu.dot_dimension_numbers<[1], [0], [0], [1], [0, 0, 1, 1], [], []>} : vector<2x32xf32>, vector<32x32xf32>, vector<2x32xf32> -> vector<2x32xf32>
    %387 = vector.extract_strided_slice %265 {offsets = [4, 0, 0], sizes = [1, 2, 32], strides = [1, 1, 1]} : vector<8x2x32xf32> to vector<1x2x32xf32>
    %388 = vector.shape_cast %387 : vector<1x2x32xf32> to vector<2x32xf32>
    %389 = arith.addf %388, %384 : vector<2x32xf32>
    %390 = arith.negf %389 : vector<2x32xf32>
    %391 = math.exp %390 : vector<2x32xf32>
    %cst_95 = arith.constant 1.000000e+00 : f32
    %392 = vector.broadcast %cst_95 : f32 to vector<2x32xf32>
    %393 = arith.addf %392, %391 : vector<2x32xf32>
    %394 = arith.divf %392, %393 : vector<2x32xf32>
    %395 = vector.extract_strided_slice %266 {offsets = [4, 0, 0], sizes = [1, 2, 32], strides = [1, 1, 1]} : vector<8x2x32xf32> to vector<1x2x32xf32>
    %396 = vector.shape_cast %395 : vector<1x2x32xf32> to vector<2x32xf32>
    %397 = arith.addf %396, %385 : vector<2x32xf32>
    %398 = arith.negf %397 : vector<2x32xf32>
    %399 = math.exp %398 : vector<2x32xf32>
    %cst_96 = arith.constant 1.000000e+00 : f32
    %400 = vector.broadcast %cst_96 : f32 to vector<2x32xf32>
    %401 = arith.addf %400, %399 : vector<2x32xf32>
    %402 = arith.divf %400, %401 : vector<2x32xf32>
    %403 = vector.extract_strided_slice %267 {offsets = [4, 0, 0], sizes = [1, 2, 32], strides = [1, 1, 1]} : vector<8x2x32xf32> to vector<1x2x32xf32>
    %404 = vector.shape_cast %403 : vector<1x2x32xf32> to vector<2x32xf32>
    %405 = vector.broadcast %258 : vector<1x32xf32> to vector<2x32xf32>
    %406 = arith.addf %386, %405 : vector<2x32xf32>
    %407 = arith.mulf %394, %406 : vector<2x32xf32>
    %408 = arith.addf %404, %407 : vector<2x32xf32>
    %409 = math.tanh %408 : vector<2x32xf32>
    %cst_97 = arith.constant 1.000000e+00 : f32
    %410 = vector.broadcast %cst_97 : f32 to vector<2x32xf32>
    %411 = arith.subf %410, %402 : vector<2x32xf32>
    %412 = arith.mulf %411, %409 : vector<2x32xf32>
    %413 = arith.mulf %402, %383 : vector<2x32xf32>
    %414 = arith.addf %412, %413 : vector<2x32xf32>
    %cst_98 = arith.constant dense<0.000000e+00> : vector<2x32xf32>
    %415 = tpu.matmul %414, %255, %cst_98 {dimension_numbers = #tpu.dot_dimension_numbers<[1], [0], [0], [1], [0, 0, 1, 1], [], []>} : vector<2x32xf32>, vector<32x32xf32>, vector<2x32xf32> -> vector<2x32xf32>
    %cst_99 = arith.constant dense<0.000000e+00> : vector<2x32xf32>
    %416 = tpu.matmul %414, %256, %cst_99 {dimension_numbers = #tpu.dot_dimension_numbers<[1], [0], [0], [1], [0, 0, 1, 1], [], []>} : vector<2x32xf32>, vector<32x32xf32>, vector<2x32xf32> -> vector<2x32xf32>
    %cst_100 = arith.constant dense<0.000000e+00> : vector<2x32xf32>
    %417 = tpu.matmul %414, %257, %cst_100 {dimension_numbers = #tpu.dot_dimension_numbers<[1], [0], [0], [1], [0, 0, 1, 1], [], []>} : vector<2x32xf32>, vector<32x32xf32>, vector<2x32xf32> -> vector<2x32xf32>
    %418 = vector.extract_strided_slice %265 {offsets = [5, 0, 0], sizes = [1, 2, 32], strides = [1, 1, 1]} : vector<8x2x32xf32> to vector<1x2x32xf32>
    %419 = vector.shape_cast %418 : vector<1x2x32xf32> to vector<2x32xf32>
    %420 = arith.addf %419, %415 : vector<2x32xf32>
    %421 = arith.negf %420 : vector<2x32xf32>
    %422 = math.exp %421 : vector<2x32xf32>
    %cst_101 = arith.constant 1.000000e+00 : f32
    %423 = vector.broadcast %cst_101 : f32 to vector<2x32xf32>
    %424 = arith.addf %423, %422 : vector<2x32xf32>
    %425 = arith.divf %423, %424 : vector<2x32xf32>
    %426 = vector.extract_strided_slice %266 {offsets = [5, 0, 0], sizes = [1, 2, 32], strides = [1, 1, 1]} : vector<8x2x32xf32> to vector<1x2x32xf32>
    %427 = vector.shape_cast %426 : vector<1x2x32xf32> to vector<2x32xf32>
    %428 = arith.addf %427, %416 : vector<2x32xf32>
    %429 = arith.negf %428 : vector<2x32xf32>
    %430 = math.exp %429 : vector<2x32xf32>
    %cst_102 = arith.constant 1.000000e+00 : f32
    %431 = vector.broadcast %cst_102 : f32 to vector<2x32xf32>
    %432 = arith.addf %431, %430 : vector<2x32xf32>
    %433 = arith.divf %431, %432 : vector<2x32xf32>
    %434 = vector.extract_strided_slice %267 {offsets = [5, 0, 0], sizes = [1, 2, 32], strides = [1, 1, 1]} : vector<8x2x32xf32> to vector<1x2x32xf32>
    %435 = vector.shape_cast %434 : vector<1x2x32xf32> to vector<2x32xf32>
    %436 = vector.broadcast %258 : vector<1x32xf32> to vector<2x32xf32>
    %437 = arith.addf %417, %436 : vector<2x32xf32>
    %438 = arith.mulf %425, %437 : vector<2x32xf32>
    %439 = arith.addf %435, %438 : vector<2x32xf32>
    %440 = math.tanh %439 : vector<2x32xf32>
    %cst_103 = arith.constant 1.000000e+00 : f32
    %441 = vector.broadcast %cst_103 : f32 to vector<2x32xf32>
    %442 = arith.subf %441, %433 : vector<2x32xf32>
    %443 = arith.mulf %442, %440 : vector<2x32xf32>
    %444 = arith.mulf %433, %414 : vector<2x32xf32>
    %445 = arith.addf %443, %444 : vector<2x32xf32>
    %cst_104 = arith.constant dense<0.000000e+00> : vector<2x32xf32>
    %446 = tpu.matmul %445, %255, %cst_104 {dimension_numbers = #tpu.dot_dimension_numbers<[1], [0], [0], [1], [0, 0, 1, 1], [], []>} : vector<2x32xf32>, vector<32x32xf32>, vector<2x32xf32> -> vector<2x32xf32>
    %cst_105 = arith.constant dense<0.000000e+00> : vector<2x32xf32>
    %447 = tpu.matmul %445, %256, %cst_105 {dimension_numbers = #tpu.dot_dimension_numbers<[1], [0], [0], [1], [0, 0, 1, 1], [], []>} : vector<2x32xf32>, vector<32x32xf32>, vector<2x32xf32> -> vector<2x32xf32>
    %cst_106 = arith.constant dense<0.000000e+00> : vector<2x32xf32>
    %448 = tpu.matmul %445, %257, %cst_106 {dimension_numbers = #tpu.dot_dimension_numbers<[1], [0], [0], [1], [0, 0, 1, 1], [], []>} : vector<2x32xf32>, vector<32x32xf32>, vector<2x32xf32> -> vector<2x32xf32>
    %449 = vector.extract_strided_slice %265 {offsets = [6, 0, 0], sizes = [1, 2, 32], strides = [1, 1, 1]} : vector<8x2x32xf32> to vector<1x2x32xf32>
    %450 = vector.shape_cast %449 : vector<1x2x32xf32> to vector<2x32xf32>
    %451 = arith.addf %450, %446 : vector<2x32xf32>
    %452 = arith.negf %451 : vector<2x32xf32>
    %453 = math.exp %452 : vector<2x32xf32>
    %cst_107 = arith.constant 1.000000e+00 : f32
    %454 = vector.broadcast %cst_107 : f32 to vector<2x32xf32>
    %455 = arith.addf %454, %453 : vector<2x32xf32>
    %456 = arith.divf %454, %455 : vector<2x32xf32>
    %457 = vector.extract_strided_slice %266 {offsets = [6, 0, 0], sizes = [1, 2, 32], strides = [1, 1, 1]} : vector<8x2x32xf32> to vector<1x2x32xf32>
    %458 = vector.shape_cast %457 : vector<1x2x32xf32> to vector<2x32xf32>
    %459 = arith.addf %458, %447 : vector<2x32xf32>
    %460 = arith.negf %459 : vector<2x32xf32>
    %461 = math.exp %460 : vector<2x32xf32>
    %cst_108 = arith.constant 1.000000e+00 : f32
    %462 = vector.broadcast %cst_108 : f32 to vector<2x32xf32>
    %463 = arith.addf %462, %461 : vector<2x32xf32>
    %464 = arith.divf %462, %463 : vector<2x32xf32>
    %465 = vector.extract_strided_slice %267 {offsets = [6, 0, 0], sizes = [1, 2, 32], strides = [1, 1, 1]} : vector<8x2x32xf32> to vector<1x2x32xf32>
    %466 = vector.shape_cast %465 : vector<1x2x32xf32> to vector<2x32xf32>
    %467 = vector.broadcast %258 : vector<1x32xf32> to vector<2x32xf32>
    %468 = arith.addf %448, %467 : vector<2x32xf32>
    %469 = arith.mulf %456, %468 : vector<2x32xf32>
    %470 = arith.addf %466, %469 : vector<2x32xf32>
    %471 = math.tanh %470 : vector<2x32xf32>
    %cst_109 = arith.constant 1.000000e+00 : f32
    %472 = vector.broadcast %cst_109 : f32 to vector<2x32xf32>
    %473 = arith.subf %472, %464 : vector<2x32xf32>
    %474 = arith.mulf %473, %471 : vector<2x32xf32>
    %475 = arith.mulf %464, %445 : vector<2x32xf32>
    %476 = arith.addf %474, %475 : vector<2x32xf32>
    %cst_110 = arith.constant dense<0.000000e+00> : vector<2x32xf32>
    %477 = tpu.matmul %476, %255, %cst_110 {dimension_numbers = #tpu.dot_dimension_numbers<[1], [0], [0], [1], [0, 0, 1, 1], [], []>} : vector<2x32xf32>, vector<32x32xf32>, vector<2x32xf32> -> vector<2x32xf32>
    %cst_111 = arith.constant dense<0.000000e+00> : vector<2x32xf32>
    %478 = tpu.matmul %476, %256, %cst_111 {dimension_numbers = #tpu.dot_dimension_numbers<[1], [0], [0], [1], [0, 0, 1, 1], [], []>} : vector<2x32xf32>, vector<32x32xf32>, vector<2x32xf32> -> vector<2x32xf32>
    %cst_112 = arith.constant dense<0.000000e+00> : vector<2x32xf32>
    %479 = tpu.matmul %476, %257, %cst_112 {dimension_numbers = #tpu.dot_dimension_numbers<[1], [0], [0], [1], [0, 0, 1, 1], [], []>} : vector<2x32xf32>, vector<32x32xf32>, vector<2x32xf32> -> vector<2x32xf32>
    %480 = vector.extract_strided_slice %265 {offsets = [7, 0, 0], sizes = [1, 2, 32], strides = [1, 1, 1]} : vector<8x2x32xf32> to vector<1x2x32xf32>
    %481 = vector.shape_cast %480 : vector<1x2x32xf32> to vector<2x32xf32>
    %482 = arith.addf %481, %477 : vector<2x32xf32>
    %483 = arith.negf %482 : vector<2x32xf32>
    %484 = math.exp %483 : vector<2x32xf32>
    %cst_113 = arith.constant 1.000000e+00 : f32
    %485 = vector.broadcast %cst_113 : f32 to vector<2x32xf32>
    %486 = arith.addf %485, %484 : vector<2x32xf32>
    %487 = arith.divf %485, %486 : vector<2x32xf32>
    %488 = vector.extract_strided_slice %266 {offsets = [7, 0, 0], sizes = [1, 2, 32], strides = [1, 1, 1]} : vector<8x2x32xf32> to vector<1x2x32xf32>
    %489 = vector.shape_cast %488 : vector<1x2x32xf32> to vector<2x32xf32>
    %490 = arith.addf %489, %478 : vector<2x32xf32>
    %491 = arith.negf %490 : vector<2x32xf32>
    %492 = math.exp %491 : vector<2x32xf32>
    %cst_114 = arith.constant 1.000000e+00 : f32
    %493 = vector.broadcast %cst_114 : f32 to vector<2x32xf32>
    %494 = arith.addf %493, %492 : vector<2x32xf32>
    %495 = arith.divf %493, %494 : vector<2x32xf32>
    %496 = vector.extract_strided_slice %267 {offsets = [7, 0, 0], sizes = [1, 2, 32], strides = [1, 1, 1]} : vector<8x2x32xf32> to vector<1x2x32xf32>
    %497 = vector.shape_cast %496 : vector<1x2x32xf32> to vector<2x32xf32>
    %498 = vector.broadcast %258 : vector<1x32xf32> to vector<2x32xf32>
    %499 = arith.addf %479, %498 : vector<2x32xf32>
    %500 = arith.mulf %487, %499 : vector<2x32xf32>
    %501 = arith.addf %497, %500 : vector<2x32xf32>
    %502 = math.tanh %501 : vector<2x32xf32>
    %cst_115 = arith.constant 1.000000e+00 : f32
    %503 = vector.broadcast %cst_115 : f32 to vector<2x32xf32>
    %504 = arith.subf %503, %495 : vector<2x32xf32>
    %505 = arith.mulf %504, %502 : vector<2x32xf32>
    %506 = arith.mulf %495, %476 : vector<2x32xf32>
    %507 = arith.addf %505, %506 : vector<2x32xf32>
    %c0_116 = arith.constant 0 : index
    %c0_117 = arith.constant 0 : index
    %508 = vector.load %arg1[%c0_116, %c0_117] : memref<16x4xf32, #tpu.memory_space<vmem>>, vector<16x4xf32>
    %c0_118 = arith.constant 0 : index
    %c0_119 = arith.constant 0 : index
    %509 = vector.load %arg26[%c0_118, %c0_119] : memref<4x16xf32, #tpu.memory_space<vmem>>, vector<4x16xf32>
    %cst_120 = arith.constant dense<0.000000e+00> : vector<16x16xf32>
    %510 = tpu.matmul %508, %509, %cst_120 {dimension_numbers = #tpu.dot_dimension_numbers<[1], [0], [0], [1], [0, 0, 1, 1], [], []>} : vector<16x4xf32>, vector<4x16xf32>, vector<16x16xf32> -> vector<16x16xf32>
    %c0_121 = arith.constant 0 : index
    %c0_122 = arith.constant 0 : index
    %511 = vector.load %arg27[%c0_121, %c0_122] : memref<1x16xf32, #tpu.memory_space<vmem>>, vector<1x16xf32>
    %512 = vector.broadcast %511 : vector<1x16xf32> to vector<16x16xf32>
    %513 = arith.addf %510, %512 : vector<16x16xf32>
    %cst_123 = arith.constant 5.000000e-01 : f32
    %514 = vector.broadcast %cst_123 : f32 to vector<16x16xf32>
    %515 = arith.mulf %514, %513 : vector<16x16xf32>
    %cst_124 = arith.constant 0.707106769 : f32
    %516 = vector.broadcast %cst_124 : f32 to vector<16x16xf32>
    %517 = arith.mulf %513, %516 : vector<16x16xf32>
    %518 = math.erf %517 : vector<16x16xf32>
    %cst_125 = arith.constant 1.000000e+00 : f32
    %519 = vector.broadcast %cst_125 : f32 to vector<16x16xf32>
    %520 = arith.addf %519, %518 : vector<16x16xf32>
    %521 = arith.mulf %515, %520 : vector<16x16xf32>
    %c0_126 = arith.constant 0 : index
    %c0_127 = arith.constant 0 : index
    %522 = vector.load %arg15[%c0_126, %c0_127] : memref<32x32xf32, #tpu.memory_space<vmem>>, vector<32x32xf32>
    %c0_128 = arith.constant 0 : index
    %c0_129 = arith.constant 0 : index
    %523 = vector.load %arg16[%c0_128, %c0_129] : memref<32x32xf32, #tpu.memory_space<vmem>>, vector<32x32xf32>
    %c0_130 = arith.constant 0 : index
    %c0_131 = arith.constant 0 : index
    %524 = vector.load %arg17[%c0_130, %c0_131] : memref<32x32xf32, #tpu.memory_space<vmem>>, vector<32x32xf32>
    %c0_132 = arith.constant 0 : index
    %c0_133 = arith.constant 0 : index
    %525 = vector.load %arg19[%c0_132, %c0_133] : memref<1x32xf32, #tpu.memory_space<vmem>>, vector<1x32xf32>
    %c0_134 = arith.constant 0 : index
    %c0_135 = arith.constant 0 : index
    %526 = vector.load %arg14[%c0_134, %c0_135] : memref<16x96xf32, #tpu.memory_space<vmem>>, vector<16x96xf32>
    %cst_136 = arith.constant dense<0.000000e+00> : vector<16x96xf32>
    %527 = tpu.matmul %521, %526, %cst_136 {dimension_numbers = #tpu.dot_dimension_numbers<[1], [0], [0], [1], [0, 0, 1, 1], [], []>} : vector<16x16xf32>, vector<16x96xf32>, vector<16x96xf32> -> vector<16x96xf32>
    %c0_137 = arith.constant 0 : index
    %c0_138 = arith.constant 0 : index
    %528 = vector.load %arg18[%c0_137, %c0_138] : memref<1x96xf32, #tpu.memory_space<vmem>>, vector<1x96xf32>
    %529 = vector.broadcast %528 : vector<1x96xf32> to vector<16x96xf32>
    %530 = arith.addf %527, %529 : vector<16x96xf32>
    %531 = vector.shape_cast %530 : vector<16x96xf32> to vector<8x2x96xf32>
    %532 = vector.extract_strided_slice %531 {offsets = [0, 0, 0], sizes = [8, 2, 32], strides = [1, 1, 1]} : vector<8x2x96xf32> to vector<8x2x32xf32>
    %533 = vector.extract_strided_slice %531 {offsets = [0, 0, 32], sizes = [8, 2, 32], strides = [1, 1, 1]} : vector<8x2x96xf32> to vector<8x2x32xf32>
    %534 = vector.extract_strided_slice %531 {offsets = [0, 0, 64], sizes = [8, 2, 32], strides = [1, 1, 1]} : vector<8x2x96xf32> to vector<8x2x32xf32>
    %535 = vector.extract_strided_slice %532 {offsets = [0, 0, 0], sizes = [1, 2, 32], strides = [1, 1, 1]} : vector<8x2x32xf32> to vector<1x2x32xf32>
    %536 = vector.shape_cast %535 : vector<1x2x32xf32> to vector<2x32xf32>
    %537 = arith.negf %536 : vector<2x32xf32>
    %538 = math.exp %537 : vector<2x32xf32>
    %cst_139 = arith.constant 1.000000e+00 : f32
    %539 = vector.broadcast %cst_139 : f32 to vector<2x32xf32>
    %540 = arith.addf %539, %538 : vector<2x32xf32>
    %541 = arith.divf %539, %540 : vector<2x32xf32>
    %542 = vector.extract_strided_slice %533 {offsets = [0, 0, 0], sizes = [1, 2, 32], strides = [1, 1, 1]} : vector<8x2x32xf32> to vector<1x2x32xf32>
    %543 = vector.shape_cast %542 : vector<1x2x32xf32> to vector<2x32xf32>
    %544 = arith.negf %543 : vector<2x32xf32>
    %545 = math.exp %544 : vector<2x32xf32>
    %cst_140 = arith.constant 1.000000e+00 : f32
    %546 = vector.broadcast %cst_140 : f32 to vector<2x32xf32>
    %547 = arith.addf %546, %545 : vector<2x32xf32>
    %548 = arith.divf %546, %547 : vector<2x32xf32>
    %549 = vector.extract_strided_slice %534 {offsets = [0, 0, 0], sizes = [1, 2, 32], strides = [1, 1, 1]} : vector<8x2x32xf32> to vector<1x2x32xf32>
    %550 = vector.shape_cast %549 : vector<1x2x32xf32> to vector<2x32xf32>
    %551 = vector.broadcast %525 : vector<1x32xf32> to vector<2x32xf32>
    %552 = arith.mulf %541, %551 : vector<2x32xf32>
    %553 = arith.addf %550, %552 : vector<2x32xf32>
    %554 = math.tanh %553 : vector<2x32xf32>
    %cst_141 = arith.constant 1.000000e+00 : f32
    %555 = vector.broadcast %cst_141 : f32 to vector<2x32xf32>
    %556 = arith.subf %555, %548 : vector<2x32xf32>
    %557 = arith.mulf %556, %554 : vector<2x32xf32>
    %cst_142 = arith.constant dense<0.000000e+00> : vector<2x32xf32>
    %558 = tpu.matmul %557, %522, %cst_142 {dimension_numbers = #tpu.dot_dimension_numbers<[1], [0], [0], [1], [0, 0, 1, 1], [], []>} : vector<2x32xf32>, vector<32x32xf32>, vector<2x32xf32> -> vector<2x32xf32>
    %cst_143 = arith.constant dense<0.000000e+00> : vector<2x32xf32>
    %559 = tpu.matmul %557, %523, %cst_143 {dimension_numbers = #tpu.dot_dimension_numbers<[1], [0], [0], [1], [0, 0, 1, 1], [], []>} : vector<2x32xf32>, vector<32x32xf32>, vector<2x32xf32> -> vector<2x32xf32>
    %cst_144 = arith.constant dense<0.000000e+00> : vector<2x32xf32>
    %560 = tpu.matmul %557, %524, %cst_144 {dimension_numbers = #tpu.dot_dimension_numbers<[1], [0], [0], [1], [0, 0, 1, 1], [], []>} : vector<2x32xf32>, vector<32x32xf32>, vector<2x32xf32> -> vector<2x32xf32>
    %561 = vector.extract_strided_slice %532 {offsets = [1, 0, 0], sizes = [1, 2, 32], strides = [1, 1, 1]} : vector<8x2x32xf32> to vector<1x2x32xf32>
    %562 = vector.shape_cast %561 : vector<1x2x32xf32> to vector<2x32xf32>
    %563 = arith.addf %562, %558 : vector<2x32xf32>
    %564 = arith.negf %563 : vector<2x32xf32>
    %565 = math.exp %564 : vector<2x32xf32>
    %cst_145 = arith.constant 1.000000e+00 : f32
    %566 = vector.broadcast %cst_145 : f32 to vector<2x32xf32>
    %567 = arith.addf %566, %565 : vector<2x32xf32>
    %568 = arith.divf %566, %567 : vector<2x32xf32>
    %569 = vector.extract_strided_slice %533 {offsets = [1, 0, 0], sizes = [1, 2, 32], strides = [1, 1, 1]} : vector<8x2x32xf32> to vector<1x2x32xf32>
    %570 = vector.shape_cast %569 : vector<1x2x32xf32> to vector<2x32xf32>
    %571 = arith.addf %570, %559 : vector<2x32xf32>
    %572 = arith.negf %571 : vector<2x32xf32>
    %573 = math.exp %572 : vector<2x32xf32>
    %cst_146 = arith.constant 1.000000e+00 : f32
    %574 = vector.broadcast %cst_146 : f32 to vector<2x32xf32>
    %575 = arith.addf %574, %573 : vector<2x32xf32>
    %576 = arith.divf %574, %575 : vector<2x32xf32>
    %577 = vector.extract_strided_slice %534 {offsets = [1, 0, 0], sizes = [1, 2, 32], strides = [1, 1, 1]} : vector<8x2x32xf32> to vector<1x2x32xf32>
    %578 = vector.shape_cast %577 : vector<1x2x32xf32> to vector<2x32xf32>
    %579 = vector.broadcast %525 : vector<1x32xf32> to vector<2x32xf32>
    %580 = arith.addf %560, %579 : vector<2x32xf32>
    %581 = arith.mulf %568, %580 : vector<2x32xf32>
    %582 = arith.addf %578, %581 : vector<2x32xf32>
    %583 = math.tanh %582 : vector<2x32xf32>
    %cst_147 = arith.constant 1.000000e+00 : f32
    %584 = vector.broadcast %cst_147 : f32 to vector<2x32xf32>
    %585 = arith.subf %584, %576 : vector<2x32xf32>
    %586 = arith.mulf %585, %583 : vector<2x32xf32>
    %587 = arith.mulf %576, %557 : vector<2x32xf32>
    %588 = arith.addf %586, %587 : vector<2x32xf32>
    %cst_148 = arith.constant dense<0.000000e+00> : vector<2x32xf32>
    %589 = tpu.matmul %588, %522, %cst_148 {dimension_numbers = #tpu.dot_dimension_numbers<[1], [0], [0], [1], [0, 0, 1, 1], [], []>} : vector<2x32xf32>, vector<32x32xf32>, vector<2x32xf32> -> vector<2x32xf32>
    %cst_149 = arith.constant dense<0.000000e+00> : vector<2x32xf32>
    %590 = tpu.matmul %588, %523, %cst_149 {dimension_numbers = #tpu.dot_dimension_numbers<[1], [0], [0], [1], [0, 0, 1, 1], [], []>} : vector<2x32xf32>, vector<32x32xf32>, vector<2x32xf32> -> vector<2x32xf32>
    %cst_150 = arith.constant dense<0.000000e+00> : vector<2x32xf32>
    %591 = tpu.matmul %588, %524, %cst_150 {dimension_numbers = #tpu.dot_dimension_numbers<[1], [0], [0], [1], [0, 0, 1, 1], [], []>} : vector<2x32xf32>, vector<32x32xf32>, vector<2x32xf32> -> vector<2x32xf32>
    %592 = vector.extract_strided_slice %532 {offsets = [2, 0, 0], sizes = [1, 2, 32], strides = [1, 1, 1]} : vector<8x2x32xf32> to vector<1x2x32xf32>
    %593 = vector.shape_cast %592 : vector<1x2x32xf32> to vector<2x32xf32>
    %594 = arith.addf %593, %589 : vector<2x32xf32>
    %595 = arith.negf %594 : vector<2x32xf32>
    %596 = math.exp %595 : vector<2x32xf32>
    %cst_151 = arith.constant 1.000000e+00 : f32
    %597 = vector.broadcast %cst_151 : f32 to vector<2x32xf32>
    %598 = arith.addf %597, %596 : vector<2x32xf32>
    %599 = arith.divf %597, %598 : vector<2x32xf32>
    %600 = vector.extract_strided_slice %533 {offsets = [2, 0, 0], sizes = [1, 2, 32], strides = [1, 1, 1]} : vector<8x2x32xf32> to vector<1x2x32xf32>
    %601 = vector.shape_cast %600 : vector<1x2x32xf32> to vector<2x32xf32>
    %602 = arith.addf %601, %590 : vector<2x32xf32>
    %603 = arith.negf %602 : vector<2x32xf32>
    %604 = math.exp %603 : vector<2x32xf32>
    %cst_152 = arith.constant 1.000000e+00 : f32
    %605 = vector.broadcast %cst_152 : f32 to vector<2x32xf32>
    %606 = arith.addf %605, %604 : vector<2x32xf32>
    %607 = arith.divf %605, %606 : vector<2x32xf32>
    %608 = vector.extract_strided_slice %534 {offsets = [2, 0, 0], sizes = [1, 2, 32], strides = [1, 1, 1]} : vector<8x2x32xf32> to vector<1x2x32xf32>
    %609 = vector.shape_cast %608 : vector<1x2x32xf32> to vector<2x32xf32>
    %610 = vector.broadcast %525 : vector<1x32xf32> to vector<2x32xf32>
    %611 = arith.addf %591, %610 : vector<2x32xf32>
    %612 = arith.mulf %599, %611 : vector<2x32xf32>
    %613 = arith.addf %609, %612 : vector<2x32xf32>
    %614 = math.tanh %613 : vector<2x32xf32>
    %cst_153 = arith.constant 1.000000e+00 : f32
    %615 = vector.broadcast %cst_153 : f32 to vector<2x32xf32>
    %616 = arith.subf %615, %607 : vector<2x32xf32>
    %617 = arith.mulf %616, %614 : vector<2x32xf32>
    %618 = arith.mulf %607, %588 : vector<2x32xf32>
    %619 = arith.addf %617, %618 : vector<2x32xf32>
    %cst_154 = arith.constant dense<0.000000e+00> : vector<2x32xf32>
    %620 = tpu.matmul %619, %522, %cst_154 {dimension_numbers = #tpu.dot_dimension_numbers<[1], [0], [0], [1], [0, 0, 1, 1], [], []>} : vector<2x32xf32>, vector<32x32xf32>, vector<2x32xf32> -> vector<2x32xf32>
    %cst_155 = arith.constant dense<0.000000e+00> : vector<2x32xf32>
    %621 = tpu.matmul %619, %523, %cst_155 {dimension_numbers = #tpu.dot_dimension_numbers<[1], [0], [0], [1], [0, 0, 1, 1], [], []>} : vector<2x32xf32>, vector<32x32xf32>, vector<2x32xf32> -> vector<2x32xf32>
    %cst_156 = arith.constant dense<0.000000e+00> : vector<2x32xf32>
    %622 = tpu.matmul %619, %524, %cst_156 {dimension_numbers = #tpu.dot_dimension_numbers<[1], [0], [0], [1], [0, 0, 1, 1], [], []>} : vector<2x32xf32>, vector<32x32xf32>, vector<2x32xf32> -> vector<2x32xf32>
    %623 = vector.extract_strided_slice %532 {offsets = [3, 0, 0], sizes = [1, 2, 32], strides = [1, 1, 1]} : vector<8x2x32xf32> to vector<1x2x32xf32>
    %624 = vector.shape_cast %623 : vector<1x2x32xf32> to vector<2x32xf32>
    %625 = arith.addf %624, %620 : vector<2x32xf32>
    %626 = arith.negf %625 : vector<2x32xf32>
    %627 = math.exp %626 : vector<2x32xf32>
    %cst_157 = arith.constant 1.000000e+00 : f32
    %628 = vector.broadcast %cst_157 : f32 to vector<2x32xf32>
    %629 = arith.addf %628, %627 : vector<2x32xf32>
    %630 = arith.divf %628, %629 : vector<2x32xf32>
    %631 = vector.extract_strided_slice %533 {offsets = [3, 0, 0], sizes = [1, 2, 32], strides = [1, 1, 1]} : vector<8x2x32xf32> to vector<1x2x32xf32>
    %632 = vector.shape_cast %631 : vector<1x2x32xf32> to vector<2x32xf32>
    %633 = arith.addf %632, %621 : vector<2x32xf32>
    %634 = arith.negf %633 : vector<2x32xf32>
    %635 = math.exp %634 : vector<2x32xf32>
    %cst_158 = arith.constant 1.000000e+00 : f32
    %636 = vector.broadcast %cst_158 : f32 to vector<2x32xf32>
    %637 = arith.addf %636, %635 : vector<2x32xf32>
    %638 = arith.divf %636, %637 : vector<2x32xf32>
    %639 = vector.extract_strided_slice %534 {offsets = [3, 0, 0], sizes = [1, 2, 32], strides = [1, 1, 1]} : vector<8x2x32xf32> to vector<1x2x32xf32>
    %640 = vector.shape_cast %639 : vector<1x2x32xf32> to vector<2x32xf32>
    %641 = vector.broadcast %525 : vector<1x32xf32> to vector<2x32xf32>
    %642 = arith.addf %622, %641 : vector<2x32xf32>
    %643 = arith.mulf %630, %642 : vector<2x32xf32>
    %644 = arith.addf %640, %643 : vector<2x32xf32>
    %645 = math.tanh %644 : vector<2x32xf32>
    %cst_159 = arith.constant 1.000000e+00 : f32
    %646 = vector.broadcast %cst_159 : f32 to vector<2x32xf32>
    %647 = arith.subf %646, %638 : vector<2x32xf32>
    %648 = arith.mulf %647, %645 : vector<2x32xf32>
    %649 = arith.mulf %638, %619 : vector<2x32xf32>
    %650 = arith.addf %648, %649 : vector<2x32xf32>
    %cst_160 = arith.constant dense<0.000000e+00> : vector<2x32xf32>
    %651 = tpu.matmul %650, %522, %cst_160 {dimension_numbers = #tpu.dot_dimension_numbers<[1], [0], [0], [1], [0, 0, 1, 1], [], []>} : vector<2x32xf32>, vector<32x32xf32>, vector<2x32xf32> -> vector<2x32xf32>
    %cst_161 = arith.constant dense<0.000000e+00> : vector<2x32xf32>
    %652 = tpu.matmul %650, %523, %cst_161 {dimension_numbers = #tpu.dot_dimension_numbers<[1], [0], [0], [1], [0, 0, 1, 1], [], []>} : vector<2x32xf32>, vector<32x32xf32>, vector<2x32xf32> -> vector<2x32xf32>
    %cst_162 = arith.constant dense<0.000000e+00> : vector<2x32xf32>
    %653 = tpu.matmul %650, %524, %cst_162 {dimension_numbers = #tpu.dot_dimension_numbers<[1], [0], [0], [1], [0, 0, 1, 1], [], []>} : vector<2x32xf32>, vector<32x32xf32>, vector<2x32xf32> -> vector<2x32xf32>
    %654 = vector.extract_strided_slice %532 {offsets = [4, 0, 0], sizes = [1, 2, 32], strides = [1, 1, 1]} : vector<8x2x32xf32> to vector<1x2x32xf32>
    %655 = vector.shape_cast %654 : vector<1x2x32xf32> to vector<2x32xf32>
    %656 = arith.addf %655, %651 : vector<2x32xf32>
    %657 = arith.negf %656 : vector<2x32xf32>
    %658 = math.exp %657 : vector<2x32xf32>
    %cst_163 = arith.constant 1.000000e+00 : f32
    %659 = vector.broadcast %cst_163 : f32 to vector<2x32xf32>
    %660 = arith.addf %659, %658 : vector<2x32xf32>
    %661 = arith.divf %659, %660 : vector<2x32xf32>
    %662 = vector.extract_strided_slice %533 {offsets = [4, 0, 0], sizes = [1, 2, 32], strides = [1, 1, 1]} : vector<8x2x32xf32> to vector<1x2x32xf32>
    %663 = vector.shape_cast %662 : vector<1x2x32xf32> to vector<2x32xf32>
    %664 = arith.addf %663, %652 : vector<2x32xf32>
    %665 = arith.negf %664 : vector<2x32xf32>
    %666 = math.exp %665 : vector<2x32xf32>
    %cst_164 = arith.constant 1.000000e+00 : f32
    %667 = vector.broadcast %cst_164 : f32 to vector<2x32xf32>
    %668 = arith.addf %667, %666 : vector<2x32xf32>
    %669 = arith.divf %667, %668 : vector<2x32xf32>
    %670 = vector.extract_strided_slice %534 {offsets = [4, 0, 0], sizes = [1, 2, 32], strides = [1, 1, 1]} : vector<8x2x32xf32> to vector<1x2x32xf32>
    %671 = vector.shape_cast %670 : vector<1x2x32xf32> to vector<2x32xf32>
    %672 = vector.broadcast %525 : vector<1x32xf32> to vector<2x32xf32>
    %673 = arith.addf %653, %672 : vector<2x32xf32>
    %674 = arith.mulf %661, %673 : vector<2x32xf32>
    %675 = arith.addf %671, %674 : vector<2x32xf32>
    %676 = math.tanh %675 : vector<2x32xf32>
    %cst_165 = arith.constant 1.000000e+00 : f32
    %677 = vector.broadcast %cst_165 : f32 to vector<2x32xf32>
    %678 = arith.subf %677, %669 : vector<2x32xf32>
    %679 = arith.mulf %678, %676 : vector<2x32xf32>
    %680 = arith.mulf %669, %650 : vector<2x32xf32>
    %681 = arith.addf %679, %680 : vector<2x32xf32>
    %cst_166 = arith.constant dense<0.000000e+00> : vector<2x32xf32>
    %682 = tpu.matmul %681, %522, %cst_166 {dimension_numbers = #tpu.dot_dimension_numbers<[1], [0], [0], [1], [0, 0, 1, 1], [], []>} : vector<2x32xf32>, vector<32x32xf32>, vector<2x32xf32> -> vector<2x32xf32>
    %cst_167 = arith.constant dense<0.000000e+00> : vector<2x32xf32>
    %683 = tpu.matmul %681, %523, %cst_167 {dimension_numbers = #tpu.dot_dimension_numbers<[1], [0], [0], [1], [0, 0, 1, 1], [], []>} : vector<2x32xf32>, vector<32x32xf32>, vector<2x32xf32> -> vector<2x32xf32>
    %cst_168 = arith.constant dense<0.000000e+00> : vector<2x32xf32>
    %684 = tpu.matmul %681, %524, %cst_168 {dimension_numbers = #tpu.dot_dimension_numbers<[1], [0], [0], [1], [0, 0, 1, 1], [], []>} : vector<2x32xf32>, vector<32x32xf32>, vector<2x32xf32> -> vector<2x32xf32>
    %685 = vector.extract_strided_slice %532 {offsets = [5, 0, 0], sizes = [1, 2, 32], strides = [1, 1, 1]} : vector<8x2x32xf32> to vector<1x2x32xf32>
    %686 = vector.shape_cast %685 : vector<1x2x32xf32> to vector<2x32xf32>
    %687 = arith.addf %686, %682 : vector<2x32xf32>
    %688 = arith.negf %687 : vector<2x32xf32>
    %689 = math.exp %688 : vector<2x32xf32>
    %cst_169 = arith.constant 1.000000e+00 : f32
    %690 = vector.broadcast %cst_169 : f32 to vector<2x32xf32>
    %691 = arith.addf %690, %689 : vector<2x32xf32>
    %692 = arith.divf %690, %691 : vector<2x32xf32>
    %693 = vector.extract_strided_slice %533 {offsets = [5, 0, 0], sizes = [1, 2, 32], strides = [1, 1, 1]} : vector<8x2x32xf32> to vector<1x2x32xf32>
    %694 = vector.shape_cast %693 : vector<1x2x32xf32> to vector<2x32xf32>
    %695 = arith.addf %694, %683 : vector<2x32xf32>
    %696 = arith.negf %695 : vector<2x32xf32>
    %697 = math.exp %696 : vector<2x32xf32>
    %cst_170 = arith.constant 1.000000e+00 : f32
    %698 = vector.broadcast %cst_170 : f32 to vector<2x32xf32>
    %699 = arith.addf %698, %697 : vector<2x32xf32>
    %700 = arith.divf %698, %699 : vector<2x32xf32>
    %701 = vector.extract_strided_slice %534 {offsets = [5, 0, 0], sizes = [1, 2, 32], strides = [1, 1, 1]} : vector<8x2x32xf32> to vector<1x2x32xf32>
    %702 = vector.shape_cast %701 : vector<1x2x32xf32> to vector<2x32xf32>
    %703 = vector.broadcast %525 : vector<1x32xf32> to vector<2x32xf32>
    %704 = arith.addf %684, %703 : vector<2x32xf32>
    %705 = arith.mulf %692, %704 : vector<2x32xf32>
    %706 = arith.addf %702, %705 : vector<2x32xf32>
    %707 = math.tanh %706 : vector<2x32xf32>
    %cst_171 = arith.constant 1.000000e+00 : f32
    %708 = vector.broadcast %cst_171 : f32 to vector<2x32xf32>
    %709 = arith.subf %708, %700 : vector<2x32xf32>
    %710 = arith.mulf %709, %707 : vector<2x32xf32>
    %711 = arith.mulf %700, %681 : vector<2x32xf32>
    %712 = arith.addf %710, %711 : vector<2x32xf32>
    %cst_172 = arith.constant dense<0.000000e+00> : vector<2x32xf32>
    %713 = tpu.matmul %712, %522, %cst_172 {dimension_numbers = #tpu.dot_dimension_numbers<[1], [0], [0], [1], [0, 0, 1, 1], [], []>} : vector<2x32xf32>, vector<32x32xf32>, vector<2x32xf32> -> vector<2x32xf32>
    %cst_173 = arith.constant dense<0.000000e+00> : vector<2x32xf32>
    %714 = tpu.matmul %712, %523, %cst_173 {dimension_numbers = #tpu.dot_dimension_numbers<[1], [0], [0], [1], [0, 0, 1, 1], [], []>} : vector<2x32xf32>, vector<32x32xf32>, vector<2x32xf32> -> vector<2x32xf32>
    %cst_174 = arith.constant dense<0.000000e+00> : vector<2x32xf32>
    %715 = tpu.matmul %712, %524, %cst_174 {dimension_numbers = #tpu.dot_dimension_numbers<[1], [0], [0], [1], [0, 0, 1, 1], [], []>} : vector<2x32xf32>, vector<32x32xf32>, vector<2x32xf32> -> vector<2x32xf32>
    %716 = vector.extract_strided_slice %532 {offsets = [6, 0, 0], sizes = [1, 2, 32], strides = [1, 1, 1]} : vector<8x2x32xf32> to vector<1x2x32xf32>
    %717 = vector.shape_cast %716 : vector<1x2x32xf32> to vector<2x32xf32>
    %718 = arith.addf %717, %713 : vector<2x32xf32>
    %719 = arith.negf %718 : vector<2x32xf32>
    %720 = math.exp %719 : vector<2x32xf32>
    %cst_175 = arith.constant 1.000000e+00 : f32
    %721 = vector.broadcast %cst_175 : f32 to vector<2x32xf32>
    %722 = arith.addf %721, %720 : vector<2x32xf32>
    %723 = arith.divf %721, %722 : vector<2x32xf32>
    %724 = vector.extract_strided_slice %533 {offsets = [6, 0, 0], sizes = [1, 2, 32], strides = [1, 1, 1]} : vector<8x2x32xf32> to vector<1x2x32xf32>
    %725 = vector.shape_cast %724 : vector<1x2x32xf32> to vector<2x32xf32>
    %726 = arith.addf %725, %714 : vector<2x32xf32>
    %727 = arith.negf %726 : vector<2x32xf32>
    %728 = math.exp %727 : vector<2x32xf32>
    %cst_176 = arith.constant 1.000000e+00 : f32
    %729 = vector.broadcast %cst_176 : f32 to vector<2x32xf32>
    %730 = arith.addf %729, %728 : vector<2x32xf32>
    %731 = arith.divf %729, %730 : vector<2x32xf32>
    %732 = vector.extract_strided_slice %534 {offsets = [6, 0, 0], sizes = [1, 2, 32], strides = [1, 1, 1]} : vector<8x2x32xf32> to vector<1x2x32xf32>
    %733 = vector.shape_cast %732 : vector<1x2x32xf32> to vector<2x32xf32>
    %734 = vector.broadcast %525 : vector<1x32xf32> to vector<2x32xf32>
    %735 = arith.addf %715, %734 : vector<2x32xf32>
    %736 = arith.mulf %723, %735 : vector<2x32xf32>
    %737 = arith.addf %733, %736 : vector<2x32xf32>
    %738 = math.tanh %737 : vector<2x32xf32>
    %cst_177 = arith.constant 1.000000e+00 : f32
    %739 = vector.broadcast %cst_177 : f32 to vector<2x32xf32>
    %740 = arith.subf %739, %731 : vector<2x32xf32>
    %741 = arith.mulf %740, %738 : vector<2x32xf32>
    %742 = arith.mulf %731, %712 : vector<2x32xf32>
    %743 = arith.addf %741, %742 : vector<2x32xf32>
    %cst_178 = arith.constant dense<0.000000e+00> : vector<2x32xf32>
    %744 = tpu.matmul %743, %522, %cst_178 {dimension_numbers = #tpu.dot_dimension_numbers<[1], [0], [0], [1], [0, 0, 1, 1], [], []>} : vector<2x32xf32>, vector<32x32xf32>, vector<2x32xf32> -> vector<2x32xf32>
    %cst_179 = arith.constant dense<0.000000e+00> : vector<2x32xf32>
    %745 = tpu.matmul %743, %523, %cst_179 {dimension_numbers = #tpu.dot_dimension_numbers<[1], [0], [0], [1], [0, 0, 1, 1], [], []>} : vector<2x32xf32>, vector<32x32xf32>, vector<2x32xf32> -> vector<2x32xf32>
    %cst_180 = arith.constant dense<0.000000e+00> : vector<2x32xf32>
    %746 = tpu.matmul %743, %524, %cst_180 {dimension_numbers = #tpu.dot_dimension_numbers<[1], [0], [0], [1], [0, 0, 1, 1], [], []>} : vector<2x32xf32>, vector<32x32xf32>, vector<2x32xf32> -> vector<2x32xf32>
    %747 = vector.extract_strided_slice %532 {offsets = [7, 0, 0], sizes = [1, 2, 32], strides = [1, 1, 1]} : vector<8x2x32xf32> to vector<1x2x32xf32>
    %748 = vector.shape_cast %747 : vector<1x2x32xf32> to vector<2x32xf32>
    %749 = arith.addf %748, %744 : vector<2x32xf32>
    %750 = arith.negf %749 : vector<2x32xf32>
    %751 = math.exp %750 : vector<2x32xf32>
    %cst_181 = arith.constant 1.000000e+00 : f32
    %752 = vector.broadcast %cst_181 : f32 to vector<2x32xf32>
    %753 = arith.addf %752, %751 : vector<2x32xf32>
    %754 = arith.divf %752, %753 : vector<2x32xf32>
    %755 = vector.extract_strided_slice %533 {offsets = [7, 0, 0], sizes = [1, 2, 32], strides = [1, 1, 1]} : vector<8x2x32xf32> to vector<1x2x32xf32>
    %756 = vector.shape_cast %755 : vector<1x2x32xf32> to vector<2x32xf32>
    %757 = arith.addf %756, %745 : vector<2x32xf32>
    %758 = arith.negf %757 : vector<2x32xf32>
    %759 = math.exp %758 : vector<2x32xf32>
    %cst_182 = arith.constant 1.000000e+00 : f32
    %760 = vector.broadcast %cst_182 : f32 to vector<2x32xf32>
    %761 = arith.addf %760, %759 : vector<2x32xf32>
    %762 = arith.divf %760, %761 : vector<2x32xf32>
    %763 = vector.extract_strided_slice %534 {offsets = [7, 0, 0], sizes = [1, 2, 32], strides = [1, 1, 1]} : vector<8x2x32xf32> to vector<1x2x32xf32>
    %764 = vector.shape_cast %763 : vector<1x2x32xf32> to vector<2x32xf32>
    %765 = vector.broadcast %525 : vector<1x32xf32> to vector<2x32xf32>
    %766 = arith.addf %746, %765 : vector<2x32xf32>
    %767 = arith.mulf %754, %766 : vector<2x32xf32>
    %768 = arith.addf %764, %767 : vector<2x32xf32>
    %769 = math.tanh %768 : vector<2x32xf32>
    %cst_183 = arith.constant 1.000000e+00 : f32
    %770 = vector.broadcast %cst_183 : f32 to vector<2x32xf32>
    %771 = arith.subf %770, %762 : vector<2x32xf32>
    %772 = arith.mulf %771, %769 : vector<2x32xf32>
    %773 = arith.mulf %762, %743 : vector<2x32xf32>
    %774 = arith.addf %772, %773 : vector<2x32xf32>
    %775 = tpu.concatenate %557, %588, %619, %650, %681, %712, %743, %774 in 0 : vector<2x32xf32>, vector<2x32xf32>, vector<2x32xf32>, vector<2x32xf32>, vector<2x32xf32>, vector<2x32xf32>, vector<2x32xf32>, vector<2x32xf32> -> vector<16x32xf32>
    %c0_184 = arith.constant 0 : index
    %c0_185 = arith.constant 0 : index
    %776 = vector.load %arg21[%c0_184, %c0_185] : memref<32x32xf32, #tpu.memory_space<vmem>>, vector<32x32xf32>
    %c0_186 = arith.constant 0 : index
    %c0_187 = arith.constant 0 : index
    %777 = vector.load %arg22[%c0_186, %c0_187] : memref<32x32xf32, #tpu.memory_space<vmem>>, vector<32x32xf32>
    %c0_188 = arith.constant 0 : index
    %c0_189 = arith.constant 0 : index
    %778 = vector.load %arg23[%c0_188, %c0_189] : memref<32x32xf32, #tpu.memory_space<vmem>>, vector<32x32xf32>
    %c0_190 = arith.constant 0 : index
    %c0_191 = arith.constant 0 : index
    %779 = vector.load %arg25[%c0_190, %c0_191] : memref<1x32xf32, #tpu.memory_space<vmem>>, vector<1x32xf32>
    %c0_192 = arith.constant 0 : index
    %c0_193 = arith.constant 0 : index
    %780 = vector.load %arg20[%c0_192, %c0_193] : memref<32x96xf32, #tpu.memory_space<vmem>>, vector<32x96xf32>
    %cst_194 = arith.constant dense<0.000000e+00> : vector<16x96xf32>
    %781 = tpu.matmul %775, %780, %cst_194 {dimension_numbers = #tpu.dot_dimension_numbers<[1], [0], [0], [1], [0, 0, 1, 1], [], []>} : vector<16x32xf32>, vector<32x96xf32>, vector<16x96xf32> -> vector<16x96xf32>
    %c0_195 = arith.constant 0 : index
    %c0_196 = arith.constant 0 : index
    %782 = vector.load %arg24[%c0_195, %c0_196] : memref<1x96xf32, #tpu.memory_space<vmem>>, vector<1x96xf32>
    %783 = vector.broadcast %782 : vector<1x96xf32> to vector<16x96xf32>
    %784 = arith.addf %781, %783 : vector<16x96xf32>
    %785 = vector.shape_cast %784 : vector<16x96xf32> to vector<8x2x96xf32>
    %786 = vector.extract_strided_slice %785 {offsets = [0, 0, 0], sizes = [8, 2, 32], strides = [1, 1, 1]} : vector<8x2x96xf32> to vector<8x2x32xf32>
    %787 = vector.extract_strided_slice %785 {offsets = [0, 0, 32], sizes = [8, 2, 32], strides = [1, 1, 1]} : vector<8x2x96xf32> to vector<8x2x32xf32>
    %788 = vector.extract_strided_slice %785 {offsets = [0, 0, 64], sizes = [8, 2, 32], strides = [1, 1, 1]} : vector<8x2x96xf32> to vector<8x2x32xf32>
    %789 = vector.extract_strided_slice %786 {offsets = [0, 0, 0], sizes = [1, 2, 32], strides = [1, 1, 1]} : vector<8x2x32xf32> to vector<1x2x32xf32>
    %790 = vector.shape_cast %789 : vector<1x2x32xf32> to vector<2x32xf32>
    %791 = arith.negf %790 : vector<2x32xf32>
    %792 = math.exp %791 : vector<2x32xf32>
    %cst_197 = arith.constant 1.000000e+00 : f32
    %793 = vector.broadcast %cst_197 : f32 to vector<2x32xf32>
    %794 = arith.addf %793, %792 : vector<2x32xf32>
    %795 = arith.divf %793, %794 : vector<2x32xf32>
    %796 = vector.extract_strided_slice %787 {offsets = [0, 0, 0], sizes = [1, 2, 32], strides = [1, 1, 1]} : vector<8x2x32xf32> to vector<1x2x32xf32>
    %797 = vector.shape_cast %796 : vector<1x2x32xf32> to vector<2x32xf32>
    %798 = arith.negf %797 : vector<2x32xf32>
    %799 = math.exp %798 : vector<2x32xf32>
    %cst_198 = arith.constant 1.000000e+00 : f32
    %800 = vector.broadcast %cst_198 : f32 to vector<2x32xf32>
    %801 = arith.addf %800, %799 : vector<2x32xf32>
    %802 = arith.divf %800, %801 : vector<2x32xf32>
    %803 = vector.extract_strided_slice %788 {offsets = [0, 0, 0], sizes = [1, 2, 32], strides = [1, 1, 1]} : vector<8x2x32xf32> to vector<1x2x32xf32>
    %804 = vector.shape_cast %803 : vector<1x2x32xf32> to vector<2x32xf32>
    %805 = vector.broadcast %779 : vector<1x32xf32> to vector<2x32xf32>
    %806 = arith.mulf %795, %805 : vector<2x32xf32>
    %807 = arith.addf %804, %806 : vector<2x32xf32>
    %808 = math.tanh %807 : vector<2x32xf32>
    %cst_199 = arith.constant 1.000000e+00 : f32
    %809 = vector.broadcast %cst_199 : f32 to vector<2x32xf32>
    %810 = arith.subf %809, %802 : vector<2x32xf32>
    %811 = arith.mulf %810, %808 : vector<2x32xf32>
    %cst_200 = arith.constant dense<0.000000e+00> : vector<2x32xf32>
    %812 = tpu.matmul %811, %776, %cst_200 {dimension_numbers = #tpu.dot_dimension_numbers<[1], [0], [0], [1], [0, 0, 1, 1], [], []>} : vector<2x32xf32>, vector<32x32xf32>, vector<2x32xf32> -> vector<2x32xf32>
    %cst_201 = arith.constant dense<0.000000e+00> : vector<2x32xf32>
    %813 = tpu.matmul %811, %777, %cst_201 {dimension_numbers = #tpu.dot_dimension_numbers<[1], [0], [0], [1], [0, 0, 1, 1], [], []>} : vector<2x32xf32>, vector<32x32xf32>, vector<2x32xf32> -> vector<2x32xf32>
    %cst_202 = arith.constant dense<0.000000e+00> : vector<2x32xf32>
    %814 = tpu.matmul %811, %778, %cst_202 {dimension_numbers = #tpu.dot_dimension_numbers<[1], [0], [0], [1], [0, 0, 1, 1], [], []>} : vector<2x32xf32>, vector<32x32xf32>, vector<2x32xf32> -> vector<2x32xf32>
    %815 = vector.extract_strided_slice %786 {offsets = [1, 0, 0], sizes = [1, 2, 32], strides = [1, 1, 1]} : vector<8x2x32xf32> to vector<1x2x32xf32>
    %816 = vector.shape_cast %815 : vector<1x2x32xf32> to vector<2x32xf32>
    %817 = arith.addf %816, %812 : vector<2x32xf32>
    %818 = arith.negf %817 : vector<2x32xf32>
    %819 = math.exp %818 : vector<2x32xf32>
    %cst_203 = arith.constant 1.000000e+00 : f32
    %820 = vector.broadcast %cst_203 : f32 to vector<2x32xf32>
    %821 = arith.addf %820, %819 : vector<2x32xf32>
    %822 = arith.divf %820, %821 : vector<2x32xf32>
    %823 = vector.extract_strided_slice %787 {offsets = [1, 0, 0], sizes = [1, 2, 32], strides = [1, 1, 1]} : vector<8x2x32xf32> to vector<1x2x32xf32>
    %824 = vector.shape_cast %823 : vector<1x2x32xf32> to vector<2x32xf32>
    %825 = arith.addf %824, %813 : vector<2x32xf32>
    %826 = arith.negf %825 : vector<2x32xf32>
    %827 = math.exp %826 : vector<2x32xf32>
    %cst_204 = arith.constant 1.000000e+00 : f32
    %828 = vector.broadcast %cst_204 : f32 to vector<2x32xf32>
    %829 = arith.addf %828, %827 : vector<2x32xf32>
    %830 = arith.divf %828, %829 : vector<2x32xf32>
    %831 = vector.extract_strided_slice %788 {offsets = [1, 0, 0], sizes = [1, 2, 32], strides = [1, 1, 1]} : vector<8x2x32xf32> to vector<1x2x32xf32>
    %832 = vector.shape_cast %831 : vector<1x2x32xf32> to vector<2x32xf32>
    %833 = vector.broadcast %779 : vector<1x32xf32> to vector<2x32xf32>
    %834 = arith.addf %814, %833 : vector<2x32xf32>
    %835 = arith.mulf %822, %834 : vector<2x32xf32>
    %836 = arith.addf %832, %835 : vector<2x32xf32>
    %837 = math.tanh %836 : vector<2x32xf32>
    %cst_205 = arith.constant 1.000000e+00 : f32
    %838 = vector.broadcast %cst_205 : f32 to vector<2x32xf32>
    %839 = arith.subf %838, %830 : vector<2x32xf32>
    %840 = arith.mulf %839, %837 : vector<2x32xf32>
    %841 = arith.mulf %830, %811 : vector<2x32xf32>
    %842 = arith.addf %840, %841 : vector<2x32xf32>
    %cst_206 = arith.constant dense<0.000000e+00> : vector<2x32xf32>
    %843 = tpu.matmul %842, %776, %cst_206 {dimension_numbers = #tpu.dot_dimension_numbers<[1], [0], [0], [1], [0, 0, 1, 1], [], []>} : vector<2x32xf32>, vector<32x32xf32>, vector<2x32xf32> -> vector<2x32xf32>
    %cst_207 = arith.constant dense<0.000000e+00> : vector<2x32xf32>
    %844 = tpu.matmul %842, %777, %cst_207 {dimension_numbers = #tpu.dot_dimension_numbers<[1], [0], [0], [1], [0, 0, 1, 1], [], []>} : vector<2x32xf32>, vector<32x32xf32>, vector<2x32xf32> -> vector<2x32xf32>
    %cst_208 = arith.constant dense<0.000000e+00> : vector<2x32xf32>
    %845 = tpu.matmul %842, %778, %cst_208 {dimension_numbers = #tpu.dot_dimension_numbers<[1], [0], [0], [1], [0, 0, 1, 1], [], []>} : vector<2x32xf32>, vector<32x32xf32>, vector<2x32xf32> -> vector<2x32xf32>
    %846 = vector.extract_strided_slice %786 {offsets = [2, 0, 0], sizes = [1, 2, 32], strides = [1, 1, 1]} : vector<8x2x32xf32> to vector<1x2x32xf32>
    %847 = vector.shape_cast %846 : vector<1x2x32xf32> to vector<2x32xf32>
    %848 = arith.addf %847, %843 : vector<2x32xf32>
    %849 = arith.negf %848 : vector<2x32xf32>
    %850 = math.exp %849 : vector<2x32xf32>
    %cst_209 = arith.constant 1.000000e+00 : f32
    %851 = vector.broadcast %cst_209 : f32 to vector<2x32xf32>
    %852 = arith.addf %851, %850 : vector<2x32xf32>
    %853 = arith.divf %851, %852 : vector<2x32xf32>
    %854 = vector.extract_strided_slice %787 {offsets = [2, 0, 0], sizes = [1, 2, 32], strides = [1, 1, 1]} : vector<8x2x32xf32> to vector<1x2x32xf32>
    %855 = vector.shape_cast %854 : vector<1x2x32xf32> to vector<2x32xf32>
    %856 = arith.addf %855, %844 : vector<2x32xf32>
    %857 = arith.negf %856 : vector<2x32xf32>
    %858 = math.exp %857 : vector<2x32xf32>
    %cst_210 = arith.constant 1.000000e+00 : f32
    %859 = vector.broadcast %cst_210 : f32 to vector<2x32xf32>
    %860 = arith.addf %859, %858 : vector<2x32xf32>
    %861 = arith.divf %859, %860 : vector<2x32xf32>
    %862 = vector.extract_strided_slice %788 {offsets = [2, 0, 0], sizes = [1, 2, 32], strides = [1, 1, 1]} : vector<8x2x32xf32> to vector<1x2x32xf32>
    %863 = vector.shape_cast %862 : vector<1x2x32xf32> to vector<2x32xf32>
    %864 = vector.broadcast %779 : vector<1x32xf32> to vector<2x32xf32>
    %865 = arith.addf %845, %864 : vector<2x32xf32>
    %866 = arith.mulf %853, %865 : vector<2x32xf32>
    %867 = arith.addf %863, %866 : vector<2x32xf32>
    %868 = math.tanh %867 : vector<2x32xf32>
    %cst_211 = arith.constant 1.000000e+00 : f32
    %869 = vector.broadcast %cst_211 : f32 to vector<2x32xf32>
    %870 = arith.subf %869, %861 : vector<2x32xf32>
    %871 = arith.mulf %870, %868 : vector<2x32xf32>
    %872 = arith.mulf %861, %842 : vector<2x32xf32>
    %873 = arith.addf %871, %872 : vector<2x32xf32>
    %cst_212 = arith.constant dense<0.000000e+00> : vector<2x32xf32>
    %874 = tpu.matmul %873, %776, %cst_212 {dimension_numbers = #tpu.dot_dimension_numbers<[1], [0], [0], [1], [0, 0, 1, 1], [], []>} : vector<2x32xf32>, vector<32x32xf32>, vector<2x32xf32> -> vector<2x32xf32>
    %cst_213 = arith.constant dense<0.000000e+00> : vector<2x32xf32>
    %875 = tpu.matmul %873, %777, %cst_213 {dimension_numbers = #tpu.dot_dimension_numbers<[1], [0], [0], [1], [0, 0, 1, 1], [], []>} : vector<2x32xf32>, vector<32x32xf32>, vector<2x32xf32> -> vector<2x32xf32>
    %cst_214 = arith.constant dense<0.000000e+00> : vector<2x32xf32>
    %876 = tpu.matmul %873, %778, %cst_214 {dimension_numbers = #tpu.dot_dimension_numbers<[1], [0], [0], [1], [0, 0, 1, 1], [], []>} : vector<2x32xf32>, vector<32x32xf32>, vector<2x32xf32> -> vector<2x32xf32>
    %877 = vector.extract_strided_slice %786 {offsets = [3, 0, 0], sizes = [1, 2, 32], strides = [1, 1, 1]} : vector<8x2x32xf32> to vector<1x2x32xf32>
    %878 = vector.shape_cast %877 : vector<1x2x32xf32> to vector<2x32xf32>
    %879 = arith.addf %878, %874 : vector<2x32xf32>
    %880 = arith.negf %879 : vector<2x32xf32>
    %881 = math.exp %880 : vector<2x32xf32>
    %cst_215 = arith.constant 1.000000e+00 : f32
    %882 = vector.broadcast %cst_215 : f32 to vector<2x32xf32>
    %883 = arith.addf %882, %881 : vector<2x32xf32>
    %884 = arith.divf %882, %883 : vector<2x32xf32>
    %885 = vector.extract_strided_slice %787 {offsets = [3, 0, 0], sizes = [1, 2, 32], strides = [1, 1, 1]} : vector<8x2x32xf32> to vector<1x2x32xf32>
    %886 = vector.shape_cast %885 : vector<1x2x32xf32> to vector<2x32xf32>
    %887 = arith.addf %886, %875 : vector<2x32xf32>
    %888 = arith.negf %887 : vector<2x32xf32>
    %889 = math.exp %888 : vector<2x32xf32>
    %cst_216 = arith.constant 1.000000e+00 : f32
    %890 = vector.broadcast %cst_216 : f32 to vector<2x32xf32>
    %891 = arith.addf %890, %889 : vector<2x32xf32>
    %892 = arith.divf %890, %891 : vector<2x32xf32>
    %893 = vector.extract_strided_slice %788 {offsets = [3, 0, 0], sizes = [1, 2, 32], strides = [1, 1, 1]} : vector<8x2x32xf32> to vector<1x2x32xf32>
    %894 = vector.shape_cast %893 : vector<1x2x32xf32> to vector<2x32xf32>
    %895 = vector.broadcast %779 : vector<1x32xf32> to vector<2x32xf32>
    %896 = arith.addf %876, %895 : vector<2x32xf32>
    %897 = arith.mulf %884, %896 : vector<2x32xf32>
    %898 = arith.addf %894, %897 : vector<2x32xf32>
    %899 = math.tanh %898 : vector<2x32xf32>
    %cst_217 = arith.constant 1.000000e+00 : f32
    %900 = vector.broadcast %cst_217 : f32 to vector<2x32xf32>
    %901 = arith.subf %900, %892 : vector<2x32xf32>
    %902 = arith.mulf %901, %899 : vector<2x32xf32>
    %903 = arith.mulf %892, %873 : vector<2x32xf32>
    %904 = arith.addf %902, %903 : vector<2x32xf32>
    %cst_218 = arith.constant dense<0.000000e+00> : vector<2x32xf32>
    %905 = tpu.matmul %904, %776, %cst_218 {dimension_numbers = #tpu.dot_dimension_numbers<[1], [0], [0], [1], [0, 0, 1, 1], [], []>} : vector<2x32xf32>, vector<32x32xf32>, vector<2x32xf32> -> vector<2x32xf32>
    %cst_219 = arith.constant dense<0.000000e+00> : vector<2x32xf32>
    %906 = tpu.matmul %904, %777, %cst_219 {dimension_numbers = #tpu.dot_dimension_numbers<[1], [0], [0], [1], [0, 0, 1, 1], [], []>} : vector<2x32xf32>, vector<32x32xf32>, vector<2x32xf32> -> vector<2x32xf32>
    %cst_220 = arith.constant dense<0.000000e+00> : vector<2x32xf32>
    %907 = tpu.matmul %904, %778, %cst_220 {dimension_numbers = #tpu.dot_dimension_numbers<[1], [0], [0], [1], [0, 0, 1, 1], [], []>} : vector<2x32xf32>, vector<32x32xf32>, vector<2x32xf32> -> vector<2x32xf32>
    %908 = vector.extract_strided_slice %786 {offsets = [4, 0, 0], sizes = [1, 2, 32], strides = [1, 1, 1]} : vector<8x2x32xf32> to vector<1x2x32xf32>
    %909 = vector.shape_cast %908 : vector<1x2x32xf32> to vector<2x32xf32>
    %910 = arith.addf %909, %905 : vector<2x32xf32>
    %911 = arith.negf %910 : vector<2x32xf32>
    %912 = math.exp %911 : vector<2x32xf32>
    %cst_221 = arith.constant 1.000000e+00 : f32
    %913 = vector.broadcast %cst_221 : f32 to vector<2x32xf32>
    %914 = arith.addf %913, %912 : vector<2x32xf32>
    %915 = arith.divf %913, %914 : vector<2x32xf32>
    %916 = vector.extract_strided_slice %787 {offsets = [4, 0, 0], sizes = [1, 2, 32], strides = [1, 1, 1]} : vector<8x2x32xf32> to vector<1x2x32xf32>
    %917 = vector.shape_cast %916 : vector<1x2x32xf32> to vector<2x32xf32>
    %918 = arith.addf %917, %906 : vector<2x32xf32>
    %919 = arith.negf %918 : vector<2x32xf32>
    %920 = math.exp %919 : vector<2x32xf32>
    %cst_222 = arith.constant 1.000000e+00 : f32
    %921 = vector.broadcast %cst_222 : f32 to vector<2x32xf32>
    %922 = arith.addf %921, %920 : vector<2x32xf32>
    %923 = arith.divf %921, %922 : vector<2x32xf32>
    %924 = vector.extract_strided_slice %788 {offsets = [4, 0, 0], sizes = [1, 2, 32], strides = [1, 1, 1]} : vector<8x2x32xf32> to vector<1x2x32xf32>
    %925 = vector.shape_cast %924 : vector<1x2x32xf32> to vector<2x32xf32>
    %926 = vector.broadcast %779 : vector<1x32xf32> to vector<2x32xf32>
    %927 = arith.addf %907, %926 : vector<2x32xf32>
    %928 = arith.mulf %915, %927 : vector<2x32xf32>
    %929 = arith.addf %925, %928 : vector<2x32xf32>
    %930 = math.tanh %929 : vector<2x32xf32>
    %cst_223 = arith.constant 1.000000e+00 : f32
    %931 = vector.broadcast %cst_223 : f32 to vector<2x32xf32>
    %932 = arith.subf %931, %923 : vector<2x32xf32>
    %933 = arith.mulf %932, %930 : vector<2x32xf32>
    %934 = arith.mulf %923, %904 : vector<2x32xf32>
    %935 = arith.addf %933, %934 : vector<2x32xf32>
    %cst_224 = arith.constant dense<0.000000e+00> : vector<2x32xf32>
    %936 = tpu.matmul %935, %776, %cst_224 {dimension_numbers = #tpu.dot_dimension_numbers<[1], [0], [0], [1], [0, 0, 1, 1], [], []>} : vector<2x32xf32>, vector<32x32xf32>, vector<2x32xf32> -> vector<2x32xf32>
    %cst_225 = arith.constant dense<0.000000e+00> : vector<2x32xf32>
    %937 = tpu.matmul %935, %777, %cst_225 {dimension_numbers = #tpu.dot_dimension_numbers<[1], [0], [0], [1], [0, 0, 1, 1], [], []>} : vector<2x32xf32>, vector<32x32xf32>, vector<2x32xf32> -> vector<2x32xf32>
    %cst_226 = arith.constant dense<0.000000e+00> : vector<2x32xf32>
    %938 = tpu.matmul %935, %778, %cst_226 {dimension_numbers = #tpu.dot_dimension_numbers<[1], [0], [0], [1], [0, 0, 1, 1], [], []>} : vector<2x32xf32>, vector<32x32xf32>, vector<2x32xf32> -> vector<2x32xf32>
    %939 = vector.extract_strided_slice %786 {offsets = [5, 0, 0], sizes = [1, 2, 32], strides = [1, 1, 1]} : vector<8x2x32xf32> to vector<1x2x32xf32>
    %940 = vector.shape_cast %939 : vector<1x2x32xf32> to vector<2x32xf32>
    %941 = arith.addf %940, %936 : vector<2x32xf32>
    %942 = arith.negf %941 : vector<2x32xf32>
    %943 = math.exp %942 : vector<2x32xf32>
    %cst_227 = arith.constant 1.000000e+00 : f32
    %944 = vector.broadcast %cst_227 : f32 to vector<2x32xf32>
    %945 = arith.addf %944, %943 : vector<2x32xf32>
    %946 = arith.divf %944, %945 : vector<2x32xf32>
    %947 = vector.extract_strided_slice %787 {offsets = [5, 0, 0], sizes = [1, 2, 32], strides = [1, 1, 1]} : vector<8x2x32xf32> to vector<1x2x32xf32>
    %948 = vector.shape_cast %947 : vector<1x2x32xf32> to vector<2x32xf32>
    %949 = arith.addf %948, %937 : vector<2x32xf32>
    %950 = arith.negf %949 : vector<2x32xf32>
    %951 = math.exp %950 : vector<2x32xf32>
    %cst_228 = arith.constant 1.000000e+00 : f32
    %952 = vector.broadcast %cst_228 : f32 to vector<2x32xf32>
    %953 = arith.addf %952, %951 : vector<2x32xf32>
    %954 = arith.divf %952, %953 : vector<2x32xf32>
    %955 = vector.extract_strided_slice %788 {offsets = [5, 0, 0], sizes = [1, 2, 32], strides = [1, 1, 1]} : vector<8x2x32xf32> to vector<1x2x32xf32>
    %956 = vector.shape_cast %955 : vector<1x2x32xf32> to vector<2x32xf32>
    %957 = vector.broadcast %779 : vector<1x32xf32> to vector<2x32xf32>
    %958 = arith.addf %938, %957 : vector<2x32xf32>
    %959 = arith.mulf %946, %958 : vector<2x32xf32>
    %960 = arith.addf %956, %959 : vector<2x32xf32>
    %961 = math.tanh %960 : vector<2x32xf32>
    %cst_229 = arith.constant 1.000000e+00 : f32
    %962 = vector.broadcast %cst_229 : f32 to vector<2x32xf32>
    %963 = arith.subf %962, %954 : vector<2x32xf32>
    %964 = arith.mulf %963, %961 : vector<2x32xf32>
    %965 = arith.mulf %954, %935 : vector<2x32xf32>
    %966 = arith.addf %964, %965 : vector<2x32xf32>
    %cst_230 = arith.constant dense<0.000000e+00> : vector<2x32xf32>
    %967 = tpu.matmul %966, %776, %cst_230 {dimension_numbers = #tpu.dot_dimension_numbers<[1], [0], [0], [1], [0, 0, 1, 1], [], []>} : vector<2x32xf32>, vector<32x32xf32>, vector<2x32xf32> -> vector<2x32xf32>
    %cst_231 = arith.constant dense<0.000000e+00> : vector<2x32xf32>
    %968 = tpu.matmul %966, %777, %cst_231 {dimension_numbers = #tpu.dot_dimension_numbers<[1], [0], [0], [1], [0, 0, 1, 1], [], []>} : vector<2x32xf32>, vector<32x32xf32>, vector<2x32xf32> -> vector<2x32xf32>
    %cst_232 = arith.constant dense<0.000000e+00> : vector<2x32xf32>
    %969 = tpu.matmul %966, %778, %cst_232 {dimension_numbers = #tpu.dot_dimension_numbers<[1], [0], [0], [1], [0, 0, 1, 1], [], []>} : vector<2x32xf32>, vector<32x32xf32>, vector<2x32xf32> -> vector<2x32xf32>
    %970 = vector.extract_strided_slice %786 {offsets = [6, 0, 0], sizes = [1, 2, 32], strides = [1, 1, 1]} : vector<8x2x32xf32> to vector<1x2x32xf32>
    %971 = vector.shape_cast %970 : vector<1x2x32xf32> to vector<2x32xf32>
    %972 = arith.addf %971, %967 : vector<2x32xf32>
    %973 = arith.negf %972 : vector<2x32xf32>
    %974 = math.exp %973 : vector<2x32xf32>
    %cst_233 = arith.constant 1.000000e+00 : f32
    %975 = vector.broadcast %cst_233 : f32 to vector<2x32xf32>
    %976 = arith.addf %975, %974 : vector<2x32xf32>
    %977 = arith.divf %975, %976 : vector<2x32xf32>
    %978 = vector.extract_strided_slice %787 {offsets = [6, 0, 0], sizes = [1, 2, 32], strides = [1, 1, 1]} : vector<8x2x32xf32> to vector<1x2x32xf32>
    %979 = vector.shape_cast %978 : vector<1x2x32xf32> to vector<2x32xf32>
    %980 = arith.addf %979, %968 : vector<2x32xf32>
    %981 = arith.negf %980 : vector<2x32xf32>
    %982 = math.exp %981 : vector<2x32xf32>
    %cst_234 = arith.constant 1.000000e+00 : f32
    %983 = vector.broadcast %cst_234 : f32 to vector<2x32xf32>
    %984 = arith.addf %983, %982 : vector<2x32xf32>
    %985 = arith.divf %983, %984 : vector<2x32xf32>
    %986 = vector.extract_strided_slice %788 {offsets = [6, 0, 0], sizes = [1, 2, 32], strides = [1, 1, 1]} : vector<8x2x32xf32> to vector<1x2x32xf32>
    %987 = vector.shape_cast %986 : vector<1x2x32xf32> to vector<2x32xf32>
    %988 = vector.broadcast %779 : vector<1x32xf32> to vector<2x32xf32>
    %989 = arith.addf %969, %988 : vector<2x32xf32>
    %990 = arith.mulf %977, %989 : vector<2x32xf32>
    %991 = arith.addf %987, %990 : vector<2x32xf32>
    %992 = math.tanh %991 : vector<2x32xf32>
    %cst_235 = arith.constant 1.000000e+00 : f32
    %993 = vector.broadcast %cst_235 : f32 to vector<2x32xf32>
    %994 = arith.subf %993, %985 : vector<2x32xf32>
    %995 = arith.mulf %994, %992 : vector<2x32xf32>
    %996 = arith.mulf %985, %966 : vector<2x32xf32>
    %997 = arith.addf %995, %996 : vector<2x32xf32>
    %cst_236 = arith.constant dense<0.000000e+00> : vector<2x32xf32>
    %998 = tpu.matmul %997, %776, %cst_236 {dimension_numbers = #tpu.dot_dimension_numbers<[1], [0], [0], [1], [0, 0, 1, 1], [], []>} : vector<2x32xf32>, vector<32x32xf32>, vector<2x32xf32> -> vector<2x32xf32>
    %cst_237 = arith.constant dense<0.000000e+00> : vector<2x32xf32>
    %999 = tpu.matmul %997, %777, %cst_237 {dimension_numbers = #tpu.dot_dimension_numbers<[1], [0], [0], [1], [0, 0, 1, 1], [], []>} : vector<2x32xf32>, vector<32x32xf32>, vector<2x32xf32> -> vector<2x32xf32>
    %cst_238 = arith.constant dense<0.000000e+00> : vector<2x32xf32>
    %1000 = tpu.matmul %997, %778, %cst_238 {dimension_numbers = #tpu.dot_dimension_numbers<[1], [0], [0], [1], [0, 0, 1, 1], [], []>} : vector<2x32xf32>, vector<32x32xf32>, vector<2x32xf32> -> vector<2x32xf32>
    %1001 = vector.extract_strided_slice %786 {offsets = [7, 0, 0], sizes = [1, 2, 32], strides = [1, 1, 1]} : vector<8x2x32xf32> to vector<1x2x32xf32>
    %1002 = vector.shape_cast %1001 : vector<1x2x32xf32> to vector<2x32xf32>
    %1003 = arith.addf %1002, %998 : vector<2x32xf32>
    %1004 = arith.negf %1003 : vector<2x32xf32>
    %1005 = math.exp %1004 : vector<2x32xf32>
    %cst_239 = arith.constant 1.000000e+00 : f32
    %1006 = vector.broadcast %cst_239 : f32 to vector<2x32xf32>
    %1007 = arith.addf %1006, %1005 : vector<2x32xf32>
    %1008 = arith.divf %1006, %1007 : vector<2x32xf32>
    %1009 = vector.extract_strided_slice %787 {offsets = [7, 0, 0], sizes = [1, 2, 32], strides = [1, 1, 1]} : vector<8x2x32xf32> to vector<1x2x32xf32>
    %1010 = vector.shape_cast %1009 : vector<1x2x32xf32> to vector<2x32xf32>
    %1011 = arith.addf %1010, %999 : vector<2x32xf32>
    %1012 = arith.negf %1011 : vector<2x32xf32>
    %1013 = math.exp %1012 : vector<2x32xf32>
    %cst_240 = arith.constant 1.000000e+00 : f32
    %1014 = vector.broadcast %cst_240 : f32 to vector<2x32xf32>
    %1015 = arith.addf %1014, %1013 : vector<2x32xf32>
    %1016 = arith.divf %1014, %1015 : vector<2x32xf32>
    %1017 = vector.extract_strided_slice %788 {offsets = [7, 0, 0], sizes = [1, 2, 32], strides = [1, 1, 1]} : vector<8x2x32xf32> to vector<1x2x32xf32>
    %1018 = vector.shape_cast %1017 : vector<1x2x32xf32> to vector<2x32xf32>
    %1019 = vector.broadcast %779 : vector<1x32xf32> to vector<2x32xf32>
    %1020 = arith.addf %1000, %1019 : vector<2x32xf32>
    %1021 = arith.mulf %1008, %1020 : vector<2x32xf32>
    %1022 = arith.addf %1018, %1021 : vector<2x32xf32>
    %1023 = math.tanh %1022 : vector<2x32xf32>
    %cst_241 = arith.constant 1.000000e+00 : f32
    %1024 = vector.broadcast %cst_241 : f32 to vector<2x32xf32>
    %1025 = arith.subf %1024, %1016 : vector<2x32xf32>
    %1026 = arith.mulf %1025, %1023 : vector<2x32xf32>
    %1027 = arith.mulf %1016, %997 : vector<2x32xf32>
    %1028 = arith.addf %1026, %1027 : vector<2x32xf32>
    %1029 = vector.shape_cast %811 : vector<2x32xf32> to vector<2x1x32xf32>
    %1030 = vector.shape_cast %842 : vector<2x32xf32> to vector<2x1x32xf32>
    %1031 = vector.shape_cast %873 : vector<2x32xf32> to vector<2x1x32xf32>
    %1032 = vector.shape_cast %904 : vector<2x32xf32> to vector<2x1x32xf32>
    %1033 = vector.shape_cast %935 : vector<2x32xf32> to vector<2x1x32xf32>
    %1034 = vector.shape_cast %966 : vector<2x32xf32> to vector<2x1x32xf32>
    %1035 = vector.shape_cast %997 : vector<2x32xf32> to vector<2x1x32xf32>
    %1036 = vector.shape_cast %1028 : vector<2x32xf32> to vector<2x1x32xf32>
    %1037 = tpu.concatenate %1029, %1030, %1031, %1032, %1033, %1034, %1035, %1036 in 1 : vector<2x1x32xf32>, vector<2x1x32xf32>, vector<2x1x32xf32>, vector<2x1x32xf32>, vector<2x1x32xf32>, vector<2x1x32xf32>, vector<2x1x32xf32>, vector<2x1x32xf32> -> vector<2x8x32xf32>
    %1038 = vector.shape_cast %1037 : vector<2x8x32xf32> to vector<16x32xf32>
    %c0_242 = arith.constant 0 : index
    %c0_243 = arith.constant 0 : index
    %1039 = vector.load %arg28[%c0_242, %c0_243] : memref<32x32xf32, #tpu.memory_space<vmem>>, vector<32x32xf32>
    %cst_244 = arith.constant dense<0.000000e+00> : vector<2x32xf32>
    %1040 = tpu.matmul %1028, %1039, %cst_244 {dimension_numbers = #tpu.dot_dimension_numbers<[1], [0], [0], [1], [0, 0, 1, 1], [], []>} : vector<2x32xf32>, vector<32x32xf32>, vector<2x32xf32> -> vector<2x32xf32>
    %c0_245 = arith.constant 0 : index
    %c0_246 = arith.constant 0 : index
    %1041 = vector.load %arg31[%c0_245, %c0_246] : memref<1x32xf32, #tpu.memory_space<vmem>>, vector<1x32xf32>
    %1042 = vector.broadcast %1041 : vector<1x32xf32> to vector<2x32xf32>
    %1043 = arith.addf %1040, %1042 : vector<2x32xf32>
    %cst_247 = arith.constant 0.353553385 : f32
    %1044 = vector.broadcast %cst_247 : f32 to vector<2x32xf32>
    %1045 = arith.mulf %1043, %1044 : vector<2x32xf32>
    %c0_248 = arith.constant 0 : index
    %c0_249 = arith.constant 0 : index
    %1046 = vector.load %arg29[%c0_248, %c0_249] : memref<32x32xf32, #tpu.memory_space<vmem>>, vector<32x32xf32>
    %cst_250 = arith.constant dense<0.000000e+00> : vector<16x32xf32>
    %1047 = tpu.matmul %1038, %1046, %cst_250 {dimension_numbers = #tpu.dot_dimension_numbers<[1], [0], [0], [1], [0, 0, 1, 1], [], []>} : vector<16x32xf32>, vector<32x32xf32>, vector<16x32xf32> -> vector<16x32xf32>
    %c0_251 = arith.constant 0 : index
    %c0_252 = arith.constant 0 : index
    %1048 = vector.load %arg32[%c0_251, %c0_252] : memref<1x32xf32, #tpu.memory_space<vmem>>, vector<1x32xf32>
    %1049 = vector.broadcast %1048 : vector<1x32xf32> to vector<16x32xf32>
    %1050 = arith.addf %1047, %1049 : vector<16x32xf32>
    %1051 = vector.shape_cast %1050 : vector<16x32xf32> to vector<2x8x32xf32>
    %c0_253 = arith.constant 0 : index
    %c0_254 = arith.constant 0 : index
    %1052 = vector.load %arg30[%c0_253, %c0_254] : memref<32x32xf32, #tpu.memory_space<vmem>>, vector<32x32xf32>
    %cst_255 = arith.constant dense<0.000000e+00> : vector<16x32xf32>
    %1053 = tpu.matmul %1038, %1052, %cst_255 {dimension_numbers = #tpu.dot_dimension_numbers<[1], [0], [0], [1], [0, 0, 1, 1], [], []>} : vector<16x32xf32>, vector<32x32xf32>, vector<16x32xf32> -> vector<16x32xf32>
    %c0_256 = arith.constant 0 : index
    %c0_257 = arith.constant 0 : index
    %1054 = vector.load %arg33[%c0_256, %c0_257] : memref<1x32xf32, #tpu.memory_space<vmem>>, vector<1x32xf32>
    %1055 = vector.broadcast %1054 : vector<1x32xf32> to vector<16x32xf32>
    %1056 = arith.addf %1053, %1055 : vector<16x32xf32>
    %1057 = vector.shape_cast %1056 : vector<16x32xf32> to vector<2x8x32xf32>
    %c0_258 = arith.constant 0 : index
    %c0_259 = arith.constant 0 : index
    %1058 = vector.load %arg34[%c0_258, %c0_259] : memref<32x32xf32, #tpu.memory_space<vmem>>, vector<32x32xf32>
    %1059 = vector.extract_strided_slice %1045 {offsets = [0, 0], sizes = [2, 8], strides = [1, 1]} : vector<2x32xf32> to vector<2x8xf32>
    %1060 = vector.shape_cast %1059 : vector<2x8xf32> to vector<2x1x8xf32>
    %1061 = vector.extract_strided_slice %1051 {offsets = [0, 0, 0], sizes = [2, 8, 8], strides = [1, 1, 1]} : vector<2x8x32xf32> to vector<2x8x8xf32>
    %1062 = vector.extract_strided_slice %1057 {offsets = [0, 0, 0], sizes = [2, 8, 8], strides = [1, 1, 1]} : vector<2x8x32xf32> to vector<2x8x8xf32>
    "tpu.trace_start"() <{level = 10 : i32, message = "bqd,bkd->bqk"}> : () -> ()
    %cst_260 = arith.constant dense<0.000000e+00> : vector<2x1x8xf32>
    %1063 = tpu.matmul %1060, %1061, %cst_260 {dimension_numbers = #tpu.dot_dimension_numbers<[2], [2], [1], [1], [0, 0, 0, 1, 1, 1], [0], [0]>} : vector<2x1x8xf32>, vector<2x8x8xf32>, vector<2x1x8xf32> -> vector<2x1x8xf32>
    "tpu.trace_stop"() : () -> ()
    %cst_261 = arith.constant dense<0xFF800000> : vector<2x1xf32>
    %1064 = vector.multi_reduction <maximumf>, %1063, %cst_261 [2] : vector<2x1x8xf32> to vector<2x1xf32>
    %cst_262 = arith.constant 0xFF800000 : f32
    %1065 = vector.broadcast %cst_262 : f32 to vector<2x1xf32>
    %1066 = arith.maximumf %1065, %1064 : vector<2x1xf32>
    %1067 = vector.shape_cast %1066 : vector<2x1xf32> to vector<2x1x1xf32>
    %1068 = vector.broadcast %1067 : vector<2x1x1xf32> to vector<2x1x8xf32>
    %1069 = arith.subf %1063, %1068 : vector<2x1x8xf32>
    %1070 = math.exp %1069 : vector<2x1x8xf32>
    %cst_263 = arith.constant dense<0.000000e+00> : vector<2x1xf32>
    %1071 = vector.multi_reduction <add>, %1070, %cst_263 [2] : vector<2x1x8xf32> to vector<2x1xf32>
    %1072 = vector.shape_cast %1071 : vector<2x1xf32> to vector<2x1x1xf32>
    %1073 = vector.broadcast %1072 : vector<2x1x1xf32> to vector<2x1x8xf32>
    %1074 = arith.divf %1070, %1073 : vector<2x1x8xf32>
    "tpu.trace_start"() <{level = 10 : i32, message = "bqk,bkd->bqd"}> : () -> ()
    %cst_264 = arith.constant dense<0.000000e+00> : vector<2x1x8xf32>
    %1075 = tpu.matmul %1074, %1062, %cst_264 {dimension_numbers = #tpu.dot_dimension_numbers<[2], [1], [1], [2], [0, 0, 0, 1, 1, 2], [0], [0]>} : vector<2x1x8xf32>, vector<2x8x8xf32>, vector<2x1x8xf32> -> vector<2x1x8xf32>
    "tpu.trace_stop"() : () -> ()
    %1076 = vector.shape_cast %1075 : vector<2x1x8xf32> to vector<2x8xf32>
    %1077 = vector.extract_strided_slice %1058 {offsets = [0, 0], sizes = [8, 32], strides = [1, 1]} : vector<32x32xf32> to vector<8x32xf32>
    %cst_265 = arith.constant dense<0.000000e+00> : vector<2x32xf32>
    %1078 = tpu.matmul %1076, %1077, %cst_265 {dimension_numbers = #tpu.dot_dimension_numbers<[1], [0], [0], [1], [0, 0, 1, 1], [], []>} : vector<2x8xf32>, vector<8x32xf32>, vector<2x32xf32> -> vector<2x32xf32>
    %1079 = vector.extract_strided_slice %1045 {offsets = [0, 8], sizes = [2, 8], strides = [1, 1]} : vector<2x32xf32> to vector<2x8xf32>
    %1080 = vector.shape_cast %1079 : vector<2x8xf32> to vector<2x1x8xf32>
    %1081 = vector.extract_strided_slice %1051 {offsets = [0, 0, 8], sizes = [2, 8, 8], strides = [1, 1, 1]} : vector<2x8x32xf32> to vector<2x8x8xf32>
    %1082 = vector.extract_strided_slice %1057 {offsets = [0, 0, 8], sizes = [2, 8, 8], strides = [1, 1, 1]} : vector<2x8x32xf32> to vector<2x8x8xf32>
    "tpu.trace_start"() <{level = 10 : i32, message = "bqd,bkd->bqk"}> : () -> ()
    %cst_266 = arith.constant dense<0.000000e+00> : vector<2x1x8xf32>
    %1083 = tpu.matmul %1080, %1081, %cst_266 {dimension_numbers = #tpu.dot_dimension_numbers<[2], [2], [1], [1], [0, 0, 0, 1, 1, 1], [0], [0]>} : vector<2x1x8xf32>, vector<2x8x8xf32>, vector<2x1x8xf32> -> vector<2x1x8xf32>
    "tpu.trace_stop"() : () -> ()
    %cst_267 = arith.constant dense<0xFF800000> : vector<2x1xf32>
    %1084 = vector.multi_reduction <maximumf>, %1083, %cst_267 [2] : vector<2x1x8xf32> to vector<2x1xf32>
    %cst_268 = arith.constant 0xFF800000 : f32
    %1085 = vector.broadcast %cst_268 : f32 to vector<2x1xf32>
    %1086 = arith.maximumf %1085, %1084 : vector<2x1xf32>
    %1087 = vector.shape_cast %1086 : vector<2x1xf32> to vector<2x1x1xf32>
    %1088 = vector.broadcast %1087 : vector<2x1x1xf32> to vector<2x1x8xf32>
    %1089 = arith.subf %1083, %1088 : vector<2x1x8xf32>
    %1090 = math.exp %1089 : vector<2x1x8xf32>
    %cst_269 = arith.constant dense<0.000000e+00> : vector<2x1xf32>
    %1091 = vector.multi_reduction <add>, %1090, %cst_269 [2] : vector<2x1x8xf32> to vector<2x1xf32>
    %1092 = vector.shape_cast %1091 : vector<2x1xf32> to vector<2x1x1xf32>
    %1093 = vector.broadcast %1092 : vector<2x1x1xf32> to vector<2x1x8xf32>
    %1094 = arith.divf %1090, %1093 : vector<2x1x8xf32>
    "tpu.trace_start"() <{level = 10 : i32, message = "bqk,bkd->bqd"}> : () -> ()
    %cst_270 = arith.constant dense<0.000000e+00> : vector<2x1x8xf32>
    %1095 = tpu.matmul %1094, %1082, %cst_270 {dimension_numbers = #tpu.dot_dimension_numbers<[2], [1], [1], [2], [0, 0, 0, 1, 1, 2], [0], [0]>} : vector<2x1x8xf32>, vector<2x8x8xf32>, vector<2x1x8xf32> -> vector<2x1x8xf32>
    "tpu.trace_stop"() : () -> ()
    %1096 = vector.shape_cast %1095 : vector<2x1x8xf32> to vector<2x8xf32>
    %1097 = vector.extract_strided_slice %1058 {offsets = [8, 0], sizes = [8, 32], strides = [1, 1]} : vector<32x32xf32> to vector<8x32xf32>
    %cst_271 = arith.constant dense<0.000000e+00> : vector<2x32xf32>
    %1098 = tpu.matmul %1096, %1097, %cst_271 {dimension_numbers = #tpu.dot_dimension_numbers<[1], [0], [0], [1], [0, 0, 1, 1], [], []>} : vector<2x8xf32>, vector<8x32xf32>, vector<2x32xf32> -> vector<2x32xf32>
    %1099 = arith.addf %1078, %1098 : vector<2x32xf32>
    %1100 = vector.extract_strided_slice %1045 {offsets = [0, 16], sizes = [2, 8], strides = [1, 1]} : vector<2x32xf32> to vector<2x8xf32>
    %1101 = vector.shape_cast %1100 : vector<2x8xf32> to vector<2x1x8xf32>
    %1102 = vector.extract_strided_slice %1051 {offsets = [0, 0, 16], sizes = [2, 8, 8], strides = [1, 1, 1]} : vector<2x8x32xf32> to vector<2x8x8xf32>
    %1103 = vector.extract_strided_slice %1057 {offsets = [0, 0, 16], sizes = [2, 8, 8], strides = [1, 1, 1]} : vector<2x8x32xf32> to vector<2x8x8xf32>
    "tpu.trace_start"() <{level = 10 : i32, message = "bqd,bkd->bqk"}> : () -> ()
    %cst_272 = arith.constant dense<0.000000e+00> : vector<2x1x8xf32>
    %1104 = tpu.matmul %1101, %1102, %cst_272 {dimension_numbers = #tpu.dot_dimension_numbers<[2], [2], [1], [1], [0, 0, 0, 1, 1, 1], [0], [0]>} : vector<2x1x8xf32>, vector<2x8x8xf32>, vector<2x1x8xf32> -> vector<2x1x8xf32>
    "tpu.trace_stop"() : () -> ()
    %cst_273 = arith.constant dense<0xFF800000> : vector<2x1xf32>
    %1105 = vector.multi_reduction <maximumf>, %1104, %cst_273 [2] : vector<2x1x8xf32> to vector<2x1xf32>
    %cst_274 = arith.constant 0xFF800000 : f32
    %1106 = vector.broadcast %cst_274 : f32 to vector<2x1xf32>
    %1107 = arith.maximumf %1106, %1105 : vector<2x1xf32>
    %1108 = vector.shape_cast %1107 : vector<2x1xf32> to vector<2x1x1xf32>
    %1109 = vector.broadcast %1108 : vector<2x1x1xf32> to vector<2x1x8xf32>
    %1110 = arith.subf %1104, %1109 : vector<2x1x8xf32>
    %1111 = math.exp %1110 : vector<2x1x8xf32>
    %cst_275 = arith.constant dense<0.000000e+00> : vector<2x1xf32>
    %1112 = vector.multi_reduction <add>, %1111, %cst_275 [2] : vector<2x1x8xf32> to vector<2x1xf32>
    %1113 = vector.shape_cast %1112 : vector<2x1xf32> to vector<2x1x1xf32>
    %1114 = vector.broadcast %1113 : vector<2x1x1xf32> to vector<2x1x8xf32>
    %1115 = arith.divf %1111, %1114 : vector<2x1x8xf32>
    "tpu.trace_start"() <{level = 10 : i32, message = "bqk,bkd->bqd"}> : () -> ()
    %cst_276 = arith.constant dense<0.000000e+00> : vector<2x1x8xf32>
    %1116 = tpu.matmul %1115, %1103, %cst_276 {dimension_numbers = #tpu.dot_dimension_numbers<[2], [1], [1], [2], [0, 0, 0, 1, 1, 2], [0], [0]>} : vector<2x1x8xf32>, vector<2x8x8xf32>, vector<2x1x8xf32> -> vector<2x1x8xf32>
    "tpu.trace_stop"() : () -> ()
    %1117 = vector.shape_cast %1116 : vector<2x1x8xf32> to vector<2x8xf32>
    %1118 = vector.extract_strided_slice %1058 {offsets = [16, 0], sizes = [8, 32], strides = [1, 1]} : vector<32x32xf32> to vector<8x32xf32>
    %cst_277 = arith.constant dense<0.000000e+00> : vector<2x32xf32>
    %1119 = tpu.matmul %1117, %1118, %cst_277 {dimension_numbers = #tpu.dot_dimension_numbers<[1], [0], [0], [1], [0, 0, 1, 1], [], []>} : vector<2x8xf32>, vector<8x32xf32>, vector<2x32xf32> -> vector<2x32xf32>
    %1120 = arith.addf %1099, %1119 : vector<2x32xf32>
    %1121 = vector.extract_strided_slice %1045 {offsets = [0, 24], sizes = [2, 8], strides = [1, 1]} : vector<2x32xf32> to vector<2x8xf32>
    %1122 = vector.shape_cast %1121 : vector<2x8xf32> to vector<2x1x8xf32>
    %1123 = vector.extract_strided_slice %1051 {offsets = [0, 0, 24], sizes = [2, 8, 8], strides = [1, 1, 1]} : vector<2x8x32xf32> to vector<2x8x8xf32>
    %1124 = vector.extract_strided_slice %1057 {offsets = [0, 0, 24], sizes = [2, 8, 8], strides = [1, 1, 1]} : vector<2x8x32xf32> to vector<2x8x8xf32>
    "tpu.trace_start"() <{level = 10 : i32, message = "bqd,bkd->bqk"}> : () -> ()
    %cst_278 = arith.constant dense<0.000000e+00> : vector<2x1x8xf32>
    %1125 = tpu.matmul %1122, %1123, %cst_278 {dimension_numbers = #tpu.dot_dimension_numbers<[2], [2], [1], [1], [0, 0, 0, 1, 1, 1], [0], [0]>} : vector<2x1x8xf32>, vector<2x8x8xf32>, vector<2x1x8xf32> -> vector<2x1x8xf32>
    "tpu.trace_stop"() : () -> ()
    %cst_279 = arith.constant dense<0xFF800000> : vector<2x1xf32>
    %1126 = vector.multi_reduction <maximumf>, %1125, %cst_279 [2] : vector<2x1x8xf32> to vector<2x1xf32>
    %cst_280 = arith.constant 0xFF800000 : f32
    %1127 = vector.broadcast %cst_280 : f32 to vector<2x1xf32>
    %1128 = arith.maximumf %1127, %1126 : vector<2x1xf32>
    %1129 = vector.shape_cast %1128 : vector<2x1xf32> to vector<2x1x1xf32>
    %1130 = vector.broadcast %1129 : vector<2x1x1xf32> to vector<2x1x8xf32>
    %1131 = arith.subf %1125, %1130 : vector<2x1x8xf32>
    %1132 = math.exp %1131 : vector<2x1x8xf32>
    %cst_281 = arith.constant dense<0.000000e+00> : vector<2x1xf32>
    %1133 = vector.multi_reduction <add>, %1132, %cst_281 [2] : vector<2x1x8xf32> to vector<2x1xf32>
    %1134 = vector.shape_cast %1133 : vector<2x1xf32> to vector<2x1x1xf32>
    %1135 = vector.broadcast %1134 : vector<2x1x1xf32> to vector<2x1x8xf32>
    %1136 = arith.divf %1132, %1135 : vector<2x1x8xf32>
    "tpu.trace_start"() <{level = 10 : i32, message = "bqk,bkd->bqd"}> : () -> ()
    %cst_282 = arith.constant dense<0.000000e+00> : vector<2x1x8xf32>
    %1137 = tpu.matmul %1136, %1124, %cst_282 {dimension_numbers = #tpu.dot_dimension_numbers<[2], [1], [1], [2], [0, 0, 0, 1, 1, 2], [0], [0]>} : vector<2x1x8xf32>, vector<2x8x8xf32>, vector<2x1x8xf32> -> vector<2x1x8xf32>
    "tpu.trace_stop"() : () -> ()
    %1138 = vector.shape_cast %1137 : vector<2x1x8xf32> to vector<2x8xf32>
    %1139 = vector.extract_strided_slice %1058 {offsets = [24, 0], sizes = [8, 32], strides = [1, 1]} : vector<32x32xf32> to vector<8x32xf32>
    %cst_283 = arith.constant dense<0.000000e+00> : vector<2x32xf32>
    %1140 = tpu.matmul %1138, %1139, %cst_283 {dimension_numbers = #tpu.dot_dimension_numbers<[1], [0], [0], [1], [0, 0, 1, 1], [], []>} : vector<2x8xf32>, vector<8x32xf32>, vector<2x32xf32> -> vector<2x32xf32>
    %1141 = arith.addf %1120, %1140 : vector<2x32xf32>
    %c0_284 = arith.constant 0 : index
    %c0_285 = arith.constant 0 : index
    %1142 = vector.load %arg35[%c0_284, %c0_285] : memref<1x32xf32, #tpu.memory_space<vmem>>, vector<1x32xf32>
    %1143 = vector.broadcast %1142 : vector<1x32xf32> to vector<2x32xf32>
    %1144 = arith.addf %1141, %1143 : vector<2x32xf32>
    %c0_286 = arith.constant 0 : index
    %c0_287 = arith.constant 0 : index
    %1145 = vector.load %arg36[%c0_286, %c0_287] : memref<32x4xf32, #tpu.memory_space<vmem>>, vector<32x4xf32>
    %cst_288 = arith.constant dense<0.000000e+00> : vector<2x4xf32>
    %1146 = tpu.matmul %507, %1145, %cst_288 {dimension_numbers = #tpu.dot_dimension_numbers<[1], [0], [0], [1], [0, 0, 1, 1], [], []>} : vector<2x32xf32>, vector<32x4xf32>, vector<2x4xf32> -> vector<2x4xf32>
    %c0_289 = arith.constant 0 : index
    %c0_290 = arith.constant 0 : index
    %1147 = vector.load %arg37[%c0_289, %c0_290] : memref<32x4xf32, #tpu.memory_space<vmem>>, vector<32x4xf32>
    %cst_291 = arith.constant dense<0.000000e+00> : vector<2x4xf32>
    %1148 = tpu.matmul %1144, %1147, %cst_291 {dimension_numbers = #tpu.dot_dimension_numbers<[1], [0], [0], [1], [0, 0, 1, 1], [], []>} : vector<2x32xf32>, vector<32x4xf32>, vector<2x4xf32> -> vector<2x4xf32>
    %1149 = arith.addf %1146, %1148 : vector<2x4xf32>
    %c0_292 = arith.constant 0 : index
    %c0_293 = arith.constant 0 : index
    %1150 = vector.load %arg38[%c0_292, %c0_293] : memref<1x4xf32, #tpu.memory_space<vmem>>, vector<1x4xf32>
    %1151 = vector.broadcast %1150 : vector<1x4xf32> to vector<2x4xf32>
    %1152 = arith.addf %1149, %1151 : vector<2x4xf32>
    %c0_294 = arith.constant 0 : index
    %c0_295 = arith.constant 0 : index
    %1153 = vector.load %arg39[%c0_294, %c0_295] : memref<2x4xf32, #tpu.memory_space<vmem>>, vector<2x4xf32>
    tpu.vector_store %arg39[%c0_294, %c0_295], %1152 {strides = array<i32>} : memref<2x4xf32, #tpu.memory_space<vmem>>, vector<2x4xf32>,
    return
  }
}

</mosaic_0001>

<llo_original>
// kernel: gru_model_with_attention.1
$region0: #{gru_model_with_attention.1}
  #allocation0 [shape = 'u32[]', space=smem, size = 0x4, offset = 0x4, fixed_abs, tag = 'smem constant byte address 0x4 - core index']
  #allocation1 [shape = 'u32[72,128]{1,0:T(1,128)}', space=vmem, size = 0x9000, scoped, tag = 'internal scratch']
  %s0 = inlined_call_operand.smem [shape: u32[40], index: -1, kind: input, shape index: {}]
  %s1 = sld [smem:[%s0]]
  %s2 = scalar_lea.smem %s0, 1
  %s3 = sld [smem:[%s2]]
  %s4 = scalar_lea.smem %s0, 2
  %s5 = sld [smem:[%s4]]
  %s6 = scalar_lea.smem %s0, 3
  %s7 = sld [smem:[%s6]]
  %s8 = scalar_lea.smem %s0, 4
  %s9 = sld [smem:[%s8]]
  %s10 = scalar_lea.smem %s0, 5
  %s11 = sld [smem:[%s10]]
  %s12 = scalar_lea.smem %s0, 6
  %s13 = sld [smem:[%s12]]
  %s14 = scalar_lea.smem %s0, 7
  %s15 = sld [smem:[%s14]]
  %s16 = scalar_lea.smem %s0, 8
  %s17 = sld [smem:[%s16]]
  %s18 = scalar_lea.smem %s0, 9
  %s19 = sld [smem:[%s18]]
  %s20 = scalar_lea.smem %s0, 10
  %s21 = sld [smem:[%s20]]
  %s22 = scalar_lea.smem %s0, 11
  %s23 = sld [smem:[%s22]]
  %s24 = scalar_lea.smem %s0, 12
  %s25 = sld [smem:[%s24]]
  %s26 = scalar_lea.smem %s0, 13
  %s27 = sld [smem:[%s26]]
  %s28 = scalar_lea.smem %s0, 14
  %s29 = sld [smem:[%s28]]
  %s30 = scalar_lea.smem %s0, 15
  %s31 = sld [smem:[%s30]]
  %s32 = scalar_lea.smem %s0, 16
  %s33 = sld [smem:[%s32]]
  %s34 = scalar_lea.smem %s0, 17
  %s35 = sld [smem:[%s34]]
  %s36 = scalar_lea.smem %s0, 18
  %s37 = sld [smem:[%s36]]
  %s38 = scalar_lea.smem %s0, 19
  %s39 = sld [smem:[%s38]]
  %s40 = scalar_lea.smem %s0, 20
  %s41 = sld [smem:[%s40]]
  %s42 = scalar_lea.smem %s0, 21
  %s43 = sld [smem:[%s42]]
  %s44 = scalar_lea.smem %s0, 22
  %s45 = sld [smem:[%s44]]
  %s46 = scalar_lea.smem %s0, 23
  %s47 = sld [smem:[%s46]]
  %s48 = scalar_lea.smem %s0, 24
  %s49 = sld [smem:[%s48]]
  %s50 = scalar_lea.smem %s0, 25
  %s51 = sld [smem:[%s50]]
  %s52 = scalar_lea.smem %s0, 26
  %s53 = sld [smem:[%s52]]
  %s54 = scalar_lea.smem %s0, 27
  %s55 = sld [smem:[%s54]]
  %s56 = scalar_lea.smem %s0, 28
  %s57 = sld [smem:[%s56]]
  %s58 = scalar_lea.smem %s0, 29
  %s59 = sld [smem:[%s58]]
  %s60 = scalar_lea.smem %s0, 30
  %s61 = sld [smem:[%s60]]
  %s62 = scalar_lea.smem %s0, 31
  %s63 = sld [smem:[%s62]]
  %s64 = scalar_lea.smem %s0, 32
  %s65 = sld [smem:[%s64]]
  %s66 = scalar_lea.smem %s0, 33
  %s67 = sld [smem:[%s66]]
  %s68 = scalar_lea.smem %s0, 34
  %s69 = sld [smem:[%s68]]
  %s70 = scalar_lea.smem %s0, 35
  %s71 = sld [smem:[%s70]]
  %s72 = scalar_lea.smem %s0, 36
  %s73 = sld [smem:[%s72]]
  %s74 = scalar_lea.smem %s0, 37
  %s75 = sld [smem:[%s74]]
  %s76 = scalar_lea.smem %s0, 38
  %s77 = sld [smem:[%s76]]
  %s78 = scalar_lea.smem %s0, 39
  %s79 = sld [smem:[%s78]]
  %s80 = sld [smem:[#allocation0]]
  $region166: #{gru_model_with_attention.1} parent=0
    _
  %s82 = ssub.s32 1, %s80
  %s83 = scalar_select 0, %s82, %s80
  $region1: #{gru_model_with_attention.1} parent=0
    #allocation2 [shape = 'u8[1024]{0}', space=vmem, size = 0x400, scoped, tag = 'output window, operand 0, single buffered']
    #allocation3 [shape = 's32[1]{0}', space=sflag, size = 0x4, scoped, tag = 'scoped memory for gru_model_with_attention.1']
    %84 = vsyncpa [#allocation3], 0
    // Predicated region
    $region2: #{gru_model_with_attention.1} parent=1 // pred_check
      _
    $region3: #{gru_model_with_attention.1} parent=1 // pred_check_branch
      %86 = sbr.rel (0) target = $region5
    $region4: #{gru_model_with_attention.1} parent=1 // pred_region
      _
    $region5: #{gru_model_with_attention.1} parent=1 // pred_fallthru
      _
    // Predicated region
    $region6: #{gru_model_with_attention.1} parent=1 // pred_check
      _
    $region7: #{gru_model_with_attention.1} parent=1 // pred_check_branch
      %88 = sbr.rel (0) target = $region9
    $region8: #{gru_model_with_attention.1} parent=1 // pred_region
      _
    $region9: #{gru_model_with_attention.1} parent=1 // pred_fallthru
      _
    // Predicated region
    $region10: #{gru_model_with_attention.1} parent=1 // pred_check
      _
    $region11: #{gru_model_with_attention.1} parent=1 // pred_check_branch
      %90 = sbr.rel (0) target = $region13
    $region12: #{gru_model_with_attention.1} parent=1 // pred_region
      _
    $region13: #{gru_model_with_attention.1} parent=1 // pred_fallthru
      _
    // Predicated region
    $region14: #{gru_model_with_attention.1} parent=1 // pred_check
      _
    $region15: #{gru_model_with_attention.1} parent=1 // pred_check_branch
      %92 = sbr.rel (0) target = $region17
    $region16: #{gru_model_with_attention.1} parent=1 // pred_region
      _
    $region17: #{gru_model_with_attention.1} parent=1 // pred_fallthru
      _
    // Predicated region
    $region18: #{gru_model_with_attention.1} parent=1 // pred_check
      _
    $region19: #{gru_model_with_attention.1} parent=1 // pred_check_branch
      %94 = sbr.rel (0) target = $region21
    $region20: #{gru_model_with_attention.1} parent=1 // pred_region
      _
    $region21: #{gru_model_with_attention.1} parent=1 // pred_fallthru
      _
    // Predicated region
    $region22: #{gru_model_with_attention.1} parent=1 // pred_check
      _
    $region23: #{gru_model_with_attention.1} parent=1 // pred_check_branch
      %96 = sbr.rel (0) target = $region25
    $region24: #{gru_model_with_attention.1} parent=1 // pred_region
      _
    $region25: #{gru_model_with_attention.1} parent=1 // pred_fallthru
      _
    // Predicated region
    $region26: #{gru_model_with_attention.1} parent=1 // pred_check
      _
    $region27: #{gru_model_with_attention.1} parent=1 // pred_check_branch
      %98 = sbr.rel (0) target = $region29
    $region28: #{gru_model_with_attention.1} parent=1 // pred_region
      _
    $region29: #{gru_model_with_attention.1} parent=1 // pred_fallthru
      _
    // Predicated region
    $region30: #{gru_model_with_attention.1} parent=1 // pred_check
      _
    $region31: #{gru_model_with_attention.1} parent=1 // pred_check_branch
      %100 = sbr.rel (0) target = $region33
    $region32: #{gru_model_with_attention.1} parent=1 // pred_region
      _
    $region33: #{gru_model_with_attention.1} parent=1 // pred_fallthru
      _
    // Predicated region
    $region34: #{gru_model_with_attention.1} parent=1 // pred_check
      _
    $region35: #{gru_model_with_attention.1} parent=1 // pred_check_branch
      %102 = sbr.rel (0) target = $region37
    $region36: #{gru_model_with_attention.1} parent=1 // pred_region
      _
    $region37: #{gru_model_with_attention.1} parent=1 // pred_fallthru
      _
    // Predicated region
    $region38: #{gru_model_with_attention.1} parent=1 // pred_check
      _
    $region39: #{gru_model_with_attention.1} parent=1 // pred_check_branch
      %104 = sbr.rel (0) target = $region41
    $region40: #{gru_model_with_attention.1} parent=1 // pred_region
      _
    $region41: #{gru_model_with_attention.1} parent=1 // pred_fallthru
      _
    // Predicated region
    $region42: #{gru_model_with_attention.1} parent=1 // pred_check
      _
    $region43: #{gru_model_with_attention.1} parent=1 // pred_check_branch
      %106 = sbr.rel (0) target = $region45
    $region44: #{gru_model_with_attention.1} parent=1 // pred_region
      _
    $region45: #{gru_model_with_attention.1} parent=1 // pred_fallthru
      _
    // Predicated region
    $region46: #{gru_model_with_attention.1} parent=1 // pred_check
      _
    $region47: #{gru_model_with_attention.1} parent=1 // pred_check_branch
      %108 = sbr.rel (0) target = $region49
    $region48: #{gru_model_with_attention.1} parent=1 // pred_region
      _
    $region49: #{gru_model_with_attention.1} parent=1 // pred_fallthru
      _
    // Predicated region
    $region50: #{gru_model_with_attention.1} parent=1 // pred_check
      _
    $region51: #{gru_model_with_attention.1} parent=1 // pred_check_branch
      %110 = sbr.rel (0) target = $region53
    $region52: #{gru_model_with_attention.1} parent=1 // pred_region
      _
    $region53: #{gru_model_with_attention.1} parent=1 // pred_fallthru
      _
    // Predicated region
    $region54: #{gru_model_with_attention.1} parent=1 // pred_check
      _
    $region55: #{gru_model_with_attention.1} parent=1 // pred_check_branch
      %112 = sbr.rel (0) target = $region57
    $region56: #{gru_model_with_attention.1} parent=1 // pred_region
      _
    $region57: #{gru_model_with_attention.1} parent=1 // pred_fallthru
      _
    // Predicated region
    $region58: #{gru_model_with_attention.1} parent=1 // pred_check
      _
    $region59: #{gru_model_with_attention.1} parent=1 // pred_check_branch
      %114 = sbr.rel (0) target = $region61
    $region60: #{gru_model_with_attention.1} parent=1 // pred_region
      _
    $region61: #{gru_model_with_attention.1} parent=1 // pred_fallthru
      _
    // Predicated region
    $region62: #{gru_model_with_attention.1} parent=1 // pred_check
      _
    $region63: #{gru_model_with_attention.1} parent=1 // pred_check_branch
      %116 = sbr.rel (0) target = $region65
    $region64: #{gru_model_with_attention.1} parent=1 // pred_region
      _
    $region65: #{gru_model_with_attention.1} parent=1 // pred_fallthru
      _
    // Predicated region
    $region66: #{gru_model_with_attention.1} parent=1 // pred_check
      _
    $region67: #{gru_model_with_attention.1} parent=1 // pred_check_branch
      %118 = sbr.rel (0) target = $region69
    $region68: #{gru_model_with_attention.1} parent=1 // pred_region
      _
    $region69: #{gru_model_with_attention.1} parent=1 // pred_fallthru
      _
    // Predicated region
    $region70: #{gru_model_with_attention.1} parent=1 // pred_check
      _
    $region71: #{gru_model_with_attention.1} parent=1 // pred_check_branch
      %120 = sbr.rel (0) target = $region73
    $region72: #{gru_model_with_attention.1} parent=1 // pred_region
      _
    $region73: #{gru_model_with_attention.1} parent=1 // pred_fallthru
      _
    // Predicated region
    $region74: #{gru_model_with_attention.1} parent=1 // pred_check
      _
    $region75: #{gru_model_with_attention.1} parent=1 // pred_check_branch
      %122 = sbr.rel (0) target = $region77
    $region76: #{gru_model_with_attention.1} parent=1 // pred_region
      _
    $region77: #{gru_model_with_attention.1} parent=1 // pred_fallthru
      _
    // Predicated region
    $region78: #{gru_model_with_attention.1} parent=1 // pred_check
      _
    $region79: #{gru_model_with_attention.1} parent=1 // pred_check_branch
      %124 = sbr.rel (0) target = $region81
    $region80: #{gru_model_with_attention.1} parent=1 // pred_region
      _
    $region81: #{gru_model_with_attention.1} parent=1 // pred_fallthru
      _
    // Predicated region
    $region82: #{gru_model_with_attention.1} parent=1 // pred_check
      _
    $region83: #{gru_model_with_attention.1} parent=1 // pred_check_branch
      %126 = sbr.rel (0) target = $region85
    $region84: #{gru_model_with_attention.1} parent=1 // pred_region
      _
    $region85: #{gru_model_with_attention.1} parent=1 // pred_fallthru
      _
    // Predicated region
    $region86: #{gru_model_with_attention.1} parent=1 // pred_check
      _
    $region87: #{gru_model_with_attention.1} parent=1 // pred_check_branch
      %128 = sbr.rel (0) target = $region89
    $region88: #{gru_model_with_attention.1} parent=1 // pred_region
      _
    $region89: #{gru_model_with_attention.1} parent=1 // pred_fallthru
      _
    // Predicated region
    $region90: #{gru_model_with_attention.1} parent=1 // pred_check
      _
    $region91: #{gru_model_with_attention.1} parent=1 // pred_check_branch
      %130 = sbr.rel (0) target = $region93
    $region92: #{gru_model_with_attention.1} parent=1 // pred_region
      _
    $region93: #{gru_model_with_attention.1} parent=1 // pred_fallthru
      _
    // Predicated region
    $region94: #{gru_model_with_attention.1} parent=1 // pred_check
      _
    $region95: #{gru_model_with_attention.1} parent=1 // pred_check_branch
      %132 = sbr.rel (0) target = $region97
    $region96: #{gru_model_with_attention.1} parent=1 // pred_region
      _
    $region97: #{gru_model_with_attention.1} parent=1 // pred_fallthru
      _
    // Predicated region
    $region98: #{gru_model_with_attention.1} parent=1 // pred_check
      _
    $region99: #{gru_model_with_attention.1} parent=1 // pred_check_branch
      %134 = sbr.rel (0) target = $region101
    $region100: #{gru_model_with_attention.1} parent=1 // pred_region
      _
    $region101: #{gru_model_with_attention.1} parent=1 // pred_fallthru
      _
    // Predicated region
    $region102: #{gru_model_with_attention.1} parent=1 // pred_check
      _
    $region103: #{gru_model_with_attention.1} parent=1 // pred_check_branch
      %136 = sbr.rel (0) target = $region105
    $region104: #{gru_model_with_attention.1} parent=1 // pred_region
      _
    $region105: #{gru_model_with_attention.1} parent=1 // pred_fallthru
      _
    // Predicated region
    $region106: #{gru_model_with_attention.1} parent=1 // pred_check
      _
    $region107: #{gru_model_with_attention.1} parent=1 // pred_check_branch
      %138 = sbr.rel (0) target = $region109
    $region108: #{gru_model_with_attention.1} parent=1 // pred_region
      _
    $region109: #{gru_model_with_attention.1} parent=1 // pred_fallthru
      _
    // Predicated region
    $region110: #{gru_model_with_attention.1} parent=1 // pred_check
      _
    $region111: #{gru_model_with_attention.1} parent=1 // pred_check_branch
      %140 = sbr.rel (0) target = $region113
    $region112: #{gru_model_with_attention.1} parent=1 // pred_region
      _
    $region113: #{gru_model_with_attention.1} parent=1 // pred_fallthru
      _
    // Predicated region
    $region114: #{gru_model_with_attention.1} parent=1 // pred_check
      _
    $region115: #{gru_model_with_attention.1} parent=1 // pred_check_branch
      %142 = sbr.rel (0) target = $region117
    $region116: #{gru_model_with_attention.1} parent=1 // pred_region
      _
    $region117: #{gru_model_with_attention.1} parent=1 // pred_fallthru
      _
    // Predicated region
    $region118: #{gru_model_with_attention.1} parent=1 // pred_check
      _
    $region119: #{gru_model_with_attention.1} parent=1 // pred_check_branch
      %144 = sbr.rel (0) target = $region121
    $region120: #{gru_model_with_attention.1} parent=1 // pred_region
      _
    $region121: #{gru_model_with_attention.1} parent=1 // pred_fallthru
      _
    // Predicated region
    $region122: #{gru_model_with_attention.1} parent=1 // pred_check
      _
    $region123: #{gru_model_with_attention.1} parent=1 // pred_check_branch
      %146 = sbr.rel (0) target = $region125
    $region124: #{gru_model_with_attention.1} parent=1 // pred_region
      _
    $region125: #{gru_model_with_attention.1} parent=1 // pred_fallthru
      _
    // Predicated region
    $region126: #{gru_model_with_attention.1} parent=1 // pred_check
      _
    $region127: #{gru_model_with_attention.1} parent=1 // pred_check_branch
      %148 = sbr.rel (0) target = $region129
    $region128: #{gru_model_with_attention.1} parent=1 // pred_region
      _
    $region129: #{gru_model_with_attention.1} parent=1 // pred_fallthru
      _
    // Predicated region
    $region130: #{gru_model_with_attention.1} parent=1 // pred_check
      _
    $region131: #{gru_model_with_attention.1} parent=1 // pred_check_branch
      %150 = sbr.rel (0) target = $region133
    $region132: #{gru_model_with_attention.1} parent=1 // pred_region
      _
    $region133: #{gru_model_with_attention.1} parent=1 // pred_fallthru
      _
    // Predicated region
    $region134: #{gru_model_with_attention.1} parent=1 // pred_check
      _
    $region135: #{gru_model_with_attention.1} parent=1 // pred_check_branch
      %152 = sbr.rel (0) target = $region137
    $region136: #{gru_model_with_attention.1} parent=1 // pred_region
      _
    $region137: #{gru_model_with_attention.1} parent=1 // pred_fallthru
      _
    // Predicated region
    $region138: #{gru_model_with_attention.1} parent=1 // pred_check
      _
    $region139: #{gru_model_with_attention.1} parent=1 // pred_check_branch
      %154 = sbr.rel (0) target = $region141
    $region140: #{gru_model_with_attention.1} parent=1 // pred_region
      _
    $region141: #{gru_model_with_attention.1} parent=1 // pred_fallthru
      _
    // Predicated region
    $region142: #{gru_model_with_attention.1} parent=1 // pred_check
      _
    $region143: #{gru_model_with_attention.1} parent=1 // pred_check_branch
      %156 = sbr.rel (0) target = $region145
    $region144: #{gru_model_with_attention.1} parent=1 // pred_region
      _
    $region145: #{gru_model_with_attention.1} parent=1 // pred_fallthru
      _
    // Predicated region
    $region146: #{gru_model_with_attention.1} parent=1 // pred_check
      _
    $region147: #{gru_model_with_attention.1} parent=1 // pred_check_branch
      %158 = sbr.rel (0) target = $region149
    $region148: #{gru_model_with_attention.1} parent=1 // pred_region
      _
    $region149: #{gru_model_with_attention.1} parent=1 // pred_fallthru
      _
    // Predicated region
    $region150: #{gru_model_with_attention.1} parent=1 // pred_check
      _
    $region151: #{gru_model_with_attention.1} parent=1 // pred_check_branch
      %160 = sbr.rel (0) target = $region153
    $region152: #{gru_model_with_attention.1} parent=1 // pred_region
      _
    $region153: #{gru_model_with_attention.1} parent=1 // pred_fallthru
      _
    // Predicated region
    $region154: #{gru_model_with_attention.1} parent=1 // pred_check
      _
    $region155: #{gru_model_with_attention.1} parent=1 // pred_check_branch
      %162 = sbr.rel (0) target = $region157
    $region156: #{gru_model_with_attention.1} parent=1 // pred_region
      _
    $region157: #{gru_model_with_attention.1} parent=1 // pred_fallthru
      _
    %v163 = vld [vmem:[%s1] sm:$0xff]
    %v164 = vld [vmem:[%s1 + $0x8] sm:$0xff]
    %v165 = vld [vmem:[%s7] sm:$0xff]
    %v166 = vld [vmem:[%s7 + $0x8] sm:$0xff]
    %v167 = vld [vmem:[%s7 + $0x10] sm:$0xff]
    %v168 = vld [vmem:[%s7 + $0x18] sm:$0xff]
    %v169 = vld [vmem:[%s9] sm:$0xff]
    %v170 = vld [vmem:[%s9 + $0x8] sm:$0xff]
    %v171 = vld [vmem:[%s9 + $0x10] sm:$0xff]
    %v172 = vld [vmem:[%s9 + $0x18] sm:$0xff]
    %v173 = vld [vmem:[%s11] sm:$0xff]
    %v174 = vld [vmem:[%s11 + $0x8] sm:$0xff]
    %v175 = vld [vmem:[%s11 + $0x10] sm:$0xff]
    %v176 = vld [vmem:[%s11 + $0x18] sm:$0xff]
    %v177 = vld [vmem:[%s15] sm:$0x1]
    %v178 = vld [vmem:[%s5] sm:$0xf]
    %v179 = vld [vmem:[%s13] sm:$0x1]
    %v181 = vperm.slane %v179, 0
    %vm183 = vcmask 31744
    %v185 = vsel %vm183, %v163, 0
    %v188 = vsel %vm183, %v164, 0
    %vm190 = vcmask 1043456
    %v192 = vsel %vm190, %v178, 0
    %194 = vmatpush.msra.mxu0 0.0
    %195 = vmatpush.msra.mxu0 0.0
    %196 = vmatpush.msra.mxu0 0.0
    %197 = vmatpush.msra.mxu0 0.0
    %198 = vmatpush.msra.mxu0 0.0
    %199 = vmatpush.msra.mxu0 0.0
    %200 = vmatpush.msra.mxu0 0.0
    %201 = vmatpush.msra.mxu0 0.0
    %202 = vmatpush.msra.mxu0 0.0
    %203 = vmatpush.msra.mxu0 0.0
    %204 = vmatpush.msra.mxu0 0.0
    %205 = vmatpush.msra.mxu0 0.0
    %206 = vmatpush.msra.mxu0 0.0
    %207 = vmatpush.msra.mxu0 0.0
    %208 = vmatpush.msra.mxu0 0.0
    %209 = vmatpush.msra.mxu0 %v192
    %210 = vmatmul.f32.gmra.mxu0 %v185
    %v211 = vpop.f32.mrf.mxu0
    %v212 = vadd.f32 %v181, %v211
    %213 = vmatmul.f32.gmra.mxu0 %v188
    %v214 = vpop.f32.mrf.mxu0
    %v215 = vadd.f32 %v181, %v214
    %216 = vdwg.mxu0
    %v219 = vrot.slane %v212, 2
    %v220 = vrot.slane %v212, 4
    %v221 = vrot.slane %v212, 6
    %v222 = vrot.slane %v215, 2
    %v223 = vrot.slane %v215, 4
    %v224 = vrot.slane %v215, 6
    %v231 = vxor.u32 %v212, 2147483648
    %v232 = vmul.f32 %v231, 1.442695
    %v233 = vpow.pop %v232
    %v234 = vadd.f32 %v233, 1.0
    %v235 = vrcp.pop %v234
    %v236 = vmul.f32 %v234, %v235
    %v237 = vsub.f32 1.0, %v236
    %v238 = vmul.f32 %v235, %v237
    %v239 = vadd.f32 %v235, %v238
    %vm240 = vweird.f32 %v234
    %vm241 = vweird.f32 %v235
    %vm242 = vmor %vm240, %vm241
    %v243 = vsel %vm242, %v235, %v239
    %v244 = vand.u32 2147483647, %v234
    %vm245 = vcmp.eq.f32.partialorder %v244, 8.507059e+37
    %v246 = vand.u32 %v234, 2147483648
    %v247 = vor.u32 1.1754944e-38, %v246
    %v248 = vsel %vm245, %v247, %v243
    %v249 = vmul.f32 1.0, %v248
    %v251 = vperm.slane %v177, 0
    %v253 = vmul.f32 %v249, %v251
    %255 = vrot.lane.b32.xlu0 %v253, 64
    %v256 = vpop.permute.xlu0 %255
    %v258 = vadd.f32 %v212, %v256
    %v259 = vtanh.pop %v258
    %v260 = vsub.f32 1.0, %v249
    %262 = vrot.lane.b32.xlu0 %v259, 96
    %v263 = vpop.permute.xlu0 %262
    %v265 = vmul.f32 %v260, %v263
    %267 = vst [vmem:[#allocation1] ss:$4 sm:$0xff] %v265
    %v268 = vld.sshfl [vmem:[#allocation1] sm:$0xff pattern:$0x73625140]
    %269 = vrot.lane.b32.xlu0 %v268, 96
    %v270 = vpop.permute.xlu0 %269
    %vm271 = vcmask 261120
    %v272 = vsel %vm271, %v270, 0
    %274 = vmatpush.msra.mxu0 0.0
    %275 = vmatpush.msra.mxu0 0.0
    %276 = vmatpush.msra.mxu0 0.0
    %277 = vmatpush.msra.mxu0 0.0
    %278 = vmatpush.msra.mxu0 0.0
    %279 = vmatpush.msra.mxu0 0.0
    %280 = vmatpush.msra.mxu0 0.0
    %281 = vmatpush.msra.mxu0 0.0
    %282 = vmatpush.msra.mxu0 0.0
    %283 = vmatpush.msra.mxu0 0.0
    %284 = vmatpush.msra.mxu0 0.0
    %285 = vmatpush.msra.mxu0 0.0
    %286 = vmatpush.msra.mxu0 %v168
    %287 = vmatpush.msra.mxu0 %v167
    %288 = vmatpush.msra.mxu0 %v166
    %289 = vmatpush.msra.mxu0 %v165
    %290 = vmatmul.f32.gmra.mxu0 %v272
    %v291 = vpop.f32.mrf.mxu0
    %v292 = vadd.f32 0.0, %v291
    %293 = vdwg.mxu0
    %294 = vst [vmem:[#allocation1] ss:$4 sm:$0xff] %v265
    %v295 = vld.sshfl [vmem:[#allocation1] sm:$0xff pattern:$0x73625140]
    %296 = vrot.lane.b32.xlu0 %v295, 96
    %v297 = vpop.permute.xlu0 %296
    %v298 = vsel %vm271, %v297, 0
    %300 = vmatpush.msra.mxu0 0.0
    %301 = vmatpush.msra.mxu0 0.0
    %302 = vmatpush.msra.mxu0 0.0
    %303 = vmatpush.msra.mxu0 0.0
    %304 = vmatpush.msra.mxu0 0.0
    %305 = vmatpush.msra.mxu0 0.0
    %306 = vmatpush.msra.mxu0 0.0
    %307 = vmatpush.msra.mxu0 0.0
    %308 = vmatpush.msra.mxu0 0.0
    %309 = vmatpush.msra.mxu0 0.0
    %310 = vmatpush.msra.mxu0 0.0
    %311 = vmatpush.msra.mxu0 0.0
    %312 = vmatpush.msra.mxu0 %v172
    %313 = vmatpush.msra.mxu0 %v171
    %314 = vmatpush.msra.mxu0 %v170
    %315 = vmatpush.msra.mxu0 %v169
    %316 = vmatmul.f32.gmra.mxu0 %v298
    %v317 = vpop.f32.mrf.mxu0
    %v318 = vadd.f32 0.0, %v317
    %319 = vdwg.mxu0
    %v320 = vadd.f32 %v219, %v292
    %v321 = vxor.u32 %v320, 2147483648
    %v322 = vmul.f32 %v321, 1.442695
    %v323 = vpow.pop %v322
    %v324 = vadd.f32 %v323, 1.0
    %v325 = vrcp.pop %v324
    %v326 = vmul.f32 %v324, %v325
    %v327 = vsub.f32 1.0, %v326
    %v328 = vmul.f32 %v325, %v327
    %v329 = vadd.f32 %v325, %v328
    %vm330 = vweird.f32 %v324
    %vm331 = vweird.f32 %v325
    %vm332 = vmor %vm330, %vm331
    %v333 = vsel %vm332, %v325, %v329
    %v334 = vand.u32 2147483647, %v324
    %vm335 = vcmp.eq.f32.partialorder %v334, 8.507059e+37
    %v336 = vand.u32 %v324, 2147483648
    %v337 = vor.u32 1.1754944e-38, %v336
    %v338 = vsel %vm335, %v337, %v333
    %v339 = vmul.f32 1.0, %v338
    %341 = vrot.lane.b32.xlu0 %v318, 32
    %v342 = vpop.permute.xlu0 %341
    %v344 = vadd.f32 %v219, %v342
    %v345 = vxor.u32 %v344, 2147483648
    %v346 = vmul.f32 %v345, 1.442695
    %v347 = vpow.pop %v346
    %v348 = vadd.f32 %v347, 1.0
    %v349 = vrcp.pop %v348
    %v350 = vmul.f32 %v348, %v349
    %v351 = vsub.f32 1.0, %v350
    %v352 = vmul.f32 %v349, %v351
    %v353 = vadd.f32 %v349, %v352
    %vm354 = vweird.f32 %v348
    %vm355 = vweird.f32 %v349
    %vm356 = vmor %vm354, %vm355
    %v357 = vsel %vm356, %v349, %v353
    %v358 = vand.u32 2147483647, %v348
    %vm359 = vcmp.eq.f32.partialorder %v358, 8.507059e+37
    %v360 = vand.u32 %v348, 2147483648
    %v361 = vor.u32 1.1754944e-38, %v360
    %v362 = vsel %vm359, %v361, %v357
    %v363 = vmul.f32 1.0, %v362
    %364 = vst [vmem:[#allocation1] ss:$4 sm:$0xff] %v265
    %v365 = vld.sshfl [vmem:[#allocation1] sm:$0xff pattern:$0x73625140]
    %366 = vrot.lane.b32.xlu0 %v365, 96
    %v367 = vpop.permute.xlu0 %366
    %v368 = vsel %vm271, %v367, 0
    %370 = vmatpush.msra.mxu0 0.0
    %371 = vmatpush.msra.mxu0 0.0
    %372 = vmatpush.msra.mxu0 0.0
    %373 = vmatpush.msra.mxu0 0.0
    %374 = vmatpush.msra.mxu0 0.0
    %375 = vmatpush.msra.mxu0 0.0
    %376 = vmatpush.msra.mxu0 0.0
    %377 = vmatpush.msra.mxu0 0.0
    %378 = vmatpush.msra.mxu0 0.0
    %379 = vmatpush.msra.mxu0 0.0
    %380 = vmatpush.msra.mxu0 0.0
    %381 = vmatpush.msra.mxu0 0.0
    %382 = vmatpush.msra.mxu0 %v176
    %383 = vmatpush.msra.mxu0 %v175
    %384 = vmatpush.msra.mxu0 %v174
    %385 = vmatpush.msra.mxu0 %v173
    %386 = vmatmul.f32.gmra.mxu0 %v368
    %v387 = vpop.f32.mrf.mxu0
    %v388 = vadd.f32 %v251, %v387
    %389 = vdwg.mxu0
    %v390 = vmul.f32 %v339, %v388
    %392 = vrot.lane.b32.xlu0 %v390, 64
    %v393 = vpop.permute.xlu0 %392
    %v395 = vadd.f32 %v219, %v393
    %v396 = vtanh.pop %v395
    %v397 = vsub.f32 1.0, %v363
    %399 = vrot.lane.b32.xlu0 %v396, 96
    %v400 = vpop.permute.xlu0 %399
    %v402 = vmul.f32 %v397, %v400
    %v403 = vmul.f32 %v363, %v265
    %v404 = vadd.f32 %v402, %v403
    %406 = vst [vmem:[#allocation1] ss:$4 sm:$0xff] %v404
    %v407 = vld.sshfl [vmem:[#allocation1] sm:$0xff pattern:$0x73625140]
    %408 = vrot.lane.b32.xlu0 %v407, 96
    %v409 = vpop.permute.xlu0 %408
    %v410 = vsel %vm271, %v409, 0
    %412 = vmatpush.msra.mxu0 0.0
    %413 = vmatpush.msra.mxu0 0.0
    %414 = vmatpush.msra.mxu0 0.0
    %415 = vmatpush.msra.mxu0 0.0
    %416 = vmatpush.msra.mxu0 0.0
    %417 = vmatpush.msra.mxu0 0.0
    %418 = vmatpush.msra.mxu0 0.0
    %419 = vmatpush.msra.mxu0 0.0
    %420 = vmatpush.msra.mxu0 0.0
    %421 = vmatpush.msra.mxu0 0.0
    %422 = vmatpush.msra.mxu0 0.0
    %423 = vmatpush.msra.mxu0 0.0
    %424 = vmatpush.msra.mxu0 %v168
    %425 = vmatpush.msra.mxu0 %v167
    %426 = vmatpush.msra.mxu0 %v166
    %427 = vmatpush.msra.mxu0 %v165
    %428 = vmatmul.f32.gmra.mxu0 %v410
    %v429 = vpop.f32.mrf.mxu0
    %v430 = vadd.f32 0.0, %v429
    %431 = vdwg.mxu0
    %432 = vst [vmem:[#allocation1] ss:$4 sm:$0xff] %v404
    %v433 = vld.sshfl [vmem:[#allocation1] sm:$0xff pattern:$0x73625140]
    %434 = vrot.lane.b32.xlu0 %v433, 96
    %v435 = vpop.permute.xlu0 %434
    %v436 = vsel %vm271, %v435, 0
    %438 = vmatpush.msra.mxu0 0.0
    %439 = vmatpush.msra.mxu0 0.0
    %440 = vmatpush.msra.mxu0 0.0
    %441 = vmatpush.msra.mxu0 0.0
    %442 = vmatpush.msra.mxu0 0.0
    %443 = vmatpush.msra.mxu0 0.0
    %444 = vmatpush.msra.mxu0 0.0
    %445 = vmatpush.msra.mxu0 0.0
    %446 = vmatpush.msra.mxu0 0.0
    %447 = vmatpush.msra.mxu0 0.0
    %448 = vmatpush.msra.mxu0 0.0
    %449 = vmatpush.msra.mxu0 0.0
    %450 = vmatpush.msra.mxu0 %v172
    %451 = vmatpush.msra.mxu0 %v171
    %452 = vmatpush.msra.mxu0 %v170
    %453 = vmatpush.msra.mxu0 %v169
    %454 = vmatmul.f32.gmra.mxu0 %v436
    %v455 = vpop.f32.mrf.mxu0
    %v456 = vadd.f32 0.0, %v455
    %457 = vdwg.mxu0
    %v458 = vadd.f32 %v220, %v430
    %v459 = vxor.u32 %v458, 2147483648
    %v460 = vmul.f32 %v459, 1.442695
    %v461 = vpow.pop %v460
    %v462 = vadd.f32 %v461, 1.0
    %v463 = vrcp.pop %v462
    %v464 = vmul.f32 %v462, %v463
    %v465 = vsub.f32 1.0, %v464
    %v466 = vmul.f32 %v463, %v465
    %v467 = vadd.f32 %v463, %v466
    %vm468 = vweird.f32 %v462
    %vm469 = vweird.f32 %v463
    %vm470 = vmor %vm468, %vm469
    %v471 = vsel %vm470, %v463, %v467
    %v472 = vand.u32 2147483647, %v462
    %vm473 = vcmp.eq.f32.partialorder %v472, 8.507059e+37
    %v474 = vand.u32 %v462, 2147483648
    %v475 = vor.u32 1.1754944e-38, %v474
    %v476 = vsel %vm473, %v475, %v471
    %v477 = vmul.f32 1.0, %v476
    %479 = vrot.lane.b32.xlu0 %v456, 32
    %v480 = vpop.permute.xlu0 %479
    %v482 = vadd.f32 %v220, %v480
    %v483 = vxor.u32 %v482, 2147483648
    %v484 = vmul.f32 %v483, 1.442695
    %v485 = vpow.pop %v484
    %v486 = vadd.f32 %v485, 1.0
    %v487 = vrcp.pop %v486
    %v488 = vmul.f32 %v486, %v487
    %v489 = vsub.f32 1.0, %v488
    %v490 = vmul.f32 %v487, %v489
    %v491 = vadd.f32 %v487, %v490
    %vm492 = vweird.f32 %v486
    %vm493 = vweird.f32 %v487
    %vm494 = vmor %vm492, %vm493
    %v495 = vsel %vm494, %v487, %v491
    %v496 = vand.u32 2147483647, %v486
    %vm497 = vcmp.eq.f32.partialorder %v496, 8.507059e+37
    %v498 = vand.u32 %v486, 2147483648
    %v499 = vor.u32 1.1754944e-38, %v498
    %v500 = vsel %vm497, %v499, %v495
    %v501 = vmul.f32 1.0, %v500
    %502 = vst [vmem:[#allocation1] ss:$4 sm:$0xff] %v404
    %v503 = vld.sshfl [vmem:[#allocation1] sm:$0xff pattern:$0x73625140]
    %504 = vrot.lane.b32.xlu0 %v503, 96
    %v505 = vpop.permute.xlu0 %504
    %v506 = vsel %vm271, %v505, 0
    %508 = vmatpush.msra.mxu0 0.0
    %509 = vmatpush.msra.mxu0 0.0
    %510 = vmatpush.msra.mxu0 0.0
    %511 = vmatpush.msra.mxu0 0.0
    %512 = vmatpush.msra.mxu0 0.0
    %513 = vmatpush.msra.mxu0 0.0
    %514 = vmatpush.msra.mxu0 0.0
    %515 = vmatpush.msra.mxu0 0.0
    %516 = vmatpush.msra.mxu0 0.0
    %517 = vmatpush.msra.mxu0 0.0
    %518 = vmatpush.msra.mxu0 0.0
    %519 = vmatpush.msra.mxu0 0.0
    %520 = vmatpush.msra.mxu0 %v176
    %521 = vmatpush.msra.mxu0 %v175
    %522 = vmatpush.msra.mxu0 %v174
    %523 = vmatpush.msra.mxu0 %v173
    %524 = vmatmul.f32.gmra.mxu0 %v506
    %v525 = vpop.f32.mrf.mxu0
    %v526 = vadd.f32 %v251, %v525
    %527 = vdwg.mxu0
    %v528 = vmul.f32 %v477, %v526
    %530 = vrot.lane.b32.xlu0 %v528, 64
    %v531 = vpop.permute.xlu0 %530
    %v533 = vadd.f32 %v220, %v531
    %v534 = vtanh.pop %v533
    %v535 = vsub.f32 1.0, %v501
    %537 = vrot.lane.b32.xlu0 %v534, 96
    %v538 = vpop.permute.xlu0 %537
    %v540 = vmul.f32 %v535, %v538
    %v541 = vmul.f32 %v501, %v404
    %v542 = vadd.f32 %v540, %v541
    %544 = vst [vmem:[#allocation1] ss:$4 sm:$0xff] %v542
    %v545 = vld.sshfl [vmem:[#allocation1] sm:$0xff pattern:$0x73625140]
    %546 = vrot.lane.b32.xlu0 %v545, 96
    %v547 = vpop.permute.xlu0 %546
    %v548 = vsel %vm271, %v547, 0
    %550 = vmatpush.msra.mxu0 0.0
    %551 = vmatpush.msra.mxu0 0.0
    %552 = vmatpush.msra.mxu0 0.0
    %553 = vmatpush.msra.mxu0 0.0
    %554 = vmatpush.msra.mxu0 0.0
    %555 = vmatpush.msra.mxu0 0.0
    %556 = vmatpush.msra.mxu0 0.0
    %557 = vmatpush.msra.mxu0 0.0
    %558 = vmatpush.msra.mxu0 0.0
    %559 = vmatpush.msra.mxu0 0.0
    %560 = vmatpush.msra.mxu0 0.0
    %561 = vmatpush.msra.mxu0 0.0
    %562 = vmatpush.msra.mxu0 %v168
    %563 = vmatpush.msra.mxu0 %v167
    %564 = vmatpush.msra.mxu0 %v166
    %565 = vmatpush.msra.mxu0 %v165
    %566 = vmatmul.f32.gmra.mxu0 %v548
    %v567 = vpop.f32.mrf.mxu0
    %v568 = vadd.f32 0.0, %v567
    %569 = vdwg.mxu0
    %570 = vst [vmem:[#allocation1] ss:$4 sm:$0xff] %v542
    %v571 = vld.sshfl [vmem:[#allocation1] sm:$0xff pattern:$0x73625140]
    %572 = vrot.lane.b32.xlu0 %v571, 96
    %v573 = vpop.permute.xlu0 %572
    %v574 = vsel %vm271, %v573, 0
    %576 = vmatpush.msra.mxu0 0.0
    %577 = vmatpush.msra.mxu0 0.0
    %578 = vmatpush.msra.mxu0 0.0
    %579 = vmatpush.msra.mxu0 0.0
    %580 = vmatpush.msra.mxu0 0.0
    %581 = vmatpush.msra.mxu0 0.0
    %582 = vmatpush.msra.mxu0 0.0
    %583 = vmatpush.msra.mxu0 0.0
    %584 = vmatpush.msra.mxu0 0.0
    %585 = vmatpush.msra.mxu0 0.0
    %586 = vmatpush.msra.mxu0 0.0
    %587 = vmatpush.msra.mxu0 0.0
    %588 = vmatpush.msra.mxu0 %v172
    %589 = vmatpush.msra.mxu0 %v171
    %590 = vmatpush.msra.mxu0 %v170
    %591 = vmatpush.msra.mxu0 %v169
    %592 = vmatmul.f32.gmra.mxu0 %v574
    %v593 = vpop.f32.mrf.mxu0
    %v594 = vadd.f32 0.0, %v593
    %595 = vdwg.mxu0
    %v596 = vadd.f32 %v221, %v568
    %v597 = vxor.u32 %v596, 2147483648
    %v598 = vmul.f32 %v597, 1.442695
    %v599 = vpow.pop %v598
    %v600 = vadd.f32 %v599, 1.0
    %v601 = vrcp.pop %v600
    %v602 = vmul.f32 %v600, %v601
    %v603 = vsub.f32 1.0, %v602
    %v604 = vmul.f32 %v601, %v603
    %v605 = vadd.f32 %v601, %v604
    %vm606 = vweird.f32 %v600
    %vm607 = vweird.f32 %v601
    %vm608 = vmor %vm606, %vm607
    %v609 = vsel %vm608, %v601, %v605
    %v610 = vand.u32 2147483647, %v600
    %vm611 = vcmp.eq.f32.partialorder %v610, 8.507059e+37
    %v612 = vand.u32 %v600, 2147483648
    %v613 = vor.u32 1.1754944e-38, %v612
    %v614 = vsel %vm611, %v613, %v609
    %v615 = vmul.f32 1.0, %v614
    %617 = vrot.lane.b32.xlu0 %v594, 32
    %v618 = vpop.permute.xlu0 %617
    %v620 = vadd.f32 %v221, %v618
    %v621 = vxor.u32 %v620, 2147483648
    %v622 = vmul.f32 %v621, 1.442695
    %v623 = vpow.pop %v622
    %v624 = vadd.f32 %v623, 1.0
    %v625 = vrcp.pop %v624
    %v626 = vmul.f32 %v624, %v625
    %v627 = vsub.f32 1.0, %v626
    %v628 = vmul.f32 %v625, %v627
    %v629 = vadd.f32 %v625, %v628
    %vm630 = vweird.f32 %v624
    %vm631 = vweird.f32 %v625
    %vm632 = vmor %vm630, %vm631
    %v633 = vsel %vm632, %v625, %v629
    %v634 = vand.u32 2147483647, %v624
    %vm635 = vcmp.eq.f32.partialorder %v634, 8.507059e+37
    %v636 = vand.u32 %v624, 2147483648
    %v637 = vor.u32 1.1754944e-38, %v636
    %v638 = vsel %vm635, %v637, %v633
    %v639 = vmul.f32 1.0, %v638
    %640 = vst [vmem:[#allocation1] ss:$4 sm:$0xff] %v542
    %v641 = vld.sshfl [vmem:[#allocation1] sm:$0xff pattern:$0x73625140]
    %642 = vrot.lane.b32.xlu0 %v641, 96
    %v643 = vpop.permute.xlu0 %642
    %v644 = vsel %vm271, %v643, 0
    %646 = vmatpush.msra.mxu0 0.0
    %647 = vmatpush.msra.mxu0 0.0
    %648 = vmatpush.msra.mxu0 0.0
    %649 = vmatpush.msra.mxu0 0.0
    %650 = vmatpush.msra.mxu0 0.0
    %651 = vmatpush.msra.mxu0 0.0
    %652 = vmatpush.msra.mxu0 0.0
    %653 = vmatpush.msra.mxu0 0.0
    %654 = vmatpush.msra.mxu0 0.0
    %655 = vmatpush.msra.mxu0 0.0
    %656 = vmatpush.msra.mxu0 0.0
    %657 = vmatpush.msra.mxu0 0.0
    %658 = vmatpush.msra.mxu0 %v176
    %659 = vmatpush.msra.mxu0 %v175
    %660 = vmatpush.msra.mxu0 %v174
    %661 = vmatpush.msra.mxu0 %v173
    %662 = vmatmul.f32.gmra.mxu0 %v644
    %v663 = vpop.f32.mrf.mxu0
    %v664 = vadd.f32 %v251, %v663
    %665 = vdwg.mxu0
    %v666 = vmul.f32 %v615, %v664
    %668 = vrot.lane.b32.xlu0 %v666, 64
    %v669 = vpop.permute.xlu0 %668
    %v671 = vadd.f32 %v221, %v669
    %v672 = vtanh.pop %v671
    %v673 = vsub.f32 1.0, %v639
    %675 = vrot.lane.b32.xlu0 %v672, 96
    %v676 = vpop.permute.xlu0 %675
    %v678 = vmul.f32 %v673, %v676
    %v679 = vmul.f32 %v639, %v542
    %v680 = vadd.f32 %v678, %v679
    %682 = vst [vmem:[#allocation1] ss:$4 sm:$0xff] %v680
    %v683 = vld.sshfl [vmem:[#allocation1] sm:$0xff pattern:$0x73625140]
    %684 = vrot.lane.b32.xlu0 %v683, 96
    %v685 = vpop.permute.xlu0 %684
    %v686 = vsel %vm271, %v685, 0
    %688 = vmatpush.msra.mxu0 0.0
    %689 = vmatpush.msra.mxu0 0.0
    %690 = vmatpush.msra.mxu0 0.0
    %691 = vmatpush.msra.mxu0 0.0
    %692 = vmatpush.msra.mxu0 0.0
    %693 = vmatpush.msra.mxu0 0.0
    %694 = vmatpush.msra.mxu0 0.0
    %695 = vmatpush.msra.mxu0 0.0
    %696 = vmatpush.msra.mxu0 0.0
    %697 = vmatpush.msra.mxu0 0.0
    %698 = vmatpush.msra.mxu0 0.0
    %699 = vmatpush.msra.mxu0 0.0
    %700 = vmatpush.msra.mxu0 %v168
    %701 = vmatpush.msra.mxu0 %v167
    %702 = vmatpush.msra.mxu0 %v166
    %703 = vmatpush.msra.mxu0 %v165
    %704 = vmatmul.f32.gmra.mxu0 %v686
    %v705 = vpop.f32.mrf.mxu0
    %v706 = vadd.f32 0.0, %v705
    %707 = vdwg.mxu0
    %708 = vst [vmem:[#allocation1] ss:$4 sm:$0xff] %v680
    %v709 = vld.sshfl [vmem:[#allocation1] sm:$0xff pattern:$0x73625140]
    %710 = vrot.lane.b32.xlu0 %v709, 96
    %v711 = vpop.permute.xlu0 %710
    %v712 = vsel %vm271, %v711, 0
    %714 = vmatpush.msra.mxu0 0.0
    %715 = vmatpush.msra.mxu0 0.0
    %716 = vmatpush.msra.mxu0 0.0
    %717 = vmatpush.msra.mxu0 0.0
    %718 = vmatpush.msra.mxu0 0.0
    %719 = vmatpush.msra.mxu0 0.0
    %720 = vmatpush.msra.mxu0 0.0
    %721 = vmatpush.msra.mxu0 0.0
    %722 = vmatpush.msra.mxu0 0.0
    %723 = vmatpush.msra.mxu0 0.0
    %724 = vmatpush.msra.mxu0 0.0
    %725 = vmatpush.msra.mxu0 0.0
    %726 = vmatpush.msra.mxu0 %v172
    %727 = vmatpush.msra.mxu0 %v171
    %728 = vmatpush.msra.mxu0 %v170
    %729 = vmatpush.msra.mxu0 %v169
    %730 = vmatmul.f32.gmra.mxu0 %v712
    %v731 = vpop.f32.mrf.mxu0
    %v732 = vadd.f32 0.0, %v731
    %733 = vdwg.mxu0
    %v734 = vadd.f32 %v215, %v706
    %v735 = vxor.u32 %v734, 2147483648
    %v736 = vmul.f32 %v735, 1.442695
    %v737 = vpow.pop %v736
    %v738 = vadd.f32 %v737, 1.0
    %v739 = vrcp.pop %v738
    %v740 = vmul.f32 %v738, %v739
    %v741 = vsub.f32 1.0, %v740
    %v742 = vmul.f32 %v739, %v741
    %v743 = vadd.f32 %v739, %v742
    %vm744 = vweird.f32 %v738
    %vm745 = vweird.f32 %v739
    %vm746 = vmor %vm744, %vm745
    %v747 = vsel %vm746, %v739, %v743
    %v748 = vand.u32 2147483647, %v738
    %vm749 = vcmp.eq.f32.partialorder %v748, 8.507059e+37
    %v750 = vand.u32 %v738, 2147483648
    %v751 = vor.u32 1.1754944e-38, %v750
    %v752 = vsel %vm749, %v751, %v747
    %v753 = vmul.f32 1.0, %v752
    %755 = vrot.lane.b32.xlu0 %v732, 32
    %v756 = vpop.permute.xlu0 %755
    %v758 = vadd.f32 %v215, %v756
    %v759 = vxor.u32 %v758, 2147483648
    %v760 = vmul.f32 %v759, 1.442695
    %v761 = vpow.pop %v760
    %v762 = vadd.f32 %v761, 1.0
    %v763 = vrcp.pop %v762
    %v764 = vmul.f32 %v762, %v763
    %v765 = vsub.f32 1.0, %v764
    %v766 = vmul.f32 %v763, %v765
    %v767 = vadd.f32 %v763, %v766
    %vm768 = vweird.f32 %v762
    %vm769 = vweird.f32 %v763
    %vm770 = vmor %vm768, %vm769
    %v771 = vsel %vm770, %v763, %v767
    %v772 = vand.u32 2147483647, %v762
    %vm773 = vcmp.eq.f32.partialorder %v772, 8.507059e+37
    %v774 = vand.u32 %v762, 2147483648
    %v775 = vor.u32 1.1754944e-38, %v774
    %v776 = vsel %vm773, %v775, %v771
    %v777 = vmul.f32 1.0, %v776
    %778 = vst [vmem:[#allocation1] ss:$4 sm:$0xff] %v680
    %v779 = vld.sshfl [vmem:[#allocation1] sm:$0xff pattern:$0x73625140]
    %780 = vrot.lane.b32.xlu0 %v779, 96
    %v781 = vpop.permute.xlu0 %780
    %v782 = vsel %vm271, %v781, 0
    %784 = vmatpush.msra.mxu0 0.0
    %785 = vmatpush.msra.mxu0 0.0
    %786 = vmatpush.msra.mxu0 0.0
    %787 = vmatpush.msra.mxu0 0.0
    %788 = vmatpush.msra.mxu0 0.0
    %789 = vmatpush.msra.mxu0 0.0
    %790 = vmatpush.msra.mxu0 0.0
    %791 = vmatpush.msra.mxu0 0.0
    %792 = vmatpush.msra.mxu0 0.0
    %793 = vmatpush.msra.mxu0 0.0
    %794 = vmatpush.msra.mxu0 0.0
    %795 = vmatpush.msra.mxu0 0.0
    %796 = vmatpush.msra.mxu0 %v176
    %797 = vmatpush.msra.mxu0 %v175
    %798 = vmatpush.msra.mxu0 %v174
    %799 = vmatpush.msra.mxu0 %v173
    %800 = vmatmul.f32.gmra.mxu0 %v782
    %v801 = vpop.f32.mrf.mxu0
    %v802 = vadd.f32 %v251, %v801
    %803 = vdwg.mxu0
    %v804 = vmul.f32 %v753, %v802
    %806 = vrot.lane.b32.xlu0 %v804, 64
    %v807 = vpop.permute.xlu0 %806
    %v809 = vadd.f32 %v215, %v807
    %v810 = vtanh.pop %v809
    %v811 = vsub.f32 1.0, %v777
    %813 = vrot.lane.b32.xlu0 %v810, 96
    %v814 = vpop.permute.xlu0 %813
    %v816 = vmul.f32 %v811, %v814
    %v817 = vmul.f32 %v777, %v680
    %v818 = vadd.f32 %v816, %v817
    %820 = vst [vmem:[#allocation1] ss:$4 sm:$0xff] %v818
    %v821 = vld.sshfl [vmem:[#allocation1] sm:$0xff pattern:$0x73625140]
    %822 = vrot.lane.b32.xlu0 %v821, 96
    %v823 = vpop.permute.xlu0 %822
    %v824 = vsel %vm271, %v823, 0
    %826 = vmatpush.msra.mxu0 0.0
    %827 = vmatpush.msra.mxu0 0.0
    %828 = vmatpush.msra.mxu0 0.0
    %829 = vmatpush.msra.mxu0 0.0
    %830 = vmatpush.msra.mxu0 0.0
    %831 = vmatpush.msra.mxu0 0.0
    %832 = vmatpush.msra.mxu0 0.0
    %833 = vmatpush.msra.mxu0 0.0
    %834 = vmatpush.msra.mxu0 0.0
    %835 = vmatpush.msra.mxu0 0.0
    %836 = vmatpush.msra.mxu0 0.0
    %837 = vmatpush.msra.mxu0 0.0
    %838 = vmatpush.msra.mxu0 %v168
    %839 = vmatpush.msra.mxu0 %v167
    %840 = vmatpush.msra.mxu0 %v166
    %841 = vmatpush.msra.mxu0 %v165
    %842 = vmatmul.f32.gmra.mxu0 %v824
    %v843 = vpop.f32.mrf.mxu0
    %v844 = vadd.f32 0.0, %v843
    %845 = vdwg.mxu0
    %846 = vst [vmem:[#allocation1] ss:$4 sm:$0xff] %v818
    %v847 = vld.sshfl [vmem:[#allocation1] sm:$0xff pattern:$0x73625140]
    %848 = vrot.lane.b32.xlu0 %v847, 96
    %v849 = vpop.permute.xlu0 %848
    %v850 = vsel %vm271, %v849, 0
    %852 = vmatpush.msra.mxu0 0.0
    %853 = vmatpush.msra.mxu0 0.0
    %854 = vmatpush.msra.mxu0 0.0
    %855 = vmatpush.msra.mxu0 0.0
    %856 = vmatpush.msra.mxu0 0.0
    %857 = vmatpush.msra.mxu0 0.0
    %858 = vmatpush.msra.mxu0 0.0
    %859 = vmatpush.msra.mxu0 0.0
    %860 = vmatpush.msra.mxu0 0.0
    %861 = vmatpush.msra.mxu0 0.0
    %862 = vmatpush.msra.mxu0 0.0
    %863 = vmatpush.msra.mxu0 0.0
    %864 = vmatpush.msra.mxu0 %v172
    %865 = vmatpush.msra.mxu0 %v171
    %866 = vmatpush.msra.mxu0 %v170
    %867 = vmatpush.msra.mxu0 %v169
    %868 = vmatmul.f32.gmra.mxu0 %v850
    %v869 = vpop.f32.mrf.mxu0
    %v870 = vadd.f32 0.0, %v869
    %871 = vdwg.mxu0
    %v872 = vadd.f32 %v222, %v844
    %v873 = vxor.u32 %v872, 2147483648
    %v874 = vmul.f32 %v873, 1.442695
    %v875 = vpow.pop %v874
    %v876 = vadd.f32 %v875, 1.0
    %v877 = vrcp.pop %v876
    %v878 = vmul.f32 %v876, %v877
    %v879 = vsub.f32 1.0, %v878
    %v880 = vmul.f32 %v877, %v879
    %v881 = vadd.f32 %v877, %v880
    %vm882 = vweird.f32 %v876
    %vm883 = vweird.f32 %v877
    %vm884 = vmor %vm882, %vm883
    %v885 = vsel %vm884, %v877, %v881
    %v886 = vand.u32 2147483647, %v876
    %vm887 = vcmp.eq.f32.partialorder %v886, 8.507059e+37
    %v888 = vand.u32 %v876, 2147483648
    %v889 = vor.u32 1.1754944e-38, %v888
    %v890 = vsel %vm887, %v889, %v885
    %v891 = vmul.f32 1.0, %v890
    %893 = vrot.lane.b32.xlu0 %v870, 32
    %v894 = vpop.permute.xlu0 %893
    %v896 = vadd.f32 %v222, %v894
    %v897 = vxor.u32 %v896, 2147483648
    %v898 = vmul.f32 %v897, 1.442695
    %v899 = vpow.pop %v898
    %v900 = vadd.f32 %v899, 1.0
    %v901 = vrcp.pop %v900
    %v902 = vmul.f32 %v900, %v901
    %v903 = vsub.f32 1.0, %v902
    %v904 = vmul.f32 %v901, %v903
    %v905 = vadd.f32 %v901, %v904
    %vm906 = vweird.f32 %v900
    %vm907 = vweird.f32 %v901
    %vm908 = vmor %vm906, %vm907
    %v909 = vsel %vm908, %v901, %v905
    %v910 = vand.u32 2147483647, %v900
    %vm911 = vcmp.eq.f32.partialorder %v910, 8.507059e+37
    %v912 = vand.u32 %v900, 2147483648
    %v913 = vor.u32 1.1754944e-38, %v912
    %v914 = vsel %vm911, %v913, %v909
    %v915 = vmul.f32 1.0, %v914
    %916 = vst [vmem:[#allocation1] ss:$4 sm:$0xff] %v818
    %v917 = vld.sshfl [vmem:[#allocation1] sm:$0xff pattern:$0x73625140]
    %918 = vrot.lane.b32.xlu0 %v917, 96
    %v919 = vpop.permute.xlu0 %918
    %v920 = vsel %vm271, %v919, 0
    %922 = vmatpush.msra.mxu0 0.0
    %923 = vmatpush.msra.mxu0 0.0
    %924 = vmatpush.msra.mxu0 0.0
    %925 = vmatpush.msra.mxu0 0.0
    %926 = vmatpush.msra.mxu0 0.0
    %927 = vmatpush.msra.mxu0 0.0
    %928 = vmatpush.msra.mxu0 0.0
    %929 = vmatpush.msra.mxu0 0.0
    %930 = vmatpush.msra.mxu0 0.0
    %931 = vmatpush.msra.mxu0 0.0
    %932 = vmatpush.msra.mxu0 0.0
    %933 = vmatpush.msra.mxu0 0.0
    %934 = vmatpush.msra.mxu0 %v176
    %935 = vmatpush.msra.mxu0 %v175
    %936 = vmatpush.msra.mxu0 %v174
    %937 = vmatpush.msra.mxu0 %v173
    %938 = vmatmul.f32.gmra.mxu0 %v920
    %v939 = vpop.f32.mrf.mxu0
    %v940 = vadd.f32 %v251, %v939
    %941 = vdwg.mxu0
    %v942 = vmul.f32 %v891, %v940
    %944 = vrot.lane.b32.xlu0 %v942, 64
    %v945 = vpop.permute.xlu0 %944
    %v947 = vadd.f32 %v222, %v945
    %v948 = vtanh.pop %v947
    %v949 = vsub.f32 1.0, %v915
    %951 = vrot.lane.b32.xlu0 %v948, 96
    %v952 = vpop.permute.xlu0 %951
    %v954 = vmul.f32 %v949, %v952
    %v955 = vmul.f32 %v915, %v818
    %v956 = vadd.f32 %v954, %v955
    %958 = vst [vmem:[#allocation1] ss:$4 sm:$0xff] %v956
    %v959 = vld.sshfl [vmem:[#allocation1] sm:$0xff pattern:$0x73625140]
    %960 = vrot.lane.b32.xlu0 %v959, 96
    %v961 = vpop.permute.xlu0 %960
    %v962 = vsel %vm271, %v961, 0
    %964 = vmatpush.msra.mxu0 0.0
    %965 = vmatpush.msra.mxu0 0.0
    %966 = vmatpush.msra.mxu0 0.0
    %967 = vmatpush.msra.mxu0 0.0
    %968 = vmatpush.msra.mxu0 0.0
    %969 = vmatpush.msra.mxu0 0.0
    %970 = vmatpush.msra.mxu0 0.0
    %971 = vmatpush.msra.mxu0 0.0
    %972 = vmatpush.msra.mxu0 0.0
    %973 = vmatpush.msra.mxu0 0.0
    %974 = vmatpush.msra.mxu0 0.0
    %975 = vmatpush.msra.mxu0 0.0
    %976 = vmatpush.msra.mxu0 %v168
    %977 = vmatpush.msra.mxu0 %v167
    %978 = vmatpush.msra.mxu0 %v166
    %979 = vmatpush.msra.mxu0 %v165
    %980 = vmatmul.f32.gmra.mxu0 %v962
    %v981 = vpop.f32.mrf.mxu0
    %v982 = vadd.f32 0.0, %v981
    %983 = vdwg.mxu0
    %984 = vst [vmem:[#allocation1] ss:$4 sm:$0xff] %v956
    %v985 = vld.sshfl [vmem:[#allocation1] sm:$0xff pattern:$0x73625140]
    %986 = vrot.lane.b32.xlu0 %v985, 96
    %v987 = vpop.permute.xlu0 %986
    %v988 = vsel %vm271, %v987, 0
    %990 = vmatpush.msra.mxu0 0.0
    %991 = vmatpush.msra.mxu0 0.0
    %992 = vmatpush.msra.mxu0 0.0
    %993 = vmatpush.msra.mxu0 0.0
    %994 = vmatpush.msra.mxu0 0.0
    %995 = vmatpush.msra.mxu0 0.0
    %996 = vmatpush.msra.mxu0 0.0
    %997 = vmatpush.msra.mxu0 0.0
    %998 = vmatpush.msra.mxu0 0.0
    %999 = vmatpush.msra.mxu0 0.0
    %1000 = vmatpush.msra.mxu0 0.0
    %1001 = vmatpush.msra.mxu0 0.0
    %1002 = vmatpush.msra.mxu0 %v172
    %1003 = vmatpush.msra.mxu0 %v171
    %1004 = vmatpush.msra.mxu0 %v170
    %1005 = vmatpush.msra.mxu0 %v169
    %1006 = vmatmul.f32.gmra.mxu0 %v988
    %v1007 = vpop.f32.mrf.mxu0
    %v1008 = vadd.f32 0.0, %v1007
    %1009 = vdwg.mxu0
    %v1010 = vadd.f32 %v223, %v982
    %v1011 = vxor.u32 %v1010, 2147483648
    %v1012 = vmul.f32 %v1011, 1.442695
    %v1013 = vpow.pop %v1012
    %v1014 = vadd.f32 %v1013, 1.0
    %v1015 = vrcp.pop %v1014
    %v1016 = vmul.f32 %v1014, %v1015
    %v1017 = vsub.f32 1.0, %v1016
    %v1018 = vmul.f32 %v1015, %v1017
    %v1019 = vadd.f32 %v1015, %v1018
    %vm1020 = vweird.f32 %v1014
    %vm1021 = vweird.f32 %v1015
    %vm1022 = vmor %vm1020, %vm1021
    %v1023 = vsel %vm1022, %v1015, %v1019
    %v1024 = vand.u32 2147483647, %v1014
    %vm1025 = vcmp.eq.f32.partialorder %v1024, 8.507059e+37
    %v1026 = vand.u32 %v1014, 2147483648
    %v1027 = vor.u32 1.1754944e-38, %v1026
    %v1028 = vsel %vm1025, %v1027, %v1023
    %v1029 = vmul.f32 1.0, %v1028
    %1031 = vrot.lane.b32.xlu0 %v1008, 32
    %v1032 = vpop.permute.xlu0 %1031
    %v1034 = vadd.f32 %v223, %v1032
    %v1035 = vxor.u32 %v1034, 2147483648
    %v1036 = vmul.f32 %v1035, 1.442695
    %v1037 = vpow.pop %v1036
    %v1038 = vadd.f32 %v1037, 1.0
    %v1039 = vrcp.pop %v1038
    %v1040 = vmul.f32 %v1038, %v1039
    %v1041 = vsub.f32 1.0, %v1040
    %v1042 = vmul.f32 %v1039, %v1041
    %v1043 = vadd.f32 %v1039, %v1042
    %vm1044 = vweird.f32 %v1038
    %vm1045 = vweird.f32 %v1039
    %vm1046 = vmor %vm1044, %vm1045
    %v1047 = vsel %vm1046, %v1039, %v1043
    %v1048 = vand.u32 2147483647, %v1038
    %vm1049 = vcmp.eq.f32.partialorder %v1048, 8.507059e+37
    %v1050 = vand.u32 %v1038, 2147483648
    %v1051 = vor.u32 1.1754944e-38, %v1050
    %v1052 = vsel %vm1049, %v1051, %v1047
    %v1053 = vmul.f32 1.0, %v1052
    %1054 = vst [vmem:[#allocation1] ss:$4 sm:$0xff] %v956
    %v1055 = vld.sshfl [vmem:[#allocation1] sm:$0xff pattern:$0x73625140]
    %1056 = vrot.lane.b32.xlu0 %v1055, 96
    %v1057 = vpop.permute.xlu0 %1056
    %v1058 = vsel %vm271, %v1057, 0
    %1060 = vmatpush.msra.mxu0 0.0
    %1061 = vmatpush.msra.mxu0 0.0
    %1062 = vmatpush.msra.mxu0 0.0
    %1063 = vmatpush.msra.mxu0 0.0
    %1064 = vmatpush.msra.mxu0 0.0
    %1065 = vmatpush.msra.mxu0 0.0
    %1066 = vmatpush.msra.mxu0 0.0
    %1067 = vmatpush.msra.mxu0 0.0
    %1068 = vmatpush.msra.mxu0 0.0
    %1069 = vmatpush.msra.mxu0 0.0
    %1070 = vmatpush.msra.mxu0 0.0
    %1071 = vmatpush.msra.mxu0 0.0
    %1072 = vmatpush.msra.mxu0 %v176
    %1073 = vmatpush.msra.mxu0 %v175
    %1074 = vmatpush.msra.mxu0 %v174
    %1075 = vmatpush.msra.mxu0 %v173
    %1076 = vmatmul.f32.gmra.mxu0 %v1058
    %v1077 = vpop.f32.mrf.mxu0
    %v1078 = vadd.f32 %v251, %v1077
    %1079 = vdwg.mxu0
    %v1080 = vmul.f32 %v1029, %v1078
    %1082 = vrot.lane.b32.xlu0 %v1080, 64
    %v1083 = vpop.permute.xlu0 %1082
    %v1085 = vadd.f32 %v223, %v1083
    %v1086 = vtanh.pop %v1085
    %v1087 = vsub.f32 1.0, %v1053
    %1089 = vrot.lane.b32.xlu0 %v1086, 96
    %v1090 = vpop.permute.xlu0 %1089
    %v1092 = vmul.f32 %v1087, %v1090
    %v1093 = vmul.f32 %v1053, %v956
    %v1094 = vadd.f32 %v1092, %v1093
    %1096 = vst [vmem:[#allocation1] ss:$4 sm:$0xff] %v1094
    %v1097 = vld.sshfl [vmem:[#allocation1] sm:$0xff pattern:$0x73625140]
    %1098 = vrot.lane.b32.xlu0 %v1097, 96
    %v1099 = vpop.permute.xlu0 %1098
    %v1100 = vsel %vm271, %v1099, 0
    %1102 = vmatpush.msra.mxu0 0.0
    %1103 = vmatpush.msra.mxu0 0.0
    %1104 = vmatpush.msra.mxu0 0.0
    %1105 = vmatpush.msra.mxu0 0.0
    %1106 = vmatpush.msra.mxu0 0.0
    %1107 = vmatpush.msra.mxu0 0.0
    %1108 = vmatpush.msra.mxu0 0.0
    %1109 = vmatpush.msra.mxu0 0.0
    %1110 = vmatpush.msra.mxu0 0.0
    %1111 = vmatpush.msra.mxu0 0.0
    %1112 = vmatpush.msra.mxu0 0.0
    %1113 = vmatpush.msra.mxu0 0.0
    %1114 = vmatpush.msra.mxu0 %v168
    %1115 = vmatpush.msra.mxu0 %v167
    %1116 = vmatpush.msra.mxu0 %v166
    %1117 = vmatpush.msra.mxu0 %v165
    %1118 = vmatmul.f32.gmra.mxu0 %v1100
    %v1119 = vpop.f32.mrf.mxu0
    %v1120 = vadd.f32 0.0, %v1119
    %1121 = vdwg.mxu0
    %1122 = vst [vmem:[#allocation1] ss:$4 sm:$0xff] %v1094
    %v1123 = vld.sshfl [vmem:[#allocation1] sm:$0xff pattern:$0x73625140]
    %1124 = vrot.lane.b32.xlu0 %v1123, 96
    %v1125 = vpop.permute.xlu0 %1124
    %v1126 = vsel %vm271, %v1125, 0
    %1128 = vmatpush.msra.mxu0 0.0
    %1129 = vmatpush.msra.mxu0 0.0
    %1130 = vmatpush.msra.mxu0 0.0
    %1131 = vmatpush.msra.mxu0 0.0
    %1132 = vmatpush.msra.mxu0 0.0
    %1133 = vmatpush.msra.mxu0 0.0
    %1134 = vmatpush.msra.mxu0 0.0
    %1135 = vmatpush.msra.mxu0 0.0
    %1136 = vmatpush.msra.mxu0 0.0
    %1137 = vmatpush.msra.mxu0 0.0
    %1138 = vmatpush.msra.mxu0 0.0
    %1139 = vmatpush.msra.mxu0 0.0
    %1140 = vmatpush.msra.mxu0 %v172
    %1141 = vmatpush.msra.mxu0 %v171
    %1142 = vmatpush.msra.mxu0 %v170
    %1143 = vmatpush.msra.mxu0 %v169
    %1144 = vmatmul.f32.gmra.mxu0 %v1126
    %v1145 = vpop.f32.mrf.mxu0
    %v1146 = vadd.f32 0.0, %v1145
    %1147 = vdwg.mxu0
    %v1148 = vadd.f32 %v224, %v1120
    %v1149 = vxor.u32 %v1148, 2147483648
    %v1150 = vmul.f32 %v1149, 1.442695
    %v1151 = vpow.pop %v1150
    %v1152 = vadd.f32 %v1151, 1.0
    %v1153 = vrcp.pop %v1152
    %v1154 = vmul.f32 %v1152, %v1153
    %v1155 = vsub.f32 1.0, %v1154
    %v1156 = vmul.f32 %v1153, %v1155
    %v1157 = vadd.f32 %v1153, %v1156
    %vm1158 = vweird.f32 %v1152
    %vm1159 = vweird.f32 %v1153
    %vm1160 = vmor %vm1158, %vm1159
    %v1161 = vsel %vm1160, %v1153, %v1157
    %v1162 = vand.u32 2147483647, %v1152
    %vm1163 = vcmp.eq.f32.partialorder %v1162, 8.507059e+37
    %v1164 = vand.u32 %v1152, 2147483648
    %v1165 = vor.u32 1.1754944e-38, %v1164
    %v1166 = vsel %vm1163, %v1165, %v1161
    %v1167 = vmul.f32 1.0, %v1166
    %1169 = vrot.lane.b32.xlu0 %v1146, 32
    %v1170 = vpop.permute.xlu0 %1169
    %v1172 = vadd.f32 %v224, %v1170
    %v1173 = vxor.u32 %v1172, 2147483648
    %v1174 = vmul.f32 %v1173, 1.442695
    %v1175 = vpow.pop %v1174
    %v1176 = vadd.f32 %v1175, 1.0
    %v1177 = vrcp.pop %v1176
    %v1178 = vmul.f32 %v1176, %v1177
    %v1179 = vsub.f32 1.0, %v1178
    %v1180 = vmul.f32 %v1177, %v1179
    %v1181 = vadd.f32 %v1177, %v1180
    %vm1182 = vweird.f32 %v1176
    %vm1183 = vweird.f32 %v1177
    %vm1184 = vmor %vm1182, %vm1183
    %v1185 = vsel %vm1184, %v1177, %v1181
    %v1186 = vand.u32 2147483647, %v1176
    %vm1187 = vcmp.eq.f32.partialorder %v1186, 8.507059e+37
    %v1188 = vand.u32 %v1176, 2147483648
    %v1189 = vor.u32 1.1754944e-38, %v1188
    %v1190 = vsel %vm1187, %v1189, %v1185
    %v1191 = vmul.f32 1.0, %v1190
    %1192 = vst [vmem:[#allocation1] ss:$4 sm:$0xff] %v1094
    %v1193 = vld.sshfl [vmem:[#allocation1] sm:$0xff pattern:$0x73625140]
    %1194 = vrot.lane.b32.xlu0 %v1193, 96
    %v1195 = vpop.permute.xlu0 %1194
    %v1196 = vsel %vm271, %v1195, 0
    %1198 = vmatpush.msra.mxu0 0.0
    %1199 = vmatpush.msra.mxu0 0.0
    %1200 = vmatpush.msra.mxu0 0.0
    %1201 = vmatpush.msra.mxu0 0.0
    %1202 = vmatpush.msra.mxu0 0.0
    %1203 = vmatpush.msra.mxu0 0.0
    %1204 = vmatpush.msra.mxu0 0.0
    %1205 = vmatpush.msra.mxu0 0.0
    %1206 = vmatpush.msra.mxu0 0.0
    %1207 = vmatpush.msra.mxu0 0.0
    %1208 = vmatpush.msra.mxu0 0.0
    %1209 = vmatpush.msra.mxu0 0.0
    %1210 = vmatpush.msra.mxu0 %v176
    %1211 = vmatpush.msra.mxu0 %v175
    %1212 = vmatpush.msra.mxu0 %v174
    %1213 = vmatpush.msra.mxu0 %v173
    %1214 = vmatmul.f32.gmra.mxu0 %v1196
    %v1215 = vpop.f32.mrf.mxu0
    %v1216 = vadd.f32 %v251, %v1215
    %1217 = vdwg.mxu0
    %v1218 = vmul.f32 %v1167, %v1216
    %1220 = vrot.lane.b32.xlu0 %v1218, 64
    %v1221 = vpop.permute.xlu0 %1220
    %v1223 = vadd.f32 %v224, %v1221
    %v1224 = vtanh.pop %v1223
    %v1225 = vsub.f32 1.0, %v1191
    %1227 = vrot.lane.b32.xlu0 %v1224, 96
    %v1228 = vpop.permute.xlu0 %1227
    %v1230 = vmul.f32 %v1225, %v1228
    %v1231 = vmul.f32 %v1191, %v1094
    %v1232 = vadd.f32 %v1230, %v1231
    %s1233 = scalar_lea.vmem [#allocation1], 1
    %1234 = vst [vmem:[%s1233] ss:$4 sm:$0xff] %v404
    %v1235 = vld.sshfl [vmem:[#allocation1] sm:$0xff pattern:$0x73625140]
    %s1237 = scalar_lea.vmem [#allocation1], 2
    %1238 = vst [vmem:[%s1237] ss:$4 sm:$0xff] %v542
    %v1239 = vld.sshfl [vmem:[#allocation1] sm:$0xff pattern:$0x73625140]
    %s1241 = scalar_lea.vmem [#allocation1], 3
    %1242 = vst [vmem:[%s1241] ss:$4 sm:$0xff] %v680
    %v1243 = vld.sshfl [vmem:[#allocation1] sm:$0xff pattern:$0x73625140]
    %s1245 = scalar_lea.vmem [#allocation1], 1
    %1246 = vst [vmem:[%s1245] ss:$4 sm:$0xff] %v956
    %v1247 = vld.sshfl [vmem:[#allocation1] sm:$0xff pattern:$0x73625140]
    %s1249 = scalar_lea.vmem [#allocation1], 2
    %1250 = vst [vmem:[%s1249] ss:$4 sm:$0xff] %v1094
    %v1251 = vld.sshfl [vmem:[#allocation1] sm:$0xff pattern:$0x73625140]
    %s1254 = scalar_lea.vmem [#allocation1], 3
    %1255 = vst [vmem:[%s1254] ss:$4 sm:$0xff] %v1232
    %v1256 = vld.sshfl [vmem:[#allocation1] sm:$0xff pattern:$0x73625140]
    %vm1258 = vcmask 1041408
    %v1259 = vsel %vm1258, %v265, %v1235
    %v1260 = vsel %vm190, %v1259, %v1239
    %vm1261 = vcmask 1045504
    %v1262 = vsel %vm1261, %v1260, %v1243
    %v1263 = vsel %vm1258, %v818, %v1247
    %v1264 = vsel %vm190, %v1263, %v1251
    %v1265 = vsel %vm1261, %v1264, %v1256
    %v1266 = vld [vmem:[%s19] sm:$0xff]
    %v1267 = vld [vmem:[%s19 + $0x8] sm:$0xff]
    %v1268 = vld [vmem:[%s19 + $0x10] sm:$0xff]
    %v1269 = vld [vmem:[%s19 + $0x18] sm:$0xff]
    %v1270 = vld [vmem:[%s21] sm:$0xff]
    %v1271 = vld [vmem:[%s21 + $0x8] sm:$0xff]
    %v1272 = vld [vmem:[%s21 + $0x10] sm:$0xff]
    %v1273 = vld [vmem:[%s21 + $0x18] sm:$0xff]
    %v1274 = vld [vmem:[%s23] sm:$0xff]
    %v1275 = vld [vmem:[%s23 + $0x8] sm:$0xff]
    %v1276 = vld [vmem:[%s23 + $0x10] sm:$0xff]
    %v1277 = vld [vmem:[%s23 + $0x18] sm:$0xff]
    %v1278 = vld [vmem:[%s27] sm:$0x1]
    %v1279 = vld [vmem:[%s17] sm:$0xff]
    %v1280 = vld [vmem:[%s17 + $0x8] sm:$0xff]
    %v1281 = vld [vmem:[%s17 + $0x10] sm:$0xff]
    %v1282 = vld [vmem:[%s17 + $0x18] sm:$0xff]
    %v1283 = vld [vmem:[%s25] sm:$0x1]
    %v1285 = vperm.slane %v1283, 0
    %1289 = vrot.lane.b32.xlu0 %v1262, 96
    %v1290 = vpop.permute.xlu0 %1289
    %1291 = vrot.lane.b32.xlu0 %v1265, 96
    %v1292 = vpop.permute.xlu0 %1291
    %v1293 = vsel %vm271, %v1290, 0
    %v1295 = vsel %vm271, %v1292, 0
    %1297 = vmatpush.msra.mxu0 0.0
    %1298 = vmatpush.msra.mxu0 0.0
    %1299 = vmatpush.msra.mxu0 0.0
    %1300 = vmatpush.msra.mxu0 0.0
    %1301 = vmatpush.msra.mxu0 0.0
    %1302 = vmatpush.msra.mxu0 0.0
    %1303 = vmatpush.msra.mxu0 0.0
    %1304 = vmatpush.msra.mxu0 0.0
    %1305 = vmatpush.msra.mxu0 0.0
    %1306 = vmatpush.msra.mxu0 0.0
    %1307 = vmatpush.msra.mxu0 0.0
    %1308 = vmatpush.msra.mxu0 0.0
    %1309 = vmatpush.msra.mxu0 %v1282
    %1310 = vmatpush.msra.mxu0 %v1281
    %1311 = vmatpush.msra.mxu0 %v1280
    %1312 = vmatpush.msra.mxu0 %v1279
    %1313 = vmatmul.f32.gmra.mxu0 %v1293
    %v1314 = vpop.f32.mrf.mxu0
    %v1315 = vadd.f32 %v1285, %v1314
    %1316 = vmatmul.f32.gmra.mxu0 %v1295
    %v1317 = vpop.f32.mrf.mxu0
    %v1318 = vadd.f32 %v1285, %v1317
    %1319 = vdwg.mxu0
    %v1322 = vrot.slane %v1315, 2
    %v1323 = vrot.slane %v1315, 4
    %v1324 = vrot.slane %v1315, 6
    %v1325 = vrot.slane %v1318, 2
    %v1326 = vrot.slane %v1318, 4
    %v1327 = vrot.slane %v1318, 6
    %v1334 = vxor.u32 %v1315, 2147483648
    %v1335 = vmul.f32 %v1334, 1.442695
    %v1336 = vpow.pop %v1335
    %v1337 = vadd.f32 %v1336, 1.0
    %v1338 = vrcp.pop %v1337
    %v1339 = vmul.f32 %v1337, %v1338
    %v1340 = vsub.f32 1.0, %v1339
    %v1341 = vmul.f32 %v1338, %v1340
    %v1342 = vadd.f32 %v1338, %v1341
    %vm1343 = vweird.f32 %v1337
    %vm1344 = vweird.f32 %v1338
    %vm1345 = vmor %vm1343, %vm1344
    %v1346 = vsel %vm1345, %v1338, %v1342
    %v1347 = vand.u32 2147483647, %v1337
    %vm1348 = vcmp.eq.f32.partialorder %v1347, 8.507059e+37
    %v1349 = vand.u32 %v1337, 2147483648
    %v1350 = vor.u32 1.1754944e-38, %v1349
    %v1351 = vsel %vm1348, %v1350, %v1346
    %v1352 = vmul.f32 1.0, %v1351
    %v1354 = vperm.slane %v1278, 0
    %v1356 = vmul.f32 %v1352, %v1354
    %1358 = vrot.lane.b32.xlu0 %v1356, 64
    %v1359 = vpop.permute.xlu0 %1358
    %v1361 = vadd.f32 %v1315, %v1359
    %v1362 = vtanh.pop %v1361
    %v1363 = vsub.f32 1.0, %v1352
    %1365 = vrot.lane.b32.xlu0 %v1362, 96
    %v1366 = vpop.permute.xlu0 %1365
    %v1368 = vmul.f32 %v1363, %v1366
    %1370 = vst [vmem:[#allocation1] ss:$4 sm:$0xff] %v1368
    %v1371 = vld.sshfl [vmem:[#allocation1] sm:$0xff pattern:$0x73625140]
    %1372 = vrot.lane.b32.xlu0 %v1371, 96
    %v1373 = vpop.permute.xlu0 %1372
    %v1374 = vsel %vm271, %v1373, 0
    %1376 = vmatpush.msra.mxu0 0.0
    %1377 = vmatpush.msra.mxu0 0.0
    %1378 = vmatpush.msra.mxu0 0.0
    %1379 = vmatpush.msra.mxu0 0.0
    %1380 = vmatpush.msra.mxu0 0.0
    %1381 = vmatpush.msra.mxu0 0.0
    %1382 = vmatpush.msra.mxu0 0.0
    %1383 = vmatpush.msra.mxu0 0.0
    %1384 = vmatpush.msra.mxu0 0.0
    %1385 = vmatpush.msra.mxu0 0.0
    %1386 = vmatpush.msra.mxu0 0.0
    %1387 = vmatpush.msra.mxu0 0.0
    %1388 = vmatpush.msra.mxu0 %v1269
    %1389 = vmatpush.msra.mxu0 %v1268
    %1390 = vmatpush.msra.mxu0 %v1267
    %1391 = vmatpush.msra.mxu0 %v1266
    %1392 = vmatmul.f32.gmra.mxu0 %v1374
    %v1393 = vpop.f32.mrf.mxu0
    %v1394 = vadd.f32 0.0, %v1393
    %1395 = vdwg.mxu0
    %1396 = vst [vmem:[#allocation1] ss:$4 sm:$0xff] %v1368
    %v1397 = vld.sshfl [vmem:[#allocation1] sm:$0xff pattern:$0x73625140]
    %1398 = vrot.lane.b32.xlu0 %v1397, 96
    %v1399 = vpop.permute.xlu0 %1398
    %v1400 = vsel %vm271, %v1399, 0
    %1402 = vmatpush.msra.mxu0 0.0
    %1403 = vmatpush.msra.mxu0 0.0
    %1404 = vmatpush.msra.mxu0 0.0
    %1405 = vmatpush.msra.mxu0 0.0
    %1406 = vmatpush.msra.mxu0 0.0
    %1407 = vmatpush.msra.mxu0 0.0
    %1408 = vmatpush.msra.mxu0 0.0
    %1409 = vmatpush.msra.mxu0 0.0
    %1410 = vmatpush.msra.mxu0 0.0
    %1411 = vmatpush.msra.mxu0 0.0
    %1412 = vmatpush.msra.mxu0 0.0
    %1413 = vmatpush.msra.mxu0 0.0
    %1414 = vmatpush.msra.mxu0 %v1273
    %1415 = vmatpush.msra.mxu0 %v1272
    %1416 = vmatpush.msra.mxu0 %v1271
    %1417 = vmatpush.msra.mxu0 %v1270
    %1418 = vmatmul.f32.gmra.mxu0 %v1400
    %v1419 = vpop.f32.mrf.mxu0
    %v1420 = vadd.f32 0.0, %v1419
    %1421 = vdwg.mxu0
    %v1422 = vadd.f32 %v1322, %v1394
    %v1423 = vxor.u32 %v1422, 2147483648
    %v1424 = vmul.f32 %v1423, 1.442695
    %v1425 = vpow.pop %v1424
    %v1426 = vadd.f32 %v1425, 1.0
    %v1427 = vrcp.pop %v1426
    %v1428 = vmul.f32 %v1426, %v1427
    %v1429 = vsub.f32 1.0, %v1428
    %v1430 = vmul.f32 %v1427, %v1429
    %v1431 = vadd.f32 %v1427, %v1430
    %vm1432 = vweird.f32 %v1426
    %vm1433 = vweird.f32 %v1427
    %vm1434 = vmor %vm1432, %vm1433
    %v1435 = vsel %vm1434, %v1427, %v1431
    %v1436 = vand.u32 2147483647, %v1426
    %vm1437 = vcmp.eq.f32.partialorder %v1436, 8.507059e+37
    %v1438 = vand.u32 %v1426, 2147483648
    %v1439 = vor.u32 1.1754944e-38, %v1438
    %v1440 = vsel %vm1437, %v1439, %v1435
    %v1441 = vmul.f32 1.0, %v1440
    %1443 = vrot.lane.b32.xlu0 %v1420, 32
    %v1444 = vpop.permute.xlu0 %1443
    %v1446 = vadd.f32 %v1322, %v1444
    %v1447 = vxor.u32 %v1446, 2147483648
    %v1448 = vmul.f32 %v1447, 1.442695
    %v1449 = vpow.pop %v1448
    %v1450 = vadd.f32 %v1449, 1.0
    %v1451 = vrcp.pop %v1450
    %v1452 = vmul.f32 %v1450, %v1451
    %v1453 = vsub.f32 1.0, %v1452
    %v1454 = vmul.f32 %v1451, %v1453
    %v1455 = vadd.f32 %v1451, %v1454
    %vm1456 = vweird.f32 %v1450
    %vm1457 = vweird.f32 %v1451
    %vm1458 = vmor %vm1456, %vm1457
    %v1459 = vsel %vm1458, %v1451, %v1455
    %v1460 = vand.u32 2147483647, %v1450
    %vm1461 = vcmp.eq.f32.partialorder %v1460, 8.507059e+37
    %v1462 = vand.u32 %v1450, 2147483648
    %v1463 = vor.u32 1.1754944e-38, %v1462
    %v1464 = vsel %vm1461, %v1463, %v1459
    %v1465 = vmul.f32 1.0, %v1464
    %1466 = vst [vmem:[#allocation1] ss:$4 sm:$0xff] %v1368
    %v1467 = vld.sshfl [vmem:[#allocation1] sm:$0xff pattern:$0x73625140]
    %1468 = vrot.lane.b32.xlu0 %v1467, 96
    %v1469 = vpop.permute.xlu0 %1468
    %v1470 = vsel %vm271, %v1469, 0
    %1472 = vmatpush.msra.mxu0 0.0
    %1473 = vmatpush.msra.mxu0 0.0
    %1474 = vmatpush.msra.mxu0 0.0
    %1475 = vmatpush.msra.mxu0 0.0
    %1476 = vmatpush.msra.mxu0 0.0
    %1477 = vmatpush.msra.mxu0 0.0
    %1478 = vmatpush.msra.mxu0 0.0
    %1479 = vmatpush.msra.mxu0 0.0
    %1480 = vmatpush.msra.mxu0 0.0
    %1481 = vmatpush.msra.mxu0 0.0
    %1482 = vmatpush.msra.mxu0 0.0
    %1483 = vmatpush.msra.mxu0 0.0
    %1484 = vmatpush.msra.mxu0 %v1277
    %1485 = vmatpush.msra.mxu0 %v1276
    %1486 = vmatpush.msra.mxu0 %v1275
    %1487 = vmatpush.msra.mxu0 %v1274
    %1488 = vmatmul.f32.gmra.mxu0 %v1470
    %v1489 = vpop.f32.mrf.mxu0
    %v1490 = vadd.f32 %v1354, %v1489
    %1491 = vdwg.mxu0
    %v1492 = vmul.f32 %v1441, %v1490
    %1494 = vrot.lane.b32.xlu0 %v1492, 64
    %v1495 = vpop.permute.xlu0 %1494
    %v1497 = vadd.f32 %v1322, %v1495
    %v1498 = vtanh.pop %v1497
    %v1499 = vsub.f32 1.0, %v1465
    %1501 = vrot.lane.b32.xlu0 %v1498, 96
    %v1502 = vpop.permute.xlu0 %1501
    %v1504 = vmul.f32 %v1499, %v1502
    %v1505 = vmul.f32 %v1465, %v1368
    %v1506 = vadd.f32 %v1504, %v1505
    %1508 = vst [vmem:[#allocation1] ss:$4 sm:$0xff] %v1506
    %v1509 = vld.sshfl [vmem:[#allocation1] sm:$0xff pattern:$0x73625140]
    %1510 = vrot.lane.b32.xlu0 %v1509, 96
    %v1511 = vpop.permute.xlu0 %1510
    %v1512 = vsel %vm271, %v1511, 0
    %1514 = vmatpush.msra.mxu0 0.0
    %1515 = vmatpush.msra.mxu0 0.0
    %1516 = vmatpush.msra.mxu0 0.0
    %1517 = vmatpush.msra.mxu0 0.0
    %1518 = vmatpush.msra.mxu0 0.0
    %1519 = vmatpush.msra.mxu0 0.0
    %1520 = vmatpush.msra.mxu0 0.0
    %1521 = vmatpush.msra.mxu0 0.0
    %1522 = vmatpush.msra.mxu0 0.0
    %1523 = vmatpush.msra.mxu0 0.0
    %1524 = vmatpush.msra.mxu0 0.0
    %1525 = vmatpush.msra.mxu0 0.0
    %1526 = vmatpush.msra.mxu0 %v1269
    %1527 = vmatpush.msra.mxu0 %v1268
    %1528 = vmatpush.msra.mxu0 %v1267
    %1529 = vmatpush.msra.mxu0 %v1266
    %1530 = vmatmul.f32.gmra.mxu0 %v1512
    %v1531 = vpop.f32.mrf.mxu0
    %v1532 = vadd.f32 0.0, %v1531
    %1533 = vdwg.mxu0
    %1534 = vst [vmem:[#allocation1] ss:$4 sm:$0xff] %v1506
    %v1535 = vld.sshfl [vmem:[#allocation1] sm:$0xff pattern:$0x73625140]
    %1536 = vrot.lane.b32.xlu0 %v1535, 96
    %v1537 = vpop.permute.xlu0 %1536
    %v1538 = vsel %vm271, %v1537, 0
    %1540 = vmatpush.msra.mxu0 0.0
    %1541 = vmatpush.msra.mxu0 0.0
    %1542 = vmatpush.msra.mxu0 0.0
    %1543 = vmatpush.msra.mxu0 0.0
    %1544 = vmatpush.msra.mxu0 0.0
    %1545 = vmatpush.msra.mxu0 0.0
    %1546 = vmatpush.msra.mxu0 0.0
    %1547 = vmatpush.msra.mxu0 0.0
    %1548 = vmatpush.msra.mxu0 0.0
    %1549 = vmatpush.msra.mxu0 0.0
    %1550 = vmatpush.msra.mxu0 0.0
    %1551 = vmatpush.msra.mxu0 0.0
    %1552 = vmatpush.msra.mxu0 %v1273
    %1553 = vmatpush.msra.mxu0 %v1272
    %1554 = vmatpush.msra.mxu0 %v1271
    %1555 = vmatpush.msra.mxu0 %v1270
    %1556 = vmatmul.f32.gmra.mxu0 %v1538
    %v1557 = vpop.f32.mrf.mxu0
    %v1558 = vadd.f32 0.0, %v1557
    %1559 = vdwg.mxu0
    %v1560 = vadd.f32 %v1323, %v1532
    %v1561 = vxor.u32 %v1560, 2147483648
    %v1562 = vmul.f32 %v1561, 1.442695
    %v1563 = vpow.pop %v1562
    %v1564 = vadd.f32 %v1563, 1.0
    %v1565 = vrcp.pop %v1564
    %v1566 = vmul.f32 %v1564, %v1565
    %v1567 = vsub.f32 1.0, %v1566
    %v1568 = vmul.f32 %v1565, %v1567
    %v1569 = vadd.f32 %v1565, %v1568
    %vm1570 = vweird.f32 %v1564
    %vm1571 = vweird.f32 %v1565
    %vm1572 = vmor %vm1570, %vm1571
    %v1573 = vsel %vm1572, %v1565, %v1569
    %v1574 = vand.u32 2147483647, %v1564
    %vm1575 = vcmp.eq.f32.partialorder %v1574, 8.507059e+37
    %v1576 = vand.u32 %v1564, 2147483648
    %v1577 = vor.u32 1.1754944e-38, %v1576
    %v1578 = vsel %vm1575, %v1577, %v1573
    %v1579 = vmul.f32 1.0, %v1578
    %1581 = vrot.lane.b32.xlu0 %v1558, 32
    %v1582 = vpop.permute.xlu0 %1581
    %v1584 = vadd.f32 %v1323, %v1582
    %v1585 = vxor.u32 %v1584, 2147483648
    %v1586 = vmul.f32 %v1585, 1.442695
    %v1587 = vpow.pop %v1586
    %v1588 = vadd.f32 %v1587, 1.0
    %v1589 = vrcp.pop %v1588
    %v1590 = vmul.f32 %v1588, %v1589
    %v1591 = vsub.f32 1.0, %v1590
    %v1592 = vmul.f32 %v1589, %v1591
    %v1593 = vadd.f32 %v1589, %v1592
    %vm1594 = vweird.f32 %v1588
    %vm1595 = vweird.f32 %v1589
    %vm1596 = vmor %vm1594, %vm1595
    %v1597 = vsel %vm1596, %v1589, %v1593
    %v1598 = vand.u32 2147483647, %v1588
    %vm1599 = vcmp.eq.f32.partialorder %v1598, 8.507059e+37
    %v1600 = vand.u32 %v1588, 2147483648
    %v1601 = vor.u32 1.1754944e-38, %v1600
    %v1602 = vsel %vm1599, %v1601, %v1597
    %v1603 = vmul.f32 1.0, %v1602
    %1604 = vst [vmem:[#allocation1] ss:$4 sm:$0xff] %v1506
    %v1605 = vld.sshfl [vmem:[#allocation1] sm:$0xff pattern:$0x73625140]
    %1606 = vrot.lane.b32.xlu0 %v1605, 96
    %v1607 = vpop.permute.xlu0 %1606
    %v1608 = vsel %vm271, %v1607, 0
    %1610 = vmatpush.msra.mxu0 0.0
    %1611 = vmatpush.msra.mxu0 0.0
    %1612 = vmatpush.msra.mxu0 0.0
    %1613 = vmatpush.msra.mxu0 0.0
    %1614 = vmatpush.msra.mxu0 0.0
    %1615 = vmatpush.msra.mxu0 0.0
    %1616 = vmatpush.msra.mxu0 0.0
    %1617 = vmatpush.msra.mxu0 0.0
    %1618 = vmatpush.msra.mxu0 0.0
    %1619 = vmatpush.msra.mxu0 0.0
    %1620 = vmatpush.msra.mxu0 0.0
    %1621 = vmatpush.msra.mxu0 0.0
    %1622 = vmatpush.msra.mxu0 %v1277
    %1623 = vmatpush.msra.mxu0 %v1276
    %1624 = vmatpush.msra.mxu0 %v1275
    %1625 = vmatpush.msra.mxu0 %v1274
    %1626 = vmatmul.f32.gmra.mxu0 %v1608
    %v1627 = vpop.f32.mrf.mxu0
    %v1628 = vadd.f32 %v1354, %v1627
    %1629 = vdwg.mxu0
    %v1630 = vmul.f32 %v1579, %v1628
    %1632 = vrot.lane.b32.xlu0 %v1630, 64
    %v1633 = vpop.permute.xlu0 %1632
    %v1635 = vadd.f32 %v1323, %v1633
    %v1636 = vtanh.pop %v1635
    %v1637 = vsub.f32 1.0, %v1603
    %1639 = vrot.lane.b32.xlu0 %v1636, 96
    %v1640 = vpop.permute.xlu0 %1639
    %v1642 = vmul.f32 %v1637, %v1640
    %v1643 = vmul.f32 %v1603, %v1506
    %v1644 = vadd.f32 %v1642, %v1643
    %1646 = vst [vmem:[#allocation1] ss:$4 sm:$0xff] %v1644
    %v1647 = vld.sshfl [vmem:[#allocation1] sm:$0xff pattern:$0x73625140]
    %1648 = vrot.lane.b32.xlu0 %v1647, 96
    %v1649 = vpop.permute.xlu0 %1648
    %v1650 = vsel %vm271, %v1649, 0
    %1652 = vmatpush.msra.mxu0 0.0
    %1653 = vmatpush.msra.mxu0 0.0
    %1654 = vmatpush.msra.mxu0 0.0
    %1655 = vmatpush.msra.mxu0 0.0
    %1656 = vmatpush.msra.mxu0 0.0
    %1657 = vmatpush.msra.mxu0 0.0
    %1658 = vmatpush.msra.mxu0 0.0
    %1659 = vmatpush.msra.mxu0 0.0
    %1660 = vmatpush.msra.mxu0 0.0
    %1661 = vmatpush.msra.mxu0 0.0
    %1662 = vmatpush.msra.mxu0 0.0
    %1663 = vmatpush.msra.mxu0 0.0
    %1664 = vmatpush.msra.mxu0 %v1269
    %1665 = vmatpush.msra.mxu0 %v1268
    %1666 = vmatpush.msra.mxu0 %v1267
    %1667 = vmatpush.msra.mxu0 %v1266
    %1668 = vmatmul.f32.gmra.mxu0 %v1650
    %v1669 = vpop.f32.mrf.mxu0
    %v1670 = vadd.f32 0.0, %v1669
    %1671 = vdwg.mxu0
    %1672 = vst [vmem:[#allocation1] ss:$4 sm:$0xff] %v1644
    %v1673 = vld.sshfl [vmem:[#allocation1] sm:$0xff pattern:$0x73625140]
    %1674 = vrot.lane.b32.xlu0 %v1673, 96
    %v1675 = vpop.permute.xlu0 %1674
    %v1676 = vsel %vm271, %v1675, 0
    %1678 = vmatpush.msra.mxu0 0.0
    %1679 = vmatpush.msra.mxu0 0.0
    %1680 = vmatpush.msra.mxu0 0.0
    %1681 = vmatpush.msra.mxu0 0.0
    %1682 = vmatpush.msra.mxu0 0.0
    %1683 = vmatpush.msra.mxu0 0.0
    %1684 = vmatpush.msra.mxu0 0.0
    %1685 = vmatpush.msra.mxu0 0.0
    %1686 = vmatpush.msra.mxu0 0.0
    %1687 = vmatpush.msra.mxu0 0.0
    %1688 = vmatpush.msra.mxu0 0.0
    %1689 = vmatpush.msra.mxu0 0.0
    %1690 = vmatpush.msra.mxu0 %v1273
    %1691 = vmatpush.msra.mxu0 %v1272
    %1692 = vmatpush.msra.mxu0 %v1271
    %1693 = vmatpush.msra.mxu0 %v1270
    %1694 = vmatmul.f32.gmra.mxu0 %v1676
    %v1695 = vpop.f32.mrf.mxu0
    %v1696 = vadd.f32 0.0, %v1695
    %1697 = vdwg.mxu0
    %v1698 = vadd.f32 %v1324, %v1670
    %v1699 = vxor.u32 %v1698, 2147483648
    %v1700 = vmul.f32 %v1699, 1.442695
    %v1701 = vpow.pop %v1700
    %v1702 = vadd.f32 %v1701, 1.0
    %v1703 = vrcp.pop %v1702
    %v1704 = vmul.f32 %v1702, %v1703
    %v1705 = vsub.f32 1.0, %v1704
    %v1706 = vmul.f32 %v1703, %v1705
    %v1707 = vadd.f32 %v1703, %v1706
    %vm1708 = vweird.f32 %v1702
    %vm1709 = vweird.f32 %v1703
    %vm1710 = vmor %vm1708, %vm1709
    %v1711 = vsel %vm1710, %v1703, %v1707
    %v1712 = vand.u32 2147483647, %v1702
    %vm1713 = vcmp.eq.f32.partialorder %v1712, 8.507059e+37
    %v1714 = vand.u32 %v1702, 2147483648
    %v1715 = vor.u32 1.1754944e-38, %v1714
    %v1716 = vsel %vm1713, %v1715, %v1711
    %v1717 = vmul.f32 1.0, %v1716
    %1719 = vrot.lane.b32.xlu0 %v1696, 32
    %v1720 = vpop.permute.xlu0 %1719
    %v1722 = vadd.f32 %v1324, %v1720
    %v1723 = vxor.u32 %v1722, 2147483648
    %v1724 = vmul.f32 %v1723, 1.442695
    %v1725 = vpow.pop %v1724
    %v1726 = vadd.f32 %v1725, 1.0
    %v1727 = vrcp.pop %v1726
    %v1728 = vmul.f32 %v1726, %v1727
    %v1729 = vsub.f32 1.0, %v1728
    %v1730 = vmul.f32 %v1727, %v1729
    %v1731 = vadd.f32 %v1727, %v1730
    %vm1732 = vweird.f32 %v1726
    %vm1733 = vweird.f32 %v1727
    %vm1734 = vmor %vm1732, %vm1733
    %v1735 = vsel %vm1734, %v1727, %v1731
    %v1736 = vand.u32 2147483647, %v1726
    %vm1737 = vcmp.eq.f32.partialorder %v1736, 8.507059e+37
    %v1738 = vand.u32 %v1726, 2147483648
    %v1739 = vor.u32 1.1754944e-38, %v1738
    %v1740 = vsel %vm1737, %v1739, %v1735
    %v1741 = vmul.f32 1.0, %v1740
    %1742 = vst [vmem:[#allocation1] ss:$4 sm:$0xff] %v1644
    %v1743 = vld.sshfl [vmem:[#allocation1] sm:$0xff pattern:$0x73625140]
    %1744 = vrot.lane.b32.xlu0 %v1743, 96
    %v1745 = vpop.permute.xlu0 %1744
    %v1746 = vsel %vm271, %v1745, 0
    %1748 = vmatpush.msra.mxu0 0.0
    %1749 = vmatpush.msra.mxu0 0.0
    %1750 = vmatpush.msra.mxu0 0.0
    %1751 = vmatpush.msra.mxu0 0.0
    %1752 = vmatpush.msra.mxu0 0.0
    %1753 = vmatpush.msra.mxu0 0.0
    %1754 = vmatpush.msra.mxu0 0.0
    %1755 = vmatpush.msra.mxu0 0.0
    %1756 = vmatpush.msra.mxu0 0.0
    %1757 = vmatpush.msra.mxu0 0.0
    %1758 = vmatpush.msra.mxu0 0.0
    %1759 = vmatpush.msra.mxu0 0.0
    %1760 = vmatpush.msra.mxu0 %v1277
    %1761 = vmatpush.msra.mxu0 %v1276
    %1762 = vmatpush.msra.mxu0 %v1275
    %1763 = vmatpush.msra.mxu0 %v1274
    %1764 = vmatmul.f32.gmra.mxu0 %v1746
    %v1765 = vpop.f32.mrf.mxu0
    %v1766 = vadd.f32 %v1354, %v1765
    %1767 = vdwg.mxu0
    %v1768 = vmul.f32 %v1717, %v1766
    %1770 = vrot.lane.b32.xlu0 %v1768, 64
    %v1771 = vpop.permute.xlu0 %1770
    %v1773 = vadd.f32 %v1324, %v1771
    %v1774 = vtanh.pop %v1773
    %v1775 = vsub.f32 1.0, %v1741
    %1777 = vrot.lane.b32.xlu0 %v1774, 96
    %v1778 = vpop.permute.xlu0 %1777
    %v1780 = vmul.f32 %v1775, %v1778
    %v1781 = vmul.f32 %v1741, %v1644
    %v1782 = vadd.f32 %v1780, %v1781
    %1784 = vst [vmem:[#allocation1] ss:$4 sm:$0xff] %v1782
    %v1785 = vld.sshfl [vmem:[#allocation1] sm:$0xff pattern:$0x73625140]
    %1786 = vrot.lane.b32.xlu0 %v1785, 96
    %v1787 = vpop.permute.xlu0 %1786
    %v1788 = vsel %vm271, %v1787, 0
    %1790 = vmatpush.msra.mxu0 0.0
    %1791 = vmatpush.msra.mxu0 0.0
    %1792 = vmatpush.msra.mxu0 0.0
    %1793 = vmatpush.msra.mxu0 0.0
    %1794 = vmatpush.msra.mxu0 0.0
    %1795 = vmatpush.msra.mxu0 0.0
    %1796 = vmatpush.msra.mxu0 0.0
    %1797 = vmatpush.msra.mxu0 0.0
    %1798 = vmatpush.msra.mxu0 0.0
    %1799 = vmatpush.msra.mxu0 0.0
    %1800 = vmatpush.msra.mxu0 0.0
    %1801 = vmatpush.msra.mxu0 0.0
    %1802 = vmatpush.msra.mxu0 %v1269
    %1803 = vmatpush.msra.mxu0 %v1268
    %1804 = vmatpush.msra.mxu0 %v1267
    %1805 = vmatpush.msra.mxu0 %v1266
    %1806 = vmatmul.f32.gmra.mxu0 %v1788
    %v1807 = vpop.f32.mrf.mxu0
    %v1808 = vadd.f32 0.0, %v1807
    %1809 = vdwg.mxu0
    %1810 = vst [vmem:[#allocation1] ss:$4 sm:$0xff] %v1782
    %v1811 = vld.sshfl [vmem:[#allocation1] sm:$0xff pattern:$0x73625140]
    %1812 = vrot.lane.b32.xlu0 %v1811, 96
    %v1813 = vpop.permute.xlu0 %1812
    %v1814 = vsel %vm271, %v1813, 0
    %1816 = vmatpush.msra.mxu0 0.0
    %1817 = vmatpush.msra.mxu0 0.0
    %1818 = vmatpush.msra.mxu0 0.0
    %1819 = vmatpush.msra.mxu0 0.0
    %1820 = vmatpush.msra.mxu0 0.0
    %1821 = vmatpush.msra.mxu0 0.0
    %1822 = vmatpush.msra.mxu0 0.0
    %1823 = vmatpush.msra.mxu0 0.0
    %1824 = vmatpush.msra.mxu0 0.0
    %1825 = vmatpush.msra.mxu0 0.0
    %1826 = vmatpush.msra.mxu0 0.0
    %1827 = vmatpush.msra.mxu0 0.0
    %1828 = vmatpush.msra.mxu0 %v1273
    %1829 = vmatpush.msra.mxu0 %v1272
    %1830 = vmatpush.msra.mxu0 %v1271
    %1831 = vmatpush.msra.mxu0 %v1270
    %1832 = vmatmul.f32.gmra.mxu0 %v1814
    %v1833 = vpop.f32.mrf.mxu0
    %v1834 = vadd.f32 0.0, %v1833
    %1835 = vdwg.mxu0
    %v1836 = vadd.f32 %v1318, %v1808
    %v1837 = vxor.u32 %v1836, 2147483648
    %v1838 = vmul.f32 %v1837, 1.442695
    %v1839 = vpow.pop %v1838
    %v1840 = vadd.f32 %v1839, 1.0
    %v1841 = vrcp.pop %v1840
    %v1842 = vmul.f32 %v1840, %v1841
    %v1843 = vsub.f32 1.0, %v1842
    %v1844 = vmul.f32 %v1841, %v1843
    %v1845 = vadd.f32 %v1841, %v1844
    %vm1846 = vweird.f32 %v1840
    %vm1847 = vweird.f32 %v1841
    %vm1848 = vmor %vm1846, %vm1847
    %v1849 = vsel %vm1848, %v1841, %v1845
    %v1850 = vand.u32 2147483647, %v1840
    %vm1851 = vcmp.eq.f32.partialorder %v1850, 8.507059e+37
    %v1852 = vand.u32 %v1840, 2147483648
    %v1853 = vor.u32 1.1754944e-38, %v1852
    %v1854 = vsel %vm1851, %v1853, %v1849
    %v1855 = vmul.f32 1.0, %v1854
    %1857 = vrot.lane.b32.xlu0 %v1834, 32
    %v1858 = vpop.permute.xlu0 %1857
    %v1860 = vadd.f32 %v1318, %v1858
    %v1861 = vxor.u32 %v1860, 2147483648
    %v1862 = vmul.f32 %v1861, 1.442695
    %v1863 = vpow.pop %v1862
    %v1864 = vadd.f32 %v1863, 1.0
    %v1865 = vrcp.pop %v1864
    %v1866 = vmul.f32 %v1864, %v1865
    %v1867 = vsub.f32 1.0, %v1866
    %v1868 = vmul.f32 %v1865, %v1867
    %v1869 = vadd.f32 %v1865, %v1868
    %vm1870 = vweird.f32 %v1864
    %vm1871 = vweird.f32 %v1865
    %vm1872 = vmor %vm1870, %vm1871
    %v1873 = vsel %vm1872, %v1865, %v1869
    %v1874 = vand.u32 2147483647, %v1864
    %vm1875 = vcmp.eq.f32.partialorder %v1874, 8.507059e+37
    %v1876 = vand.u32 %v1864, 2147483648
    %v1877 = vor.u32 1.1754944e-38, %v1876
    %v1878 = vsel %vm1875, %v1877, %v1873
    %v1879 = vmul.f32 1.0, %v1878
    %1880 = vst [vmem:[#allocation1] ss:$4 sm:$0xff] %v1782
    %v1881 = vld.sshfl [vmem:[#allocation1] sm:$0xff pattern:$0x73625140]
    %1882 = vrot.lane.b32.xlu0 %v1881, 96
    %v1883 = vpop.permute.xlu0 %1882
    %v1884 = vsel %vm271, %v1883, 0
    %1886 = vmatpush.msra.mxu0 0.0
    %1887 = vmatpush.msra.mxu0 0.0
    %1888 = vmatpush.msra.mxu0 0.0
    %1889 = vmatpush.msra.mxu0 0.0
    %1890 = vmatpush.msra.mxu0 0.0
    %1891 = vmatpush.msra.mxu0 0.0
    %1892 = vmatpush.msra.mxu0 0.0
    %1893 = vmatpush.msra.mxu0 0.0
    %1894 = vmatpush.msra.mxu0 0.0
    %1895 = vmatpush.msra.mxu0 0.0
    %1896 = vmatpush.msra.mxu0 0.0
    %1897 = vmatpush.msra.mxu0 0.0
    %1898 = vmatpush.msra.mxu0 %v1277
    %1899 = vmatpush.msra.mxu0 %v1276
    %1900 = vmatpush.msra.mxu0 %v1275
    %1901 = vmatpush.msra.mxu0 %v1274
    %1902 = vmatmul.f32.gmra.mxu0 %v1884
    %v1903 = vpop.f32.mrf.mxu0
    %v1904 = vadd.f32 %v1354, %v1903
    %1905 = vdwg.mxu0
    %v1906 = vmul.f32 %v1855, %v1904
    %1908 = vrot.lane.b32.xlu0 %v1906, 64
    %v1909 = vpop.permute.xlu0 %1908
    %v1911 = vadd.f32 %v1318, %v1909
    %v1912 = vtanh.pop %v1911
    %v1913 = vsub.f32 1.0, %v1879
    %1915 = vrot.lane.b32.xlu0 %v1912, 96
    %v1916 = vpop.permute.xlu0 %1915
    %v1918 = vmul.f32 %v1913, %v1916
    %v1919 = vmul.f32 %v1879, %v1782
    %v1920 = vadd.f32 %v1918, %v1919
    %1922 = vst [vmem:[#allocation1] ss:$4 sm:$0xff] %v1920
    %v1923 = vld.sshfl [vmem:[#allocation1] sm:$0xff pattern:$0x73625140]
    %1924 = vrot.lane.b32.xlu0 %v1923, 96
    %v1925 = vpop.permute.xlu0 %1924
    %v1926 = vsel %vm271, %v1925, 0
    %1928 = vmatpush.msra.mxu0 0.0
    %1929 = vmatpush.msra.mxu0 0.0
    %1930 = vmatpush.msra.mxu0 0.0
    %1931 = vmatpush.msra.mxu0 0.0
    %1932 = vmatpush.msra.mxu0 0.0
    %1933 = vmatpush.msra.mxu0 0.0
    %1934 = vmatpush.msra.mxu0 0.0
    %1935 = vmatpush.msra.mxu0 0.0
    %1936 = vmatpush.msra.mxu0 0.0
    %1937 = vmatpush.msra.mxu0 0.0
    %1938 = vmatpush.msra.mxu0 0.0
    %1939 = vmatpush.msra.mxu0 0.0
    %1940 = vmatpush.msra.mxu0 %v1269
    %1941 = vmatpush.msra.mxu0 %v1268
    %1942 = vmatpush.msra.mxu0 %v1267
    %1943 = vmatpush.msra.mxu0 %v1266
    %1944 = vmatmul.f32.gmra.mxu0 %v1926
    %v1945 = vpop.f32.mrf.mxu0
    %v1946 = vadd.f32 0.0, %v1945
    %1947 = vdwg.mxu0
    %1948 = vst [vmem:[#allocation1] ss:$4 sm:$0xff] %v1920
    %v1949 = vld.sshfl [vmem:[#allocation1] sm:$0xff pattern:$0x73625140]
    %1950 = vrot.lane.b32.xlu0 %v1949, 96
    %v1951 = vpop.permute.xlu0 %1950
    %v1952 = vsel %vm271, %v1951, 0
    %1954 = vmatpush.msra.mxu0 0.0
    %1955 = vmatpush.msra.mxu0 0.0
    %1956 = vmatpush.msra.mxu0 0.0
    %1957 = vmatpush.msra.mxu0 0.0
    %1958 = vmatpush.msra.mxu0 0.0
    %1959 = vmatpush.msra.mxu0 0.0
    %1960 = vmatpush.msra.mxu0 0.0
    %1961 = vmatpush.msra.mxu0 0.0
    %1962 = vmatpush.msra.mxu0 0.0
    %1963 = vmatpush.msra.mxu0 0.0
    %1964 = vmatpush.msra.mxu0 0.0
    %1965 = vmatpush.msra.mxu0 0.0
    %1966 = vmatpush.msra.mxu0 %v1273
    %1967 = vmatpush.msra.mxu0 %v1272
    %1968 = vmatpush.msra.mxu0 %v1271
    %1969 = vmatpush.msra.mxu0 %v1270
    %1970 = vmatmul.f32.gmra.mxu0 %v1952
    %v1971 = vpop.f32.mrf.mxu0
    %v1972 = vadd.f32 0.0, %v1971
    %1973 = vdwg.mxu0
    %v1974 = vadd.f32 %v1325, %v1946
    %v1975 = vxor.u32 %v1974, 2147483648
    %v1976 = vmul.f32 %v1975, 1.442695
    %v1977 = vpow.pop %v1976
    %v1978 = vadd.f32 %v1977, 1.0
    %v1979 = vrcp.pop %v1978
    %v1980 = vmul.f32 %v1978, %v1979
    %v1981 = vsub.f32 1.0, %v1980
    %v1982 = vmul.f32 %v1979, %v1981
    %v1983 = vadd.f32 %v1979, %v1982
    %vm1984 = vweird.f32 %v1978
    %vm1985 = vweird.f32 %v1979
    %vm1986 = vmor %vm1984, %vm1985
    %v1987 = vsel %vm1986, %v1979, %v1983
    %v1988 = vand.u32 2147483647, %v1978
    %vm1989 = vcmp.eq.f32.partialorder %v1988, 8.507059e+37
    %v1990 = vand.u32 %v1978, 2147483648
    %v1991 = vor.u32 1.1754944e-38, %v1990
    %v1992 = vsel %vm1989, %v1991, %v1987
    %v1993 = vmul.f32 1.0, %v1992
    %1995 = vrot.lane.b32.xlu0 %v1972, 32
    %v1996 = vpop.permute.xlu0 %1995
    %v1998 = vadd.f32 %v1325, %v1996
    %v1999 = vxor.u32 %v1998, 2147483648
    %v2000 = vmul.f32 %v1999, 1.442695
    %v2001 = vpow.pop %v2000
    %v2002 = vadd.f32 %v2001, 1.0
    %v2003 = vrcp.pop %v2002
    %v2004 = vmul.f32 %v2002, %v2003
    %v2005 = vsub.f32 1.0, %v2004
    %v2006 = vmul.f32 %v2003, %v2005
    %v2007 = vadd.f32 %v2003, %v2006
    %vm2008 = vweird.f32 %v2002
    %vm2009 = vweird.f32 %v2003
    %vm2010 = vmor %vm2008, %vm2009
    %v2011 = vsel %vm2010, %v2003, %v2007
    %v2012 = vand.u32 2147483647, %v2002
    %vm2013 = vcmp.eq.f32.partialorder %v2012, 8.507059e+37
    %v2014 = vand.u32 %v2002, 2147483648
    %v2015 = vor.u32 1.1754944e-38, %v2014
    %v2016 = vsel %vm2013, %v2015, %v2011
    %v2017 = vmul.f32 1.0, %v2016
    %2018 = vst [vmem:[#allocation1] ss:$4 sm:$0xff] %v1920
    %v2019 = vld.sshfl [vmem:[#allocation1] sm:$0xff pattern:$0x73625140]
    %2020 = vrot.lane.b32.xlu0 %v2019, 96
    %v2021 = vpop.permute.xlu0 %2020
    %v2022 = vsel %vm271, %v2021, 0
    %2024 = vmatpush.msra.mxu0 0.0
    %2025 = vmatpush.msra.mxu0 0.0
    %2026 = vmatpush.msra.mxu0 0.0
    %2027 = vmatpush.msra.mxu0 0.0
    %2028 = vmatpush.msra.mxu0 0.0
    %2029 = vmatpush.msra.mxu0 0.0
    %2030 = vmatpush.msra.mxu0 0.0
    %2031 = vmatpush.msra.mxu0 0.0
    %2032 = vmatpush.msra.mxu0 0.0
    %2033 = vmatpush.msra.mxu0 0.0
    %2034 = vmatpush.msra.mxu0 0.0
    %2035 = vmatpush.msra.mxu0 0.0
    %2036 = vmatpush.msra.mxu0 %v1277
    %2037 = vmatpush.msra.mxu0 %v1276
    %2038 = vmatpush.msra.mxu0 %v1275
    %2039 = vmatpush.msra.mxu0 %v1274
    %2040 = vmatmul.f32.gmra.mxu0 %v2022
    %v2041 = vpop.f32.mrf.mxu0
    %v2042 = vadd.f32 %v1354, %v2041
    %2043 = vdwg.mxu0
    %v2044 = vmul.f32 %v1993, %v2042
    %2046 = vrot.lane.b32.xlu0 %v2044, 64
    %v2047 = vpop.permute.xlu0 %2046
    %v2049 = vadd.f32 %v1325, %v2047
    %v2050 = vtanh.pop %v2049
    %v2051 = vsub.f32 1.0, %v2017
    %2053 = vrot.lane.b32.xlu0 %v2050, 96
    %v2054 = vpop.permute.xlu0 %2053
    %v2056 = vmul.f32 %v2051, %v2054
    %v2057 = vmul.f32 %v2017, %v1920
    %v2058 = vadd.f32 %v2056, %v2057
    %2060 = vst [vmem:[#allocation1] ss:$4 sm:$0xff] %v2058
    %v2061 = vld.sshfl [vmem:[#allocation1] sm:$0xff pattern:$0x73625140]
    %2062 = vrot.lane.b32.xlu0 %v2061, 96
    %v2063 = vpop.permute.xlu0 %2062
    %v2064 = vsel %vm271, %v2063, 0
    %2066 = vmatpush.msra.mxu0 0.0
    %2067 = vmatpush.msra.mxu0 0.0
    %2068 = vmatpush.msra.mxu0 0.0
    %2069 = vmatpush.msra.mxu0 0.0
    %2070 = vmatpush.msra.mxu0 0.0
    %2071 = vmatpush.msra.mxu0 0.0
    %2072 = vmatpush.msra.mxu0 0.0
    %2073 = vmatpush.msra.mxu0 0.0
    %2074 = vmatpush.msra.mxu0 0.0
    %2075 = vmatpush.msra.mxu0 0.0
    %2076 = vmatpush.msra.mxu0 0.0
    %2077 = vmatpush.msra.mxu0 0.0
    %2078 = vmatpush.msra.mxu0 %v1269
    %2079 = vmatpush.msra.mxu0 %v1268
    %2080 = vmatpush.msra.mxu0 %v1267
    %2081 = vmatpush.msra.mxu0 %v1266
    %2082 = vmatmul.f32.gmra.mxu0 %v2064
    %v2083 = vpop.f32.mrf.mxu0
    %v2084 = vadd.f32 0.0, %v2083
    %2085 = vdwg.mxu0
    %2086 = vst [vmem:[#allocation1] ss:$4 sm:$0xff] %v2058
    %v2087 = vld.sshfl [vmem:[#allocation1] sm:$0xff pattern:$0x73625140]
    %2088 = vrot.lane.b32.xlu0 %v2087, 96
    %v2089 = vpop.permute.xlu0 %2088
    %v2090 = vsel %vm271, %v2089, 0
    %2092 = vmatpush.msra.mxu0 0.0
    %2093 = vmatpush.msra.mxu0 0.0
    %2094 = vmatpush.msra.mxu0 0.0
    %2095 = vmatpush.msra.mxu0 0.0
    %2096 = vmatpush.msra.mxu0 0.0
    %2097 = vmatpush.msra.mxu0 0.0
    %2098 = vmatpush.msra.mxu0 0.0
    %2099 = vmatpush.msra.mxu0 0.0
    %2100 = vmatpush.msra.mxu0 0.0
    %2101 = vmatpush.msra.mxu0 0.0
    %2102 = vmatpush.msra.mxu0 0.0
    %2103 = vmatpush.msra.mxu0 0.0
    %2104 = vmatpush.msra.mxu0 %v1273
    %2105 = vmatpush.msra.mxu0 %v1272
    %2106 = vmatpush.msra.mxu0 %v1271
    %2107 = vmatpush.msra.mxu0 %v1270
    %2108 = vmatmul.f32.gmra.mxu0 %v2090
    %v2109 = vpop.f32.mrf.mxu0
    %v2110 = vadd.f32 0.0, %v2109
    %2111 = vdwg.mxu0
    %v2112 = vadd.f32 %v1326, %v2084
    %v2113 = vxor.u32 %v2112, 2147483648
    %v2114 = vmul.f32 %v2113, 1.442695
    %v2115 = vpow.pop %v2114
    %v2116 = vadd.f32 %v2115, 1.0
    %v2117 = vrcp.pop %v2116
    %v2118 = vmul.f32 %v2116, %v2117
    %v2119 = vsub.f32 1.0, %v2118
    %v2120 = vmul.f32 %v2117, %v2119
    %v2121 = vadd.f32 %v2117, %v2120
    %vm2122 = vweird.f32 %v2116
    %vm2123 = vweird.f32 %v2117
    %vm2124 = vmor %vm2122, %vm2123
    %v2125 = vsel %vm2124, %v2117, %v2121
    %v2126 = vand.u32 2147483647, %v2116
    %vm2127 = vcmp.eq.f32.partialorder %v2126, 8.507059e+37
    %v2128 = vand.u32 %v2116, 2147483648
    %v2129 = vor.u32 1.1754944e-38, %v2128
    %v2130 = vsel %vm2127, %v2129, %v2125
    %v2131 = vmul.f32 1.0, %v2130
    %2133 = vrot.lane.b32.xlu0 %v2110, 32
    %v2134 = vpop.permute.xlu0 %2133
    %v2136 = vadd.f32 %v1326, %v2134
    %v2137 = vxor.u32 %v2136, 2147483648
    %v2138 = vmul.f32 %v2137, 1.442695
    %v2139 = vpow.pop %v2138
    %v2140 = vadd.f32 %v2139, 1.0
    %v2141 = vrcp.pop %v2140
    %v2142 = vmul.f32 %v2140, %v2141
    %v2143 = vsub.f32 1.0, %v2142
    %v2144 = vmul.f32 %v2141, %v2143
    %v2145 = vadd.f32 %v2141, %v2144
    %vm2146 = vweird.f32 %v2140
    %vm2147 = vweird.f32 %v2141
    %vm2148 = vmor %vm2146, %vm2147
    %v2149 = vsel %vm2148, %v2141, %v2145
    %v2150 = vand.u32 2147483647, %v2140
    %vm2151 = vcmp.eq.f32.partialorder %v2150, 8.507059e+37
    %v2152 = vand.u32 %v2140, 2147483648
    %v2153 = vor.u32 1.1754944e-38, %v2152
    %v2154 = vsel %vm2151, %v2153, %v2149
    %v2155 = vmul.f32 1.0, %v2154
    %2156 = vst [vmem:[#allocation1] ss:$4 sm:$0xff] %v2058
    %v2157 = vld.sshfl [vmem:[#allocation1] sm:$0xff pattern:$0x73625140]
    %2158 = vrot.lane.b32.xlu0 %v2157, 96
    %v2159 = vpop.permute.xlu0 %2158
    %v2160 = vsel %vm271, %v2159, 0
    %2162 = vmatpush.msra.mxu0 0.0
    %2163 = vmatpush.msra.mxu0 0.0
    %2164 = vmatpush.msra.mxu0 0.0
    %2165 = vmatpush.msra.mxu0 0.0
    %2166 = vmatpush.msra.mxu0 0.0
    %2167 = vmatpush.msra.mxu0 0.0
    %2168 = vmatpush.msra.mxu0 0.0
    %2169 = vmatpush.msra.mxu0 0.0
    %2170 = vmatpush.msra.mxu0 0.0
    %2171 = vmatpush.msra.mxu0 0.0
    %2172 = vmatpush.msra.mxu0 0.0
    %2173 = vmatpush.msra.mxu0 0.0
    %2174 = vmatpush.msra.mxu0 %v1277
    %2175 = vmatpush.msra.mxu0 %v1276
    %2176 = vmatpush.msra.mxu0 %v1275
    %2177 = vmatpush.msra.mxu0 %v1274
    %2178 = vmatmul.f32.gmra.mxu0 %v2160
    %v2179 = vpop.f32.mrf.mxu0
    %v2180 = vadd.f32 %v1354, %v2179
    %2181 = vdwg.mxu0
    %v2182 = vmul.f32 %v2131, %v2180
    %2184 = vrot.lane.b32.xlu0 %v2182, 64
    %v2185 = vpop.permute.xlu0 %2184
    %v2187 = vadd.f32 %v1326, %v2185
    %v2188 = vtanh.pop %v2187
    %v2189 = vsub.f32 1.0, %v2155
    %2191 = vrot.lane.b32.xlu0 %v2188, 96
    %v2192 = vpop.permute.xlu0 %2191
    %v2194 = vmul.f32 %v2189, %v2192
    %v2195 = vmul.f32 %v2155, %v2058
    %v2196 = vadd.f32 %v2194, %v2195
    %2198 = vst [vmem:[#allocation1] ss:$4 sm:$0xff] %v2196
    %v2199 = vld.sshfl [vmem:[#allocation1] sm:$0xff pattern:$0x73625140]
    %2200 = vrot.lane.b32.xlu0 %v2199, 96
    %v2201 = vpop.permute.xlu0 %2200
    %v2202 = vsel %vm271, %v2201, 0
    %2204 = vmatpush.msra.mxu0 0.0
    %2205 = vmatpush.msra.mxu0 0.0
    %2206 = vmatpush.msra.mxu0 0.0
    %2207 = vmatpush.msra.mxu0 0.0
    %2208 = vmatpush.msra.mxu0 0.0
    %2209 = vmatpush.msra.mxu0 0.0
    %2210 = vmatpush.msra.mxu0 0.0
    %2211 = vmatpush.msra.mxu0 0.0
    %2212 = vmatpush.msra.mxu0 0.0
    %2213 = vmatpush.msra.mxu0 0.0
    %2214 = vmatpush.msra.mxu0 0.0
    %2215 = vmatpush.msra.mxu0 0.0
    %2216 = vmatpush.msra.mxu0 %v1269
    %2217 = vmatpush.msra.mxu0 %v1268
    %2218 = vmatpush.msra.mxu0 %v1267
    %2219 = vmatpush.msra.mxu0 %v1266
    %2220 = vmatmul.f32.gmra.mxu0 %v2202
    %v2221 = vpop.f32.mrf.mxu0
    %v2222 = vadd.f32 0.0, %v2221
    %2223 = vdwg.mxu0
    %2224 = vst [vmem:[#allocation1] ss:$4 sm:$0xff] %v2196
    %v2225 = vld.sshfl [vmem:[#allocation1] sm:$0xff pattern:$0x73625140]
    %2226 = vrot.lane.b32.xlu0 %v2225, 96
    %v2227 = vpop.permute.xlu0 %2226
    %v2228 = vsel %vm271, %v2227, 0
    %2230 = vmatpush.msra.mxu0 0.0
    %2231 = vmatpush.msra.mxu0 0.0
    %2232 = vmatpush.msra.mxu0 0.0
    %2233 = vmatpush.msra.mxu0 0.0
    %2234 = vmatpush.msra.mxu0 0.0
    %2235 = vmatpush.msra.mxu0 0.0
    %2236 = vmatpush.msra.mxu0 0.0
    %2237 = vmatpush.msra.mxu0 0.0
    %2238 = vmatpush.msra.mxu0 0.0
    %2239 = vmatpush.msra.mxu0 0.0
    %2240 = vmatpush.msra.mxu0 0.0
    %2241 = vmatpush.msra.mxu0 0.0
    %2242 = vmatpush.msra.mxu0 %v1273
    %2243 = vmatpush.msra.mxu0 %v1272
    %2244 = vmatpush.msra.mxu0 %v1271
    %2245 = vmatpush.msra.mxu0 %v1270
    %2246 = vmatmul.f32.gmra.mxu0 %v2228
    %v2247 = vpop.f32.mrf.mxu0
    %v2248 = vadd.f32 0.0, %v2247
    %2249 = vdwg.mxu0
    %v2250 = vadd.f32 %v1327, %v2222
    %v2251 = vxor.u32 %v2250, 2147483648
    %v2252 = vmul.f32 %v2251, 1.442695
    %v2253 = vpow.pop %v2252
    %v2254 = vadd.f32 %v2253, 1.0
    %v2255 = vrcp.pop %v2254
    %v2256 = vmul.f32 %v2254, %v2255
    %v2257 = vsub.f32 1.0, %v2256
    %v2258 = vmul.f32 %v2255, %v2257
    %v2259 = vadd.f32 %v2255, %v2258
    %vm2260 = vweird.f32 %v2254
    %vm2261 = vweird.f32 %v2255
    %vm2262 = vmor %vm2260, %vm2261
    %v2263 = vsel %vm2262, %v2255, %v2259
    %v2264 = vand.u32 2147483647, %v2254
    %vm2265 = vcmp.eq.f32.partialorder %v2264, 8.507059e+37
    %v2266 = vand.u32 %v2254, 2147483648
    %v2267 = vor.u32 1.1754944e-38, %v2266
    %v2268 = vsel %vm2265, %v2267, %v2263
    %v2269 = vmul.f32 1.0, %v2268
    %2271 = vrot.lane.b32.xlu0 %v2248, 32
    %v2272 = vpop.permute.xlu0 %2271
    %v2274 = vadd.f32 %v1327, %v2272
    %v2275 = vxor.u32 %v2274, 2147483648
    %v2276 = vmul.f32 %v2275, 1.442695
    %v2277 = vpow.pop %v2276
    %v2278 = vadd.f32 %v2277, 1.0
    %v2279 = vrcp.pop %v2278
    %v2280 = vmul.f32 %v2278, %v2279
    %v2281 = vsub.f32 1.0, %v2280
    %v2282 = vmul.f32 %v2279, %v2281
    %v2283 = vadd.f32 %v2279, %v2282
    %vm2284 = vweird.f32 %v2278
    %vm2285 = vweird.f32 %v2279
    %vm2286 = vmor %vm2284, %vm2285
    %v2287 = vsel %vm2286, %v2279, %v2283
    %v2288 = vand.u32 2147483647, %v2278
    %vm2289 = vcmp.eq.f32.partialorder %v2288, 8.507059e+37
    %v2290 = vand.u32 %v2278, 2147483648
    %v2291 = vor.u32 1.1754944e-38, %v2290
    %v2292 = vsel %vm2289, %v2291, %v2287
    %v2293 = vmul.f32 1.0, %v2292
    %2294 = vst [vmem:[#allocation1] ss:$4 sm:$0xff] %v2196
    %v2295 = vld.sshfl [vmem:[#allocation1] sm:$0xff pattern:$0x73625140]
    %2296 = vrot.lane.b32.xlu0 %v2295, 96
    %v2297 = vpop.permute.xlu0 %2296
    %v2298 = vsel %vm271, %v2297, 0
    %2300 = vmatpush.msra.mxu0 0.0
    %2301 = vmatpush.msra.mxu0 0.0
    %2302 = vmatpush.msra.mxu0 0.0
    %2303 = vmatpush.msra.mxu0 0.0
    %2304 = vmatpush.msra.mxu0 0.0
    %2305 = vmatpush.msra.mxu0 0.0
    %2306 = vmatpush.msra.mxu0 0.0
    %2307 = vmatpush.msra.mxu0 0.0
    %2308 = vmatpush.msra.mxu0 0.0
    %2309 = vmatpush.msra.mxu0 0.0
    %2310 = vmatpush.msra.mxu0 0.0
    %2311 = vmatpush.msra.mxu0 0.0
    %2312 = vmatpush.msra.mxu0 %v1277
    %2313 = vmatpush.msra.mxu0 %v1276
    %2314 = vmatpush.msra.mxu0 %v1275
    %2315 = vmatpush.msra.mxu0 %v1274
    %2316 = vmatmul.f32.gmra.mxu0 %v2298
    %v2317 = vpop.f32.mrf.mxu0
    %v2318 = vadd.f32 %v1354, %v2317
    %2319 = vdwg.mxu0
    %v2320 = vmul.f32 %v2269, %v2318
    %2322 = vrot.lane.b32.xlu0 %v2320, 64
    %v2323 = vpop.permute.xlu0 %2322
    %v2325 = vadd.f32 %v1327, %v2323
    %v2326 = vtanh.pop %v2325
    %v2327 = vsub.f32 1.0, %v2293
    %2329 = vrot.lane.b32.xlu0 %v2326, 96
    %v2330 = vpop.permute.xlu0 %2329
    %v2332 = vmul.f32 %v2327, %v2330
    %v2333 = vmul.f32 %v2293, %v2196
    %v2334 = vadd.f32 %v2332, %v2333
    %v2335 = vld [vmem:[%s3] sm:$0xff]
    %v2336 = vld [vmem:[%s3 + $0x8] sm:$0xff]
    %v2337 = vld [vmem:[%s53] sm:$0xf]
    %v2338 = vld [vmem:[%s55] sm:$0x1]
    %v2340 = vperm.slane %v2338, 0
    %v2343 = vsel %vm183, %v2335, 0
    %v2346 = vsel %vm183, %v2336, 0
    %v2349 = vsel %vm190, %v2337, 0
    %2351 = vmatpush.msra.mxu0 0.0
    %2352 = vmatpush.msra.mxu0 0.0
    %2353 = vmatpush.msra.mxu0 0.0
    %2354 = vmatpush.msra.mxu0 0.0
    %2355 = vmatpush.msra.mxu0 0.0
    %2356 = vmatpush.msra.mxu0 0.0
    %2357 = vmatpush.msra.mxu0 0.0
    %2358 = vmatpush.msra.mxu0 0.0
    %2359 = vmatpush.msra.mxu0 0.0
    %2360 = vmatpush.msra.mxu0 0.0
    %2361 = vmatpush.msra.mxu0 0.0
    %2362 = vmatpush.msra.mxu0 0.0
    %2363 = vmatpush.msra.mxu0 0.0
    %2364 = vmatpush.msra.mxu0 0.0
    %2365 = vmatpush.msra.mxu0 0.0
    %2366 = vmatpush.msra.mxu0 %v2349
    %2367 = vmatmul.f32.gmra.mxu0 %v2343
    %v2368 = vpop.f32.mrf.mxu0
    %v2369 = vadd.f32 %v2340, %v2368
    %2370 = vmatmul.f32.gmra.mxu0 %v2346
    %v2371 = vpop.f32.mrf.mxu0
    %v2372 = vadd.f32 %v2340, %v2371
    %2373 = vdwg.mxu0
    %v2374 = vmul.f32 %v2369, 0.5
    %v2375 = vmul.f32 %v2372, 0.5
    %v2376 = vmul.f32 %v2369, 0.70710677
    %v2377 = vmul.f32 %v2372, 0.70710677
    %v2378 = vmul.f32 %v2376, %v2376
    %v2379 = vmin.f32 16.0, %v2378
    %v2380 = vmul.f32 %v2379, 2.1237322e-06
    %v2381 = vadd.f32 %v2380, 0.00028619796
    %v2382 = vmul.f32 %v2379, %v2381
    %v2383 = vadd.f32 %v2382, 0.0036580483
    %v2384 = vmul.f32 %v2379, %v2383
    %v2385 = vadd.f32 %v2384, 0.05243302
    %v2386 = vmul.f32 %v2379, %v2385
    %v2387 = vadd.f32 %v2386, 0.18741608
    %v2388 = vmul.f32 %v2379, %v2387
    %v2389 = vadd.f32 %v2388, 1.1283791
    %v2390 = vmul.f32 %v2376, %v2389
    %v2391 = vmul.f32 %v2379, 3.8918573e-05
    %v2392 = vadd.f32 %v2391, 0.001143296
    %v2393 = vmul.f32 %v2379, %v2392
    %v2394 = vadd.f32 %v2393, 0.014752088
    %v2395 = vmul.f32 %v2379, %v2394
    %v2396 = vadd.f32 %v2395, 0.112945676
    %v2397 = vmul.f32 %v2379, %v2396
    %v2398 = vadd.f32 %v2397, 0.4994258
    %v2399 = vmul.f32 %v2379, %v2398
    %v2400 = vadd.f32 %v2399, 1.0
    %v2401 = vrcp.pop %v2400
    %v2402 = vmul.f32 %v2400, %v2401
    %v2403 = vsub.f32 1.0, %v2402
    %v2404 = vmul.f32 %v2401, %v2403
    %v2405 = vadd.f32 %v2401, %v2404
    %vm2406 = vweird.f32 %v2400
    %vm2407 = vweird.f32 %v2401
    %vm2408 = vmor %vm2406, %vm2407
    %v2409 = vsel %vm2408, %v2401, %v2405
    %v2410 = vand.u32 2147483647, %v2400
    %vm2411 = vcmp.eq.f32.partialorder %v2410, 8.507059e+37
    %v2412 = vand.u32 %v2400, 2147483648
    %v2413 = vor.u32 1.1754944e-38, %v2412
    %v2414 = vsel %vm2411, %v2413, %v2409
    %v2415 = vmul.f32 %v2390, %v2414
    %v2416 = vmin.f32 %v2415, 1.0
    %v2417 = vmax.f32 %v2416, -1.0
    %v2418 = vmul.f32 %v2377, %v2377
    %v2419 = vmin.f32 16.0, %v2418
    %v2420 = vmul.f32 %v2419, 2.1237322e-06
    %v2421 = vadd.f32 %v2420, 0.00028619796
    %v2422 = vmul.f32 %v2419, %v2421
    %v2423 = vadd.f32 %v2422, 0.0036580483
    %v2424 = vmul.f32 %v2419, %v2423
    %v2425 = vadd.f32 %v2424, 0.05243302
    %v2426 = vmul.f32 %v2419, %v2425
    %v2427 = vadd.f32 %v2426, 0.18741608
    %v2428 = vmul.f32 %v2419, %v2427
    %v2429 = vadd.f32 %v2428, 1.1283791
    %v2430 = vmul.f32 %v2377, %v2429
    %v2431 = vmul.f32 %v2419, 3.8918573e-05
    %v2432 = vadd.f32 %v2431, 0.001143296
    %v2433 = vmul.f32 %v2419, %v2432
    %v2434 = vadd.f32 %v2433, 0.014752088
    %v2435 = vmul.f32 %v2419, %v2434
    %v2436 = vadd.f32 %v2435, 0.112945676
    %v2437 = vmul.f32 %v2419, %v2436
    %v2438 = vadd.f32 %v2437, 0.4994258
    %v2439 = vmul.f32 %v2419, %v2438
    %v2440 = vadd.f32 %v2439, 1.0
    %v2441 = vrcp.pop %v2440
    %v2442 = vmul.f32 %v2440, %v2441
    %v2443 = vsub.f32 1.0, %v2442
    %v2444 = vmul.f32 %v2441, %v2443
    %v2445 = vadd.f32 %v2441, %v2444
    %vm2446 = vweird.f32 %v2440
    %vm2447 = vweird.f32 %v2441
    %vm2448 = vmor %vm2446, %vm2447
    %v2449 = vsel %vm2448, %v2441, %v2445
    %v2450 = vand.u32 2147483647, %v2440
    %vm2451 = vcmp.eq.f32.partialorder %v2450, 8.507059e+37
    %v2452 = vand.u32 %v2440, 2147483648
    %v2453 = vor.u32 1.1754944e-38, %v2452
    %v2454 = vsel %vm2451, %v2453, %v2449
    %v2455 = vmul.f32 %v2430, %v2454
    %v2456 = vmin.f32 %v2455, 1.0
    %v2457 = vmax.f32 %v2456, -1.0
    %v2458 = vadd.f32 %v2417, 1.0
    %v2459 = vadd.f32 %v2457, 1.0
    %v2460 = vmul.f32 %v2374, %v2458
    %v2461 = vmul.f32 %v2375, %v2459
    %v2462 = vld [vmem:[%s31] sm:$0xff]
    %v2463 = vld [vmem:[%s31 + $0x8] sm:$0xff]
    %v2464 = vld [vmem:[%s31 + $0x10] sm:$0xff]
    %v2465 = vld [vmem:[%s31 + $0x18] sm:$0xff]
    %v2466 = vld [vmem:[%s33] sm:$0xff]
    %v2467 = vld [vmem:[%s33 + $0x8] sm:$0xff]
    %v2468 = vld [vmem:[%s33 + $0x10] sm:$0xff]
    %v2469 = vld [vmem:[%s33 + $0x18] sm:$0xff]
    %v2470 = vld [vmem:[%s35] sm:$0xff]
    %v2471 = vld [vmem:[%s35 + $0x8] sm:$0xff]
    %v2472 = vld [vmem:[%s35 + $0x10] sm:$0xff]
    %v2473 = vld [vmem:[%s35 + $0x18] sm:$0xff]
    %v2474 = vld [vmem:[%s39] sm:$0x1]
    %v2475 = vld [vmem:[%s29] sm:$0xff]
    %v2476 = vld [vmem:[%s29 + $0x8] sm:$0xff]
    %v2477 = vld [vmem:[%s37] sm:$0x1]
    %v2479 = vperm.slane %v2477, 0
    %vm2481 = vcmask 130048
    %v2483 = vsel %vm2481, %v2460, 0
    %v2486 = vsel %vm2481, %v2461, 0
    %2488 = vmatpush.msra.mxu0 0.0
    %2489 = vmatpush.msra.mxu0 0.0
    %2490 = vmatpush.msra.mxu0 0.0
    %2491 = vmatpush.msra.mxu0 0.0
    %2492 = vmatpush.msra.mxu0 0.0
    %2493 = vmatpush.msra.mxu0 0.0
    %2494 = vmatpush.msra.mxu0 0.0
    %2495 = vmatpush.msra.mxu0 0.0
    %2496 = vmatpush.msra.mxu0 0.0
    %2497 = vmatpush.msra.mxu0 0.0
    %2498 = vmatpush.msra.mxu0 0.0
    %2499 = vmatpush.msra.mxu0 0.0
    %2500 = vmatpush.msra.mxu0 0.0
    %2501 = vmatpush.msra.mxu0 0.0
    %2502 = vmatpush.msra.mxu0 %v2476
    %2503 = vmatpush.msra.mxu0 %v2475
    %2504 = vmatmul.f32.gmra.mxu0 %v2483
    %v2505 = vpop.f32.mrf.mxu0
    %v2506 = vadd.f32 %v2479, %v2505
    %2507 = vmatmul.f32.gmra.mxu0 %v2486
    %v2508 = vpop.f32.mrf.mxu0
    %v2509 = vadd.f32 %v2479, %v2508
    %2510 = vdwg.mxu0
    %v2513 = vrot.slane %v2506, 2
    %v2514 = vrot.slane %v2506, 4
    %v2515 = vrot.slane %v2506, 6
    %v2516 = vrot.slane %v2509, 2
    %v2517 = vrot.slane %v2509, 4
    %v2518 = vrot.slane %v2509, 6
    %v2525 = vxor.u32 %v2506, 2147483648
    %v2526 = vmul.f32 %v2525, 1.442695
    %v2527 = vpow.pop %v2526
    %v2528 = vadd.f32 %v2527, 1.0
    %v2529 = vrcp.pop %v2528
    %v2530 = vmul.f32 %v2528, %v2529
    %v2531 = vsub.f32 1.0, %v2530
    %v2532 = vmul.f32 %v2529, %v2531
    %v2533 = vadd.f32 %v2529, %v2532
    %vm2534 = vweird.f32 %v2528
    %vm2535 = vweird.f32 %v2529
    %vm2536 = vmor %vm2534, %vm2535
    %v2537 = vsel %vm2536, %v2529, %v2533
    %v2538 = vand.u32 2147483647, %v2528
    %vm2539 = vcmp.eq.f32.partialorder %v2538, 8.507059e+37
    %v2540 = vand.u32 %v2528, 2147483648
    %v2541 = vor.u32 1.1754944e-38, %v2540
    %v2542 = vsel %vm2539, %v2541, %v2537
    %v2543 = vmul.f32 1.0, %v2542
    %v2545 = vperm.slane %v2474, 0
    %v2547 = vmul.f32 %v2543, %v2545
    %2549 = vrot.lane.b32.xlu0 %v2547, 64
    %v2550 = vpop.permute.xlu0 %2549
    %v2552 = vadd.f32 %v2506, %v2550
    %v2553 = vtanh.pop %v2552
    %v2554 = vsub.f32 1.0, %v2543
    %2556 = vrot.lane.b32.xlu0 %v2553, 96
    %v2557 = vpop.permute.xlu0 %2556
    %v2559 = vmul.f32 %v2554, %v2557
    %2561 = vst [vmem:[#allocation1] ss:$4 sm:$0xff] %v2559
    %v2562 = vld.sshfl [vmem:[#allocation1] sm:$0xff pattern:$0x73625140]
    %2563 = vrot.lane.b32.xlu0 %v2562, 96
    %v2564 = vpop.permute.xlu0 %2563
    %v2565 = vsel %vm271, %v2564, 0
    %2567 = vmatpush.msra.mxu0 0.0
    %2568 = vmatpush.msra.mxu0 0.0
    %2569 = vmatpush.msra.mxu0 0.0
    %2570 = vmatpush.msra.mxu0 0.0
    %2571 = vmatpush.msra.mxu0 0.0
    %2572 = vmatpush.msra.mxu0 0.0
    %2573 = vmatpush.msra.mxu0 0.0
    %2574 = vmatpush.msra.mxu0 0.0
    %2575 = vmatpush.msra.mxu0 0.0
    %2576 = vmatpush.msra.mxu0 0.0
    %2577 = vmatpush.msra.mxu0 0.0
    %2578 = vmatpush.msra.mxu0 0.0
    %2579 = vmatpush.msra.mxu0 %v2465
    %2580 = vmatpush.msra.mxu0 %v2464
    %2581 = vmatpush.msra.mxu0 %v2463
    %2582 = vmatpush.msra.mxu0 %v2462
    %2583 = vmatmul.f32.gmra.mxu0 %v2565
    %v2584 = vpop.f32.mrf.mxu0
    %v2585 = vadd.f32 0.0, %v2584
    %2586 = vdwg.mxu0
    %2587 = vst [vmem:[#allocation1] ss:$4 sm:$0xff] %v2559
    %v2588 = vld.sshfl [vmem:[#allocation1] sm:$0xff pattern:$0x73625140]
    %2589 = vrot.lane.b32.xlu0 %v2588, 96
    %v2590 = vpop.permute.xlu0 %2589
    %v2591 = vsel %vm271, %v2590, 0
    %2593 = vmatpush.msra.mxu0 0.0
    %2594 = vmatpush.msra.mxu0 0.0
    %2595 = vmatpush.msra.mxu0 0.0
    %2596 = vmatpush.msra.mxu0 0.0
    %2597 = vmatpush.msra.mxu0 0.0
    %2598 = vmatpush.msra.mxu0 0.0
    %2599 = vmatpush.msra.mxu0 0.0
    %2600 = vmatpush.msra.mxu0 0.0
    %2601 = vmatpush.msra.mxu0 0.0
    %2602 = vmatpush.msra.mxu0 0.0
    %2603 = vmatpush.msra.mxu0 0.0
    %2604 = vmatpush.msra.mxu0 0.0
    %2605 = vmatpush.msra.mxu0 %v2469
    %2606 = vmatpush.msra.mxu0 %v2468
    %2607 = vmatpush.msra.mxu0 %v2467
    %2608 = vmatpush.msra.mxu0 %v2466
    %2609 = vmatmul.f32.gmra.mxu0 %v2591
    %v2610 = vpop.f32.mrf.mxu0
    %v2611 = vadd.f32 0.0, %v2610
    %2612 = vdwg.mxu0
    %v2613 = vadd.f32 %v2513, %v2585
    %v2614 = vxor.u32 %v2613, 2147483648
    %v2615 = vmul.f32 %v2614, 1.442695
    %v2616 = vpow.pop %v2615
    %v2617 = vadd.f32 %v2616, 1.0
    %v2618 = vrcp.pop %v2617
    %v2619 = vmul.f32 %v2617, %v2618
    %v2620 = vsub.f32 1.0, %v2619
    %v2621 = vmul.f32 %v2618, %v2620
    %v2622 = vadd.f32 %v2618, %v2621
    %vm2623 = vweird.f32 %v2617
    %vm2624 = vweird.f32 %v2618
    %vm2625 = vmor %vm2623, %vm2624
    %v2626 = vsel %vm2625, %v2618, %v2622
    %v2627 = vand.u32 2147483647, %v2617
    %vm2628 = vcmp.eq.f32.partialorder %v2627, 8.507059e+37
    %v2629 = vand.u32 %v2617, 2147483648
    %v2630 = vor.u32 1.1754944e-38, %v2629
    %v2631 = vsel %vm2628, %v2630, %v2626
    %v2632 = vmul.f32 1.0, %v2631
    %2634 = vrot.lane.b32.xlu0 %v2611, 32
    %v2635 = vpop.permute.xlu0 %2634
    %v2637 = vadd.f32 %v2513, %v2635
    %v2638 = vxor.u32 %v2637, 2147483648
    %v2639 = vmul.f32 %v2638, 1.442695
    %v2640 = vpow.pop %v2639
    %v2641 = vadd.f32 %v2640, 1.0
    %v2642 = vrcp.pop %v2641
    %v2643 = vmul.f32 %v2641, %v2642
    %v2644 = vsub.f32 1.0, %v2643
    %v2645 = vmul.f32 %v2642, %v2644
    %v2646 = vadd.f32 %v2642, %v2645
    %vm2647 = vweird.f32 %v2641
    %vm2648 = vweird.f32 %v2642
    %vm2649 = vmor %vm2647, %vm2648
    %v2650 = vsel %vm2649, %v2642, %v2646
    %v2651 = vand.u32 2147483647, %v2641
    %vm2652 = vcmp.eq.f32.partialorder %v2651, 8.507059e+37
    %v2653 = vand.u32 %v2641, 2147483648
    %v2654 = vor.u32 1.1754944e-38, %v2653
    %v2655 = vsel %vm2652, %v2654, %v2650
    %v2656 = vmul.f32 1.0, %v2655
    %2657 = vst [vmem:[#allocation1] ss:$4 sm:$0xff] %v2559
    %v2658 = vld.sshfl [vmem:[#allocation1] sm:$0xff pattern:$0x73625140]
    %2659 = vrot.lane.b32.xlu0 %v2658, 96
    %v2660 = vpop.permute.xlu0 %2659
    %v2661 = vsel %vm271, %v2660, 0
    %2663 = vmatpush.msra.mxu0 0.0
    %2664 = vmatpush.msra.mxu0 0.0
    %2665 = vmatpush.msra.mxu0 0.0
    %2666 = vmatpush.msra.mxu0 0.0
    %2667 = vmatpush.msra.mxu0 0.0
    %2668 = vmatpush.msra.mxu0 0.0
    %2669 = vmatpush.msra.mxu0 0.0
    %2670 = vmatpush.msra.mxu0 0.0
    %2671 = vmatpush.msra.mxu0 0.0
    %2672 = vmatpush.msra.mxu0 0.0
    %2673 = vmatpush.msra.mxu0 0.0
    %2674 = vmatpush.msra.mxu0 0.0
    %2675 = vmatpush.msra.mxu0 %v2473
    %2676 = vmatpush.msra.mxu0 %v2472
    %2677 = vmatpush.msra.mxu0 %v2471
    %2678 = vmatpush.msra.mxu0 %v2470
    %2679 = vmatmul.f32.gmra.mxu0 %v2661
    %v2680 = vpop.f32.mrf.mxu0
    %v2681 = vadd.f32 %v2545, %v2680
    %2682 = vdwg.mxu0
    %v2683 = vmul.f32 %v2632, %v2681
    %2685 = vrot.lane.b32.xlu0 %v2683, 64
    %v2686 = vpop.permute.xlu0 %2685
    %v2688 = vadd.f32 %v2513, %v2686
    %v2689 = vtanh.pop %v2688
    %v2690 = vsub.f32 1.0, %v2656
    %2692 = vrot.lane.b32.xlu0 %v2689, 96
    %v2693 = vpop.permute.xlu0 %2692
    %v2695 = vmul.f32 %v2690, %v2693
    %v2696 = vmul.f32 %v2656, %v2559
    %v2697 = vadd.f32 %v2695, %v2696
    %2699 = vst [vmem:[#allocation1] ss:$4 sm:$0xff] %v2697
    %v2700 = vld.sshfl [vmem:[#allocation1] sm:$0xff pattern:$0x73625140]
    %2701 = vrot.lane.b32.xlu0 %v2700, 96
    %v2702 = vpop.permute.xlu0 %2701
    %v2703 = vsel %vm271, %v2702, 0
    %2705 = vmatpush.msra.mxu0 0.0
    %2706 = vmatpush.msra.mxu0 0.0
    %2707 = vmatpush.msra.mxu0 0.0
    %2708 = vmatpush.msra.mxu0 0.0
    %2709 = vmatpush.msra.mxu0 0.0
    %2710 = vmatpush.msra.mxu0 0.0
    %2711 = vmatpush.msra.mxu0 0.0
    %2712 = vmatpush.msra.mxu0 0.0
    %2713 = vmatpush.msra.mxu0 0.0
    %2714 = vmatpush.msra.mxu0 0.0
    %2715 = vmatpush.msra.mxu0 0.0
    %2716 = vmatpush.msra.mxu0 0.0
    %2717 = vmatpush.msra.mxu0 %v2465
    %2718 = vmatpush.msra.mxu0 %v2464
    %2719 = vmatpush.msra.mxu0 %v2463
    %2720 = vmatpush.msra.mxu0 %v2462
    %2721 = vmatmul.f32.gmra.mxu0 %v2703
    %v2722 = vpop.f32.mrf.mxu0
    %v2723 = vadd.f32 0.0, %v2722
    %2724 = vdwg.mxu0
    %2725 = vst [vmem:[#allocation1] ss:$4 sm:$0xff] %v2697
    %v2726 = vld.sshfl [vmem:[#allocation1] sm:$0xff pattern:$0x73625140]
    %2727 = vrot.lane.b32.xlu0 %v2726, 96
    %v2728 = vpop.permute.xlu0 %2727
    %v2729 = vsel %vm271, %v2728, 0
    %2731 = vmatpush.msra.mxu0 0.0
    %2732 = vmatpush.msra.mxu0 0.0
    %2733 = vmatpush.msra.mxu0 0.0
    %2734 = vmatpush.msra.mxu0 0.0
    %2735 = vmatpush.msra.mxu0 0.0
    %2736 = vmatpush.msra.mxu0 0.0
    %2737 = vmatpush.msra.mxu0 0.0
    %2738 = vmatpush.msra.mxu0 0.0
    %2739 = vmatpush.msra.mxu0 0.0
    %2740 = vmatpush.msra.mxu0 0.0
    %2741 = vmatpush.msra.mxu0 0.0
    %2742 = vmatpush.msra.mxu0 0.0
    %2743 = vmatpush.msra.mxu0 %v2469
    %2744 = vmatpush.msra.mxu0 %v2468
    %2745 = vmatpush.msra.mxu0 %v2467
    %2746 = vmatpush.msra.mxu0 %v2466
    %2747 = vmatmul.f32.gmra.mxu0 %v2729
    %v2748 = vpop.f32.mrf.mxu0
    %v2749 = vadd.f32 0.0, %v2748
    %2750 = vdwg.mxu0
    %v2751 = vadd.f32 %v2514, %v2723
    %v2752 = vxor.u32 %v2751, 2147483648
    %v2753 = vmul.f32 %v2752, 1.442695
    %v2754 = vpow.pop %v2753
    %v2755 = vadd.f32 %v2754, 1.0
    %v2756 = vrcp.pop %v2755
    %v2757 = vmul.f32 %v2755, %v2756
    %v2758 = vsub.f32 1.0, %v2757
    %v2759 = vmul.f32 %v2756, %v2758
    %v2760 = vadd.f32 %v2756, %v2759
    %vm2761 = vweird.f32 %v2755
    %vm2762 = vweird.f32 %v2756
    %vm2763 = vmor %vm2761, %vm2762
    %v2764 = vsel %vm2763, %v2756, %v2760
    %v2765 = vand.u32 2147483647, %v2755
    %vm2766 = vcmp.eq.f32.partialorder %v2765, 8.507059e+37
    %v2767 = vand.u32 %v2755, 2147483648
    %v2768 = vor.u32 1.1754944e-38, %v2767
    %v2769 = vsel %vm2766, %v2768, %v2764
    %v2770 = vmul.f32 1.0, %v2769
    %2772 = vrot.lane.b32.xlu0 %v2749, 32
    %v2773 = vpop.permute.xlu0 %2772
    %v2775 = vadd.f32 %v2514, %v2773
    %v2776 = vxor.u32 %v2775, 2147483648
    %v2777 = vmul.f32 %v2776, 1.442695
    %v2778 = vpow.pop %v2777
    %v2779 = vadd.f32 %v2778, 1.0
    %v2780 = vrcp.pop %v2779
    %v2781 = vmul.f32 %v2779, %v2780
    %v2782 = vsub.f32 1.0, %v2781
    %v2783 = vmul.f32 %v2780, %v2782
    %v2784 = vadd.f32 %v2780, %v2783
    %vm2785 = vweird.f32 %v2779
    %vm2786 = vweird.f32 %v2780
    %vm2787 = vmor %vm2785, %vm2786
    %v2788 = vsel %vm2787, %v2780, %v2784
    %v2789 = vand.u32 2147483647, %v2779
    %vm2790 = vcmp.eq.f32.partialorder %v2789, 8.507059e+37
    %v2791 = vand.u32 %v2779, 2147483648
    %v2792 = vor.u32 1.1754944e-38, %v2791
    %v2793 = vsel %vm2790, %v2792, %v2788
    %v2794 = vmul.f32 1.0, %v2793
    %2795 = vst [vmem:[#allocation1] ss:$4 sm:$0xff] %v2697
    %v2796 = vld.sshfl [vmem:[#allocation1] sm:$0xff pattern:$0x73625140]
    %2797 = vrot.lane.b32.xlu0 %v2796, 96
    %v2798 = vpop.permute.xlu0 %2797
    %v2799 = vsel %vm271, %v2798, 0
    %2801 = vmatpush.msra.mxu0 0.0
    %2802 = vmatpush.msra.mxu0 0.0
    %2803 = vmatpush.msra.mxu0 0.0
    %2804 = vmatpush.msra.mxu0 0.0
    %2805 = vmatpush.msra.mxu0 0.0
    %2806 = vmatpush.msra.mxu0 0.0
    %2807 = vmatpush.msra.mxu0 0.0
    %2808 = vmatpush.msra.mxu0 0.0
    %2809 = vmatpush.msra.mxu0 0.0
    %2810 = vmatpush.msra.mxu0 0.0
    %2811 = vmatpush.msra.mxu0 0.0
    %2812 = vmatpush.msra.mxu0 0.0
    %2813 = vmatpush.msra.mxu0 %v2473
    %2814 = vmatpush.msra.mxu0 %v2472
    %2815 = vmatpush.msra.mxu0 %v2471
    %2816 = vmatpush.msra.mxu0 %v2470
    %2817 = vmatmul.f32.gmra.mxu0 %v2799
    %v2818 = vpop.f32.mrf.mxu0
    %v2819 = vadd.f32 %v2545, %v2818
    %2820 = vdwg.mxu0
    %v2821 = vmul.f32 %v2770, %v2819
    %2823 = vrot.lane.b32.xlu0 %v2821, 64
    %v2824 = vpop.permute.xlu0 %2823
    %v2826 = vadd.f32 %v2514, %v2824
    %v2827 = vtanh.pop %v2826
    %v2828 = vsub.f32 1.0, %v2794
    %2830 = vrot.lane.b32.xlu0 %v2827, 96
    %v2831 = vpop.permute.xlu0 %2830
    %v2833 = vmul.f32 %v2828, %v2831
    %v2834 = vmul.f32 %v2794, %v2697
    %v2835 = vadd.f32 %v2833, %v2834
    %2837 = vst [vmem:[#allocation1] ss:$4 sm:$0xff] %v2835
    %v2838 = vld.sshfl [vmem:[#allocation1] sm:$0xff pattern:$0x73625140]
    %2839 = vrot.lane.b32.xlu0 %v2838, 96
    %v2840 = vpop.permute.xlu0 %2839
    %v2841 = vsel %vm271, %v2840, 0
    %2843 = vmatpush.msra.mxu0 0.0
    %2844 = vmatpush.msra.mxu0 0.0
    %2845 = vmatpush.msra.mxu0 0.0
    %2846 = vmatpush.msra.mxu0 0.0
    %2847 = vmatpush.msra.mxu0 0.0
    %2848 = vmatpush.msra.mxu0 0.0
    %2849 = vmatpush.msra.mxu0 0.0
    %2850 = vmatpush.msra.mxu0 0.0
    %2851 = vmatpush.msra.mxu0 0.0
    %2852 = vmatpush.msra.mxu0 0.0
    %2853 = vmatpush.msra.mxu0 0.0
    %2854 = vmatpush.msra.mxu0 0.0
    %2855 = vmatpush.msra.mxu0 %v2465
    %2856 = vmatpush.msra.mxu0 %v2464
    %2857 = vmatpush.msra.mxu0 %v2463
    %2858 = vmatpush.msra.mxu0 %v2462
    %2859 = vmatmul.f32.gmra.mxu0 %v2841
    %v2860 = vpop.f32.mrf.mxu0
    %v2861 = vadd.f32 0.0, %v2860
    %2862 = vdwg.mxu0
    %2863 = vst [vmem:[#allocation1] ss:$4 sm:$0xff] %v2835
    %v2864 = vld.sshfl [vmem:[#allocation1] sm:$0xff pattern:$0x73625140]
    %2865 = vrot.lane.b32.xlu0 %v2864, 96
    %v2866 = vpop.permute.xlu0 %2865
    %v2867 = vsel %vm271, %v2866, 0
    %2869 = vmatpush.msra.mxu0 0.0
    %2870 = vmatpush.msra.mxu0 0.0
    %2871 = vmatpush.msra.mxu0 0.0
    %2872 = vmatpush.msra.mxu0 0.0
    %2873 = vmatpush.msra.mxu0 0.0
    %2874 = vmatpush.msra.mxu0 0.0
    %2875 = vmatpush.msra.mxu0 0.0
    %2876 = vmatpush.msra.mxu0 0.0
    %2877 = vmatpush.msra.mxu0 0.0
    %2878 = vmatpush.msra.mxu0 0.0
    %2879 = vmatpush.msra.mxu0 0.0
    %2880 = vmatpush.msra.mxu0 0.0
    %2881 = vmatpush.msra.mxu0 %v2469
    %2882 = vmatpush.msra.mxu0 %v2468
    %2883 = vmatpush.msra.mxu0 %v2467
    %2884 = vmatpush.msra.mxu0 %v2466
    %2885 = vmatmul.f32.gmra.mxu0 %v2867
    %v2886 = vpop.f32.mrf.mxu0
    %v2887 = vadd.f32 0.0, %v2886
    %2888 = vdwg.mxu0
    %v2889 = vadd.f32 %v2515, %v2861
    %v2890 = vxor.u32 %v2889, 2147483648
    %v2891 = vmul.f32 %v2890, 1.442695
    %v2892 = vpow.pop %v2891
    %v2893 = vadd.f32 %v2892, 1.0
    %v2894 = vrcp.pop %v2893
    %v2895 = vmul.f32 %v2893, %v2894
    %v2896 = vsub.f32 1.0, %v2895
    %v2897 = vmul.f32 %v2894, %v2896
    %v2898 = vadd.f32 %v2894, %v2897
    %vm2899 = vweird.f32 %v2893
    %vm2900 = vweird.f32 %v2894
    %vm2901 = vmor %vm2899, %vm2900
    %v2902 = vsel %vm2901, %v2894, %v2898
    %v2903 = vand.u32 2147483647, %v2893
    %vm2904 = vcmp.eq.f32.partialorder %v2903, 8.507059e+37
    %v2905 = vand.u32 %v2893, 2147483648
    %v2906 = vor.u32 1.1754944e-38, %v2905
    %v2907 = vsel %vm2904, %v2906, %v2902
    %v2908 = vmul.f32 1.0, %v2907
    %2910 = vrot.lane.b32.xlu0 %v2887, 32
    %v2911 = vpop.permute.xlu0 %2910
    %v2913 = vadd.f32 %v2515, %v2911
    %v2914 = vxor.u32 %v2913, 2147483648
    %v2915 = vmul.f32 %v2914, 1.442695
    %v2916 = vpow.pop %v2915
    %v2917 = vadd.f32 %v2916, 1.0
    %v2918 = vrcp.pop %v2917
    %v2919 = vmul.f32 %v2917, %v2918
    %v2920 = vsub.f32 1.0, %v2919
    %v2921 = vmul.f32 %v2918, %v2920
    %v2922 = vadd.f32 %v2918, %v2921
    %vm2923 = vweird.f32 %v2917
    %vm2924 = vweird.f32 %v2918
    %vm2925 = vmor %vm2923, %vm2924
    %v2926 = vsel %vm2925, %v2918, %v2922
    %v2927 = vand.u32 2147483647, %v2917
    %vm2928 = vcmp.eq.f32.partialorder %v2927, 8.507059e+37
    %v2929 = vand.u32 %v2917, 2147483648
    %v2930 = vor.u32 1.1754944e-38, %v2929
    %v2931 = vsel %vm2928, %v2930, %v2926
    %v2932 = vmul.f32 1.0, %v2931
    %2933 = vst [vmem:[#allocation1] ss:$4 sm:$0xff] %v2835
    %v2934 = vld.sshfl [vmem:[#allocation1] sm:$0xff pattern:$0x73625140]
    %2935 = vrot.lane.b32.xlu0 %v2934, 96
    %v2936 = vpop.permute.xlu0 %2935
    %v2937 = vsel %vm271, %v2936, 0
    %2939 = vmatpush.msra.mxu0 0.0
    %2940 = vmatpush.msra.mxu0 0.0
    %2941 = vmatpush.msra.mxu0 0.0
    %2942 = vmatpush.msra.mxu0 0.0
    %2943 = vmatpush.msra.mxu0 0.0
    %2944 = vmatpush.msra.mxu0 0.0
    %2945 = vmatpush.msra.mxu0 0.0
    %2946 = vmatpush.msra.mxu0 0.0
    %2947 = vmatpush.msra.mxu0 0.0
    %2948 = vmatpush.msra.mxu0 0.0
    %2949 = vmatpush.msra.mxu0 0.0
    %2950 = vmatpush.msra.mxu0 0.0
    %2951 = vmatpush.msra.mxu0 %v2473
    %2952 = vmatpush.msra.mxu0 %v2472
    %2953 = vmatpush.msra.mxu0 %v2471
    %2954 = vmatpush.msra.mxu0 %v2470
    %2955 = vmatmul.f32.gmra.mxu0 %v2937
    %v2956 = vpop.f32.mrf.mxu0
    %v2957 = vadd.f32 %v2545, %v2956
    %2958 = vdwg.mxu0
    %v2959 = vmul.f32 %v2908, %v2957
    %2961 = vrot.lane.b32.xlu0 %v2959, 64
    %v2962 = vpop.permute.xlu0 %2961
    %v2964 = vadd.f32 %v2515, %v2962
    %v2965 = vtanh.pop %v2964
    %v2966 = vsub.f32 1.0, %v2932
    %2968 = vrot.lane.b32.xlu0 %v2965, 96
    %v2969 = vpop.permute.xlu0 %2968
    %v2971 = vmul.f32 %v2966, %v2969
    %v2972 = vmul.f32 %v2932, %v2835
    %v2973 = vadd.f32 %v2971, %v2972
    %2975 = vst [vmem:[#allocation1] ss:$4 sm:$0xff] %v2973
    %v2976 = vld.sshfl [vmem:[#allocation1] sm:$0xff pattern:$0x73625140]
    %2977 = vrot.lane.b32.xlu0 %v2976, 96
    %v2978 = vpop.permute.xlu0 %2977
    %v2979 = vsel %vm271, %v2978, 0
    %2981 = vmatpush.msra.mxu0 0.0
    %2982 = vmatpush.msra.mxu0 0.0
    %2983 = vmatpush.msra.mxu0 0.0
    %2984 = vmatpush.msra.mxu0 0.0
    %2985 = vmatpush.msra.mxu0 0.0
    %2986 = vmatpush.msra.mxu0 0.0
    %2987 = vmatpush.msra.mxu0 0.0
    %2988 = vmatpush.msra.mxu0 0.0
    %2989 = vmatpush.msra.mxu0 0.0
    %2990 = vmatpush.msra.mxu0 0.0
    %2991 = vmatpush.msra.mxu0 0.0
    %2992 = vmatpush.msra.mxu0 0.0
    %2993 = vmatpush.msra.mxu0 %v2465
    %2994 = vmatpush.msra.mxu0 %v2464
    %2995 = vmatpush.msra.mxu0 %v2463
    %2996 = vmatpush.msra.mxu0 %v2462
    %2997 = vmatmul.f32.gmra.mxu0 %v2979
    %v2998 = vpop.f32.mrf.mxu0
    %v2999 = vadd.f32 0.0, %v2998
    %3000 = vdwg.mxu0
    %3001 = vst [vmem:[#allocation1] ss:$4 sm:$0xff] %v2973
    %v3002 = vld.sshfl [vmem:[#allocation1] sm:$0xff pattern:$0x73625140]
    %3003 = vrot.lane.b32.xlu0 %v3002, 96
    %v3004 = vpop.permute.xlu0 %3003
    %v3005 = vsel %vm271, %v3004, 0
    %3007 = vmatpush.msra.mxu0 0.0
    %3008 = vmatpush.msra.mxu0 0.0
    %3009 = vmatpush.msra.mxu0 0.0
    %3010 = vmatpush.msra.mxu0 0.0
    %3011 = vmatpush.msra.mxu0 0.0
    %3012 = vmatpush.msra.mxu0 0.0
    %3013 = vmatpush.msra.mxu0 0.0
    %3014 = vmatpush.msra.mxu0 0.0
    %3015 = vmatpush.msra.mxu0 0.0
    %3016 = vmatpush.msra.mxu0 0.0
    %3017 = vmatpush.msra.mxu0 0.0
    %3018 = vmatpush.msra.mxu0 0.0
    %3019 = vmatpush.msra.mxu0 %v2469
    %3020 = vmatpush.msra.mxu0 %v2468
    %3021 = vmatpush.msra.mxu0 %v2467
    %3022 = vmatpush.msra.mxu0 %v2466
    %3023 = vmatmul.f32.gmra.mxu0 %v3005
    %v3024 = vpop.f32.mrf.mxu0
    %v3025 = vadd.f32 0.0, %v3024
    %3026 = vdwg.mxu0
    %v3027 = vadd.f32 %v2509, %v2999
    %v3028 = vxor.u32 %v3027, 2147483648
    %v3029 = vmul.f32 %v3028, 1.442695
    %v3030 = vpow.pop %v3029
    %v3031 = vadd.f32 %v3030, 1.0
    %v3032 = vrcp.pop %v3031
    %v3033 = vmul.f32 %v3031, %v3032
    %v3034 = vsub.f32 1.0, %v3033
    %v3035 = vmul.f32 %v3032, %v3034
    %v3036 = vadd.f32 %v3032, %v3035
    %vm3037 = vweird.f32 %v3031
    %vm3038 = vweird.f32 %v3032
    %vm3039 = vmor %vm3037, %vm3038
    %v3040 = vsel %vm3039, %v3032, %v3036
    %v3041 = vand.u32 2147483647, %v3031
    %vm3042 = vcmp.eq.f32.partialorder %v3041, 8.507059e+37
    %v3043 = vand.u32 %v3031, 2147483648
    %v3044 = vor.u32 1.1754944e-38, %v3043
    %v3045 = vsel %vm3042, %v3044, %v3040
    %v3046 = vmul.f32 1.0, %v3045
    %3048 = vrot.lane.b32.xlu0 %v3025, 32
    %v3049 = vpop.permute.xlu0 %3048
    %v3051 = vadd.f32 %v2509, %v3049
    %v3052 = vxor.u32 %v3051, 2147483648
    %v3053 = vmul.f32 %v3052, 1.442695
    %v3054 = vpow.pop %v3053
    %v3055 = vadd.f32 %v3054, 1.0
    %v3056 = vrcp.pop %v3055
    %v3057 = vmul.f32 %v3055, %v3056
    %v3058 = vsub.f32 1.0, %v3057
    %v3059 = vmul.f32 %v3056, %v3058
    %v3060 = vadd.f32 %v3056, %v3059
    %vm3061 = vweird.f32 %v3055
    %vm3062 = vweird.f32 %v3056
    %vm3063 = vmor %vm3061, %vm3062
    %v3064 = vsel %vm3063, %v3056, %v3060
    %v3065 = vand.u32 2147483647, %v3055
    %vm3066 = vcmp.eq.f32.partialorder %v3065, 8.507059e+37
    %v3067 = vand.u32 %v3055, 2147483648
    %v3068 = vor.u32 1.1754944e-38, %v3067
    %v3069 = vsel %vm3066, %v3068, %v3064
    %v3070 = vmul.f32 1.0, %v3069
    %3071 = vst [vmem:[#allocation1] ss:$4 sm:$0xff] %v2973
    %v3072 = vld.sshfl [vmem:[#allocation1] sm:$0xff pattern:$0x73625140]
    %3073 = vrot.lane.b32.xlu0 %v3072, 96
    %v3074 = vpop.permute.xlu0 %3073
    %v3075 = vsel %vm271, %v3074, 0
    %3077 = vmatpush.msra.mxu0 0.0
    %3078 = vmatpush.msra.mxu0 0.0
    %3079 = vmatpush.msra.mxu0 0.0
    %3080 = vmatpush.msra.mxu0 0.0
    %3081 = vmatpush.msra.mxu0 0.0
    %3082 = vmatpush.msra.mxu0 0.0
    %3083 = vmatpush.msra.mxu0 0.0
    %3084 = vmatpush.msra.mxu0 0.0
    %3085 = vmatpush.msra.mxu0 0.0
    %3086 = vmatpush.msra.mxu0 0.0
    %3087 = vmatpush.msra.mxu0 0.0
    %3088 = vmatpush.msra.mxu0 0.0
    %3089 = vmatpush.msra.mxu0 %v2473
    %3090 = vmatpush.msra.mxu0 %v2472
    %3091 = vmatpush.msra.mxu0 %v2471
    %3092 = vmatpush.msra.mxu0 %v2470
    %3093 = vmatmul.f32.gmra.mxu0 %v3075
    %v3094 = vpop.f32.mrf.mxu0
    %v3095 = vadd.f32 %v2545, %v3094
    %3096 = vdwg.mxu0
    %v3097 = vmul.f32 %v3046, %v3095
    %3099 = vrot.lane.b32.xlu0 %v3097, 64
    %v3100 = vpop.permute.xlu0 %3099
    %v3102 = vadd.f32 %v2509, %v3100
    %v3103 = vtanh.pop %v3102
    %v3104 = vsub.f32 1.0, %v3070
    %3106 = vrot.lane.b32.xlu0 %v3103, 96
    %v3107 = vpop.permute.xlu0 %3106
    %v3109 = vmul.f32 %v3104, %v3107
    %v3110 = vmul.f32 %v3070, %v2973
    %v3111 = vadd.f32 %v3109, %v3110
    %3113 = vst [vmem:[#allocation1] ss:$4 sm:$0xff] %v3111
    %v3114 = vld.sshfl [vmem:[#allocation1] sm:$0xff pattern:$0x73625140]
    %3115 = vrot.lane.b32.xlu0 %v3114, 96
    %v3116 = vpop.permute.xlu0 %3115
    %v3117 = vsel %vm271, %v3116, 0
    %3119 = vmatpush.msra.mxu0 0.0
    %3120 = vmatpush.msra.mxu0 0.0
    %3121 = vmatpush.msra.mxu0 0.0
    %3122 = vmatpush.msra.mxu0 0.0
    %3123 = vmatpush.msra.mxu0 0.0
    %3124 = vmatpush.msra.mxu0 0.0
    %3125 = vmatpush.msra.mxu0 0.0
    %3126 = vmatpush.msra.mxu0 0.0
    %3127 = vmatpush.msra.mxu0 0.0
    %3128 = vmatpush.msra.mxu0 0.0
    %3129 = vmatpush.msra.mxu0 0.0
    %3130 = vmatpush.msra.mxu0 0.0
    %3131 = vmatpush.msra.mxu0 %v2465
    %3132 = vmatpush.msra.mxu0 %v2464
    %3133 = vmatpush.msra.mxu0 %v2463
    %3134 = vmatpush.msra.mxu0 %v2462
    %3135 = vmatmul.f32.gmra.mxu0 %v3117
    %v3136 = vpop.f32.mrf.mxu0
    %v3137 = vadd.f32 0.0, %v3136
    %3138 = vdwg.mxu0
    %3139 = vst [vmem:[#allocation1] ss:$4 sm:$0xff] %v3111
    %v3140 = vld.sshfl [vmem:[#allocation1] sm:$0xff pattern:$0x73625140]
    %3141 = vrot.lane.b32.xlu0 %v3140, 96
    %v3142 = vpop.permute.xlu0 %3141
    %v3143 = vsel %vm271, %v3142, 0
    %3145 = vmatpush.msra.mxu0 0.0
    %3146 = vmatpush.msra.mxu0 0.0
    %3147 = vmatpush.msra.mxu0 0.0
    %3148 = vmatpush.msra.mxu0 0.0
    %3149 = vmatpush.msra.mxu0 0.0
    %3150 = vmatpush.msra.mxu0 0.0
    %3151 = vmatpush.msra.mxu0 0.0
    %3152 = vmatpush.msra.mxu0 0.0
    %3153 = vmatpush.msra.mxu0 0.0
    %3154 = vmatpush.msra.mxu0 0.0
    %3155 = vmatpush.msra.mxu0 0.0
    %3156 = vmatpush.msra.mxu0 0.0
    %3157 = vmatpush.msra.mxu0 %v2469
    %3158 = vmatpush.msra.mxu0 %v2468
    %3159 = vmatpush.msra.mxu0 %v2467
    %3160 = vmatpush.msra.mxu0 %v2466
    %3161 = vmatmul.f32.gmra.mxu0 %v3143
    %v3162 = vpop.f32.mrf.mxu0
    %v3163 = vadd.f32 0.0, %v3162
    %3164 = vdwg.mxu0
    %v3165 = vadd.f32 %v2516, %v3137
    %v3166 = vxor.u32 %v3165, 2147483648
    %v3167 = vmul.f32 %v3166, 1.442695
    %v3168 = vpow.pop %v3167
    %v3169 = vadd.f32 %v3168, 1.0
    %v3170 = vrcp.pop %v3169
    %v3171 = vmul.f32 %v3169, %v3170
    %v3172 = vsub.f32 1.0, %v3171
    %v3173 = vmul.f32 %v3170, %v3172
    %v3174 = vadd.f32 %v3170, %v3173
    %vm3175 = vweird.f32 %v3169
    %vm3176 = vweird.f32 %v3170
    %vm3177 = vmor %vm3175, %vm3176
    %v3178 = vsel %vm3177, %v3170, %v3174
    %v3179 = vand.u32 2147483647, %v3169
    %vm3180 = vcmp.eq.f32.partialorder %v3179, 8.507059e+37
    %v3181 = vand.u32 %v3169, 2147483648
    %v3182 = vor.u32 1.1754944e-38, %v3181
    %v3183 = vsel %vm3180, %v3182, %v3178
    %v3184 = vmul.f32 1.0, %v3183
    %3186 = vrot.lane.b32.xlu0 %v3163, 32
    %v3187 = vpop.permute.xlu0 %3186
    %v3189 = vadd.f32 %v2516, %v3187
    %v3190 = vxor.u32 %v3189, 2147483648
    %v3191 = vmul.f32 %v3190, 1.442695
    %v3192 = vpow.pop %v3191
    %v3193 = vadd.f32 %v3192, 1.0
    %v3194 = vrcp.pop %v3193
    %v3195 = vmul.f32 %v3193, %v3194
    %v3196 = vsub.f32 1.0, %v3195
    %v3197 = vmul.f32 %v3194, %v3196
    %v3198 = vadd.f32 %v3194, %v3197
    %vm3199 = vweird.f32 %v3193
    %vm3200 = vweird.f32 %v3194
    %vm3201 = vmor %vm3199, %vm3200
    %v3202 = vsel %vm3201, %v3194, %v3198
    %v3203 = vand.u32 2147483647, %v3193
    %vm3204 = vcmp.eq.f32.partialorder %v3203, 8.507059e+37
    %v3205 = vand.u32 %v3193, 2147483648
    %v3206 = vor.u32 1.1754944e-38, %v3205
    %v3207 = vsel %vm3204, %v3206, %v3202
    %v3208 = vmul.f32 1.0, %v3207
    %3209 = vst [vmem:[#allocation1] ss:$4 sm:$0xff] %v3111
    %v3210 = vld.sshfl [vmem:[#allocation1] sm:$0xff pattern:$0x73625140]
    %3211 = vrot.lane.b32.xlu0 %v3210, 96
    %v3212 = vpop.permute.xlu0 %3211
    %v3213 = vsel %vm271, %v3212, 0
    %3215 = vmatpush.msra.mxu0 0.0
    %3216 = vmatpush.msra.mxu0 0.0
    %3217 = vmatpush.msra.mxu0 0.0
    %3218 = vmatpush.msra.mxu0 0.0
    %3219 = vmatpush.msra.mxu0 0.0
    %3220 = vmatpush.msra.mxu0 0.0
    %3221 = vmatpush.msra.mxu0 0.0
    %3222 = vmatpush.msra.mxu0 0.0
    %3223 = vmatpush.msra.mxu0 0.0
    %3224 = vmatpush.msra.mxu0 0.0
    %3225 = vmatpush.msra.mxu0 0.0
    %3226 = vmatpush.msra.mxu0 0.0
    %3227 = vmatpush.msra.mxu0 %v2473
    %3228 = vmatpush.msra.mxu0 %v2472
    %3229 = vmatpush.msra.mxu0 %v2471
    %3230 = vmatpush.msra.mxu0 %v2470
    %3231 = vmatmul.f32.gmra.mxu0 %v3213
    %v3232 = vpop.f32.mrf.mxu0
    %v3233 = vadd.f32 %v2545, %v3232
    %3234 = vdwg.mxu0
    %v3235 = vmul.f32 %v3184, %v3233
    %3237 = vrot.lane.b32.xlu0 %v3235, 64
    %v3238 = vpop.permute.xlu0 %3237
    %v3240 = vadd.f32 %v2516, %v3238
    %v3241 = vtanh.pop %v3240
    %v3242 = vsub.f32 1.0, %v3208
    %3244 = vrot.lane.b32.xlu0 %v3241, 96
    %v3245 = vpop.permute.xlu0 %3244
    %v3247 = vmul.f32 %v3242, %v3245
    %v3248 = vmul.f32 %v3208, %v3111
    %v3249 = vadd.f32 %v3247, %v3248
    %3251 = vst [vmem:[#allocation1] ss:$4 sm:$0xff] %v3249
    %v3252 = vld.sshfl [vmem:[#allocation1] sm:$0xff pattern:$0x73625140]
    %3253 = vrot.lane.b32.xlu0 %v3252, 96
    %v3254 = vpop.permute.xlu0 %3253
    %v3255 = vsel %vm271, %v3254, 0
    %3257 = vmatpush.msra.mxu0 0.0
    %3258 = vmatpush.msra.mxu0 0.0
    %3259 = vmatpush.msra.mxu0 0.0
    %3260 = vmatpush.msra.mxu0 0.0
    %3261 = vmatpush.msra.mxu0 0.0
    %3262 = vmatpush.msra.mxu0 0.0
    %3263 = vmatpush.msra.mxu0 0.0
    %3264 = vmatpush.msra.mxu0 0.0
    %3265 = vmatpush.msra.mxu0 0.0
    %3266 = vmatpush.msra.mxu0 0.0
    %3267 = vmatpush.msra.mxu0 0.0
    %3268 = vmatpush.msra.mxu0 0.0
    %3269 = vmatpush.msra.mxu0 %v2465
    %3270 = vmatpush.msra.mxu0 %v2464
    %3271 = vmatpush.msra.mxu0 %v2463
    %3272 = vmatpush.msra.mxu0 %v2462
    %3273 = vmatmul.f32.gmra.mxu0 %v3255
    %v3274 = vpop.f32.mrf.mxu0
    %v3275 = vadd.f32 0.0, %v3274
    %3276 = vdwg.mxu0
    %3277 = vst [vmem:[#allocation1] ss:$4 sm:$0xff] %v3249
    %v3278 = vld.sshfl [vmem:[#allocation1] sm:$0xff pattern:$0x73625140]
    %3279 = vrot.lane.b32.xlu0 %v3278, 96
    %v3280 = vpop.permute.xlu0 %3279
    %v3281 = vsel %vm271, %v3280, 0
    %3283 = vmatpush.msra.mxu0 0.0
    %3284 = vmatpush.msra.mxu0 0.0
    %3285 = vmatpush.msra.mxu0 0.0
    %3286 = vmatpush.msra.mxu0 0.0
    %3287 = vmatpush.msra.mxu0 0.0
    %3288 = vmatpush.msra.mxu0 0.0
    %3289 = vmatpush.msra.mxu0 0.0
    %3290 = vmatpush.msra.mxu0 0.0
    %3291 = vmatpush.msra.mxu0 0.0
    %3292 = vmatpush.msra.mxu0 0.0
    %3293 = vmatpush.msra.mxu0 0.0
    %3294 = vmatpush.msra.mxu0 0.0
    %3295 = vmatpush.msra.mxu0 %v2469
    %3296 = vmatpush.msra.mxu0 %v2468
    %3297 = vmatpush.msra.mxu0 %v2467
    %3298 = vmatpush.msra.mxu0 %v2466
    %3299 = vmatmul.f32.gmra.mxu0 %v3281
    %v3300 = vpop.f32.mrf.mxu0
    %v3301 = vadd.f32 0.0, %v3300
    %3302 = vdwg.mxu0
    %v3303 = vadd.f32 %v2517, %v3275
    %v3304 = vxor.u32 %v3303, 2147483648
    %v3305 = vmul.f32 %v3304, 1.442695
    %v3306 = vpow.pop %v3305
    %v3307 = vadd.f32 %v3306, 1.0
    %v3308 = vrcp.pop %v3307
    %v3309 = vmul.f32 %v3307, %v3308
    %v3310 = vsub.f32 1.0, %v3309
    %v3311 = vmul.f32 %v3308, %v3310
    %v3312 = vadd.f32 %v3308, %v3311
    %vm3313 = vweird.f32 %v3307
    %vm3314 = vweird.f32 %v3308
    %vm3315 = vmor %vm3313, %vm3314
    %v3316 = vsel %vm3315, %v3308, %v3312
    %v3317 = vand.u32 2147483647, %v3307
    %vm3318 = vcmp.eq.f32.partialorder %v3317, 8.507059e+37
    %v3319 = vand.u32 %v3307, 2147483648
    %v3320 = vor.u32 1.1754944e-38, %v3319
    %v3321 = vsel %vm3318, %v3320, %v3316
    %v3322 = vmul.f32 1.0, %v3321
    %3324 = vrot.lane.b32.xlu0 %v3301, 32
    %v3325 = vpop.permute.xlu0 %3324
    %v3327 = vadd.f32 %v2517, %v3325
    %v3328 = vxor.u32 %v3327, 2147483648
    %v3329 = vmul.f32 %v3328, 1.442695
    %v3330 = vpow.pop %v3329
    %v3331 = vadd.f32 %v3330, 1.0
    %v3332 = vrcp.pop %v3331
    %v3333 = vmul.f32 %v3331, %v3332
    %v3334 = vsub.f32 1.0, %v3333
    %v3335 = vmul.f32 %v3332, %v3334
    %v3336 = vadd.f32 %v3332, %v3335
    %vm3337 = vweird.f32 %v3331
    %vm3338 = vweird.f32 %v3332
    %vm3339 = vmor %vm3337, %vm3338
    %v3340 = vsel %vm3339, %v3332, %v3336
    %v3341 = vand.u32 2147483647, %v3331
    %vm3342 = vcmp.eq.f32.partialorder %v3341, 8.507059e+37
    %v3343 = vand.u32 %v3331, 2147483648
    %v3344 = vor.u32 1.1754944e-38, %v3343
    %v3345 = vsel %vm3342, %v3344, %v3340
    %v3346 = vmul.f32 1.0, %v3345
    %3347 = vst [vmem:[#allocation1] ss:$4 sm:$0xff] %v3249
    %v3348 = vld.sshfl [vmem:[#allocation1] sm:$0xff pattern:$0x73625140]
    %3349 = vrot.lane.b32.xlu0 %v3348, 96
    %v3350 = vpop.permute.xlu0 %3349
    %v3351 = vsel %vm271, %v3350, 0
    %3353 = vmatpush.msra.mxu0 0.0
    %3354 = vmatpush.msra.mxu0 0.0
    %3355 = vmatpush.msra.mxu0 0.0
    %3356 = vmatpush.msra.mxu0 0.0
    %3357 = vmatpush.msra.mxu0 0.0
    %3358 = vmatpush.msra.mxu0 0.0
    %3359 = vmatpush.msra.mxu0 0.0
    %3360 = vmatpush.msra.mxu0 0.0
    %3361 = vmatpush.msra.mxu0 0.0
    %3362 = vmatpush.msra.mxu0 0.0
    %3363 = vmatpush.msra.mxu0 0.0
    %3364 = vmatpush.msra.mxu0 0.0
    %3365 = vmatpush.msra.mxu0 %v2473
    %3366 = vmatpush.msra.mxu0 %v2472
    %3367 = vmatpush.msra.mxu0 %v2471
    %3368 = vmatpush.msra.mxu0 %v2470
    %3369 = vmatmul.f32.gmra.mxu0 %v3351
    %v3370 = vpop.f32.mrf.mxu0
    %v3371 = vadd.f32 %v2545, %v3370
    %3372 = vdwg.mxu0
    %v3373 = vmul.f32 %v3322, %v3371
    %3375 = vrot.lane.b32.xlu0 %v3373, 64
    %v3376 = vpop.permute.xlu0 %3375
    %v3378 = vadd.f32 %v2517, %v3376
    %v3379 = vtanh.pop %v3378
    %v3380 = vsub.f32 1.0, %v3346
    %3382 = vrot.lane.b32.xlu0 %v3379, 96
    %v3383 = vpop.permute.xlu0 %3382
    %v3385 = vmul.f32 %v3380, %v3383
    %v3386 = vmul.f32 %v3346, %v3249
    %v3387 = vadd.f32 %v3385, %v3386
    %3389 = vst [vmem:[#allocation1] ss:$4 sm:$0xff] %v3387
    %v3390 = vld.sshfl [vmem:[#allocation1] sm:$0xff pattern:$0x73625140]
    %3391 = vrot.lane.b32.xlu0 %v3390, 96
    %v3392 = vpop.permute.xlu0 %3391
    %v3393 = vsel %vm271, %v3392, 0
    %3395 = vmatpush.msra.mxu0 0.0
    %3396 = vmatpush.msra.mxu0 0.0
    %3397 = vmatpush.msra.mxu0 0.0
    %3398 = vmatpush.msra.mxu0 0.0
    %3399 = vmatpush.msra.mxu0 0.0
    %3400 = vmatpush.msra.mxu0 0.0
    %3401 = vmatpush.msra.mxu0 0.0
    %3402 = vmatpush.msra.mxu0 0.0
    %3403 = vmatpush.msra.mxu0 0.0
    %3404 = vmatpush.msra.mxu0 0.0
    %3405 = vmatpush.msra.mxu0 0.0
    %3406 = vmatpush.msra.mxu0 0.0
    %3407 = vmatpush.msra.mxu0 %v2465
    %3408 = vmatpush.msra.mxu0 %v2464
    %3409 = vmatpush.msra.mxu0 %v2463
    %3410 = vmatpush.msra.mxu0 %v2462
    %3411 = vmatmul.f32.gmra.mxu0 %v3393
    %v3412 = vpop.f32.mrf.mxu0
    %v3413 = vadd.f32 0.0, %v3412
    %3414 = vdwg.mxu0
    %3415 = vst [vmem:[#allocation1] ss:$4 sm:$0xff] %v3387
    %v3416 = vld.sshfl [vmem:[#allocation1] sm:$0xff pattern:$0x73625140]
    %3417 = vrot.lane.b32.xlu0 %v3416, 96
    %v3418 = vpop.permute.xlu0 %3417
    %v3419 = vsel %vm271, %v3418, 0
    %3421 = vmatpush.msra.mxu0 0.0
    %3422 = vmatpush.msra.mxu0 0.0
    %3423 = vmatpush.msra.mxu0 0.0
    %3424 = vmatpush.msra.mxu0 0.0
    %3425 = vmatpush.msra.mxu0 0.0
    %3426 = vmatpush.msra.mxu0 0.0
    %3427 = vmatpush.msra.mxu0 0.0
    %3428 = vmatpush.msra.mxu0 0.0
    %3429 = vmatpush.msra.mxu0 0.0
    %3430 = vmatpush.msra.mxu0 0.0
    %3431 = vmatpush.msra.mxu0 0.0
    %3432 = vmatpush.msra.mxu0 0.0
    %3433 = vmatpush.msra.mxu0 %v2469
    %3434 = vmatpush.msra.mxu0 %v2468
    %3435 = vmatpush.msra.mxu0 %v2467
    %3436 = vmatpush.msra.mxu0 %v2466
    %3437 = vmatmul.f32.gmra.mxu0 %v3419
    %v3438 = vpop.f32.mrf.mxu0
    %v3439 = vadd.f32 0.0, %v3438
    %3440 = vdwg.mxu0
    %v3441 = vadd.f32 %v2518, %v3413
    %v3442 = vxor.u32 %v3441, 2147483648
    %v3443 = vmul.f32 %v3442, 1.442695
    %v3444 = vpow.pop %v3443
    %v3445 = vadd.f32 %v3444, 1.0
    %v3446 = vrcp.pop %v3445
    %v3447 = vmul.f32 %v3445, %v3446
    %v3448 = vsub.f32 1.0, %v3447
    %v3449 = vmul.f32 %v3446, %v3448
    %v3450 = vadd.f32 %v3446, %v3449
    %vm3451 = vweird.f32 %v3445
    %vm3452 = vweird.f32 %v3446
    %vm3453 = vmor %vm3451, %vm3452
    %v3454 = vsel %vm3453, %v3446, %v3450
    %v3455 = vand.u32 2147483647, %v3445
    %vm3456 = vcmp.eq.f32.partialorder %v3455, 8.507059e+37
    %v3457 = vand.u32 %v3445, 2147483648
    %v3458 = vor.u32 1.1754944e-38, %v3457
    %v3459 = vsel %vm3456, %v3458, %v3454
    %v3460 = vmul.f32 1.0, %v3459
    %3462 = vrot.lane.b32.xlu0 %v3439, 32
    %v3463 = vpop.permute.xlu0 %3462
    %v3465 = vadd.f32 %v2518, %v3463
    %v3466 = vxor.u32 %v3465, 2147483648
    %v3467 = vmul.f32 %v3466, 1.442695
    %v3468 = vpow.pop %v3467
    %v3469 = vadd.f32 %v3468, 1.0
    %v3470 = vrcp.pop %v3469
    %v3471 = vmul.f32 %v3469, %v3470
    %v3472 = vsub.f32 1.0, %v3471
    %v3473 = vmul.f32 %v3470, %v3472
    %v3474 = vadd.f32 %v3470, %v3473
    %vm3475 = vweird.f32 %v3469
    %vm3476 = vweird.f32 %v3470
    %vm3477 = vmor %vm3475, %vm3476
    %v3478 = vsel %vm3477, %v3470, %v3474
    %v3479 = vand.u32 2147483647, %v3469
    %vm3480 = vcmp.eq.f32.partialorder %v3479, 8.507059e+37
    %v3481 = vand.u32 %v3469, 2147483648
    %v3482 = vor.u32 1.1754944e-38, %v3481
    %v3483 = vsel %vm3480, %v3482, %v3478
    %v3484 = vmul.f32 1.0, %v3483
    %3485 = vst [vmem:[#allocation1] ss:$4 sm:$0xff] %v3387
    %v3486 = vld.sshfl [vmem:[#allocation1] sm:$0xff pattern:$0x73625140]
    %3487 = vrot.lane.b32.xlu0 %v3486, 96
    %v3488 = vpop.permute.xlu0 %3487
    %v3489 = vsel %vm271, %v3488, 0
    %3491 = vmatpush.msra.mxu0 0.0
    %3492 = vmatpush.msra.mxu0 0.0
    %3493 = vmatpush.msra.mxu0 0.0
    %3494 = vmatpush.msra.mxu0 0.0
    %3495 = vmatpush.msra.mxu0 0.0
    %3496 = vmatpush.msra.mxu0 0.0
    %3497 = vmatpush.msra.mxu0 0.0
    %3498 = vmatpush.msra.mxu0 0.0
    %3499 = vmatpush.msra.mxu0 0.0
    %3500 = vmatpush.msra.mxu0 0.0
    %3501 = vmatpush.msra.mxu0 0.0
    %3502 = vmatpush.msra.mxu0 0.0
    %3503 = vmatpush.msra.mxu0 %v2473
    %3504 = vmatpush.msra.mxu0 %v2472
    %3505 = vmatpush.msra.mxu0 %v2471
    %3506 = vmatpush.msra.mxu0 %v2470
    %3507 = vmatmul.f32.gmra.mxu0 %v3489
    %v3508 = vpop.f32.mrf.mxu0
    %v3509 = vadd.f32 %v2545, %v3508
    %3510 = vdwg.mxu0
    %v3511 = vmul.f32 %v3460, %v3509
    %3513 = vrot.lane.b32.xlu0 %v3511, 64
    %v3514 = vpop.permute.xlu0 %3513
    %v3516 = vadd.f32 %v2518, %v3514
    %v3517 = vtanh.pop %v3516
    %v3518 = vsub.f32 1.0, %v3484
    %3520 = vrot.lane.b32.xlu0 %v3517, 96
    %v3521 = vpop.permute.xlu0 %3520
    %v3523 = vmul.f32 %v3518, %v3521
    %v3524 = vmul.f32 %v3484, %v3387
    %v3525 = vadd.f32 %v3523, %v3524
    %s3526 = scalar_lea.vmem [#allocation1], 1
    %3527 = vst [vmem:[%s3526] ss:$4 sm:$0xff] %v2697
    %v3528 = vld.sshfl [vmem:[#allocation1] sm:$0xff pattern:$0x73625140]
    %s3530 = scalar_lea.vmem [#allocation1], 2
    %3531 = vst [vmem:[%s3530] ss:$4 sm:$0xff] %v2835
    %v3532 = vld.sshfl [vmem:[#allocation1] sm:$0xff pattern:$0x73625140]
    %s3534 = scalar_lea.vmem [#allocation1], 3
    %3535 = vst [vmem:[%s3534] ss:$4 sm:$0xff] %v2973
    %v3536 = vld.sshfl [vmem:[#allocation1] sm:$0xff pattern:$0x73625140]
    %s3538 = scalar_lea.vmem [#allocation1], 1
    %3539 = vst [vmem:[%s3538] ss:$4 sm:$0xff] %v3249
    %v3540 = vld.sshfl [vmem:[#allocation1] sm:$0xff pattern:$0x73625140]
    %s3542 = scalar_lea.vmem [#allocation1], 2
    %3543 = vst [vmem:[%s3542] ss:$4 sm:$0xff] %v3387
    %v3544 = vld.sshfl [vmem:[#allocation1] sm:$0xff pattern:$0x73625140]
    %s3547 = scalar_lea.vmem [#allocation1], 3
    %3548 = vst [vmem:[%s3547] ss:$4 sm:$0xff] %v3525
    %v3549 = vld.sshfl [vmem:[#allocation1] sm:$0xff pattern:$0x73625140]
    %v3551 = vsel %vm1258, %v2559, %v3528
    %v3552 = vsel %vm190, %v3551, %v3532
    %v3553 = vsel %vm1261, %v3552, %v3536
    %v3554 = vsel %vm1258, %v3111, %v3540
    %v3555 = vsel %vm190, %v3554, %v3544
    %v3556 = vsel %vm1261, %v3555, %v3549
    %v3557 = vld [vmem:[%s43] sm:$0xff]
    %v3558 = vld [vmem:[%s43 + $0x8] sm:$0xff]
    %v3559 = vld [vmem:[%s43 + $0x10] sm:$0xff]
    %v3560 = vld [vmem:[%s43 + $0x18] sm:$0xff]
    %v3561 = vld [vmem:[%s45] sm:$0xff]
    %v3562 = vld [vmem:[%s45 + $0x8] sm:$0xff]
    %v3563 = vld [vmem:[%s45 + $0x10] sm:$0xff]
    %v3564 = vld [vmem:[%s45 + $0x18] sm:$0xff]
    %v3565 = vld [vmem:[%s47] sm:$0xff]
    %v3566 = vld [vmem:[%s47 + $0x8] sm:$0xff]
    %v3567 = vld [vmem:[%s47 + $0x10] sm:$0xff]
    %v3568 = vld [vmem:[%s47 + $0x18] sm:$0xff]
    %v3569 = vld [vmem:[%s51] sm:$0x1]
    %v3570 = vld [vmem:[%s41] sm:$0xff]
    %v3571 = vld [vmem:[%s41 + $0x8] sm:$0xff]
    %v3572 = vld [vmem:[%s41 + $0x10] sm:$0xff]
    %v3573 = vld [vmem:[%s41 + $0x18] sm:$0xff]
    %v3574 = vld [vmem:[%s49] sm:$0x1]
    %v3576 = vperm.slane %v3574, 0
    %3580 = vrot.lane.b32.xlu0 %v3553, 96
    %v3581 = vpop.permute.xlu0 %3580
    %3582 = vrot.lane.b32.xlu0 %v3556, 96
    %v3583 = vpop.permute.xlu0 %3582
    %v3584 = vsel %vm271, %v3581, 0
    %v3586 = vsel %vm271, %v3583, 0
    %3588 = vmatpush.msra.mxu0 0.0
    %3589 = vmatpush.msra.mxu0 0.0
    %3590 = vmatpush.msra.mxu0 0.0
    %3591 = vmatpush.msra.mxu0 0.0
    %3592 = vmatpush.msra.mxu0 0.0
    %3593 = vmatpush.msra.mxu0 0.0
    %3594 = vmatpush.msra.mxu0 0.0
    %3595 = vmatpush.msra.mxu0 0.0
    %3596 = vmatpush.msra.mxu0 0.0
    %3597 = vmatpush.msra.mxu0 0.0
    %3598 = vmatpush.msra.mxu0 0.0
    %3599 = vmatpush.msra.mxu0 0.0
    %3600 = vmatpush.msra.mxu0 %v3573
    %3601 = vmatpush.msra.mxu0 %v3572
    %3602 = vmatpush.msra.mxu0 %v3571
    %3603 = vmatpush.msra.mxu0 %v3570
    %3604 = vmatmul.f32.gmra.mxu0 %v3584
    %v3605 = vpop.f32.mrf.mxu0
    %v3606 = vadd.f32 %v3576, %v3605
    %3607 = vmatmul.f32.gmra.mxu0 %v3586
    %v3608 = vpop.f32.mrf.mxu0
    %v3609 = vadd.f32 %v3576, %v3608
    %3610 = vdwg.mxu0
    %v3613 = vrot.slane %v3606, 2
    %v3614 = vrot.slane %v3606, 4
    %v3615 = vrot.slane %v3606, 6
    %v3616 = vrot.slane %v3609, 2
    %v3617 = vrot.slane %v3609, 4
    %v3618 = vrot.slane %v3609, 6
    %v3625 = vxor.u32 %v3606, 2147483648
    %v3626 = vmul.f32 %v3625, 1.442695
    %v3627 = vpow.pop %v3626
    %v3628 = vadd.f32 %v3627, 1.0
    %v3629 = vrcp.pop %v3628
    %v3630 = vmul.f32 %v3628, %v3629
    %v3631 = vsub.f32 1.0, %v3630
    %v3632 = vmul.f32 %v3629, %v3631
    %v3633 = vadd.f32 %v3629, %v3632
    %vm3634 = vweird.f32 %v3628
    %vm3635 = vweird.f32 %v3629
    %vm3636 = vmor %vm3634, %vm3635
    %v3637 = vsel %vm3636, %v3629, %v3633
    %v3638 = vand.u32 2147483647, %v3628
    %vm3639 = vcmp.eq.f32.partialorder %v3638, 8.507059e+37
    %v3640 = vand.u32 %v3628, 2147483648
    %v3641 = vor.u32 1.1754944e-38, %v3640
    %v3642 = vsel %vm3639, %v3641, %v3637
    %v3643 = vmul.f32 1.0, %v3642
    %v3645 = vperm.slane %v3569, 0
    %v3647 = vmul.f32 %v3643, %v3645
    %3649 = vrot.lane.b32.xlu0 %v3647, 64
    %v3650 = vpop.permute.xlu0 %3649
    %v3652 = vadd.f32 %v3606, %v3650
    %v3653 = vtanh.pop %v3652
    %v3654 = vsub.f32 1.0, %v3643
    %3656 = vrot.lane.b32.xlu0 %v3653, 96
    %v3657 = vpop.permute.xlu0 %3656
    %v3659 = vmul.f32 %v3654, %v3657
    %3661 = vst [vmem:[#allocation1] ss:$4 sm:$0xff] %v3659
    %v3662 = vld.sshfl [vmem:[#allocation1] sm:$0xff pattern:$0x73625140]
    %3663 = vrot.lane.b32.xlu0 %v3662, 96
    %v3664 = vpop.permute.xlu0 %3663
    %v3665 = vsel %vm271, %v3664, 0
    %3667 = vmatpush.msra.mxu0 0.0
    %3668 = vmatpush.msra.mxu0 0.0
    %3669 = vmatpush.msra.mxu0 0.0
    %3670 = vmatpush.msra.mxu0 0.0
    %3671 = vmatpush.msra.mxu0 0.0
    %3672 = vmatpush.msra.mxu0 0.0
    %3673 = vmatpush.msra.mxu0 0.0
    %3674 = vmatpush.msra.mxu0 0.0
    %3675 = vmatpush.msra.mxu0 0.0
    %3676 = vmatpush.msra.mxu0 0.0
    %3677 = vmatpush.msra.mxu0 0.0
    %3678 = vmatpush.msra.mxu0 0.0
    %3679 = vmatpush.msra.mxu0 %v3560
    %3680 = vmatpush.msra.mxu0 %v3559
    %3681 = vmatpush.msra.mxu0 %v3558
    %3682 = vmatpush.msra.mxu0 %v3557
    %3683 = vmatmul.f32.gmra.mxu0 %v3665
    %v3684 = vpop.f32.mrf.mxu0
    %v3685 = vadd.f32 0.0, %v3684
    %3686 = vdwg.mxu0
    %3687 = vst [vmem:[#allocation1] ss:$4 sm:$0xff] %v3659
    %v3688 = vld.sshfl [vmem:[#allocation1] sm:$0xff pattern:$0x73625140]
    %3689 = vrot.lane.b32.xlu0 %v3688, 96
    %v3690 = vpop.permute.xlu0 %3689
    %v3691 = vsel %vm271, %v3690, 0
    %3693 = vmatpush.msra.mxu0 0.0
    %3694 = vmatpush.msra.mxu0 0.0
    %3695 = vmatpush.msra.mxu0 0.0
    %3696 = vmatpush.msra.mxu0 0.0
    %3697 = vmatpush.msra.mxu0 0.0
    %3698 = vmatpush.msra.mxu0 0.0
    %3699 = vmatpush.msra.mxu0 0.0
    %3700 = vmatpush.msra.mxu0 0.0
    %3701 = vmatpush.msra.mxu0 0.0
    %3702 = vmatpush.msra.mxu0 0.0
    %3703 = vmatpush.msra.mxu0 0.0
    %3704 = vmatpush.msra.mxu0 0.0
    %3705 = vmatpush.msra.mxu0 %v3564
    %3706 = vmatpush.msra.mxu0 %v3563
    %3707 = vmatpush.msra.mxu0 %v3562
    %3708 = vmatpush.msra.mxu0 %v3561
    %3709 = vmatmul.f32.gmra.mxu0 %v3691
    %v3710 = vpop.f32.mrf.mxu0
    %v3711 = vadd.f32 0.0, %v3710
    %3712 = vdwg.mxu0
    %v3713 = vadd.f32 %v3613, %v3685
    %v3714 = vxor.u32 %v3713, 2147483648
    %v3715 = vmul.f32 %v3714, 1.442695
    %v3716 = vpow.pop %v3715
    %v3717 = vadd.f32 %v3716, 1.0
    %v3718 = vrcp.pop %v3717
    %v3719 = vmul.f32 %v3717, %v3718
    %v3720 = vsub.f32 1.0, %v3719
    %v3721 = vmul.f32 %v3718, %v3720
    %v3722 = vadd.f32 %v3718, %v3721
    %vm3723 = vweird.f32 %v3717
    %vm3724 = vweird.f32 %v3718
    %vm3725 = vmor %vm3723, %vm3724
    %v3726 = vsel %vm3725, %v3718, %v3722
    %v3727 = vand.u32 2147483647, %v3717
    %vm3728 = vcmp.eq.f32.partialorder %v3727, 8.507059e+37
    %v3729 = vand.u32 %v3717, 2147483648
    %v3730 = vor.u32 1.1754944e-38, %v3729
    %v3731 = vsel %vm3728, %v3730, %v3726
    %v3732 = vmul.f32 1.0, %v3731
    %3734 = vrot.lane.b32.xlu0 %v3711, 32
    %v3735 = vpop.permute.xlu0 %3734
    %v3737 = vadd.f32 %v3613, %v3735
    %v3738 = vxor.u32 %v3737, 2147483648
    %v3739 = vmul.f32 %v3738, 1.442695
    %v3740 = vpow.pop %v3739
    %v3741 = vadd.f32 %v3740, 1.0
    %v3742 = vrcp.pop %v3741
    %v3743 = vmul.f32 %v3741, %v3742
    %v3744 = vsub.f32 1.0, %v3743
    %v3745 = vmul.f32 %v3742, %v3744
    %v3746 = vadd.f32 %v3742, %v3745
    %vm3747 = vweird.f32 %v3741
    %vm3748 = vweird.f32 %v3742
    %vm3749 = vmor %vm3747, %vm3748
    %v3750 = vsel %vm3749, %v3742, %v3746
    %v3751 = vand.u32 2147483647, %v3741
    %vm3752 = vcmp.eq.f32.partialorder %v3751, 8.507059e+37
    %v3753 = vand.u32 %v3741, 2147483648
    %v3754 = vor.u32 1.1754944e-38, %v3753
    %v3755 = vsel %vm3752, %v3754, %v3750
    %v3756 = vmul.f32 1.0, %v3755
    %3757 = vst [vmem:[#allocation1] ss:$4 sm:$0xff] %v3659
    %v3758 = vld.sshfl [vmem:[#allocation1] sm:$0xff pattern:$0x73625140]
    %3759 = vrot.lane.b32.xlu0 %v3758, 96
    %v3760 = vpop.permute.xlu0 %3759
    %v3761 = vsel %vm271, %v3760, 0
    %3763 = vmatpush.msra.mxu0 0.0
    %3764 = vmatpush.msra.mxu0 0.0
    %3765 = vmatpush.msra.mxu0 0.0
    %3766 = vmatpush.msra.mxu0 0.0
    %3767 = vmatpush.msra.mxu0 0.0
    %3768 = vmatpush.msra.mxu0 0.0
    %3769 = vmatpush.msra.mxu0 0.0
    %3770 = vmatpush.msra.mxu0 0.0
    %3771 = vmatpush.msra.mxu0 0.0
    %3772 = vmatpush.msra.mxu0 0.0
    %3773 = vmatpush.msra.mxu0 0.0
    %3774 = vmatpush.msra.mxu0 0.0
    %3775 = vmatpush.msra.mxu0 %v3568
    %3776 = vmatpush.msra.mxu0 %v3567
    %3777 = vmatpush.msra.mxu0 %v3566
    %3778 = vmatpush.msra.mxu0 %v3565
    %3779 = vmatmul.f32.gmra.mxu0 %v3761
    %v3780 = vpop.f32.mrf.mxu0
    %v3781 = vadd.f32 %v3645, %v3780
    %3782 = vdwg.mxu0
    %v3783 = vmul.f32 %v3732, %v3781
    %3785 = vrot.lane.b32.xlu0 %v3783, 64
    %v3786 = vpop.permute.xlu0 %3785
    %v3788 = vadd.f32 %v3613, %v3786
    %v3789 = vtanh.pop %v3788
    %v3790 = vsub.f32 1.0, %v3756
    %3792 = vrot.lane.b32.xlu0 %v3789, 96
    %v3793 = vpop.permute.xlu0 %3792
    %v3795 = vmul.f32 %v3790, %v3793
    %v3796 = vmul.f32 %v3756, %v3659
    %v3797 = vadd.f32 %v3795, %v3796
    %3799 = vst [vmem:[#allocation1] ss:$4 sm:$0xff] %v3797
    %v3800 = vld.sshfl [vmem:[#allocation1] sm:$0xff pattern:$0x73625140]
    %3801 = vrot.lane.b32.xlu0 %v3800, 96
    %v3802 = vpop.permute.xlu0 %3801
    %v3803 = vsel %vm271, %v3802, 0
    %3805 = vmatpush.msra.mxu0 0.0
    %3806 = vmatpush.msra.mxu0 0.0
    %3807 = vmatpush.msra.mxu0 0.0
    %3808 = vmatpush.msra.mxu0 0.0
    %3809 = vmatpush.msra.mxu0 0.0
    %3810 = vmatpush.msra.mxu0 0.0
    %3811 = vmatpush.msra.mxu0 0.0
    %3812 = vmatpush.msra.mxu0 0.0
    %3813 = vmatpush.msra.mxu0 0.0
    %3814 = vmatpush.msra.mxu0 0.0
    %3815 = vmatpush.msra.mxu0 0.0
    %3816 = vmatpush.msra.mxu0 0.0
    %3817 = vmatpush.msra.mxu0 %v3560
    %3818 = vmatpush.msra.mxu0 %v3559
    %3819 = vmatpush.msra.mxu0 %v3558
    %3820 = vmatpush.msra.mxu0 %v3557
    %3821 = vmatmul.f32.gmra.mxu0 %v3803
    %v3822 = vpop.f32.mrf.mxu0
    %v3823 = vadd.f32 0.0, %v3822
    %3824 = vdwg.mxu0
    %3825 = vst [vmem:[#allocation1] ss:$4 sm:$0xff] %v3797
    %v3826 = vld.sshfl [vmem:[#allocation1] sm:$0xff pattern:$0x73625140]
    %3827 = vrot.lane.b32.xlu0 %v3826, 96
    %v3828 = vpop.permute.xlu0 %3827
    %v3829 = vsel %vm271, %v3828, 0
    %3831 = vmatpush.msra.mxu0 0.0
    %3832 = vmatpush.msra.mxu0 0.0
    %3833 = vmatpush.msra.mxu0 0.0
    %3834 = vmatpush.msra.mxu0 0.0
    %3835 = vmatpush.msra.mxu0 0.0
    %3836 = vmatpush.msra.mxu0 0.0
    %3837 = vmatpush.msra.mxu0 0.0
    %3838 = vmatpush.msra.mxu0 0.0
    %3839 = vmatpush.msra.mxu0 0.0
    %3840 = vmatpush.msra.mxu0 0.0
    %3841 = vmatpush.msra.mxu0 0.0
    %3842 = vmatpush.msra.mxu0 0.0
    %3843 = vmatpush.msra.mxu0 %v3564
    %3844 = vmatpush.msra.mxu0 %v3563
    %3845 = vmatpush.msra.mxu0 %v3562
    %3846 = vmatpush.msra.mxu0 %v3561
    %3847 = vmatmul.f32.gmra.mxu0 %v3829
    %v3848 = vpop.f32.mrf.mxu0
    %v3849 = vadd.f32 0.0, %v3848
    %3850 = vdwg.mxu0
    %v3851 = vadd.f32 %v3614, %v3823
    %v3852 = vxor.u32 %v3851, 2147483648
    %v3853 = vmul.f32 %v3852, 1.442695
    %v3854 = vpow.pop %v3853
    %v3855 = vadd.f32 %v3854, 1.0
    %v3856 = vrcp.pop %v3855
    %v3857 = vmul.f32 %v3855, %v3856
    %v3858 = vsub.f32 1.0, %v3857
    %v3859 = vmul.f32 %v3856, %v3858
    %v3860 = vadd.f32 %v3856, %v3859
    %vm3861 = vweird.f32 %v3855
    %vm3862 = vweird.f32 %v3856
    %vm3863 = vmor %vm3861, %vm3862
    %v3864 = vsel %vm3863, %v3856, %v3860
    %v3865 = vand.u32 2147483647, %v3855
    %vm3866 = vcmp.eq.f32.partialorder %v3865, 8.507059e+37
    %v3867 = vand.u32 %v3855, 2147483648
    %v3868 = vor.u32 1.1754944e-38, %v3867
    %v3869 = vsel %vm3866, %v3868, %v3864
    %v3870 = vmul.f32 1.0, %v3869
    %3872 = vrot.lane.b32.xlu0 %v3849, 32
    %v3873 = vpop.permute.xlu0 %3872
    %v3875 = vadd.f32 %v3614, %v3873
    %v3876 = vxor.u32 %v3875, 2147483648
    %v3877 = vmul.f32 %v3876, 1.442695
    %v3878 = vpow.pop %v3877
    %v3879 = vadd.f32 %v3878, 1.0
    %v3880 = vrcp.pop %v3879
    %v3881 = vmul.f32 %v3879, %v3880
    %v3882 = vsub.f32 1.0, %v3881
    %v3883 = vmul.f32 %v3880, %v3882
    %v3884 = vadd.f32 %v3880, %v3883
    %vm3885 = vweird.f32 %v3879
    %vm3886 = vweird.f32 %v3880
    %vm3887 = vmor %vm3885, %vm3886
    %v3888 = vsel %vm3887, %v3880, %v3884
    %v3889 = vand.u32 2147483647, %v3879
    %vm3890 = vcmp.eq.f32.partialorder %v3889, 8.507059e+37
    %v3891 = vand.u32 %v3879, 2147483648
    %v3892 = vor.u32 1.1754944e-38, %v3891
    %v3893 = vsel %vm3890, %v3892, %v3888
    %v3894 = vmul.f32 1.0, %v3893
    %3895 = vst [vmem:[#allocation1] ss:$4 sm:$0xff] %v3797
    %v3896 = vld.sshfl [vmem:[#allocation1] sm:$0xff pattern:$0x73625140]
    %3897 = vrot.lane.b32.xlu0 %v3896, 96
    %v3898 = vpop.permute.xlu0 %3897
    %v3899 = vsel %vm271, %v3898, 0
    %3901 = vmatpush.msra.mxu0 0.0
    %3902 = vmatpush.msra.mxu0 0.0
    %3903 = vmatpush.msra.mxu0 0.0
    %3904 = vmatpush.msra.mxu0 0.0
    %3905 = vmatpush.msra.mxu0 0.0
    %3906 = vmatpush.msra.mxu0 0.0
    %3907 = vmatpush.msra.mxu0 0.0
    %3908 = vmatpush.msra.mxu0 0.0
    %3909 = vmatpush.msra.mxu0 0.0
    %3910 = vmatpush.msra.mxu0 0.0
    %3911 = vmatpush.msra.mxu0 0.0
    %3912 = vmatpush.msra.mxu0 0.0
    %3913 = vmatpush.msra.mxu0 %v3568
    %3914 = vmatpush.msra.mxu0 %v3567
    %3915 = vmatpush.msra.mxu0 %v3566
    %3916 = vmatpush.msra.mxu0 %v3565
    %3917 = vmatmul.f32.gmra.mxu0 %v3899
    %v3918 = vpop.f32.mrf.mxu0
    %v3919 = vadd.f32 %v3645, %v3918
    %3920 = vdwg.mxu0
    %v3921 = vmul.f32 %v3870, %v3919
    %3923 = vrot.lane.b32.xlu0 %v3921, 64
    %v3924 = vpop.permute.xlu0 %3923
    %v3926 = vadd.f32 %v3614, %v3924
    %v3927 = vtanh.pop %v3926
    %v3928 = vsub.f32 1.0, %v3894
    %3930 = vrot.lane.b32.xlu0 %v3927, 96
    %v3931 = vpop.permute.xlu0 %3930
    %v3933 = vmul.f32 %v3928, %v3931
    %v3934 = vmul.f32 %v3894, %v3797
    %v3935 = vadd.f32 %v3933, %v3934
    %3937 = vst [vmem:[#allocation1] ss:$4 sm:$0xff] %v3935
    %v3938 = vld.sshfl [vmem:[#allocation1] sm:$0xff pattern:$0x73625140]
    %3939 = vrot.lane.b32.xlu0 %v3938, 96
    %v3940 = vpop.permute.xlu0 %3939
    %v3941 = vsel %vm271, %v3940, 0
    %3943 = vmatpush.msra.mxu0 0.0
    %3944 = vmatpush.msra.mxu0 0.0
    %3945 = vmatpush.msra.mxu0 0.0
    %3946 = vmatpush.msra.mxu0 0.0
    %3947 = vmatpush.msra.mxu0 0.0
    %3948 = vmatpush.msra.mxu0 0.0
    %3949 = vmatpush.msra.mxu0 0.0
    %3950 = vmatpush.msra.mxu0 0.0
    %3951 = vmatpush.msra.mxu0 0.0
    %3952 = vmatpush.msra.mxu0 0.0
    %3953 = vmatpush.msra.mxu0 0.0
    %3954 = vmatpush.msra.mxu0 0.0
    %3955 = vmatpush.msra.mxu0 %v3560
    %3956 = vmatpush.msra.mxu0 %v3559
    %3957 = vmatpush.msra.mxu0 %v3558
    %3958 = vmatpush.msra.mxu0 %v3557
    %3959 = vmatmul.f32.gmra.mxu0 %v3941
    %v3960 = vpop.f32.mrf.mxu0
    %v3961 = vadd.f32 0.0, %v3960
    %3962 = vdwg.mxu0
    %3963 = vst [vmem:[#allocation1] ss:$4 sm:$0xff] %v3935
    %v3964 = vld.sshfl [vmem:[#allocation1] sm:$0xff pattern:$0x73625140]
    %3965 = vrot.lane.b32.xlu0 %v3964, 96
    %v3966 = vpop.permute.xlu0 %3965
    %v3967 = vsel %vm271, %v3966, 0
    %3969 = vmatpush.msra.mxu0 0.0
    %3970 = vmatpush.msra.mxu0 0.0
    %3971 = vmatpush.msra.mxu0 0.0
    %3972 = vmatpush.msra.mxu0 0.0
    %3973 = vmatpush.msra.mxu0 0.0
    %3974 = vmatpush.msra.mxu0 0.0
    %3975 = vmatpush.msra.mxu0 0.0
    %3976 = vmatpush.msra.mxu0 0.0
    %3977 = vmatpush.msra.mxu0 0.0
    %3978 = vmatpush.msra.mxu0 0.0
    %3979 = vmatpush.msra.mxu0 0.0
    %3980 = vmatpush.msra.mxu0 0.0
    %3981 = vmatpush.msra.mxu0 %v3564
    %3982 = vmatpush.msra.mxu0 %v3563
    %3983 = vmatpush.msra.mxu0 %v3562
    %3984 = vmatpush.msra.mxu0 %v3561
    %3985 = vmatmul.f32.gmra.mxu0 %v3967
    %v3986 = vpop.f32.mrf.mxu0
    %v3987 = vadd.f32 0.0, %v3986
    %3988 = vdwg.mxu0
    %v3989 = vadd.f32 %v3615, %v3961
    %v3990 = vxor.u32 %v3989, 2147483648
    %v3991 = vmul.f32 %v3990, 1.442695
    %v3992 = vpow.pop %v3991
    %v3993 = vadd.f32 %v3992, 1.0
    %v3994 = vrcp.pop %v3993
    %v3995 = vmul.f32 %v3993, %v3994
    %v3996 = vsub.f32 1.0, %v3995
    %v3997 = vmul.f32 %v3994, %v3996
    %v3998 = vadd.f32 %v3994, %v3997
    %vm3999 = vweird.f32 %v3993
    %vm4000 = vweird.f32 %v3994
    %vm4001 = vmor %vm3999, %vm4000
    %v4002 = vsel %vm4001, %v3994, %v3998
    %v4003 = vand.u32 2147483647, %v3993
    %vm4004 = vcmp.eq.f32.partialorder %v4003, 8.507059e+37
    %v4005 = vand.u32 %v3993, 2147483648
    %v4006 = vor.u32 1.1754944e-38, %v4005
    %v4007 = vsel %vm4004, %v4006, %v4002
    %v4008 = vmul.f32 1.0, %v4007
    %4010 = vrot.lane.b32.xlu0 %v3987, 32
    %v4011 = vpop.permute.xlu0 %4010
    %v4013 = vadd.f32 %v3615, %v4011
    %v4014 = vxor.u32 %v4013, 2147483648
    %v4015 = vmul.f32 %v4014, 1.442695
    %v4016 = vpow.pop %v4015
    %v4017 = vadd.f32 %v4016, 1.0
    %v4018 = vrcp.pop %v4017
    %v4019 = vmul.f32 %v4017, %v4018
    %v4020 = vsub.f32 1.0, %v4019
    %v4021 = vmul.f32 %v4018, %v4020
    %v4022 = vadd.f32 %v4018, %v4021
    %vm4023 = vweird.f32 %v4017
    %vm4024 = vweird.f32 %v4018
    %vm4025 = vmor %vm4023, %vm4024
    %v4026 = vsel %vm4025, %v4018, %v4022
    %v4027 = vand.u32 2147483647, %v4017
    %vm4028 = vcmp.eq.f32.partialorder %v4027, 8.507059e+37
    %v4029 = vand.u32 %v4017, 2147483648
    %v4030 = vor.u32 1.1754944e-38, %v4029
    %v4031 = vsel %vm4028, %v4030, %v4026
    %v4032 = vmul.f32 1.0, %v4031
    %4033 = vst [vmem:[#allocation1] ss:$4 sm:$0xff] %v3935
    %v4034 = vld.sshfl [vmem:[#allocation1] sm:$0xff pattern:$0x73625140]
    %4035 = vrot.lane.b32.xlu0 %v4034, 96
    %v4036 = vpop.permute.xlu0 %4035
    %v4037 = vsel %vm271, %v4036, 0
    %4039 = vmatpush.msra.mxu0 0.0
    %4040 = vmatpush.msra.mxu0 0.0
    %4041 = vmatpush.msra.mxu0 0.0
    %4042 = vmatpush.msra.mxu0 0.0
    %4043 = vmatpush.msra.mxu0 0.0
    %4044 = vmatpush.msra.mxu0 0.0
    %4045 = vmatpush.msra.mxu0 0.0
    %4046 = vmatpush.msra.mxu0 0.0
    %4047 = vmatpush.msra.mxu0 0.0
    %4048 = vmatpush.msra.mxu0 0.0
    %4049 = vmatpush.msra.mxu0 0.0
    %4050 = vmatpush.msra.mxu0 0.0
    %4051 = vmatpush.msra.mxu0 %v3568
    %4052 = vmatpush.msra.mxu0 %v3567
    %4053 = vmatpush.msra.mxu0 %v3566
    %4054 = vmatpush.msra.mxu0 %v3565
    %4055 = vmatmul.f32.gmra.mxu0 %v4037
    %v4056 = vpop.f32.mrf.mxu0
    %v4057 = vadd.f32 %v3645, %v4056
    %4058 = vdwg.mxu0
    %v4059 = vmul.f32 %v4008, %v4057
    %4061 = vrot.lane.b32.xlu0 %v4059, 64
    %v4062 = vpop.permute.xlu0 %4061
    %v4064 = vadd.f32 %v3615, %v4062
    %v4065 = vtanh.pop %v4064
    %v4066 = vsub.f32 1.0, %v4032
    %4068 = vrot.lane.b32.xlu0 %v4065, 96
    %v4069 = vpop.permute.xlu0 %4068
    %v4071 = vmul.f32 %v4066, %v4069
    %v4072 = vmul.f32 %v4032, %v3935
    %v4073 = vadd.f32 %v4071, %v4072
    %4075 = vst [vmem:[#allocation1] ss:$4 sm:$0xff] %v4073
    %v4076 = vld.sshfl [vmem:[#allocation1] sm:$0xff pattern:$0x73625140]
    %4077 = vrot.lane.b32.xlu0 %v4076, 96
    %v4078 = vpop.permute.xlu0 %4077
    %v4079 = vsel %vm271, %v4078, 0
    %4081 = vmatpush.msra.mxu0 0.0
    %4082 = vmatpush.msra.mxu0 0.0
    %4083 = vmatpush.msra.mxu0 0.0
    %4084 = vmatpush.msra.mxu0 0.0
    %4085 = vmatpush.msra.mxu0 0.0
    %4086 = vmatpush.msra.mxu0 0.0
    %4087 = vmatpush.msra.mxu0 0.0
    %4088 = vmatpush.msra.mxu0 0.0
    %4089 = vmatpush.msra.mxu0 0.0
    %4090 = vmatpush.msra.mxu0 0.0
    %4091 = vmatpush.msra.mxu0 0.0
    %4092 = vmatpush.msra.mxu0 0.0
    %4093 = vmatpush.msra.mxu0 %v3560
    %4094 = vmatpush.msra.mxu0 %v3559
    %4095 = vmatpush.msra.mxu0 %v3558
    %4096 = vmatpush.msra.mxu0 %v3557
    %4097 = vmatmul.f32.gmra.mxu0 %v4079
    %v4098 = vpop.f32.mrf.mxu0
    %v4099 = vadd.f32 0.0, %v4098
    %4100 = vdwg.mxu0
    %4101 = vst [vmem:[#allocation1] ss:$4 sm:$0xff] %v4073
    %v4102 = vld.sshfl [vmem:[#allocation1] sm:$0xff pattern:$0x73625140]
    %4103 = vrot.lane.b32.xlu0 %v4102, 96
    %v4104 = vpop.permute.xlu0 %4103
    %v4105 = vsel %vm271, %v4104, 0
    %4107 = vmatpush.msra.mxu0 0.0
    %4108 = vmatpush.msra.mxu0 0.0
    %4109 = vmatpush.msra.mxu0 0.0
    %4110 = vmatpush.msra.mxu0 0.0
    %4111 = vmatpush.msra.mxu0 0.0
    %4112 = vmatpush.msra.mxu0 0.0
    %4113 = vmatpush.msra.mxu0 0.0
    %4114 = vmatpush.msra.mxu0 0.0
    %4115 = vmatpush.msra.mxu0 0.0
    %4116 = vmatpush.msra.mxu0 0.0
    %4117 = vmatpush.msra.mxu0 0.0
    %4118 = vmatpush.msra.mxu0 0.0
    %4119 = vmatpush.msra.mxu0 %v3564
    %4120 = vmatpush.msra.mxu0 %v3563
    %4121 = vmatpush.msra.mxu0 %v3562
    %4122 = vmatpush.msra.mxu0 %v3561
    %4123 = vmatmul.f32.gmra.mxu0 %v4105
    %v4124 = vpop.f32.mrf.mxu0
    %v4125 = vadd.f32 0.0, %v4124
    %4126 = vdwg.mxu0
    %v4127 = vadd.f32 %v3609, %v4099
    %v4128 = vxor.u32 %v4127, 2147483648
    %v4129 = vmul.f32 %v4128, 1.442695
    %v4130 = vpow.pop %v4129
    %v4131 = vadd.f32 %v4130, 1.0
    %v4132 = vrcp.pop %v4131
    %v4133 = vmul.f32 %v4131, %v4132
    %v4134 = vsub.f32 1.0, %v4133
    %v4135 = vmul.f32 %v4132, %v4134
    %v4136 = vadd.f32 %v4132, %v4135
    %vm4137 = vweird.f32 %v4131
    %vm4138 = vweird.f32 %v4132
    %vm4139 = vmor %vm4137, %vm4138
    %v4140 = vsel %vm4139, %v4132, %v4136
    %v4141 = vand.u32 2147483647, %v4131
    %vm4142 = vcmp.eq.f32.partialorder %v4141, 8.507059e+37
    %v4143 = vand.u32 %v4131, 2147483648
    %v4144 = vor.u32 1.1754944e-38, %v4143
    %v4145 = vsel %vm4142, %v4144, %v4140
    %v4146 = vmul.f32 1.0, %v4145
    %4148 = vrot.lane.b32.xlu0 %v4125, 32
    %v4149 = vpop.permute.xlu0 %4148
    %v4151 = vadd.f32 %v3609, %v4149
    %v4152 = vxor.u32 %v4151, 2147483648
    %v4153 = vmul.f32 %v4152, 1.442695
    %v4154 = vpow.pop %v4153
    %v4155 = vadd.f32 %v4154, 1.0
    %v4156 = vrcp.pop %v4155
    %v4157 = vmul.f32 %v4155, %v4156
    %v4158 = vsub.f32 1.0, %v4157
    %v4159 = vmul.f32 %v4156, %v4158
    %v4160 = vadd.f32 %v4156, %v4159
    %vm4161 = vweird.f32 %v4155
    %vm4162 = vweird.f32 %v4156
    %vm4163 = vmor %vm4161, %vm4162
    %v4164 = vsel %vm4163, %v4156, %v4160
    %v4165 = vand.u32 2147483647, %v4155
    %vm4166 = vcmp.eq.f32.partialorder %v4165, 8.507059e+37
    %v4167 = vand.u32 %v4155, 2147483648
    %v4168 = vor.u32 1.1754944e-38, %v4167
    %v4169 = vsel %vm4166, %v4168, %v4164
    %v4170 = vmul.f32 1.0, %v4169
    %4171 = vst [vmem:[#allocation1] ss:$4 sm:$0xff] %v4073
    %v4172 = vld.sshfl [vmem:[#allocation1] sm:$0xff pattern:$0x73625140]
    %4173 = vrot.lane.b32.xlu0 %v4172, 96
    %v4174 = vpop.permute.xlu0 %4173
    %v4175 = vsel %vm271, %v4174, 0
    %4177 = vmatpush.msra.mxu0 0.0
    %4178 = vmatpush.msra.mxu0 0.0
    %4179 = vmatpush.msra.mxu0 0.0
    %4180 = vmatpush.msra.mxu0 0.0
    %4181 = vmatpush.msra.mxu0 0.0
    %4182 = vmatpush.msra.mxu0 0.0
    %4183 = vmatpush.msra.mxu0 0.0
    %4184 = vmatpush.msra.mxu0 0.0
    %4185 = vmatpush.msra.mxu0 0.0
    %4186 = vmatpush.msra.mxu0 0.0
    %4187 = vmatpush.msra.mxu0 0.0
    %4188 = vmatpush.msra.mxu0 0.0
    %4189 = vmatpush.msra.mxu0 %v3568
    %4190 = vmatpush.msra.mxu0 %v3567
    %4191 = vmatpush.msra.mxu0 %v3566
    %4192 = vmatpush.msra.mxu0 %v3565
    %4193 = vmatmul.f32.gmra.mxu0 %v4175
    %v4194 = vpop.f32.mrf.mxu0
    %v4195 = vadd.f32 %v3645, %v4194
    %4196 = vdwg.mxu0
    %v4197 = vmul.f32 %v4146, %v4195
    %4199 = vrot.lane.b32.xlu0 %v4197, 64
    %v4200 = vpop.permute.xlu0 %4199
    %v4202 = vadd.f32 %v3609, %v4200
    %v4203 = vtanh.pop %v4202
    %v4204 = vsub.f32 1.0, %v4170
    %4206 = vrot.lane.b32.xlu0 %v4203, 96
    %v4207 = vpop.permute.xlu0 %4206
    %v4209 = vmul.f32 %v4204, %v4207
    %v4210 = vmul.f32 %v4170, %v4073
    %v4211 = vadd.f32 %v4209, %v4210
    %4213 = vst [vmem:[#allocation1] ss:$4 sm:$0xff] %v4211
    %v4214 = vld.sshfl [vmem:[#allocation1] sm:$0xff pattern:$0x73625140]
    %4215 = vrot.lane.b32.xlu0 %v4214, 96
    %v4216 = vpop.permute.xlu0 %4215
    %v4217 = vsel %vm271, %v4216, 0
    %4219 = vmatpush.msra.mxu0 0.0
    %4220 = vmatpush.msra.mxu0 0.0
    %4221 = vmatpush.msra.mxu0 0.0
    %4222 = vmatpush.msra.mxu0 0.0
    %4223 = vmatpush.msra.mxu0 0.0
    %4224 = vmatpush.msra.mxu0 0.0
    %4225 = vmatpush.msra.mxu0 0.0
    %4226 = vmatpush.msra.mxu0 0.0
    %4227 = vmatpush.msra.mxu0 0.0
    %4228 = vmatpush.msra.mxu0 0.0
    %4229 = vmatpush.msra.mxu0 0.0
    %4230 = vmatpush.msra.mxu0 0.0
    %4231 = vmatpush.msra.mxu0 %v3560
    %4232 = vmatpush.msra.mxu0 %v3559
    %4233 = vmatpush.msra.mxu0 %v3558
    %4234 = vmatpush.msra.mxu0 %v3557
    %4235 = vmatmul.f32.gmra.mxu0 %v4217
    %v4236 = vpop.f32.mrf.mxu0
    %v4237 = vadd.f32 0.0, %v4236
    %4238 = vdwg.mxu0
    %4239 = vst [vmem:[#allocation1] ss:$4 sm:$0xff] %v4211
    %v4240 = vld.sshfl [vmem:[#allocation1] sm:$0xff pattern:$0x73625140]
    %4241 = vrot.lane.b32.xlu0 %v4240, 96
    %v4242 = vpop.permute.xlu0 %4241
    %v4243 = vsel %vm271, %v4242, 0
    %4245 = vmatpush.msra.mxu0 0.0
    %4246 = vmatpush.msra.mxu0 0.0
    %4247 = vmatpush.msra.mxu0 0.0
    %4248 = vmatpush.msra.mxu0 0.0
    %4249 = vmatpush.msra.mxu0 0.0
    %4250 = vmatpush.msra.mxu0 0.0
    %4251 = vmatpush.msra.mxu0 0.0
    %4252 = vmatpush.msra.mxu0 0.0
    %4253 = vmatpush.msra.mxu0 0.0
    %4254 = vmatpush.msra.mxu0 0.0
    %4255 = vmatpush.msra.mxu0 0.0
    %4256 = vmatpush.msra.mxu0 0.0
    %4257 = vmatpush.msra.mxu0 %v3564
    %4258 = vmatpush.msra.mxu0 %v3563
    %4259 = vmatpush.msra.mxu0 %v3562
    %4260 = vmatpush.msra.mxu0 %v3561
    %4261 = vmatmul.f32.gmra.mxu0 %v4243
    %v4262 = vpop.f32.mrf.mxu0
    %v4263 = vadd.f32 0.0, %v4262
    %4264 = vdwg.mxu0
    %v4265 = vadd.f32 %v3616, %v4237
    %v4266 = vxor.u32 %v4265, 2147483648
    %v4267 = vmul.f32 %v4266, 1.442695
    %v4268 = vpow.pop %v4267
    %v4269 = vadd.f32 %v4268, 1.0
    %v4270 = vrcp.pop %v4269
    %v4271 = vmul.f32 %v4269, %v4270
    %v4272 = vsub.f32 1.0, %v4271
    %v4273 = vmul.f32 %v4270, %v4272
    %v4274 = vadd.f32 %v4270, %v4273
    %vm4275 = vweird.f32 %v4269
    %vm4276 = vweird.f32 %v4270
    %vm4277 = vmor %vm4275, %vm4276
    %v4278 = vsel %vm4277, %v4270, %v4274
    %v4279 = vand.u32 2147483647, %v4269
    %vm4280 = vcmp.eq.f32.partialorder %v4279, 8.507059e+37
    %v4281 = vand.u32 %v4269, 2147483648
    %v4282 = vor.u32 1.1754944e-38, %v4281
    %v4283 = vsel %vm4280, %v4282, %v4278
    %v4284 = vmul.f32 1.0, %v4283
    %4286 = vrot.lane.b32.xlu0 %v4263, 32
    %v4287 = vpop.permute.xlu0 %4286
    %v4289 = vadd.f32 %v3616, %v4287
    %v4290 = vxor.u32 %v4289, 2147483648
    %v4291 = vmul.f32 %v4290, 1.442695
    %v4292 = vpow.pop %v4291
    %v4293 = vadd.f32 %v4292, 1.0
    %v4294 = vrcp.pop %v4293
    %v4295 = vmul.f32 %v4293, %v4294
    %v4296 = vsub.f32 1.0, %v4295
    %v4297 = vmul.f32 %v4294, %v4296
    %v4298 = vadd.f32 %v4294, %v4297
    %vm4299 = vweird.f32 %v4293
    %vm4300 = vweird.f32 %v4294
    %vm4301 = vmor %vm4299, %vm4300
    %v4302 = vsel %vm4301, %v4294, %v4298
    %v4303 = vand.u32 2147483647, %v4293
    %vm4304 = vcmp.eq.f32.partialorder %v4303, 8.507059e+37
    %v4305 = vand.u32 %v4293, 2147483648
    %v4306 = vor.u32 1.1754944e-38, %v4305
    %v4307 = vsel %vm4304, %v4306, %v4302
    %v4308 = vmul.f32 1.0, %v4307
    %4309 = vst [vmem:[#allocation1] ss:$4 sm:$0xff] %v4211
    %v4310 = vld.sshfl [vmem:[#allocation1] sm:$0xff pattern:$0x73625140]
    %4311 = vrot.lane.b32.xlu0 %v4310, 96
    %v4312 = vpop.permute.xlu0 %4311
    %v4313 = vsel %vm271, %v4312, 0
    %4315 = vmatpush.msra.mxu0 0.0
    %4316 = vmatpush.msra.mxu0 0.0
    %4317 = vmatpush.msra.mxu0 0.0
    %4318 = vmatpush.msra.mxu0 0.0
    %4319 = vmatpush.msra.mxu0 0.0
    %4320 = vmatpush.msra.mxu0 0.0
    %4321 = vmatpush.msra.mxu0 0.0
    %4322 = vmatpush.msra.mxu0 0.0
    %4323 = vmatpush.msra.mxu0 0.0
    %4324 = vmatpush.msra.mxu0 0.0
    %4325 = vmatpush.msra.mxu0 0.0
    %4326 = vmatpush.msra.mxu0 0.0
    %4327 = vmatpush.msra.mxu0 %v3568
    %4328 = vmatpush.msra.mxu0 %v3567
    %4329 = vmatpush.msra.mxu0 %v3566
    %4330 = vmatpush.msra.mxu0 %v3565
    %4331 = vmatmul.f32.gmra.mxu0 %v4313
    %v4332 = vpop.f32.mrf.mxu0
    %v4333 = vadd.f32 %v3645, %v4332
    %4334 = vdwg.mxu0
    %v4335 = vmul.f32 %v4284, %v4333
    %4337 = vrot.lane.b32.xlu0 %v4335, 64
    %v4338 = vpop.permute.xlu0 %4337
    %v4340 = vadd.f32 %v3616, %v4338
    %v4341 = vtanh.pop %v4340
    %v4342 = vsub.f32 1.0, %v4308
    %4344 = vrot.lane.b32.xlu0 %v4341, 96
    %v4345 = vpop.permute.xlu0 %4344
    %v4347 = vmul.f32 %v4342, %v4345
    %v4348 = vmul.f32 %v4308, %v4211
    %v4349 = vadd.f32 %v4347, %v4348
    %4351 = vst [vmem:[#allocation1] ss:$4 sm:$0xff] %v4349
    %v4352 = vld.sshfl [vmem:[#allocation1] sm:$0xff pattern:$0x73625140]
    %4353 = vrot.lane.b32.xlu0 %v4352, 96
    %v4354 = vpop.permute.xlu0 %4353
    %v4355 = vsel %vm271, %v4354, 0
    %4357 = vmatpush.msra.mxu0 0.0
    %4358 = vmatpush.msra.mxu0 0.0
    %4359 = vmatpush.msra.mxu0 0.0
    %4360 = vmatpush.msra.mxu0 0.0
    %4361 = vmatpush.msra.mxu0 0.0
    %4362 = vmatpush.msra.mxu0 0.0
    %4363 = vmatpush.msra.mxu0 0.0
    %4364 = vmatpush.msra.mxu0 0.0
    %4365 = vmatpush.msra.mxu0 0.0
    %4366 = vmatpush.msra.mxu0 0.0
    %4367 = vmatpush.msra.mxu0 0.0
    %4368 = vmatpush.msra.mxu0 0.0
    %4369 = vmatpush.msra.mxu0 %v3560
    %4370 = vmatpush.msra.mxu0 %v3559
    %4371 = vmatpush.msra.mxu0 %v3558
    %4372 = vmatpush.msra.mxu0 %v3557
    %4373 = vmatmul.f32.gmra.mxu0 %v4355
    %v4374 = vpop.f32.mrf.mxu0
    %v4375 = vadd.f32 0.0, %v4374
    %4376 = vdwg.mxu0
    %4377 = vst [vmem:[#allocation1] ss:$4 sm:$0xff] %v4349
    %v4378 = vld.sshfl [vmem:[#allocation1] sm:$0xff pattern:$0x73625140]
    %4379 = vrot.lane.b32.xlu0 %v4378, 96
    %v4380 = vpop.permute.xlu0 %4379
    %v4381 = vsel %vm271, %v4380, 0
    %4383 = vmatpush.msra.mxu0 0.0
    %4384 = vmatpush.msra.mxu0 0.0
    %4385 = vmatpush.msra.mxu0 0.0
    %4386 = vmatpush.msra.mxu0 0.0
    %4387 = vmatpush.msra.mxu0 0.0
    %4388 = vmatpush.msra.mxu0 0.0
    %4389 = vmatpush.msra.mxu0 0.0
    %4390 = vmatpush.msra.mxu0 0.0
    %4391 = vmatpush.msra.mxu0 0.0
    %4392 = vmatpush.msra.mxu0 0.0
    %4393 = vmatpush.msra.mxu0 0.0
    %4394 = vmatpush.msra.mxu0 0.0
    %4395 = vmatpush.msra.mxu0 %v3564
    %4396 = vmatpush.msra.mxu0 %v3563
    %4397 = vmatpush.msra.mxu0 %v3562
    %4398 = vmatpush.msra.mxu0 %v3561
    %4399 = vmatmul.f32.gmra.mxu0 %v4381
    %v4400 = vpop.f32.mrf.mxu0
    %v4401 = vadd.f32 0.0, %v4400
    %4402 = vdwg.mxu0
    %v4403 = vadd.f32 %v3617, %v4375
    %v4404 = vxor.u32 %v4403, 2147483648
    %v4405 = vmul.f32 %v4404, 1.442695
    %v4406 = vpow.pop %v4405
    %v4407 = vadd.f32 %v4406, 1.0
    %v4408 = vrcp.pop %v4407
    %v4409 = vmul.f32 %v4407, %v4408
    %v4410 = vsub.f32 1.0, %v4409
    %v4411 = vmul.f32 %v4408, %v4410
    %v4412 = vadd.f32 %v4408, %v4411
    %vm4413 = vweird.f32 %v4407
    %vm4414 = vweird.f32 %v4408
    %vm4415 = vmor %vm4413, %vm4414
    %v4416 = vsel %vm4415, %v4408, %v4412
    %v4417 = vand.u32 2147483647, %v4407
    %vm4418 = vcmp.eq.f32.partialorder %v4417, 8.507059e+37
    %v4419 = vand.u32 %v4407, 2147483648
    %v4420 = vor.u32 1.1754944e-38, %v4419
    %v4421 = vsel %vm4418, %v4420, %v4416
    %v4422 = vmul.f32 1.0, %v4421
    %4424 = vrot.lane.b32.xlu0 %v4401, 32
    %v4425 = vpop.permute.xlu0 %4424
    %v4427 = vadd.f32 %v3617, %v4425
    %v4428 = vxor.u32 %v4427, 2147483648
    %v4429 = vmul.f32 %v4428, 1.442695
    %v4430 = vpow.pop %v4429
    %v4431 = vadd.f32 %v4430, 1.0
    %v4432 = vrcp.pop %v4431
    %v4433 = vmul.f32 %v4431, %v4432
    %v4434 = vsub.f32 1.0, %v4433
    %v4435 = vmul.f32 %v4432, %v4434
    %v4436 = vadd.f32 %v4432, %v4435
    %vm4437 = vweird.f32 %v4431
    %vm4438 = vweird.f32 %v4432
    %vm4439 = vmor %vm4437, %vm4438
    %v4440 = vsel %vm4439, %v4432, %v4436
    %v4441 = vand.u32 2147483647, %v4431
    %vm4442 = vcmp.eq.f32.partialorder %v4441, 8.507059e+37
    %v4443 = vand.u32 %v4431, 2147483648
    %v4444 = vor.u32 1.1754944e-38, %v4443
    %v4445 = vsel %vm4442, %v4444, %v4440
    %v4446 = vmul.f32 1.0, %v4445
    %4447 = vst [vmem:[#allocation1] ss:$4 sm:$0xff] %v4349
    %v4448 = vld.sshfl [vmem:[#allocation1] sm:$0xff pattern:$0x73625140]
    %4449 = vrot.lane.b32.xlu0 %v4448, 96
    %v4450 = vpop.permute.xlu0 %4449
    %v4451 = vsel %vm271, %v4450, 0
    %4453 = vmatpush.msra.mxu0 0.0
    %4454 = vmatpush.msra.mxu0 0.0
    %4455 = vmatpush.msra.mxu0 0.0
    %4456 = vmatpush.msra.mxu0 0.0
    %4457 = vmatpush.msra.mxu0 0.0
    %4458 = vmatpush.msra.mxu0 0.0
    %4459 = vmatpush.msra.mxu0 0.0
    %4460 = vmatpush.msra.mxu0 0.0
    %4461 = vmatpush.msra.mxu0 0.0
    %4462 = vmatpush.msra.mxu0 0.0
    %4463 = vmatpush.msra.mxu0 0.0
    %4464 = vmatpush.msra.mxu0 0.0
    %4465 = vmatpush.msra.mxu0 %v3568
    %4466 = vmatpush.msra.mxu0 %v3567
    %4467 = vmatpush.msra.mxu0 %v3566
    %4468 = vmatpush.msra.mxu0 %v3565
    %4469 = vmatmul.f32.gmra.mxu0 %v4451
    %v4470 = vpop.f32.mrf.mxu0
    %v4471 = vadd.f32 %v3645, %v4470
    %4472 = vdwg.mxu0
    %v4473 = vmul.f32 %v4422, %v4471
    %4475 = vrot.lane.b32.xlu0 %v4473, 64
    %v4476 = vpop.permute.xlu0 %4475
    %v4478 = vadd.f32 %v3617, %v4476
    %v4479 = vtanh.pop %v4478
    %v4480 = vsub.f32 1.0, %v4446
    %4482 = vrot.lane.b32.xlu0 %v4479, 96
    %v4483 = vpop.permute.xlu0 %4482
    %v4485 = vmul.f32 %v4480, %v4483
    %v4486 = vmul.f32 %v4446, %v4349
    %v4487 = vadd.f32 %v4485, %v4486
    %4489 = vst [vmem:[#allocation1] ss:$4 sm:$0xff] %v4487
    %v4490 = vld.sshfl [vmem:[#allocation1] sm:$0xff pattern:$0x73625140]
    %4491 = vrot.lane.b32.xlu0 %v4490, 96
    %v4492 = vpop.permute.xlu0 %4491
    %v4493 = vsel %vm271, %v4492, 0
    %4495 = vmatpush.msra.mxu0 0.0
    %4496 = vmatpush.msra.mxu0 0.0
    %4497 = vmatpush.msra.mxu0 0.0
    %4498 = vmatpush.msra.mxu0 0.0
    %4499 = vmatpush.msra.mxu0 0.0
    %4500 = vmatpush.msra.mxu0 0.0
    %4501 = vmatpush.msra.mxu0 0.0
    %4502 = vmatpush.msra.mxu0 0.0
    %4503 = vmatpush.msra.mxu0 0.0
    %4504 = vmatpush.msra.mxu0 0.0
    %4505 = vmatpush.msra.mxu0 0.0
    %4506 = vmatpush.msra.mxu0 0.0
    %4507 = vmatpush.msra.mxu0 %v3560
    %4508 = vmatpush.msra.mxu0 %v3559
    %4509 = vmatpush.msra.mxu0 %v3558
    %4510 = vmatpush.msra.mxu0 %v3557
    %4511 = vmatmul.f32.gmra.mxu0 %v4493
    %v4512 = vpop.f32.mrf.mxu0
    %v4513 = vadd.f32 0.0, %v4512
    %4514 = vdwg.mxu0
    %4515 = vst [vmem:[#allocation1] ss:$4 sm:$0xff] %v4487
    %v4516 = vld.sshfl [vmem:[#allocation1] sm:$0xff pattern:$0x73625140]
    %4517 = vrot.lane.b32.xlu0 %v4516, 96
    %v4518 = vpop.permute.xlu0 %4517
    %v4519 = vsel %vm271, %v4518, 0
    %4521 = vmatpush.msra.mxu0 0.0
    %4522 = vmatpush.msra.mxu0 0.0
    %4523 = vmatpush.msra.mxu0 0.0
    %4524 = vmatpush.msra.mxu0 0.0
    %4525 = vmatpush.msra.mxu0 0.0
    %4526 = vmatpush.msra.mxu0 0.0
    %4527 = vmatpush.msra.mxu0 0.0
    %4528 = vmatpush.msra.mxu0 0.0
    %4529 = vmatpush.msra.mxu0 0.0
    %4530 = vmatpush.msra.mxu0 0.0
    %4531 = vmatpush.msra.mxu0 0.0
    %4532 = vmatpush.msra.mxu0 0.0
    %4533 = vmatpush.msra.mxu0 %v3564
    %4534 = vmatpush.msra.mxu0 %v3563
    %4535 = vmatpush.msra.mxu0 %v3562
    %4536 = vmatpush.msra.mxu0 %v3561
    %4537 = vmatmul.f32.gmra.mxu0 %v4519
    %v4538 = vpop.f32.mrf.mxu0
    %v4539 = vadd.f32 0.0, %v4538
    %4540 = vdwg.mxu0
    %v4541 = vadd.f32 %v3618, %v4513
    %v4542 = vxor.u32 %v4541, 2147483648
    %v4543 = vmul.f32 %v4542, 1.442695
    %v4544 = vpow.pop %v4543
    %v4545 = vadd.f32 %v4544, 1.0
    %v4546 = vrcp.pop %v4545
    %v4547 = vmul.f32 %v4545, %v4546
    %v4548 = vsub.f32 1.0, %v4547
    %v4549 = vmul.f32 %v4546, %v4548
    %v4550 = vadd.f32 %v4546, %v4549
    %vm4551 = vweird.f32 %v4545
    %vm4552 = vweird.f32 %v4546
    %vm4553 = vmor %vm4551, %vm4552
    %v4554 = vsel %vm4553, %v4546, %v4550
    %v4555 = vand.u32 2147483647, %v4545
    %vm4556 = vcmp.eq.f32.partialorder %v4555, 8.507059e+37
    %v4557 = vand.u32 %v4545, 2147483648
    %v4558 = vor.u32 1.1754944e-38, %v4557
    %v4559 = vsel %vm4556, %v4558, %v4554
    %v4560 = vmul.f32 1.0, %v4559
    %4562 = vrot.lane.b32.xlu0 %v4539, 32
    %v4563 = vpop.permute.xlu0 %4562
    %v4565 = vadd.f32 %v3618, %v4563
    %v4566 = vxor.u32 %v4565, 2147483648
    %v4567 = vmul.f32 %v4566, 1.442695
    %v4568 = vpow.pop %v4567
    %v4569 = vadd.f32 %v4568, 1.0
    %v4570 = vrcp.pop %v4569
    %v4571 = vmul.f32 %v4569, %v4570
    %v4572 = vsub.f32 1.0, %v4571
    %v4573 = vmul.f32 %v4570, %v4572
    %v4574 = vadd.f32 %v4570, %v4573
    %vm4575 = vweird.f32 %v4569
    %vm4576 = vweird.f32 %v4570
    %vm4577 = vmor %vm4575, %vm4576
    %v4578 = vsel %vm4577, %v4570, %v4574
    %v4579 = vand.u32 2147483647, %v4569
    %vm4580 = vcmp.eq.f32.partialorder %v4579, 8.507059e+37
    %v4581 = vand.u32 %v4569, 2147483648
    %v4582 = vor.u32 1.1754944e-38, %v4581
    %v4583 = vsel %vm4580, %v4582, %v4578
    %v4584 = vmul.f32 1.0, %v4583
    %4585 = vst [vmem:[#allocation1] ss:$4 sm:$0xff] %v4487
    %v4586 = vld.sshfl [vmem:[#allocation1] sm:$0xff pattern:$0x73625140]
    %4587 = vrot.lane.b32.xlu0 %v4586, 96
    %v4588 = vpop.permute.xlu0 %4587
    %v4589 = vsel %vm271, %v4588, 0
    %4591 = vmatpush.msra.mxu0 0.0
    %4592 = vmatpush.msra.mxu0 0.0
    %4593 = vmatpush.msra.mxu0 0.0
    %4594 = vmatpush.msra.mxu0 0.0
    %4595 = vmatpush.msra.mxu0 0.0
    %4596 = vmatpush.msra.mxu0 0.0
    %4597 = vmatpush.msra.mxu0 0.0
    %4598 = vmatpush.msra.mxu0 0.0
    %4599 = vmatpush.msra.mxu0 0.0
    %4600 = vmatpush.msra.mxu0 0.0
    %4601 = vmatpush.msra.mxu0 0.0
    %4602 = vmatpush.msra.mxu0 0.0
    %4603 = vmatpush.msra.mxu0 %v3568
    %4604 = vmatpush.msra.mxu0 %v3567
    %4605 = vmatpush.msra.mxu0 %v3566
    %4606 = vmatpush.msra.mxu0 %v3565
    %4607 = vmatmul.f32.gmra.mxu0 %v4589
    %v4608 = vpop.f32.mrf.mxu0
    %v4609 = vadd.f32 %v3645, %v4608
    %4610 = vdwg.mxu0
    %v4611 = vmul.f32 %v4560, %v4609
    %4613 = vrot.lane.b32.xlu0 %v4611, 64
    %v4614 = vpop.permute.xlu0 %4613
    %v4616 = vadd.f32 %v3618, %v4614
    %v4617 = vtanh.pop %v4616
    %v4618 = vsub.f32 1.0, %v4584
    %4620 = vrot.lane.b32.xlu0 %v4617, 96
    %v4621 = vpop.permute.xlu0 %4620
    %v4623 = vmul.f32 %v4618, %v4621
    %v4624 = vmul.f32 %v4584, %v4487
    %v4625 = vadd.f32 %v4623, %v4624
    %v4626 = vrot.slane %v3659, 1
    %v4627 = vrot.slane %v3659, 2
    %v4628 = vrot.slane %v3659, 3
    %vm4629 = vcmask 1040384
    %v4630 = vsel %vm4629, %v3659, %v4626
    %vm4631 = vcmask 1042434
    %v4632 = vsel %vm4631, %v4627, %v4628
    %v4633 = vsel %vm1258, %v4630, %v4632
    %vm4634 = vcmask 1041409
    %v4635 = vsel %vm4634, %v3659, %v4626
    %vm4636 = vcmask 1043459
    %v4637 = vsel %vm4636, %v4627, %v4628
    %vm4638 = vcmask 1042433
    %v4639 = vsel %vm4638, %v4635, %v4637
    %v4640 = vrot.slane %v4639, 1
    %v4643 = vrot.slane %v3797, 1
    %v4644 = vrot.slane %v3797, 2
    %v4645 = vrot.slane %v3797, 3
    %v4646 = vsel %vm4629, %v3797, %v4643
    %v4647 = vsel %vm4631, %v4644, %v4645
    %v4648 = vsel %vm1258, %v4646, %v4647
    %v4649 = vsel %vm4634, %v3797, %v4643
    %v4650 = vsel %vm4636, %v4644, %v4645
    %v4651 = vsel %vm4638, %v4649, %v4650
    %v4652 = vrot.slane %v4651, 1
    %v4653 = vrot.slane %v3935, 1
    %v4654 = vrot.slane %v3935, 2
    %v4655 = vrot.slane %v3935, 3
    %v4656 = vsel %vm4629, %v3935, %v4653
    %v4657 = vsel %vm4631, %v4654, %v4655
    %v4658 = vsel %vm1258, %v4656, %v4657
    %v4659 = vsel %vm4634, %v3935, %v4653
    %v4660 = vsel %vm4636, %v4654, %v4655
    %v4661 = vsel %vm4638, %v4659, %v4660
    %v4662 = vrot.slane %v4661, 1
    %v4663 = vrot.slane %v4073, 1
    %v4664 = vrot.slane %v4073, 2
    %v4665 = vrot.slane %v4073, 3
    %v4666 = vsel %vm4629, %v4073, %v4663
    %v4667 = vsel %vm4631, %v4664, %v4665
    %v4668 = vsel %vm1258, %v4666, %v4667
    %v4669 = vsel %vm4634, %v4073, %v4663
    %v4670 = vsel %vm4636, %v4664, %v4665
    %v4671 = vsel %vm4638, %v4669, %v4670
    %v4672 = vrot.slane %v4671, 1
    %v4673 = vrot.slane %v4211, 1
    %v4674 = vrot.slane %v4211, 2
    %v4675 = vrot.slane %v4211, 3
    %v4676 = vsel %vm4629, %v4211, %v4673
    %v4677 = vsel %vm4631, %v4674, %v4675
    %v4678 = vsel %vm1258, %v4676, %v4677
    %v4679 = vsel %vm4634, %v4211, %v4673
    %v4680 = vsel %vm4636, %v4674, %v4675
    %v4681 = vsel %vm4638, %v4679, %v4680
    %v4682 = vrot.slane %v4681, 1
    %v4683 = vrot.slane %v4349, 1
    %v4684 = vrot.slane %v4349, 2
    %v4685 = vrot.slane %v4349, 3
    %v4686 = vsel %vm4629, %v4349, %v4683
    %v4687 = vsel %vm4631, %v4684, %v4685
    %v4688 = vsel %vm1258, %v4686, %v4687
    %v4689 = vsel %vm4634, %v4349, %v4683
    %v4690 = vsel %vm4636, %v4684, %v4685
    %v4691 = vsel %vm4638, %v4689, %v4690
    %v4692 = vrot.slane %v4691, 1
    %v4693 = vrot.slane %v4487, 1
    %v4694 = vrot.slane %v4487, 2
    %v4695 = vrot.slane %v4487, 3
    %v4696 = vsel %vm4629, %v4487, %v4693
    %v4697 = vsel %vm4631, %v4694, %v4695
    %v4698 = vsel %vm1258, %v4696, %v4697
    %v4699 = vsel %vm4634, %v4487, %v4693
    %v4700 = vsel %vm4636, %v4694, %v4695
    %v4701 = vsel %vm4638, %v4699, %v4700
    %v4702 = vrot.slane %v4701, 1
    %v4704 = vrot.slane %v4625, 1
    %v4705 = vrot.slane %v4625, 2
    %v4706 = vrot.slane %v4625, 3
    %v4707 = vsel %vm4629, %v4625, %v4704
    %v4708 = vsel %vm4631, %v4705, %v4706
    %v4709 = vsel %vm1258, %v4707, %v4708
    %v4710 = vsel %vm4634, %v4625, %v4704
    %v4711 = vsel %vm4636, %v4705, %v4706
    %v4712 = vsel %vm4638, %v4710, %v4711
    %v4713 = vrot.slane %v4712, 1
    %v4714 = vperm.slane %v4648, 0
    %v4715 = vperm.slane %v4652, 0
    %v4718 = vperm.slane %v4658, 0
    %v4719 = vperm.slane %v4662, 0
    %v4722 = vperm.slane %v4668, 0
    %v4723 = vperm.slane %v4672, 0
    %v4726 = vperm.slane %v4678, 0
    %v4727 = vperm.slane %v4682, 0
    %v4730 = vperm.slane %v4688, 0
    %v4731 = vperm.slane %v4692, 0
    %v4734 = vperm.slane %v4698, 0
    %v4735 = vperm.slane %v4702, 0
    %v4738 = vperm.slane %v4709, 0
    %v4739 = vperm.slane %v4713, 0
    %v4742 = vsel %vm4629, %v4633, %v4714
    %v4743 = vsel %vm4629, %v4640, %v4715
    %v4744 = vsel %vm1258, %v4742, %v4718
    %v4745 = vsel %vm1258, %v4743, %v4719
    %vm4746 = vcmask 1042432
    %v4747 = vsel %vm4746, %v4744, %v4722
    %v4748 = vsel %vm4746, %v4745, %v4723
    %v4749 = vsel %vm190, %v4747, %v4726
    %v4750 = vsel %vm190, %v4748, %v4727
    %vm4751 = vcmask 1044480
    %v4752 = vsel %vm4751, %v4749, %v4730
    %v4753 = vsel %vm4751, %v4750, %v4731
    %v4754 = vsel %vm1261, %v4752, %v4734
    %v4755 = vsel %vm1261, %v4753, %v4735
    %vm4756 = vcmask 1046528
    %v4757 = vsel %vm4756, %v4754, %v4738
    %v4758 = vsel %vm4756, %v4755, %v4739
    %v4759 = vld [vmem:[%s57] sm:$0xff]
    %v4760 = vld [vmem:[%s57 + $0x8] sm:$0xff]
    %v4761 = vld [vmem:[%s57 + $0x10] sm:$0xff]
    %v4762 = vld [vmem:[%s57 + $0x18] sm:$0xff]
    %v4763 = vld [vmem:[%s63] sm:$0x1]
    %v4765 = vperm.slane %v4763, 0
    %4767 = vst [vmem:[#allocation1] ss:$4 sm:$0xff] %v4625
    %v4768 = vld.sshfl [vmem:[#allocation1] sm:$0xff pattern:$0x73625140]
    %4769 = vrot.lane.b32.xlu0 %v4768, 96
    %v4770 = vpop.permute.xlu0 %4769
    %v4771 = vsel %vm271, %v4770, 0
    %4773 = vmatpush.msra.mxu0 0.0
    %4774 = vmatpush.msra.mxu0 0.0
    %4775 = vmatpush.msra.mxu0 0.0
    %4776 = vmatpush.msra.mxu0 0.0
    %4777 = vmatpush.msra.mxu0 0.0
    %4778 = vmatpush.msra.mxu0 0.0
    %4779 = vmatpush.msra.mxu0 0.0
    %4780 = vmatpush.msra.mxu0 0.0
    %4781 = vmatpush.msra.mxu0 0.0
    %4782 = vmatpush.msra.mxu0 0.0
    %4783 = vmatpush.msra.mxu0 0.0
    %4784 = vmatpush.msra.mxu0 0.0
    %4785 = vmatpush.msra.mxu0 %v4762
    %4786 = vmatpush.msra.mxu0 %v4761
    %4787 = vmatpush.msra.mxu0 %v4760
    %4788 = vmatpush.msra.mxu0 %v4759
    %4789 = vmatmul.f32.gmra.mxu0 %v4771
    %v4790 = vpop.f32.mrf.mxu0
    %v4791 = vadd.f32 %v4765, %v4790
    %4792 = vdwg.mxu0
    %v4793 = vmul.f32 %v4791, 0.35355338
    %v4794 = vld [vmem:[%s59] sm:$0xff]
    %v4795 = vld [vmem:[%s59 + $0x8] sm:$0xff]
    %v4796 = vld [vmem:[%s59 + $0x10] sm:$0xff]
    %v4797 = vld [vmem:[%s59 + $0x18] sm:$0xff]
    %v4798 = vld [vmem:[%s65] sm:$0x1]
    %v4800 = vperm.slane %v4798, 0
    %4804 = vrot.lane.b32.xlu0 %v4757, 96
    %v4805 = vpop.permute.xlu0 %4804
    %4806 = vrot.lane.b32.xlu0 %v4758, 96
    %v4807 = vpop.permute.xlu0 %4806
    %v4808 = vsel %vm271, %v4805, 0
    %v4810 = vsel %vm271, %v4807, 0
    %4812 = vmatpush.msra.mxu0 0.0
    %4813 = vmatpush.msra.mxu0 0.0
    %4814 = vmatpush.msra.mxu0 0.0
    %4815 = vmatpush.msra.mxu0 0.0
    %4816 = vmatpush.msra.mxu0 0.0
    %4817 = vmatpush.msra.mxu0 0.0
    %4818 = vmatpush.msra.mxu0 0.0
    %4819 = vmatpush.msra.mxu0 0.0
    %4820 = vmatpush.msra.mxu0 0.0
    %4821 = vmatpush.msra.mxu0 0.0
    %4822 = vmatpush.msra.mxu0 0.0
    %4823 = vmatpush.msra.mxu0 0.0
    %4824 = vmatpush.msra.mxu0 %v4797
    %4825 = vmatpush.msra.mxu0 %v4796
    %4826 = vmatpush.msra.mxu0 %v4795
    %4827 = vmatpush.msra.mxu0 %v4794
    %4828 = vmatmul.f32.gmra.mxu0 %v4808
    %v4829 = vpop.f32.mrf.mxu0
    %v4830 = vadd.f32 %v4800, %v4829
    %4831 = vmatmul.f32.gmra.mxu0 %v4810
    %v4832 = vpop.f32.mrf.mxu0
    %v4833 = vadd.f32 %v4800, %v4832
    %4834 = vdwg.mxu0
    %v4835 = vld [vmem:[%s61] sm:$0xff]
    %v4836 = vld [vmem:[%s61 + $0x8] sm:$0xff]
    %v4837 = vld [vmem:[%s61 + $0x10] sm:$0xff]
    %v4838 = vld [vmem:[%s61 + $0x18] sm:$0xff]
    %v4839 = vld [vmem:[%s67] sm:$0x1]
    %v4841 = vperm.slane %v4839, 0
    %4843 = vmatpush.msra.mxu0 0.0
    %4844 = vmatpush.msra.mxu0 0.0
    %4845 = vmatpush.msra.mxu0 0.0
    %4846 = vmatpush.msra.mxu0 0.0
    %4847 = vmatpush.msra.mxu0 0.0
    %4848 = vmatpush.msra.mxu0 0.0
    %4849 = vmatpush.msra.mxu0 0.0
    %4850 = vmatpush.msra.mxu0 0.0
    %4851 = vmatpush.msra.mxu0 0.0
    %4852 = vmatpush.msra.mxu0 0.0
    %4853 = vmatpush.msra.mxu0 0.0
    %4854 = vmatpush.msra.mxu0 0.0
    %4855 = vmatpush.msra.mxu0 %v4838
    %4856 = vmatpush.msra.mxu0 %v4837
    %4857 = vmatpush.msra.mxu0 %v4836
    %4858 = vmatpush.msra.mxu0 %v4835
    %4859 = vmatmul.f32.gmra.mxu0 %v4808
    %v4860 = vpop.f32.mrf.mxu0
    %v4861 = vadd.f32 %v4841, %v4860
    %4862 = vmatmul.f32.gmra.mxu0 %v4810
    %v4863 = vpop.f32.mrf.mxu0
    %v4864 = vadd.f32 %v4841, %v4863
    %4865 = vdwg.mxu0
    %v4866 = vld [vmem:[%s69] sm:$0xff]
    %v4867 = vld [vmem:[%s69 + $0x8] sm:$0xff]
    %v4868 = vld [vmem:[%s69 + $0x10] sm:$0xff]
    %v4869 = vld [vmem:[%s69 + $0x18] sm:$0xff]
    %v4871 = vrot.slane %v4793, 1
    %vm4872 = vcmask 64512
    %v4873 = vsel %vm4872, %v4793, 0
    %v4876 = vsel %vm4872, %v4830, 0
    %4878 = vmatpush.xpose.msra.mxu0 0.0
    %4879 = vmatpush.xpose.msra.mxu0 0.0
    %4880 = vmatpush.xpose.msra.mxu0 0.0
    %4881 = vmatpush.xpose.msra.mxu0 0.0
    %4882 = vmatpush.xpose.msra.mxu0 0.0
    %4883 = vmatpush.xpose.msra.mxu0 0.0
    %4884 = vmatpush.xpose.msra.mxu0 0.0
    %4885 = vmatpush.xpose.msra.mxu0 0.0
    %4886 = vmatpush.xpose.msra.mxu0 0.0
    %4887 = vmatpush.xpose.msra.mxu0 0.0
    %4888 = vmatpush.xpose.msra.mxu0 0.0
    %4889 = vmatpush.xpose.msra.mxu0 0.0
    %4890 = vmatpush.xpose.msra.mxu0 0.0
    %4891 = vmatpush.xpose.msra.mxu0 0.0
    %4892 = vmatpush.xpose.msra.mxu0 0.0
    %4893 = vmatpush.xpose.msra.mxu0 %v4876
    %4894 = vmatmul.f32.gmra.mxu0 %v4873
    %v4895 = vpop.f32.mrf.mxu0
    %v4896 = vadd.f32 0.0, %v4895
    %4897 = vdwg.mxu0
    %v4898 = vsel %vm4872, %v4871, 0
    %v4901 = vsel %vm4872, %v4833, 0
    %4903 = vmatpush.xpose.msra.mxu0 0.0
    %4904 = vmatpush.xpose.msra.mxu0 0.0
    %4905 = vmatpush.xpose.msra.mxu0 0.0
    %4906 = vmatpush.xpose.msra.mxu0 0.0
    %4907 = vmatpush.xpose.msra.mxu0 0.0
    %4908 = vmatpush.xpose.msra.mxu0 0.0
    %4909 = vmatpush.xpose.msra.mxu0 0.0
    %4910 = vmatpush.xpose.msra.mxu0 0.0
    %4911 = vmatpush.xpose.msra.mxu0 0.0
    %4912 = vmatpush.xpose.msra.mxu0 0.0
    %4913 = vmatpush.xpose.msra.mxu0 0.0
    %4914 = vmatpush.xpose.msra.mxu0 0.0
    %4915 = vmatpush.xpose.msra.mxu0 0.0
    %4916 = vmatpush.xpose.msra.mxu0 0.0
    %4917 = vmatpush.xpose.msra.mxu0 0.0
    %4918 = vmatpush.xpose.msra.mxu0 %v4901
    %4919 = vmatmul.f32.gmra.mxu0 %v4898
    %v4920 = vpop.f32.mrf.mxu0
    %v4921 = vadd.f32 0.0, %v4920
    %4922 = vdwg.mxu0
    %vm4923 = vcmask 57344
    %v4924 = vsel %vm4923, %v4896, -inf
    %4925 = vmax.xlane.f32.xlu0 %v4924
    %v4926 = vpop.xlane.xlu0 %4925
    %v4927 = vsel %vm4923, %v4921, -inf
    %4928 = vmax.xlane.f32.xlu0 %v4927
    %v4929 = vpop.xlane.xlu0 %4928
    %v4930 = vsub.f32 %v4896, %v4926
    %v4931 = vsub.f32 %v4921, %v4929
    %v4932 = vmul.f32 %v4930, 1.442695
    %v4933 = vpow.pop %v4932
    %v4934 = vmul.f32 %v4931, 1.442695
    %v4935 = vpow.pop %v4934
    %v4936 = vsel %vm4923, %v4933, 0.0
    %4937 = vadd.xlane.f32.xlu0 %v4936
    %v4938 = vpop.xlane.xlu0 %4937
    %v4939 = vsel %vm4923, %v4935, 0.0
    %4940 = vadd.xlane.f32.xlu0 %v4939
    %v4941 = vpop.xlane.xlu0 %4940
    %v4942 = vrcp.pop %v4938
    %v4943 = vmul.f32 %v4938, %v4942
    %v4944 = vsub.f32 1.0, %v4943
    %v4945 = vmul.f32 %v4942, %v4944
    %v4946 = vadd.f32 %v4942, %v4945
    %vm4947 = vweird.f32 %v4938
    %vm4948 = vweird.f32 %v4942
    %vm4949 = vmor %vm4947, %vm4948
    %v4950 = vsel %vm4949, %v4942, %v4946
    %v4951 = vand.u32 2147483647, %v4938
    %vm4952 = vcmp.eq.f32.partialorder %v4951, 8.507059e+37
    %v4953 = vand.u32 %v4938, 2147483648
    %v4954 = vor.u32 1.1754944e-38, %v4953
    %v4955 = vsel %vm4952, %v4954, %v4950
    %v4956 = vmul.f32 %v4933, %v4955
    %v4957 = vrcp.pop %v4941
    %v4958 = vmul.f32 %v4941, %v4957
    %v4959 = vsub.f32 1.0, %v4958
    %v4960 = vmul.f32 %v4957, %v4959
    %v4961 = vadd.f32 %v4957, %v4960
    %vm4962 = vweird.f32 %v4941
    %vm4963 = vweird.f32 %v4957
    %vm4964 = vmor %vm4962, %vm4963
    %v4965 = vsel %vm4964, %v4957, %v4961
    %v4966 = vand.u32 2147483647, %v4941
    %vm4967 = vcmp.eq.f32.partialorder %v4966, 8.507059e+37
    %v4968 = vand.u32 %v4941, 2147483648
    %v4969 = vor.u32 1.1754944e-38, %v4968
    %v4970 = vsel %vm4967, %v4969, %v4965
    %v4971 = vmul.f32 %v4935, %v4970
    %v4973 = vsel %vm4872, %v4956, 0
    %4975 = vmatpush.msra.mxu0 0.0
    %4976 = vmatpush.msra.mxu0 0.0
    %4977 = vmatpush.msra.mxu0 0.0
    %4978 = vmatpush.msra.mxu0 0.0
    %4979 = vmatpush.msra.mxu0 0.0
    %4980 = vmatpush.msra.mxu0 0.0
    %4981 = vmatpush.msra.mxu0 0.0
    %4982 = vmatpush.msra.mxu0 0.0
    %4983 = vmatpush.msra.mxu0 0.0
    %4984 = vmatpush.msra.mxu0 0.0
    %4985 = vmatpush.msra.mxu0 0.0
    %4986 = vmatpush.msra.mxu0 0.0
    %4987 = vmatpush.msra.mxu0 0.0
    %4988 = vmatpush.msra.mxu0 0.0
    %4989 = vmatpush.msra.mxu0 0.0
    %4990 = vmatpush.msra.mxu0 %v4861
    %4991 = vmatmul.f32.gmra.mxu0 %v4973
    %v4992 = vpop.f32.mrf.mxu0
    %v4993 = vadd.f32 0.0, %v4992
    %4994 = vdwg.mxu0
    %v4996 = vsel %vm4872, %v4971, 0
    %4998 = vmatpush.msra.mxu0 0.0
    %4999 = vmatpush.msra.mxu0 0.0
    %5000 = vmatpush.msra.mxu0 0.0
    %5001 = vmatpush.msra.mxu0 0.0
    %5002 = vmatpush.msra.mxu0 0.0
    %5003 = vmatpush.msra.mxu0 0.0
    %5004 = vmatpush.msra.mxu0 0.0
    %5005 = vmatpush.msra.mxu0 0.0
    %5006 = vmatpush.msra.mxu0 0.0
    %5007 = vmatpush.msra.mxu0 0.0
    %5008 = vmatpush.msra.mxu0 0.0
    %5009 = vmatpush.msra.mxu0 0.0
    %5010 = vmatpush.msra.mxu0 0.0
    %5011 = vmatpush.msra.mxu0 0.0
    %5012 = vmatpush.msra.mxu0 0.0
    %5013 = vmatpush.msra.mxu0 %v4864
    %5014 = vmatmul.f32.gmra.mxu0 %v4996
    %v5015 = vpop.f32.mrf.mxu0
    %v5016 = vadd.f32 0.0, %v5015
    %5017 = vdwg.mxu0
    %v5018 = vperm.slane %v4793, 0
    %5019 = vrot.lane.b32.xlu0 %v5018, 120
    %v5020 = vpop.permute.xlu0 %5019
    %5021 = vrot.lane.b32.xlu0 %v4830, 120
    %v5022 = vpop.permute.xlu0 %5021
    %v5023 = vsel %vm4872, %v5020, 0
    %v5025 = vsel %vm4872, %v5022, 0
    %5027 = vmatpush.xpose.msra.mxu0 0.0
    %5028 = vmatpush.xpose.msra.mxu0 0.0
    %5029 = vmatpush.xpose.msra.mxu0 0.0
    %5030 = vmatpush.xpose.msra.mxu0 0.0
    %5031 = vmatpush.xpose.msra.mxu0 0.0
    %5032 = vmatpush.xpose.msra.mxu0 0.0
    %5033 = vmatpush.xpose.msra.mxu0 0.0
    %5034 = vmatpush.xpose.msra.mxu0 0.0
    %5035 = vmatpush.xpose.msra.mxu0 0.0
    %5036 = vmatpush.xpose.msra.mxu0 0.0
    %5037 = vmatpush.xpose.msra.mxu0 0.0
    %5038 = vmatpush.xpose.msra.mxu0 0.0
    %5039 = vmatpush.xpose.msra.mxu0 0.0
    %5040 = vmatpush.xpose.msra.mxu0 0.0
    %5041 = vmatpush.xpose.msra.mxu0 0.0
    %5042 = vmatpush.xpose.msra.mxu0 %v5025
    %5043 = vmatmul.f32.gmra.mxu0 %v5023
    %v5044 = vpop.f32.mrf.mxu0
    %v5045 = vadd.f32 0.0, %v5044
    %5046 = vdwg.mxu0
    %v5047 = vperm.slane %v4871, 0
    %5048 = vrot.lane.b32.xlu0 %v5047, 120
    %v5049 = vpop.permute.xlu0 %5048
    %5050 = vrot.lane.b32.xlu0 %v4833, 120
    %v5051 = vpop.permute.xlu0 %5050
    %v5052 = vsel %vm4872, %v5049, 0
    %v5054 = vsel %vm4872, %v5051, 0
    %5056 = vmatpush.xpose.msra.mxu0 0.0
    %5057 = vmatpush.xpose.msra.mxu0 0.0
    %5058 = vmatpush.xpose.msra.mxu0 0.0
    %5059 = vmatpush.xpose.msra.mxu0 0.0
    %5060 = vmatpush.xpose.msra.mxu0 0.0
    %5061 = vmatpush.xpose.msra.mxu0 0.0
    %5062 = vmatpush.xpose.msra.mxu0 0.0
    %5063 = vmatpush.xpose.msra.mxu0 0.0
    %5064 = vmatpush.xpose.msra.mxu0 0.0
    %5065 = vmatpush.xpose.msra.mxu0 0.0
    %5066 = vmatpush.xpose.msra.mxu0 0.0
    %5067 = vmatpush.xpose.msra.mxu0 0.0
    %5068 = vmatpush.xpose.msra.mxu0 0.0
    %5069 = vmatpush.xpose.msra.mxu0 0.0
    %5070 = vmatpush.xpose.msra.mxu0 0.0
    %5071 = vmatpush.xpose.msra.mxu0 %v5054
    %5072 = vmatmul.f32.gmra.mxu0 %v5052
    %v5073 = vpop.f32.mrf.mxu0
    %v5074 = vadd.f32 0.0, %v5073
    %5075 = vdwg.mxu0
    %v5076 = vsel %vm4923, %v5045, -inf
    %5077 = vmax.xlane.f32.xlu0 %v5076
    %v5078 = vpop.xlane.xlu0 %5077
    %v5079 = vsel %vm4923, %v5074, -inf
    %5080 = vmax.xlane.f32.xlu0 %v5079
    %v5081 = vpop.xlane.xlu0 %5080
    %v5082 = vsub.f32 %v5045, %v5078
    %v5083 = vsub.f32 %v5074, %v5081
    %v5084 = vmul.f32 %v5082, 1.442695
    %v5085 = vpow.pop %v5084
    %v5086 = vmul.f32 %v5083, 1.442695
    %v5087 = vpow.pop %v5086
    %v5088 = vsel %vm4923, %v5085, 0.0
    %5089 = vadd.xlane.f32.xlu0 %v5088
    %v5090 = vpop.xlane.xlu0 %5089
    %v5091 = vsel %vm4923, %v5087, 0.0
    %5092 = vadd.xlane.f32.xlu0 %v5091
    %v5093 = vpop.xlane.xlu0 %5092
    %v5094 = vrcp.pop %v5090
    %v5095 = vmul.f32 %v5090, %v5094
    %v5096 = vsub.f32 1.0, %v5095
    %v5097 = vmul.f32 %v5094, %v5096
    %v5098 = vadd.f32 %v5094, %v5097
    %vm5099 = vweird.f32 %v5090
    %vm5100 = vweird.f32 %v5094
    %vm5101 = vmor %vm5099, %vm5100
    %v5102 = vsel %vm5101, %v5094, %v5098
    %v5103 = vand.u32 2147483647, %v5090
    %vm5104 = vcmp.eq.f32.partialorder %v5103, 8.507059e+37
    %v5105 = vand.u32 %v5090, 2147483648
    %v5106 = vor.u32 1.1754944e-38, %v5105
    %v5107 = vsel %vm5104, %v5106, %v5102
    %v5108 = vmul.f32 %v5085, %v5107
    %v5109 = vrcp.pop %v5093
    %v5110 = vmul.f32 %v5093, %v5109
    %v5111 = vsub.f32 1.0, %v5110
    %v5112 = vmul.f32 %v5109, %v5111
    %v5113 = vadd.f32 %v5109, %v5112
    %vm5114 = vweird.f32 %v5093
    %vm5115 = vweird.f32 %v5109
    %vm5116 = vmor %vm5114, %vm5115
    %v5117 = vsel %vm5116, %v5109, %v5113
    %v5118 = vand.u32 2147483647, %v5093
    %vm5119 = vcmp.eq.f32.partialorder %v5118, 8.507059e+37
    %v5120 = vand.u32 %v5093, 2147483648
    %v5121 = vor.u32 1.1754944e-38, %v5120
    %v5122 = vsel %vm5119, %v5121, %v5117
    %v5123 = vmul.f32 %v5087, %v5122
    %5125 = vrot.lane.b32.xlu0 %v4861, 120
    %v5126 = vpop.permute.xlu0 %5125
    %v5129 = vsel %vm4872, %v5108, 0
    %5131 = vmatpush.msra.mxu0 0.0
    %5132 = vmatpush.msra.mxu0 0.0
    %5133 = vmatpush.msra.mxu0 0.0
    %5134 = vmatpush.msra.mxu0 0.0
    %5135 = vmatpush.msra.mxu0 0.0
    %5136 = vmatpush.msra.mxu0 0.0
    %5137 = vmatpush.msra.mxu0 0.0
    %5138 = vmatpush.msra.mxu0 0.0
    %5139 = vmatpush.msra.mxu0 0.0
    %5140 = vmatpush.msra.mxu0 0.0
    %5141 = vmatpush.msra.mxu0 0.0
    %5142 = vmatpush.msra.mxu0 0.0
    %5143 = vmatpush.msra.mxu0 0.0
    %5144 = vmatpush.msra.mxu0 0.0
    %5145 = vmatpush.msra.mxu0 0.0
    %5146 = vmatpush.msra.mxu0 %v5126
    %5147 = vmatmul.f32.gmra.mxu0 %v5129
    %v5148 = vpop.f32.mrf.mxu0
    %v5149 = vadd.f32 0.0, %v5148
    %5150 = vdwg.mxu0
    %5152 = vrot.lane.b32.xlu0 %v4864, 120
    %v5153 = vpop.permute.xlu0 %5152
    %v5156 = vsel %vm4872, %v5123, 0
    %5158 = vmatpush.msra.mxu0 0.0
    %5159 = vmatpush.msra.mxu0 0.0
    %5160 = vmatpush.msra.mxu0 0.0
    %5161 = vmatpush.msra.mxu0 0.0
    %5162 = vmatpush.msra.mxu0 0.0
    %5163 = vmatpush.msra.mxu0 0.0
    %5164 = vmatpush.msra.mxu0 0.0
    %5165 = vmatpush.msra.mxu0 0.0
    %5166 = vmatpush.msra.mxu0 0.0
    %5167 = vmatpush.msra.mxu0 0.0
    %5168 = vmatpush.msra.mxu0 0.0
    %5169 = vmatpush.msra.mxu0 0.0
    %5170 = vmatpush.msra.mxu0 0.0
    %5171 = vmatpush.msra.mxu0 0.0
    %5172 = vmatpush.msra.mxu0 0.0
    %5173 = vmatpush.msra.mxu0 %v5153
    %5174 = vmatmul.f32.gmra.mxu0 %v5156
    %v5175 = vpop.f32.mrf.mxu0
    %v5176 = vadd.f32 0.0, %v5175
    %5177 = vdwg.mxu0
    %v5180 = vrot.slane %v5176, 7
    %v5181 = vsel %vm4634, %v5180, %v5149
    %v5182 = vsel %vm4872, %v5181, 0
    %5184 = vmatpush.msra.mxu0 0.0
    %5185 = vmatpush.msra.mxu0 0.0
    %5186 = vmatpush.msra.mxu0 0.0
    %5187 = vmatpush.msra.mxu0 0.0
    %5188 = vmatpush.msra.mxu0 0.0
    %5189 = vmatpush.msra.mxu0 0.0
    %5190 = vmatpush.msra.mxu0 0.0
    %5191 = vmatpush.msra.mxu0 0.0
    %5192 = vmatpush.msra.mxu0 0.0
    %5193 = vmatpush.msra.mxu0 0.0
    %5194 = vmatpush.msra.mxu0 0.0
    %5195 = vmatpush.msra.mxu0 0.0
    %5196 = vmatpush.msra.mxu0 0.0
    %5197 = vmatpush.msra.mxu0 0.0
    %5198 = vmatpush.msra.mxu0 0.0
    %5199 = vmatpush.msra.mxu0 %v4867
    %5200 = vmatmul.f32.gmra.mxu0 %v5182
    %v5201 = vpop.f32.mrf.mxu0
    %v5202 = vadd.f32 0.0, %v5201
    %5203 = vdwg.mxu0
    %v5206 = vrot.slane %v5016, 7
    %v5207 = vsel %vm4634, %v5206, %v4993
    %v5208 = vsel %vm4872, %v5207, 0
    %5210 = vmatpush.msra.mxu0 0.0
    %5211 = vmatpush.msra.mxu0 0.0
    %5212 = vmatpush.msra.mxu0 0.0
    %5213 = vmatpush.msra.mxu0 0.0
    %5214 = vmatpush.msra.mxu0 0.0
    %5215 = vmatpush.msra.mxu0 0.0
    %5216 = vmatpush.msra.mxu0 0.0
    %5217 = vmatpush.msra.mxu0 0.0
    %5218 = vmatpush.msra.mxu0 0.0
    %5219 = vmatpush.msra.mxu0 0.0
    %5220 = vmatpush.msra.mxu0 0.0
    %5221 = vmatpush.msra.mxu0 0.0
    %5222 = vmatpush.msra.mxu0 0.0
    %5223 = vmatpush.msra.mxu0 0.0
    %5224 = vmatpush.msra.mxu0 0.0
    %5225 = vmatpush.msra.mxu0 %v4866
    %5226 = vmatmul.f32.gmra.mxu0 %v5208
    %v5227 = vpop.f32.mrf.mxu0
    %v5228 = vadd.f32 %v5202, %v5227
    %5229 = vdwg.mxu0
    %5230 = vrot.lane.b32.xlu0 %v5018, 112
    %v5231 = vpop.permute.xlu0 %5230
    %5232 = vrot.lane.b32.xlu0 %v4830, 112
    %v5233 = vpop.permute.xlu0 %5232
    %v5234 = vsel %vm4872, %v5231, 0
    %v5236 = vsel %vm4872, %v5233, 0
    %5238 = vmatpush.xpose.msra.mxu0 0.0
    %5239 = vmatpush.xpose.msra.mxu0 0.0
    %5240 = vmatpush.xpose.msra.mxu0 0.0
    %5241 = vmatpush.xpose.msra.mxu0 0.0
    %5242 = vmatpush.xpose.msra.mxu0 0.0
    %5243 = vmatpush.xpose.msra.mxu0 0.0
    %5244 = vmatpush.xpose.msra.mxu0 0.0
    %5245 = vmatpush.xpose.msra.mxu0 0.0
    %5246 = vmatpush.xpose.msra.mxu0 0.0
    %5247 = vmatpush.xpose.msra.mxu0 0.0
    %5248 = vmatpush.xpose.msra.mxu0 0.0
    %5249 = vmatpush.xpose.msra.mxu0 0.0
    %5250 = vmatpush.xpose.msra.mxu0 0.0
    %5251 = vmatpush.xpose.msra.mxu0 0.0
    %5252 = vmatpush.xpose.msra.mxu0 0.0
    %5253 = vmatpush.xpose.msra.mxu0 %v5236
    %5254 = vmatmul.f32.gmra.mxu0 %v5234
    %v5255 = vpop.f32.mrf.mxu0
    %v5256 = vadd.f32 0.0, %v5255
    %5257 = vdwg.mxu0
    %5258 = vrot.lane.b32.xlu0 %v5047, 112
    %v5259 = vpop.permute.xlu0 %5258
    %5260 = vrot.lane.b32.xlu0 %v4833, 112
    %v5261 = vpop.permute.xlu0 %5260
    %v5262 = vsel %vm4872, %v5259, 0
    %v5264 = vsel %vm4872, %v5261, 0
    %5266 = vmatpush.xpose.msra.mxu0 0.0
    %5267 = vmatpush.xpose.msra.mxu0 0.0
    %5268 = vmatpush.xpose.msra.mxu0 0.0
    %5269 = vmatpush.xpose.msra.mxu0 0.0
    %5270 = vmatpush.xpose.msra.mxu0 0.0
    %5271 = vmatpush.xpose.msra.mxu0 0.0
    %5272 = vmatpush.xpose.msra.mxu0 0.0
    %5273 = vmatpush.xpose.msra.mxu0 0.0
    %5274 = vmatpush.xpose.msra.mxu0 0.0
    %5275 = vmatpush.xpose.msra.mxu0 0.0
    %5276 = vmatpush.xpose.msra.mxu0 0.0
    %5277 = vmatpush.xpose.msra.mxu0 0.0
    %5278 = vmatpush.xpose.msra.mxu0 0.0
    %5279 = vmatpush.xpose.msra.mxu0 0.0
    %5280 = vmatpush.xpose.msra.mxu0 0.0
    %5281 = vmatpush.xpose.msra.mxu0 %v5264
    %5282 = vmatmul.f32.gmra.mxu0 %v5262
    %v5283 = vpop.f32.mrf.mxu0
    %v5284 = vadd.f32 0.0, %v5283
    %5285 = vdwg.mxu0
    %v5286 = vsel %vm4923, %v5256, -inf
    %5287 = vmax.xlane.f32.xlu0 %v5286
    %v5288 = vpop.xlane.xlu0 %5287
    %v5289 = vsel %vm4923, %v5284, -inf
    %5290 = vmax.xlane.f32.xlu0 %v5289
    %v5291 = vpop.xlane.xlu0 %5290
    %v5292 = vsub.f32 %v5256, %v5288
    %v5293 = vsub.f32 %v5284, %v5291
    %v5294 = vmul.f32 %v5292, 1.442695
    %v5295 = vpow.pop %v5294
    %v5296 = vmul.f32 %v5293, 1.442695
    %v5297 = vpow.pop %v5296
    %v5298 = vsel %vm4923, %v5295, 0.0
    %5299 = vadd.xlane.f32.xlu0 %v5298
    %v5300 = vpop.xlane.xlu0 %5299
    %v5301 = vsel %vm4923, %v5297, 0.0
    %5302 = vadd.xlane.f32.xlu0 %v5301
    %v5303 = vpop.xlane.xlu0 %5302
    %v5304 = vrcp.pop %v5300
    %v5305 = vmul.f32 %v5300, %v5304
    %v5306 = vsub.f32 1.0, %v5305
    %v5307 = vmul.f32 %v5304, %v5306
    %v5308 = vadd.f32 %v5304, %v5307
    %vm5309 = vweird.f32 %v5300
    %vm5310 = vweird.f32 %v5304
    %vm5311 = vmor %vm5309, %vm5310
    %v5312 = vsel %vm5311, %v5304, %v5308
    %v5313 = vand.u32 2147483647, %v5300
    %vm5314 = vcmp.eq.f32.partialorder %v5313, 8.507059e+37
    %v5315 = vand.u32 %v5300, 2147483648
    %v5316 = vor.u32 1.1754944e-38, %v5315
    %v5317 = vsel %vm5314, %v5316, %v5312
    %v5318 = vmul.f32 %v5295, %v5317
    %v5319 = vrcp.pop %v5303
    %v5320 = vmul.f32 %v5303, %v5319
    %v5321 = vsub.f32 1.0, %v5320
    %v5322 = vmul.f32 %v5319, %v5321
    %v5323 = vadd.f32 %v5319, %v5322
    %vm5324 = vweird.f32 %v5303
    %vm5325 = vweird.f32 %v5319
    %vm5326 = vmor %vm5324, %vm5325
    %v5327 = vsel %vm5326, %v5319, %v5323
    %v5328 = vand.u32 2147483647, %v5303
    %vm5329 = vcmp.eq.f32.partialorder %v5328, 8.507059e+37
    %v5330 = vand.u32 %v5303, 2147483648
    %v5331 = vor.u32 1.1754944e-38, %v5330
    %v5332 = vsel %vm5329, %v5331, %v5327
    %v5333 = vmul.f32 %v5297, %v5332
    %5334 = vrot.lane.b32.xlu0 %v4861, 112
    %v5335 = vpop.permute.xlu0 %5334
    %v5338 = vsel %vm4872, %v5318, 0
    %5340 = vmatpush.msra.mxu0 0.0
    %5341 = vmatpush.msra.mxu0 0.0
    %5342 = vmatpush.msra.mxu0 0.0
    %5343 = vmatpush.msra.mxu0 0.0
    %5344 = vmatpush.msra.mxu0 0.0
    %5345 = vmatpush.msra.mxu0 0.0
    %5346 = vmatpush.msra.mxu0 0.0
    %5347 = vmatpush.msra.mxu0 0.0
    %5348 = vmatpush.msra.mxu0 0.0
    %5349 = vmatpush.msra.mxu0 0.0
    %5350 = vmatpush.msra.mxu0 0.0
    %5351 = vmatpush.msra.mxu0 0.0
    %5352 = vmatpush.msra.mxu0 0.0
    %5353 = vmatpush.msra.mxu0 0.0
    %5354 = vmatpush.msra.mxu0 0.0
    %5355 = vmatpush.msra.mxu0 %v5335
    %5356 = vmatmul.f32.gmra.mxu0 %v5338
    %v5357 = vpop.f32.mrf.mxu0
    %v5358 = vadd.f32 0.0, %v5357
    %5359 = vdwg.mxu0
    %5360 = vrot.lane.b32.xlu0 %v4864, 112
    %v5361 = vpop.permute.xlu0 %5360
    %v5364 = vsel %vm4872, %v5333, 0
    %5366 = vmatpush.msra.mxu0 0.0
    %5367 = vmatpush.msra.mxu0 0.0
    %5368 = vmatpush.msra.mxu0 0.0
    %5369 = vmatpush.msra.mxu0 0.0
    %5370 = vmatpush.msra.mxu0 0.0
    %5371 = vmatpush.msra.mxu0 0.0
    %5372 = vmatpush.msra.mxu0 0.0
    %5373 = vmatpush.msra.mxu0 0.0
    %5374 = vmatpush.msra.mxu0 0.0
    %5375 = vmatpush.msra.mxu0 0.0
    %5376 = vmatpush.msra.mxu0 0.0
    %5377 = vmatpush.msra.mxu0 0.0
    %5378 = vmatpush.msra.mxu0 0.0
    %5379 = vmatpush.msra.mxu0 0.0
    %5380 = vmatpush.msra.mxu0 0.0
    %5381 = vmatpush.msra.mxu0 %v5361
    %5382 = vmatmul.f32.gmra.mxu0 %v5364
    %v5383 = vpop.f32.mrf.mxu0
    %v5384 = vadd.f32 0.0, %v5383
    %5385 = vdwg.mxu0
    %v5388 = vrot.slane %v5384, 7
    %v5389 = vsel %vm4634, %v5388, %v5358
    %v5390 = vsel %vm4872, %v5389, 0
    %5392 = vmatpush.msra.mxu0 0.0
    %5393 = vmatpush.msra.mxu0 0.0
    %5394 = vmatpush.msra.mxu0 0.0
    %5395 = vmatpush.msra.mxu0 0.0
    %5396 = vmatpush.msra.mxu0 0.0
    %5397 = vmatpush.msra.mxu0 0.0
    %5398 = vmatpush.msra.mxu0 0.0
    %5399 = vmatpush.msra.mxu0 0.0
    %5400 = vmatpush.msra.mxu0 0.0
    %5401 = vmatpush.msra.mxu0 0.0
    %5402 = vmatpush.msra.mxu0 0.0
    %5403 = vmatpush.msra.mxu0 0.0
    %5404 = vmatpush.msra.mxu0 0.0
    %5405 = vmatpush.msra.mxu0 0.0
    %5406 = vmatpush.msra.mxu0 0.0
    %5407 = vmatpush.msra.mxu0 %v4868
    %5408 = vmatmul.f32.gmra.mxu0 %v5390
    %v5409 = vpop.f32.mrf.mxu0
    %v5410 = vadd.f32 0.0, %v5409
    %5411 = vdwg.mxu0
    %v5412 = vadd.f32 %v5228, %v5410
    %5413 = vrot.lane.b32.xlu0 %v5018, 104
    %v5414 = vpop.permute.xlu0 %5413
    %5415 = vrot.lane.b32.xlu0 %v4830, 104
    %v5416 = vpop.permute.xlu0 %5415
    %v5417 = vsel %vm4872, %v5414, 0
    %v5419 = vsel %vm4872, %v5416, 0
    %5421 = vmatpush.xpose.msra.mxu0 0.0
    %5422 = vmatpush.xpose.msra.mxu0 0.0
    %5423 = vmatpush.xpose.msra.mxu0 0.0
    %5424 = vmatpush.xpose.msra.mxu0 0.0
    %5425 = vmatpush.xpose.msra.mxu0 0.0
    %5426 = vmatpush.xpose.msra.mxu0 0.0
    %5427 = vmatpush.xpose.msra.mxu0 0.0
    %5428 = vmatpush.xpose.msra.mxu0 0.0
    %5429 = vmatpush.xpose.msra.mxu0 0.0
    %5430 = vmatpush.xpose.msra.mxu0 0.0
    %5431 = vmatpush.xpose.msra.mxu0 0.0
    %5432 = vmatpush.xpose.msra.mxu0 0.0
    %5433 = vmatpush.xpose.msra.mxu0 0.0
    %5434 = vmatpush.xpose.msra.mxu0 0.0
    %5435 = vmatpush.xpose.msra.mxu0 0.0
    %5436 = vmatpush.xpose.msra.mxu0 %v5419
    %5437 = vmatmul.f32.gmra.mxu0 %v5417
    %v5438 = vpop.f32.mrf.mxu0
    %v5439 = vadd.f32 0.0, %v5438
    %5440 = vdwg.mxu0
    %5441 = vrot.lane.b32.xlu0 %v5047, 104
    %v5442 = vpop.permute.xlu0 %5441
    %5443 = vrot.lane.b32.xlu0 %v4833, 104
    %v5444 = vpop.permute.xlu0 %5443
    %v5445 = vsel %vm4872, %v5442, 0
    %v5447 = vsel %vm4872, %v5444, 0
    %5449 = vmatpush.xpose.msra.mxu0 0.0
    %5450 = vmatpush.xpose.msra.mxu0 0.0
    %5451 = vmatpush.xpose.msra.mxu0 0.0
    %5452 = vmatpush.xpose.msra.mxu0 0.0
    %5453 = vmatpush.xpose.msra.mxu0 0.0
    %5454 = vmatpush.xpose.msra.mxu0 0.0
    %5455 = vmatpush.xpose.msra.mxu0 0.0
    %5456 = vmatpush.xpose.msra.mxu0 0.0
    %5457 = vmatpush.xpose.msra.mxu0 0.0
    %5458 = vmatpush.xpose.msra.mxu0 0.0
    %5459 = vmatpush.xpose.msra.mxu0 0.0
    %5460 = vmatpush.xpose.msra.mxu0 0.0
    %5461 = vmatpush.xpose.msra.mxu0 0.0
    %5462 = vmatpush.xpose.msra.mxu0 0.0
    %5463 = vmatpush.xpose.msra.mxu0 0.0
    %5464 = vmatpush.xpose.msra.mxu0 %v5447
    %5465 = vmatmul.f32.gmra.mxu0 %v5445
    %v5466 = vpop.f32.mrf.mxu0
    %v5467 = vadd.f32 0.0, %v5466
    %5468 = vdwg.mxu0
    %v5469 = vsel %vm4923, %v5439, -inf
    %5470 = vmax.xlane.f32.xlu0 %v5469
    %v5471 = vpop.xlane.xlu0 %5470
    %v5472 = vsel %vm4923, %v5467, -inf
    %5473 = vmax.xlane.f32.xlu0 %v5472
    %v5474 = vpop.xlane.xlu0 %5473
    %v5475 = vsub.f32 %v5439, %v5471
    %v5476 = vsub.f32 %v5467, %v5474
    %v5477 = vmul.f32 %v5475, 1.442695
    %v5478 = vpow.pop %v5477
    %v5479 = vmul.f32 %v5476, 1.442695
    %v5480 = vpow.pop %v5479
    %v5481 = vsel %vm4923, %v5478, 0.0
    %5482 = vadd.xlane.f32.xlu0 %v5481
    %v5483 = vpop.xlane.xlu0 %5482
    %v5484 = vsel %vm4923, %v5480, 0.0
    %5485 = vadd.xlane.f32.xlu0 %v5484
    %v5486 = vpop.xlane.xlu0 %5485
    %v5487 = vrcp.pop %v5483
    %v5488 = vmul.f32 %v5483, %v5487
    %v5489 = vsub.f32 1.0, %v5488
    %v5490 = vmul.f32 %v5487, %v5489
    %v5491 = vadd.f32 %v5487, %v5490
    %vm5492 = vweird.f32 %v5483
    %vm5493 = vweird.f32 %v5487
    %vm5494 = vmor %vm5492, %vm5493
    %v5495 = vsel %vm5494, %v5487, %v5491
    %v5496 = vand.u32 2147483647, %v5483
    %vm5497 = vcmp.eq.f32.partialorder %v5496, 8.507059e+37
    %v5498 = vand.u32 %v5483, 2147483648
    %v5499 = vor.u32 1.1754944e-38, %v5498
    %v5500 = vsel %vm5497, %v5499, %v5495
    %v5501 = vmul.f32 %v5478, %v5500
    %v5502 = vrcp.pop %v5486
    %v5503 = vmul.f32 %v5486, %v5502
    %v5504 = vsub.f32 1.0, %v5503
    %v5505 = vmul.f32 %v5502, %v5504
    %v5506 = vadd.f32 %v5502, %v5505
    %vm5507 = vweird.f32 %v5486
    %vm5508 = vweird.f32 %v5502
    %vm5509 = vmor %vm5507, %vm5508
    %v5510 = vsel %vm5509, %v5502, %v5506
    %v5511 = vand.u32 2147483647, %v5486
    %vm5512 = vcmp.eq.f32.partialorder %v5511, 8.507059e+37
    %v5513 = vand.u32 %v5486, 2147483648
    %v5514 = vor.u32 1.1754944e-38, %v5513
    %v5515 = vsel %vm5512, %v5514, %v5510
    %v5516 = vmul.f32 %v5480, %v5515
    %5517 = vrot.lane.b32.xlu0 %v4861, 104
    %v5518 = vpop.permute.xlu0 %5517
    %v5521 = vsel %vm4872, %v5501, 0
    %5523 = vmatpush.msra.mxu0 0.0
    %5524 = vmatpush.msra.mxu0 0.0
    %5525 = vmatpush.msra.mxu0 0.0
    %5526 = vmatpush.msra.mxu0 0.0
    %5527 = vmatpush.msra.mxu0 0.0
    %5528 = vmatpush.msra.mxu0 0.0
    %5529 = vmatpush.msra.mxu0 0.0
    %5530 = vmatpush.msra.mxu0 0.0
    %5531 = vmatpush.msra.mxu0 0.0
    %5532 = vmatpush.msra.mxu0 0.0
    %5533 = vmatpush.msra.mxu0 0.0
    %5534 = vmatpush.msra.mxu0 0.0
    %5535 = vmatpush.msra.mxu0 0.0
    %5536 = vmatpush.msra.mxu0 0.0
    %5537 = vmatpush.msra.mxu0 0.0
    %5538 = vmatpush.msra.mxu0 %v5518
    %5539 = vmatmul.f32.gmra.mxu0 %v5521
    %v5540 = vpop.f32.mrf.mxu0
    %v5541 = vadd.f32 0.0, %v5540
    %5542 = vdwg.mxu0
    %5543 = vrot.lane.b32.xlu0 %v4864, 104
    %v5544 = vpop.permute.xlu0 %5543
    %v5547 = vsel %vm4872, %v5516, 0
    %5549 = vmatpush.msra.mxu0 0.0
    %5550 = vmatpush.msra.mxu0 0.0
    %5551 = vmatpush.msra.mxu0 0.0
    %5552 = vmatpush.msra.mxu0 0.0
    %5553 = vmatpush.msra.mxu0 0.0
    %5554 = vmatpush.msra.mxu0 0.0
    %5555 = vmatpush.msra.mxu0 0.0
    %5556 = vmatpush.msra.mxu0 0.0
    %5557 = vmatpush.msra.mxu0 0.0
    %5558 = vmatpush.msra.mxu0 0.0
    %5559 = vmatpush.msra.mxu0 0.0
    %5560 = vmatpush.msra.mxu0 0.0
    %5561 = vmatpush.msra.mxu0 0.0
    %5562 = vmatpush.msra.mxu0 0.0
    %5563 = vmatpush.msra.mxu0 0.0
    %5564 = vmatpush.msra.mxu0 %v5544
    %5565 = vmatmul.f32.gmra.mxu0 %v5547
    %v5566 = vpop.f32.mrf.mxu0
    %v5567 = vadd.f32 0.0, %v5566
    %5568 = vdwg.mxu0
    %v5571 = vrot.slane %v5567, 7
    %v5572 = vsel %vm4634, %v5571, %v5541
    %v5573 = vsel %vm4872, %v5572, 0
    %5575 = vmatpush.msra.mxu0 0.0
    %5576 = vmatpush.msra.mxu0 0.0
    %5577 = vmatpush.msra.mxu0 0.0
    %5578 = vmatpush.msra.mxu0 0.0
    %5579 = vmatpush.msra.mxu0 0.0
    %5580 = vmatpush.msra.mxu0 0.0
    %5581 = vmatpush.msra.mxu0 0.0
    %5582 = vmatpush.msra.mxu0 0.0
    %5583 = vmatpush.msra.mxu0 0.0
    %5584 = vmatpush.msra.mxu0 0.0
    %5585 = vmatpush.msra.mxu0 0.0
    %5586 = vmatpush.msra.mxu0 0.0
    %5587 = vmatpush.msra.mxu0 0.0
    %5588 = vmatpush.msra.mxu0 0.0
    %5589 = vmatpush.msra.mxu0 0.0
    %5590 = vmatpush.msra.mxu0 %v4869
    %5591 = vmatmul.f32.gmra.mxu0 %v5573
    %v5592 = vpop.f32.mrf.mxu0
    %v5593 = vadd.f32 0.0, %v5592
    %5594 = vdwg.mxu0
    %v5595 = vadd.f32 %v5412, %v5593
    %v5596 = vld [vmem:[%s71] sm:$0x1]
    %v5598 = vperm.slane %v5596, 0
    %v5600 = vadd.f32 %v5595, %v5598
    %v5601 = vld [vmem:[%s73] sm:$0xff]
    %v5602 = vld [vmem:[%s73 + $0x8] sm:$0xff]
    %v5603 = vld [vmem:[%s73 + $0x10] sm:$0xff]
    %v5604 = vld [vmem:[%s73 + $0x18] sm:$0xff]
    %v5605 = vld [vmem:[%s75] sm:$0xff]
    %v5606 = vld [vmem:[%s75 + $0x8] sm:$0xff]
    %v5607 = vld [vmem:[%s75 + $0x10] sm:$0xff]
    %v5608 = vld [vmem:[%s75 + $0x18] sm:$0xff]
    %v5610 = vsel %vm271, %v5600, 0
    %5612 = vmatpush.msra.mxu0 0.0
    %5613 = vmatpush.msra.mxu0 0.0
    %5614 = vmatpush.msra.mxu0 0.0
    %5615 = vmatpush.msra.mxu0 0.0
    %5616 = vmatpush.msra.mxu0 0.0
    %5617 = vmatpush.msra.mxu0 0.0
    %5618 = vmatpush.msra.mxu0 0.0
    %5619 = vmatpush.msra.mxu0 0.0
    %5620 = vmatpush.msra.mxu0 0.0
    %5621 = vmatpush.msra.mxu0 0.0
    %5622 = vmatpush.msra.mxu0 0.0
    %5623 = vmatpush.msra.mxu0 0.0
    %5624 = vmatpush.msra.mxu0 %v5608
    %5625 = vmatpush.msra.mxu0 %v5607
    %5626 = vmatpush.msra.mxu0 %v5606
    %5627 = vmatpush.msra.mxu0 %v5605
    %5628 = vmatmul.f32.gmra.mxu0 %v5610
    %v5629 = vpop.f32.mrf.mxu0
    %v5630 = vadd.f32 0.0, %v5629
    %5631 = vdwg.mxu0
    %5633 = vst [vmem:[#allocation1] ss:$4 sm:$0xff] %v2334
    %v5634 = vld.sshfl [vmem:[#allocation1] sm:$0xff pattern:$0x73625140]
    %5635 = vrot.lane.b32.xlu0 %v5634, 96
    %v5636 = vpop.permute.xlu0 %5635
    %v5637 = vsel %vm271, %v5636, 0
    %5639 = vmatpush.msra.mxu0 0.0
    %5640 = vmatpush.msra.mxu0 0.0
    %5641 = vmatpush.msra.mxu0 0.0
    %5642 = vmatpush.msra.mxu0 0.0
    %5643 = vmatpush.msra.mxu0 0.0
    %5644 = vmatpush.msra.mxu0 0.0
    %5645 = vmatpush.msra.mxu0 0.0
    %5646 = vmatpush.msra.mxu0 0.0
    %5647 = vmatpush.msra.mxu0 0.0
    %5648 = vmatpush.msra.mxu0 0.0
    %5649 = vmatpush.msra.mxu0 0.0
    %5650 = vmatpush.msra.mxu0 0.0
    %5651 = vmatpush.msra.mxu0 %v5604
    %5652 = vmatpush.msra.mxu0 %v5603
    %5653 = vmatpush.msra.mxu0 %v5602
    %5654 = vmatpush.msra.mxu0 %v5601
    %5655 = vmatmul.f32.gmra.mxu0 %v5637
    %v5656 = vpop.f32.mrf.mxu0
    %v5657 = vadd.f32 %v5630, %v5656
    %5658 = vdwg.mxu0
    %v5659 = vld [vmem:[%s77] sm:$0x1]
    %v5661 = vperm.slane %v5659, 0
    %v5663 = vadd.f32 %v5657, %v5661
    %vm5664 = vcmask 25600
    %5665 = vst.msk [vmem:[#allocation2] sm:$0x3] %vm5664, %v5663
    // Predicated region
    $region158: #{gru_model_with_attention.1} parent=1 // pred_check
      _
    $region159: #{gru_model_with_attention.1} parent=1 // pred_check_branch
      %5667 = sbr.rel (0) target = $region161
    $region160: #{gru_model_with_attention.1} parent=1 // pred_region
      %5669 = vsyncadd [#allocation3], 0
      %s5671 = sshll.u32 [#allocation2], 4
      %s5672 = int_to_ptr.vmem [resolvable:$true] %s5671
      %s5673 = sshll.u32 %s79, 4
      %s5674 = int_to_ptr.hbm [resolvable:$true] %s5673
      %5676 = dma.vmem_to_hbm [thread:$0]  %s5672, 32, %s5674, [#allocation3]
    $region161: #{gru_model_with_attention.1} parent=1 // pred_fallthru
      _
    // Predicated region
    $region162: #{gru_model_with_attention.1} parent=1 // pred_check
      _
    $region163: #{gru_model_with_attention.1} parent=1 // pred_check_branch
      %5678 = sbr.rel (0) target = $region165
    $region164: #{gru_model_with_attention.1} parent=1 // pred_region
      %5680 = dma.done [#allocation3], 32
    $region165: #{gru_model_with_attention.1} parent=1 // pred_fallthru
      _
    %5681 = vsyncpa [#allocation3], 1

</llo_original>
